<compile_context>
chip_gen: v7x
topology: tpu7x:2x2x1
jax: 0.10.0
libtpu: 0.0.40
codegen_flags: <defaults>
</compile_context>

<pallas_src>
import functools
import math

import jax
import jax.numpy as jnp
from jax import lax
from jax.experimental import pallas as pl
from jax.experimental.pallas import tpu as pltpu


def _round_up(x, m):
    return ((x + m - 1) // m) * m


def _vmem_capacity_bytes():
    """Physical per-core VMEM; conservative 64 MiB (v7x) if unknown."""
    try:
        info = pltpu.get_tpu_info()
        cap = getattr(info, "vmem_capacity_bytes", None)
        if cap:
            return int(cap)
    except Exception:
        pass
    return 64 << 20


def _pick_hw_tile(hw, max_tile):
    """Largest multiple-of-128 divisor of hw that is <= max_tile, else hw."""
    if hw <= max_tile:
        return hw
    for t in range(max_tile, 0, -128):
        if hw % t == 0:
            return t
    # No multiple-of-128 divisor: the block must span the full token dim
    # (BlockSpec constraint); the VMEM budget below still clamps the request.
    return hw


def _vmem_limit_bytes(tile, c, s_pad, x_itemsize, budget, single_buffer):
    """Explicit scoped-VMEM budget derived from the real tile footprint."""
    f32, bf16 = 4, 2
    wbuf = 1 if single_buffer else 2
    weights = wbuf * (2 * c * c * bf16 + c * f32)        # Wq, Wo, bias
    io = 2 * (2 * tile * c * x_itemsize)                 # x / out tiles (dbuf)
    io += 2 * (2 * s_pad * c * bf16)                     # K, V^T (dbuf)
    compute = (3 * tile * c + 2 * tile * s_pad) * f32    # qT/out/resid, scores, exp
    compute += (2 * tile * c + tile * s_pad) * bf16      # qT bf16, ohT concat, p
    est = int(1.4 * (weights + io + compute))
    return min(max(est, 32 << 20), budget)


def _cross_attention_kernel(x_ref, k_ref, vt_ref, wq_ref, wo_ref, bo_ref,
                            o_ref, *, n_heads, head_dim, s_valid, s_pad):
    # Shapes (T = token tile, Sp = padded context length):
    #   x_ref : (1, C, T)  caller dtype      wq_ref: (C, C) bf16 (scale folded)
    #   k_ref : (1, H, Sp, hd) bf16          wo_ref: (C, C) bf16
    #   vt_ref: (1, H, hd, Sp) bf16          bo_ref: (C, 1) f32
    #   o_ref : (1, C, T)
    x = x_ref[0]                                           # (C, T)
    x_bf = x.astype(jnp.bfloat16)

    # Q^T = (Wq * 1/sqrt(hd)) @ x  -- one MXU matmul, f32 accumulation.
    qT = jnp.dot(wq_ref[...], x_bf,
                 preferred_element_type=jnp.float32).astype(jnp.bfloat16)

    # Additive mask for the zero-padded context rows (hoisted out of the loop).
    if s_pad > s_valid:
        row = lax.broadcasted_iota(jnp.int32, (s_pad, 1), 0)
        kmask = jnp.where(row < s_valid, 0.0, -1e9).astype(jnp.float32)
    else:
        kmask = None

    # Per-head attention; every head's output is kept transposed (hd, T).
    oh_t = []
    for h in range(n_heads):
        lo = h * head_dim
        qh = qT[lo:lo + head_dim, :]                       # (hd, T) bf16
        kh = k_ref[0, h]                                   # (Sp, hd) bf16
        vt = vt_ref[0, h]                                  # (hd, Sp) bf16

        scores = jnp.dot(kh, qh, preferred_element_type=jnp.float32)  # (Sp, T)
        if kmask is not None:
            scores = scores + kmask
        m = jnp.max(scores, axis=0, keepdims=True)                    # (1, T)
        e = jnp.exp(scores - m)
        inv = pl.reciprocal(jnp.sum(e, axis=0, keepdims=True), approx=True)
        p = (e * inv).astype(jnp.bfloat16)                             # (Sp, T)

        oh_t.append(jnp.dot(vt, p, preferred_element_type=jnp.float32)
                    .astype(jnp.bfloat16))                             # (hd, T)

    # Fused output projection: ONE (C, C) x (C, T) matmul (K = C), then
    # bias + residual in f32.
    ohT = jnp.concatenate(oh_t, axis=0)                                # (C, T)
    out = jnp.dot(wo_ref[...], ohT, preferred_element_type=jnp.float32)
    out = out + bo_ref[...] + x.astype(jnp.float32)
    o_ref[0] = out.astype(o_ref.dtype)


def _const_spec(block_shape, single_buffer):
    """BlockSpec for a grid-constant operand, single-buffered if supported."""
    index_map = lambda i, t: (0,) * len(block_shape)
    if single_buffer and hasattr(pl, "Buffered"):
        try:
            return pl.BlockSpec(block_shape, index_map,
                                pipeline_mode=pl.Buffered(1))
        except TypeError:
            pass
    return pl.BlockSpec(block_shape, index_map)


def cross_attention_pallas(x_nchw, context, params, n_heads):
    """x_nchw: (B, C, H, W), context: (B, S, Cd)  ->  (B, C, H, W)."""
    b, c, h, w = x_nchw.shape
    s = context.shape[1]
    hw = h * w
    assert c % n_heads == 0, "query_dim must be divisible by n_heads"
    hd = c // n_heads
    s_pad = _round_up(s, 128)

    # NCHW -> (B, C, HW): contiguous reshape only, no HBM transpose pass.
    x_cm = x_nchw.reshape(b, c, hw)

    # Fused K|V projection (tiny M = S matmul) once per batch element, then
    # head-major layouts, zero-padded along S, cast to bf16 for the MXU.
    wkv_t = jnp.concatenate([params["wk"].T, params["wv"].T], axis=1)  # (Cd, 2C)
    kv = jnp.einsum("bsd,dc->bsc", context, wkv_t)                     # (B, S, 2C)
    k = kv[:, :, :c].reshape(b, s, n_heads, hd)
    v = kv[:, :, c:].reshape(b, s, n_heads, hd)
    k_hm = jnp.transpose(k, (0, 2, 1, 3))                  # (B, H, S, hd)
    vt_hm = jnp.transpose(v, (0, 2, 3, 1))                 # (B, H, hd, S)
    if s_pad > s:
        k_hm = jnp.pad(k_hm, ((0, 0), (0, 0), (0, s_pad - s), (0, 0)))
        vt_hm = jnp.pad(vt_hm, ((0, 0), (0, 0), (0, 0), (0, s_pad - s)))
    k_hm = k_hm.astype(jnp.bfloat16)
    vt_hm = vt_hm.astype(jnp.bfloat16)

    # nn.Linear weights are (out, in); the transposed formulation uses them
    # as-is (out^T = W @ in^T).  Fold the attention scale into Wq.
    wq_s = (params["wq"] * (1.0 / math.sqrt(hd))).astype(jnp.bfloat16)  # (C, C)
    wo = params["wo"].astype(jnp.bfloat16)                              # (C, C)
    bo = params["bo"].reshape(c, 1).astype(jnp.float32)                 # (C, 1)

    cap = _vmem_capacity_bytes()
    budget = int(0.85 * cap)
    max_tile = 1024 if budget >= (80 << 20) else 512        # v5e/v6e vs v7x
    tile = _pick_hw_tile(hw, max_tile)
    grid = (b, hw // tile)

    kernel = functools.partial(_cross_attention_kernel, n_heads=n_heads,
                               head_dim=hd, s_valid=s, s_pad=s_pad)

    def call(single_buffer_consts):
        in_specs = [
            pl.BlockSpec((1, c, tile), lambda i, t: (i, 0, t)),                # x
            pl.BlockSpec((1, n_heads, s_pad, hd), lambda i, t: (i, 0, 0, 0)),  # K
            pl.BlockSpec((1, n_heads, hd, s_pad), lambda i, t: (i, 0, 0, 0)),  # V^T
            _const_spec((c, c), single_buffer_consts),                         # Wq*scale
            _const_spec((c, c), single_buffer_consts),                         # Wo
            _const_spec((c, 1), single_buffer_consts),                         # bias
        ]
        return pl.pallas_call(
            kernel,
            out_shape=jax.ShapeDtypeStruct((b, c, hw), x_cm.dtype),
            grid_spec=pltpu.PrefetchScalarGridSpec(
                num_scalar_prefetch=0,
                grid=grid,
                in_specs=in_specs,
                out_specs=pl.BlockSpec((1, c, tile), lambda i, t: (i, 0, t)),
            ),
            compiler_params=pltpu.CompilerParams(
                dimension_semantics=("parallel", "parallel"),
                vmem_limit_bytes=_vmem_limit_bytes(
                    tile, c, s_pad, x_cm.dtype.itemsize, budget,
                    single_buffer_consts),
            ),
        )(x_cm, k_hm, vt_hm, wq_s, wo, bo)

    try:
        out_cm = call(True)
    except Exception:
        # Fallback for runtimes that reject pipeline_mode=Buffered(1).
        out_cm = call(False)

    # (B, C, HW) -> NCHW, again a free reshape.
    return out_cm.reshape(b, c, h, w)


def cross_attention_reference(x_nchw, context, params, n_heads):
    """Pure-JAX f32 reference replicating the PyTorch forward."""
    b, c, h, w = x_nchw.shape
    hd = c // n_heads
    x_tok = jnp.transpose(x_nchw.reshape(b, c, -1), (0, 2, 1))     # (B, HW, C)
    q = x_tok @ params["wq"].T
    k = context @ params["wk"].T
    v = context @ params["wv"].T

    def split(t):
        return jnp.transpose(t.reshape(b, -1, n_heads, hd), (0, 2, 1, 3))

    q, k, v = split(q), split(k), split(v)
    scores = jnp.einsum("bhqd,bhkd->bhqk", q, k) / math.sqrt(hd)
    p = jax.nn.softmax(scores, axis=-1)
    o = jnp.einsum("bhqk,bhkd->bhqd", p, v)
    o = jnp.transpose(o, (0, 2, 1, 3)).reshape(b, -1, c)
    out = o @ params["wo"].T + params["bo"]
    return x_nchw + jnp.transpose(out, (0, 2, 1)).reshape(b, c, h, w)


if __name__ == "__main__":
    # Small shapes consistent with the module (query_dim=C divisible by 8).
    B, C, H, W = 2, 32, 16, 16
    S, CTX_DIM, N_HEADS = 8, 16, 8

    key = jax.random.PRNGKey(0)
    kx, kc, k1, k2, k3, k4, k5 = jax.random.split(key, 7)

    x = jax.random.normal(kx, (B, C, H, W), dtype=jnp.float32)
    context = jax.random.normal(kc, (B, S, CTX_DIM), dtype=jnp.float32)

    # Deterministic parameters (nn.Linear weight shape = (out, in)).
    params = {
        "wq": jax.random.normal(k1, (C, C), jnp.float32) * 0.05,
        "wk": jax.random.normal(k2, (C, CTX_DIM), jnp.float32) * 0.05,
        "wv": jax.random.normal(k3, (C, CTX_DIM), jnp.float32) * 0.05,
        "wo": jax.random.normal(k4, (C, C), jnp.float32) * 0.05,
        "bo": jax.random.normal(k5, (C,), jnp.float32) * 0.05,
    }

    out = jax.block_until_ready(
        cross_attention_pallas(x, context, params, N_HEADS))
    ref = cross_attention_reference(x, context, params, N_HEADS)

    assert out.shape == (B, C, H, W)
    # bf16 MXU operands with f32 accumulation + approx reciprocal -> loose-ish
    # tolerance vs the pure-f32 reference (observed error is O(1e-3)).
    max_err = float(jnp.max(jnp.abs(out - ref)))
    assert jnp.allclose(out, ref, atol=2e-2, rtol=2e-2), max_err

    print("KERNEL_OK")
</pallas_src>

<mosaic_0001>
module attributes {stable_mosaic.version = 11 : i64} {
  func.func @_cross_attention_kernel(%arg0: i32, %arg1: i32, %arg2: memref<1x32x256xf32, #tpu.memory_space<vmem>>, %arg3: memref<1x8x128x4xbf16, #tpu.memory_space<vmem>>, %arg4: memref<1x8x4x128xbf16, #tpu.memory_space<vmem>>, %arg5: memref<32x32xbf16, #tpu.memory_space<vmem>>, %arg6: memref<32x32xbf16, #tpu.memory_space<vmem>>, %arg7: memref<32x1xf32, #tpu.memory_space<vmem>>, %arg8: memref<1x32x256xf32, #tpu.memory_space<vmem>>) attributes {dimension_semantics = [#tpu.dimension_semantics<parallel>, #tpu.dimension_semantics<parallel>], iteration_bounds = array<i64: 2, 1>, scalar_prefetch = 0 : i64, scratch_operands = 0 : i64, tpu.core_type = #tpu.core_type<tc>, window_params = [{transform_indices = @transform_0, window_bounds = array<i64: 1, 32, 256>}, {transform_indices = @transform_1, window_bounds = array<i64: 1, 8, 128, 4>}, {transform_indices = @transform_2, window_bounds = array<i64: 1, 8, 4, 128>}, {pipeline_mode = #tpu.pipeline_mode<synchronous>, transform_indices = @transform_3, window_bounds = array<i64: 32, 32>}, {pipeline_mode = #tpu.pipeline_mode<synchronous>, transform_indices = @transform_4, window_bounds = array<i64: 32, 32>}, {pipeline_mode = #tpu.pipeline_mode<synchronous>, transform_indices = @transform_5, window_bounds = array<i64: 32, 1>}, {transform_indices = @transform_6, window_bounds = array<i64: 1, 32, 256>}]} {
    %c0 = arith.constant 0 : index
    %c0_0 = arith.constant 0 : index
    %c0_1 = arith.constant 0 : index
    %0 = vector.load %arg2[%c0, %c0_0, %c0_1] : memref<1x32x256xf32, #tpu.memory_space<vmem>>, vector<1x32x256xf32>
    %1 = vector.shape_cast %0 : vector<1x32x256xf32> to vector<32x256xf32>
    %2 = arith.truncf %1 : vector<32x256xf32> to vector<32x256xbf16>
    %c0_2 = arith.constant 0 : index
    %c0_3 = arith.constant 0 : index
    %3 = vector.load %arg5[%c0_2, %c0_3] : memref<32x32xbf16, #tpu.memory_space<vmem>>, vector<32x32xbf16>
    %cst = arith.constant dense<0.000000e+00> : vector<32x256xf32>
    %4 = tpu.matmul %3, %2, %cst {dimension_numbers = #tpu.dot_dimension_numbers<[1], [0], [0], [1], [0, 0, 1, 1], [], []>} : vector<32x32xbf16>, vector<32x256xbf16>, vector<32x256xf32> -> vector<32x256xf32>
    %5 = arith.truncf %4 : vector<32x256xf32> to vector<32x256xbf16>
    %6 = tpu.iota {dimensions = array<i32: 0>} : vector<128x1xi32>
    %c8_i32 = arith.constant 8 : i32
    %7 = vector.broadcast %c8_i32 : i32 to vector<128x1xi32>
    %8 = arith.cmpi slt, %6, %7 : vector<128x1xi32>
    %cst_4 = arith.constant 0.000000e+00 : f32
    %cst_5 = arith.constant -1.000000e+09 : f32
    %9 = vector.broadcast %cst_4 : f32 to vector<128x1xf32>
    %10 = vector.broadcast %cst_5 : f32 to vector<128x1xf32>
    %11 = arith.select %8, %9, %10 : vector<128x1xi1>, vector<128x1xf32>
    %12 = vector.extract_strided_slice %5 {offsets = [0, 0], sizes = [4, 256], strides = [1, 1]} : vector<32x256xbf16> to vector<4x256xbf16>
    %c0_6 = arith.constant 0 : index
    %c0_7 = arith.constant 0 : index
    %c0_8 = arith.constant 0 : index
    %c0_9 = arith.constant 0 : index
    %13 = vector.load %arg3[%c0_6, %c0_7, %c0_8, %c0_9] : memref<1x8x128x4xbf16, #tpu.memory_space<vmem>>, vector<1x1x128x4xbf16>
    %14 = vector.shape_cast %13 : vector<1x1x128x4xbf16> to vector<128x4xbf16>
    %c0_10 = arith.constant 0 : index
    %c0_11 = arith.constant 0 : index
    %c0_12 = arith.constant 0 : index
    %c0_13 = arith.constant 0 : index
    %15 = vector.load %arg4[%c0_10, %c0_11, %c0_12, %c0_13] : memref<1x8x4x128xbf16, #tpu.memory_space<vmem>>, vector<1x1x4x128xbf16>
    %16 = vector.shape_cast %15 : vector<1x1x4x128xbf16> to vector<4x128xbf16>
    %cst_14 = arith.constant dense<0.000000e+00> : vector<128x256xf32>
    %17 = tpu.matmul %14, %12, %cst_14 {dimension_numbers = #tpu.dot_dimension_numbers<[1], [0], [0], [1], [0, 0, 1, 1], [], []>} : vector<128x4xbf16>, vector<4x256xbf16>, vector<128x256xf32> -> vector<128x256xf32>
    %18 = vector.broadcast %11 : vector<128x1xf32> to vector<128x256xf32>
    %19 = arith.addf %17, %18 : vector<128x256xf32>
    %cst_15 = arith.constant dense<0xFF800000> : vector<256xf32>
    %20 = vector.multi_reduction <maximumf>, %19, %cst_15 [0] : vector<128x256xf32> to vector<256xf32>
    %21 = vector.shape_cast %20 : vector<256xf32> to vector<1x256xf32>
    %22 = vector.broadcast %21 : vector<1x256xf32> to vector<128x256xf32>
    %23 = arith.subf %19, %22 : vector<128x256xf32>
    %24 = math.exp %23 : vector<128x256xf32>
    %cst_16 = arith.constant dense<0.000000e+00> : vector<256xf32>
    %25 = vector.multi_reduction <add>, %24, %cst_16 [0] : vector<128x256xf32> to vector<256xf32>
    %26 = vector.shape_cast %25 : vector<256xf32> to vector<1x256xf32>
    %27 = tpu.reciprocal %26 {approx = true} : vector<1x256xf32> -> vector<1x256xf32>
    %28 = vector.broadcast %27 : vector<1x256xf32> to vector<128x256xf32>
    %29 = arith.mulf %24, %28 : vector<128x256xf32>
    %30 = arith.truncf %29 : vector<128x256xf32> to vector<128x256xbf16>
    %cst_17 = arith.constant dense<0.000000e+00> : vector<4x256xf32>
    %31 = tpu.matmul %16, %30, %cst_17 {dimension_numbers = #tpu.dot_dimension_numbers<[1], [0], [0], [1], [0, 0, 1, 1], [], []>} : vector<4x128xbf16>, vector<128x256xbf16>, vector<4x256xf32> -> vector<4x256xf32>
    %32 = arith.truncf %31 : vector<4x256xf32> to vector<4x256xbf16>
    %33 = vector.extract_strided_slice %5 {offsets = [4, 0], sizes = [4, 256], strides = [1, 1]} : vector<32x256xbf16> to vector<4x256xbf16>
    %c0_18 = arith.constant 0 : index
    %c1 = arith.constant 1 : index
    %c0_19 = arith.constant 0 : index
    %c0_20 = arith.constant 0 : index
    %34 = vector.load %arg3[%c0_18, %c1, %c0_19, %c0_20] : memref<1x8x128x4xbf16, #tpu.memory_space<vmem>>, vector<1x1x128x4xbf16>
    %35 = vector.shape_cast %34 : vector<1x1x128x4xbf16> to vector<128x4xbf16>
    %c0_21 = arith.constant 0 : index
    %c1_22 = arith.constant 1 : index
    %c0_23 = arith.constant 0 : index
    %c0_24 = arith.constant 0 : index
    %36 = vector.load %arg4[%c0_21, %c1_22, %c0_23, %c0_24] : memref<1x8x4x128xbf16, #tpu.memory_space<vmem>>, vector<1x1x4x128xbf16>
    %37 = vector.shape_cast %36 : vector<1x1x4x128xbf16> to vector<4x128xbf16>
    %cst_25 = arith.constant dense<0.000000e+00> : vector<128x256xf32>
    %38 = tpu.matmul %35, %33, %cst_25 {dimension_numbers = #tpu.dot_dimension_numbers<[1], [0], [0], [1], [0, 0, 1, 1], [], []>} : vector<128x4xbf16>, vector<4x256xbf16>, vector<128x256xf32> -> vector<128x256xf32>
    %39 = vector.broadcast %11 : vector<128x1xf32> to vector<128x256xf32>
    %40 = arith.addf %38, %39 : vector<128x256xf32>
    %cst_26 = arith.constant dense<0xFF800000> : vector<256xf32>
    %41 = vector.multi_reduction <maximumf>, %40, %cst_26 [0] : vector<128x256xf32> to vector<256xf32>
    %42 = vector.shape_cast %41 : vector<256xf32> to vector<1x256xf32>
    %43 = vector.broadcast %42 : vector<1x256xf32> to vector<128x256xf32>
    %44 = arith.subf %40, %43 : vector<128x256xf32>
    %45 = math.exp %44 : vector<128x256xf32>
    %cst_27 = arith.constant dense<0.000000e+00> : vector<256xf32>
    %46 = vector.multi_reduction <add>, %45, %cst_27 [0] : vector<128x256xf32> to vector<256xf32>
    %47 = vector.shape_cast %46 : vector<256xf32> to vector<1x256xf32>
    %48 = tpu.reciprocal %47 {approx = true} : vector<1x256xf32> -> vector<1x256xf32>
    %49 = vector.broadcast %48 : vector<1x256xf32> to vector<128x256xf32>
    %50 = arith.mulf %45, %49 : vector<128x256xf32>
    %51 = arith.truncf %50 : vector<128x256xf32> to vector<128x256xbf16>
    %cst_28 = arith.constant dense<0.000000e+00> : vector<4x256xf32>
    %52 = tpu.matmul %37, %51, %cst_28 {dimension_numbers = #tpu.dot_dimension_numbers<[1], [0], [0], [1], [0, 0, 1, 1], [], []>} : vector<4x128xbf16>, vector<128x256xbf16>, vector<4x256xf32> -> vector<4x256xf32>
    %53 = arith.truncf %52 : vector<4x256xf32> to vector<4x256xbf16>
    %54 = vector.extract_strided_slice %5 {offsets = [8, 0], sizes = [4, 256], strides = [1, 1]} : vector<32x256xbf16> to vector<4x256xbf16>
    %c0_29 = arith.constant 0 : index
    %c2 = arith.constant 2 : index
    %c0_30 = arith.constant 0 : index
    %c0_31 = arith.constant 0 : index
    %55 = vector.load %arg3[%c0_29, %c2, %c0_30, %c0_31] : memref<1x8x128x4xbf16, #tpu.memory_space<vmem>>, vector<1x1x128x4xbf16>
    %56 = vector.shape_cast %55 : vector<1x1x128x4xbf16> to vector<128x4xbf16>
    %c0_32 = arith.constant 0 : index
    %c2_33 = arith.constant 2 : index
    %c0_34 = arith.constant 0 : index
    %c0_35 = arith.constant 0 : index
    %57 = vector.load %arg4[%c0_32, %c2_33, %c0_34, %c0_35] : memref<1x8x4x128xbf16, #tpu.memory_space<vmem>>, vector<1x1x4x128xbf16>
    %58 = vector.shape_cast %57 : vector<1x1x4x128xbf16> to vector<4x128xbf16>
    %cst_36 = arith.constant dense<0.000000e+00> : vector<128x256xf32>
    %59 = tpu.matmul %56, %54, %cst_36 {dimension_numbers = #tpu.dot_dimension_numbers<[1], [0], [0], [1], [0, 0, 1, 1], [], []>} : vector<128x4xbf16>, vector<4x256xbf16>, vector<128x256xf32> -> vector<128x256xf32>
    %60 = vector.broadcast %11 : vector<128x1xf32> to vector<128x256xf32>
    %61 = arith.addf %59, %60 : vector<128x256xf32>
    %cst_37 = arith.constant dense<0xFF800000> : vector<256xf32>
    %62 = vector.multi_reduction <maximumf>, %61, %cst_37 [0] : vector<128x256xf32> to vector<256xf32>
    %63 = vector.shape_cast %62 : vector<256xf32> to vector<1x256xf32>
    %64 = vector.broadcast %63 : vector<1x256xf32> to vector<128x256xf32>
    %65 = arith.subf %61, %64 : vector<128x256xf32>
    %66 = math.exp %65 : vector<128x256xf32>
    %cst_38 = arith.constant dense<0.000000e+00> : vector<256xf32>
    %67 = vector.multi_reduction <add>, %66, %cst_38 [0] : vector<128x256xf32> to vector<256xf32>
    %68 = vector.shape_cast %67 : vector<256xf32> to vector<1x256xf32>
    %69 = tpu.reciprocal %68 {approx = true} : vector<1x256xf32> -> vector<1x256xf32>
    %70 = vector.broadcast %69 : vector<1x256xf32> to vector<128x256xf32>
    %71 = arith.mulf %66, %70 : vector<128x256xf32>
    %72 = arith.truncf %71 : vector<128x256xf32> to vector<128x256xbf16>
    %cst_39 = arith.constant dense<0.000000e+00> : vector<4x256xf32>
    %73 = tpu.matmul %58, %72, %cst_39 {dimension_numbers = #tpu.dot_dimension_numbers<[1], [0], [0], [1], [0, 0, 1, 1], [], []>} : vector<4x128xbf16>, vector<128x256xbf16>, vector<4x256xf32> -> vector<4x256xf32>
    %74 = arith.truncf %73 : vector<4x256xf32> to vector<4x256xbf16>
    %75 = vector.extract_strided_slice %5 {offsets = [12, 0], sizes = [4, 256], strides = [1, 1]} : vector<32x256xbf16> to vector<4x256xbf16>
    %c0_40 = arith.constant 0 : index
    %c3 = arith.constant 3 : index
    %c0_41 = arith.constant 0 : index
    %c0_42 = arith.constant 0 : index
    %76 = vector.load %arg3[%c0_40, %c3, %c0_41, %c0_42] : memref<1x8x128x4xbf16, #tpu.memory_space<vmem>>, vector<1x1x128x4xbf16>
    %77 = vector.shape_cast %76 : vector<1x1x128x4xbf16> to vector<128x4xbf16>
    %c0_43 = arith.constant 0 : index
    %c3_44 = arith.constant 3 : index
    %c0_45 = arith.constant 0 : index
    %c0_46 = arith.constant 0 : index
    %78 = vector.load %arg4[%c0_43, %c3_44, %c0_45, %c0_46] : memref<1x8x4x128xbf16, #tpu.memory_space<vmem>>, vector<1x1x4x128xbf16>
    %79 = vector.shape_cast %78 : vector<1x1x4x128xbf16> to vector<4x128xbf16>
    %cst_47 = arith.constant dense<0.000000e+00> : vector<128x256xf32>
    %80 = tpu.matmul %77, %75, %cst_47 {dimension_numbers = #tpu.dot_dimension_numbers<[1], [0], [0], [1], [0, 0, 1, 1], [], []>} : vector<128x4xbf16>, vector<4x256xbf16>, vector<128x256xf32> -> vector<128x256xf32>
    %81 = vector.broadcast %11 : vector<128x1xf32> to vector<128x256xf32>
    %82 = arith.addf %80, %81 : vector<128x256xf32>
    %cst_48 = arith.constant dense<0xFF800000> : vector<256xf32>
    %83 = vector.multi_reduction <maximumf>, %82, %cst_48 [0] : vector<128x256xf32> to vector<256xf32>
    %84 = vector.shape_cast %83 : vector<256xf32> to vector<1x256xf32>
    %85 = vector.broadcast %84 : vector<1x256xf32> to vector<128x256xf32>
    %86 = arith.subf %82, %85 : vector<128x256xf32>
    %87 = math.exp %86 : vector<128x256xf32>
    %cst_49 = arith.constant dense<0.000000e+00> : vector<256xf32>
    %88 = vector.multi_reduction <add>, %87, %cst_49 [0] : vector<128x256xf32> to vector<256xf32>
    %89 = vector.shape_cast %88 : vector<256xf32> to vector<1x256xf32>
    %90 = tpu.reciprocal %89 {approx = true} : vector<1x256xf32> -> vector<1x256xf32>
    %91 = vector.broadcast %90 : vector<1x256xf32> to vector<128x256xf32>
    %92 = arith.mulf %87, %91 : vector<128x256xf32>
    %93 = arith.truncf %92 : vector<128x256xf32> to vector<128x256xbf16>
    %cst_50 = arith.constant dense<0.000000e+00> : vector<4x256xf32>
    %94 = tpu.matmul %79, %93, %cst_50 {dimension_numbers = #tpu.dot_dimension_numbers<[1], [0], [0], [1], [0, 0, 1, 1], [], []>} : vector<4x128xbf16>, vector<128x256xbf16>, vector<4x256xf32> -> vector<4x256xf32>
    %95 = arith.truncf %94 : vector<4x256xf32> to vector<4x256xbf16>
    %96 = vector.extract_strided_slice %5 {offsets = [16, 0], sizes = [4, 256], strides = [1, 1]} : vector<32x256xbf16> to vector<4x256xbf16>
    %c0_51 = arith.constant 0 : index
    %c4 = arith.constant 4 : index
    %c0_52 = arith.constant 0 : index
    %c0_53 = arith.constant 0 : index
    %97 = vector.load %arg3[%c0_51, %c4, %c0_52, %c0_53] : memref<1x8x128x4xbf16, #tpu.memory_space<vmem>>, vector<1x1x128x4xbf16>
    %98 = vector.shape_cast %97 : vector<1x1x128x4xbf16> to vector<128x4xbf16>
    %c0_54 = arith.constant 0 : index
    %c4_55 = arith.constant 4 : index
    %c0_56 = arith.constant 0 : index
    %c0_57 = arith.constant 0 : index
    %99 = vector.load %arg4[%c0_54, %c4_55, %c0_56, %c0_57] : memref<1x8x4x128xbf16, #tpu.memory_space<vmem>>, vector<1x1x4x128xbf16>
    %100 = vector.shape_cast %99 : vector<1x1x4x128xbf16> to vector<4x128xbf16>
    %cst_58 = arith.constant dense<0.000000e+00> : vector<128x256xf32>
    %101 = tpu.matmul %98, %96, %cst_58 {dimension_numbers = #tpu.dot_dimension_numbers<[1], [0], [0], [1], [0, 0, 1, 1], [], []>} : vector<128x4xbf16>, vector<4x256xbf16>, vector<128x256xf32> -> vector<128x256xf32>
    %102 = vector.broadcast %11 : vector<128x1xf32> to vector<128x256xf32>
    %103 = arith.addf %101, %102 : vector<128x256xf32>
    %cst_59 = arith.constant dense<0xFF800000> : vector<256xf32>
    %104 = vector.multi_reduction <maximumf>, %103, %cst_59 [0] : vector<128x256xf32> to vector<256xf32>
    %105 = vector.shape_cast %104 : vector<256xf32> to vector<1x256xf32>
    %106 = vector.broadcast %105 : vector<1x256xf32> to vector<128x256xf32>
    %107 = arith.subf %103, %106 : vector<128x256xf32>
    %108 = math.exp %107 : vector<128x256xf32>
    %cst_60 = arith.constant dense<0.000000e+00> : vector<256xf32>
    %109 = vector.multi_reduction <add>, %108, %cst_60 [0] : vector<128x256xf32> to vector<256xf32>
    %110 = vector.shape_cast %109 : vector<256xf32> to vector<1x256xf32>
    %111 = tpu.reciprocal %110 {approx = true} : vector<1x256xf32> -> vector<1x256xf32>
    %112 = vector.broadcast %111 : vector<1x256xf32> to vector<128x256xf32>
    %113 = arith.mulf %108, %112 : vector<128x256xf32>
    %114 = arith.truncf %113 : vector<128x256xf32> to vector<128x256xbf16>
    %cst_61 = arith.constant dense<0.000000e+00> : vector<4x256xf32>
    %115 = tpu.matmul %100, %114, %cst_61 {dimension_numbers = #tpu.dot_dimension_numbers<[1], [0], [0], [1], [0, 0, 1, 1], [], []>} : vector<4x128xbf16>, vector<128x256xbf16>, vector<4x256xf32> -> vector<4x256xf32>
    %116 = arith.truncf %115 : vector<4x256xf32> to vector<4x256xbf16>
    %117 = vector.extract_strided_slice %5 {offsets = [20, 0], sizes = [4, 256], strides = [1, 1]} : vector<32x256xbf16> to vector<4x256xbf16>
    %c0_62 = arith.constant 0 : index
    %c5 = arith.constant 5 : index
    %c0_63 = arith.constant 0 : index
    %c0_64 = arith.constant 0 : index
    %118 = vector.load %arg3[%c0_62, %c5, %c0_63, %c0_64] : memref<1x8x128x4xbf16, #tpu.memory_space<vmem>>, vector<1x1x128x4xbf16>
    %119 = vector.shape_cast %118 : vector<1x1x128x4xbf16> to vector<128x4xbf16>
    %c0_65 = arith.constant 0 : index
    %c5_66 = arith.constant 5 : index
    %c0_67 = arith.constant 0 : index
    %c0_68 = arith.constant 0 : index
    %120 = vector.load %arg4[%c0_65, %c5_66, %c0_67, %c0_68] : memref<1x8x4x128xbf16, #tpu.memory_space<vmem>>, vector<1x1x4x128xbf16>
    %121 = vector.shape_cast %120 : vector<1x1x4x128xbf16> to vector<4x128xbf16>
    %cst_69 = arith.constant dense<0.000000e+00> : vector<128x256xf32>
    %122 = tpu.matmul %119, %117, %cst_69 {dimension_numbers = #tpu.dot_dimension_numbers<[1], [0], [0], [1], [0, 0, 1, 1], [], []>} : vector<128x4xbf16>, vector<4x256xbf16>, vector<128x256xf32> -> vector<128x256xf32>
    %123 = vector.broadcast %11 : vector<128x1xf32> to vector<128x256xf32>
    %124 = arith.addf %122, %123 : vector<128x256xf32>
    %cst_70 = arith.constant dense<0xFF800000> : vector<256xf32>
    %125 = vector.multi_reduction <maximumf>, %124, %cst_70 [0] : vector<128x256xf32> to vector<256xf32>
    %126 = vector.shape_cast %125 : vector<256xf32> to vector<1x256xf32>
    %127 = vector.broadcast %126 : vector<1x256xf32> to vector<128x256xf32>
    %128 = arith.subf %124, %127 : vector<128x256xf32>
    %129 = math.exp %128 : vector<128x256xf32>
    %cst_71 = arith.constant dense<0.000000e+00> : vector<256xf32>
    %130 = vector.multi_reduction <add>, %129, %cst_71 [0] : vector<128x256xf32> to vector<256xf32>
    %131 = vector.shape_cast %130 : vector<256xf32> to vector<1x256xf32>
    %132 = tpu.reciprocal %131 {approx = true} : vector<1x256xf32> -> vector<1x256xf32>
    %133 = vector.broadcast %132 : vector<1x256xf32> to vector<128x256xf32>
    %134 = arith.mulf %129, %133 : vector<128x256xf32>
    %135 = arith.truncf %134 : vector<128x256xf32> to vector<128x256xbf16>
    %cst_72 = arith.constant dense<0.000000e+00> : vector<4x256xf32>
    %136 = tpu.matmul %121, %135, %cst_72 {dimension_numbers = #tpu.dot_dimension_numbers<[1], [0], [0], [1], [0, 0, 1, 1], [], []>} : vector<4x128xbf16>, vector<128x256xbf16>, vector<4x256xf32> -> vector<4x256xf32>
    %137 = arith.truncf %136 : vector<4x256xf32> to vector<4x256xbf16>
    %138 = vector.extract_strided_slice %5 {offsets = [24, 0], sizes = [4, 256], strides = [1, 1]} : vector<32x256xbf16> to vector<4x256xbf16>
    %c0_73 = arith.constant 0 : index
    %c6 = arith.constant 6 : index
    %c0_74 = arith.constant 0 : index
    %c0_75 = arith.constant 0 : index
    %139 = vector.load %arg3[%c0_73, %c6, %c0_74, %c0_75] : memref<1x8x128x4xbf16, #tpu.memory_space<vmem>>, vector<1x1x128x4xbf16>
    %140 = vector.shape_cast %139 : vector<1x1x128x4xbf16> to vector<128x4xbf16>
    %c0_76 = arith.constant 0 : index
    %c6_77 = arith.constant 6 : index
    %c0_78 = arith.constant 0 : index
    %c0_79 = arith.constant 0 : index
    %141 = vector.load %arg4[%c0_76, %c6_77, %c0_78, %c0_79] : memref<1x8x4x128xbf16, #tpu.memory_space<vmem>>, vector<1x1x4x128xbf16>
    %142 = vector.shape_cast %141 : vector<1x1x4x128xbf16> to vector<4x128xbf16>
    %cst_80 = arith.constant dense<0.000000e+00> : vector<128x256xf32>
    %143 = tpu.matmul %140, %138, %cst_80 {dimension_numbers = #tpu.dot_dimension_numbers<[1], [0], [0], [1], [0, 0, 1, 1], [], []>} : vector<128x4xbf16>, vector<4x256xbf16>, vector<128x256xf32> -> vector<128x256xf32>
    %144 = vector.broadcast %11 : vector<128x1xf32> to vector<128x256xf32>
    %145 = arith.addf %143, %144 : vector<128x256xf32>
    %cst_81 = arith.constant dense<0xFF800000> : vector<256xf32>
    %146 = vector.multi_reduction <maximumf>, %145, %cst_81 [0] : vector<128x256xf32> to vector<256xf32>
    %147 = vector.shape_cast %146 : vector<256xf32> to vector<1x256xf32>
    %148 = vector.broadcast %147 : vector<1x256xf32> to vector<128x256xf32>
    %149 = arith.subf %145, %148 : vector<128x256xf32>
    %150 = math.exp %149 : vector<128x256xf32>
    %cst_82 = arith.constant dense<0.000000e+00> : vector<256xf32>
    %151 = vector.multi_reduction <add>, %150, %cst_82 [0] : vector<128x256xf32> to vector<256xf32>
    %152 = vector.shape_cast %151 : vector<256xf32> to vector<1x256xf32>
    %153 = tpu.reciprocal %152 {approx = true} : vector<1x256xf32> -> vector<1x256xf32>
    %154 = vector.broadcast %153 : vector<1x256xf32> to vector<128x256xf32>
    %155 = arith.mulf %150, %154 : vector<128x256xf32>
    %156 = arith.truncf %155 : vector<128x256xf32> to vector<128x256xbf16>
    %cst_83 = arith.constant dense<0.000000e+00> : vector<4x256xf32>
    %157 = tpu.matmul %142, %156, %cst_83 {dimension_numbers = #tpu.dot_dimension_numbers<[1], [0], [0], [1], [0, 0, 1, 1], [], []>} : vector<4x128xbf16>, vector<128x256xbf16>, vector<4x256xf32> -> vector<4x256xf32>
    %158 = arith.truncf %157 : vector<4x256xf32> to vector<4x256xbf16>
    %159 = vector.extract_strided_slice %5 {offsets = [28, 0], sizes = [4, 256], strides = [1, 1]} : vector<32x256xbf16> to vector<4x256xbf16>
    %c0_84 = arith.constant 0 : index
    %c7 = arith.constant 7 : index
    %c0_85 = arith.constant 0 : index
    %c0_86 = arith.constant 0 : index
    %160 = vector.load %arg3[%c0_84, %c7, %c0_85, %c0_86] : memref<1x8x128x4xbf16, #tpu.memory_space<vmem>>, vector<1x1x128x4xbf16>
    %161 = vector.shape_cast %160 : vector<1x1x128x4xbf16> to vector<128x4xbf16>
    %c0_87 = arith.constant 0 : index
    %c7_88 = arith.constant 7 : index
    %c0_89 = arith.constant 0 : index
    %c0_90 = arith.constant 0 : index
    %162 = vector.load %arg4[%c0_87, %c7_88, %c0_89, %c0_90] : memref<1x8x4x128xbf16, #tpu.memory_space<vmem>>, vector<1x1x4x128xbf16>
    %163 = vector.shape_cast %162 : vector<1x1x4x128xbf16> to vector<4x128xbf16>
    %cst_91 = arith.constant dense<0.000000e+00> : vector<128x256xf32>
    %164 = tpu.matmul %161, %159, %cst_91 {dimension_numbers = #tpu.dot_dimension_numbers<[1], [0], [0], [1], [0, 0, 1, 1], [], []>} : vector<128x4xbf16>, vector<4x256xbf16>, vector<128x256xf32> -> vector<128x256xf32>
    %165 = vector.broadcast %11 : vector<128x1xf32> to vector<128x256xf32>
    %166 = arith.addf %164, %165 : vector<128x256xf32>
    %cst_92 = arith.constant dense<0xFF800000> : vector<256xf32>
    %167 = vector.multi_reduction <maximumf>, %166, %cst_92 [0] : vector<128x256xf32> to vector<256xf32>
    %168 = vector.shape_cast %167 : vector<256xf32> to vector<1x256xf32>
    %169 = vector.broadcast %168 : vector<1x256xf32> to vector<128x256xf32>
    %170 = arith.subf %166, %169 : vector<128x256xf32>
    %171 = math.exp %170 : vector<128x256xf32>
    %cst_93 = arith.constant dense<0.000000e+00> : vector<256xf32>
    %172 = vector.multi_reduction <add>, %171, %cst_93 [0] : vector<128x256xf32> to vector<256xf32>
    %173 = vector.shape_cast %172 : vector<256xf32> to vector<1x256xf32>
    %174 = tpu.reciprocal %173 {approx = true} : vector<1x256xf32> -> vector<1x256xf32>
    %175 = vector.broadcast %174 : vector<1x256xf32> to vector<128x256xf32>
    %176 = arith.mulf %171, %175 : vector<128x256xf32>
    %177 = arith.truncf %176 : vector<128x256xf32> to vector<128x256xbf16>
    %cst_94 = arith.constant dense<0.000000e+00> : vector<4x256xf32>
    %178 = tpu.matmul %163, %177, %cst_94 {dimension_numbers = #tpu.dot_dimension_numbers<[1], [0], [0], [1], [0, 0, 1, 1], [], []>} : vector<4x128xbf16>, vector<128x256xbf16>, vector<4x256xf32> -> vector<4x256xf32>
    %179 = arith.truncf %178 : vector<4x256xf32> to vector<4x256xbf16>
    %180 = tpu.concatenate %32, %53, %74, %95, %116, %137, %158, %179 in 0 : vector<4x256xbf16>, vector<4x256xbf16>, vector<4x256xbf16>, vector<4x256xbf16>, vector<4x256xbf16>, vector<4x256xbf16>, vector<4x256xbf16>, vector<4x256xbf16> -> vector<32x256xbf16>
    %c0_95 = arith.constant 0 : index
    %c0_96 = arith.constant 0 : index
    %181 = vector.load %arg6[%c0_95, %c0_96] : memref<32x32xbf16, #tpu.memory_space<vmem>>, vector<32x32xbf16>
    %cst_97 = arith.constant dense<0.000000e+00> : vector<32x256xf32>
    %182 = tpu.matmul %181, %180, %cst_97 {dimension_numbers = #tpu.dot_dimension_numbers<[1], [0], [0], [1], [0, 0, 1, 1], [], []>} : vector<32x32xbf16>, vector<32x256xbf16>, vector<32x256xf32> -> vector<32x256xf32>
    %c0_98 = arith.constant 0 : index
    %c0_99 = arith.constant 0 : index
    %183 = vector.load %arg7[%c0_98, %c0_99] : memref<32x1xf32, #tpu.memory_space<vmem>>, vector<32x1xf32>
    %184 = vector.broadcast %183 : vector<32x1xf32> to vector<32x256xf32>
    %185 = arith.addf %182, %184 : vector<32x256xf32>
    %186 = arith.addf %185, %1 : vector<32x256xf32>
    %c0_100 = arith.constant 0 : index
    %c0_101 = arith.constant 0 : index
    %c0_102 = arith.constant 0 : index
    %187 = vector.load %arg8[%c0_100, %c0_101, %c0_102] : memref<1x32x256xf32, #tpu.memory_space<vmem>>, vector<1x32x256xf32>
    %188 = vector.shape_cast %187 : vector<1x32x256xf32> to vector<32x256xf32>
    %189 = vector.shape_cast %186 : vector<32x256xf32> to vector<1x32x256xf32>
    tpu.vector_store %arg8[%c0_100, %c0_101, %c0_102], %189 {strides = array<i32>} : memref<1x32x256xf32, #tpu.memory_space<vmem>>, vector<1x32x256xf32>,
    return
  }
  func.func @transform_0(%arg0: i32, %arg1: i32) -> (i32, i32, i32) {
    %c0_i32 = arith.constant 0 : i32
    %c0_i32_0 = arith.constant 0 : i32
    return %arg0, %c0_i32, %arg1 : i32, i32, i32
  }
  func.func @transform_1(%arg0: i32, %arg1: i32) -> (i32, i32, i32, i32) {
    %c0_i32 = arith.constant 0 : i32
    %c0_i32_0 = arith.constant 0 : i32
    %c0_i32_1 = arith.constant 0 : i32
    %c0_i32_2 = arith.constant 0 : i32
    return %arg0, %c0_i32, %c0_i32_0, %c0_i32_1 : i32, i32, i32, i32
  }
  func.func @transform_2(%arg0: i32, %arg1: i32) -> (i32, i32, i32, i32) {
    %c0_i32 = arith.constant 0 : i32
    %c0_i32_0 = arith.constant 0 : i32
    %c0_i32_1 = arith.constant 0 : i32
    %c0_i32_2 = arith.constant 0 : i32
    return %arg0, %c0_i32, %c0_i32_0, %c0_i32_1 : i32, i32, i32, i32
  }
  func.func @transform_3(%arg0: i32, %arg1: i32) -> (i32, i32) {
    %c0_i32 = arith.constant 0 : i32
    %c0_i32_0 = arith.constant 0 : i32
    %c0_i32_1 = arith.constant 0 : i32
    return %c0_i32, %c0_i32_0 : i32, i32
  }
  func.func @transform_4(%arg0: i32, %arg1: i32) -> (i32, i32) {
    %c0_i32 = arith.constant 0 : i32
    %c0_i32_0 = arith.constant 0 : i32
    %c0_i32_1 = arith.constant 0 : i32
    return %c0_i32, %c0_i32_0 : i32, i32
  }
  func.func @transform_5(%arg0: i32, %arg1: i32) -> (i32, i32) {
    %c0_i32 = arith.constant 0 : i32
    %c0_i32_0 = arith.constant 0 : i32
    %c0_i32_1 = arith.constant 0 : i32
    return %c0_i32, %c0_i32_0 : i32, i32
  }
  func.func @transform_6(%arg0: i32, %arg1: i32) -> (i32, i32, i32) {
    %c0_i32 = arith.constant 0 : i32
    %c0_i32_0 = arith.constant 0 : i32
    return %arg0, %c0_i32, %arg1 : i32, i32, i32
  }
}

module attributes {stable_mosaic.version = 11 : i64} {
  func.func @_cross_attention_kernel(%arg0: i32, %arg1: i32, %arg2: memref<1x32x256xf32, #tpu.memory_space<vmem>>, %arg3: memref<1x8x128x4xbf16, #tpu.memory_space<vmem>>, %arg4: memref<1x8x4x128xbf16, #tpu.memory_space<vmem>>, %arg5: memref<32x32xbf16, #tpu.memory_space<vmem>>, %arg6: memref<32x32xbf16, #tpu.memory_space<vmem>>, %arg7: memref<32x1xf32, #tpu.memory_space<vmem>>, %arg8: memref<1x32x256xf32, #tpu.memory_space<vmem>>) attributes {dimension_semantics = [#tpu.dimension_semantics<parallel>, #tpu.dimension_semantics<parallel>], iteration_bounds = array<i64: 2, 1>, scalar_prefetch = 0 : i64, scratch_operands = 0 : i64, tpu.core_type = #tpu.core_type<tc>, window_params = [{transform_indices = @transform_0, window_bounds = array<i64: 1, 32, 256>}, {transform_indices = @transform_1, window_bounds = array<i64: 1, 8, 128, 4>}, {transform_indices = @transform_2, window_bounds = array<i64: 1, 8, 4, 128>}, {pipeline_mode = #tpu.pipeline_mode<synchronous>, transform_indices = @transform_3, window_bounds = array<i64: 32, 32>}, {pipeline_mode = #tpu.pipeline_mode<synchronous>, transform_indices = @transform_4, window_bounds = array<i64: 32, 32>}, {pipeline_mode = #tpu.pipeline_mode<synchronous>, transform_indices = @transform_5, window_bounds = array<i64: 32, 1>}, {transform_indices = @transform_6, window_bounds = array<i64: 1, 32, 256>}]} {
    %c0 = arith.constant 0 : index
    %c0_0 = arith.constant 0 : index
    %c0_1 = arith.constant 0 : index
    %0 = vector.load %arg2[%c0, %c0_0, %c0_1] : memref<1x32x256xf32, #tpu.memory_space<vmem>>, vector<1x32x256xf32>
    %1 = vector.shape_cast %0 : vector<1x32x256xf32> to vector<32x256xf32>
    %2 = arith.truncf %1 : vector<32x256xf32> to vector<32x256xbf16>
    %c0_2 = arith.constant 0 : index
    %c0_3 = arith.constant 0 : index
    %3 = vector.load %arg5[%c0_2, %c0_3] : memref<32x32xbf16, #tpu.memory_space<vmem>>, vector<32x32xbf16>
    %cst = arith.constant dense<0.000000e+00> : vector<32x256xf32>
    %4 = tpu.matmul %3, %2, %cst {dimension_numbers = #tpu.dot_dimension_numbers<[1], [0], [0], [1], [0, 0, 1, 1], [], []>} : vector<32x32xbf16>, vector<32x256xbf16>, vector<32x256xf32> -> vector<32x256xf32>
    %5 = arith.truncf %4 : vector<32x256xf32> to vector<32x256xbf16>
    %6 = tpu.iota {dimensions = array<i32: 0>} : vector<128x1xi32>
    %c8_i32 = arith.constant 8 : i32
    %7 = vector.broadcast %c8_i32 : i32 to vector<128x1xi32>
    %8 = arith.cmpi slt, %6, %7 : vector<128x1xi32>
    %cst_4 = arith.constant 0.000000e+00 : f32
    %cst_5 = arith.constant -1.000000e+09 : f32
    %9 = vector.broadcast %cst_4 : f32 to vector<128x1xf32>
    %10 = vector.broadcast %cst_5 : f32 to vector<128x1xf32>
    %11 = arith.select %8, %9, %10 : vector<128x1xi1>, vector<128x1xf32>
    %12 = vector.extract_strided_slice %5 {offsets = [0, 0], sizes = [4, 256], strides = [1, 1]} : vector<32x256xbf16> to vector<4x256xbf16>
    %c0_6 = arith.constant 0 : index
    %c0_7 = arith.constant 0 : index
    %c0_8 = arith.constant 0 : index
    %c0_9 = arith.constant 0 : index
    %13 = vector.load %arg3[%c0_6, %c0_7, %c0_8, %c0_9] : memref<1x8x128x4xbf16, #tpu.memory_space<vmem>>, vector<1x1x128x4xbf16>
    %14 = vector.shape_cast %13 : vector<1x1x128x4xbf16> to vector<128x4xbf16>
    %c0_10 = arith.constant 0 : index
    %c0_11 = arith.constant 0 : index
    %c0_12 = arith.constant 0 : index
    %c0_13 = arith.constant 0 : index
    %15 = vector.load %arg4[%c0_10, %c0_11, %c0_12, %c0_13] : memref<1x8x4x128xbf16, #tpu.memory_space<vmem>>, vector<1x1x4x128xbf16>
    %16 = vector.shape_cast %15 : vector<1x1x4x128xbf16> to vector<4x128xbf16>
    %cst_14 = arith.constant dense<0.000000e+00> : vector<128x256xf32>
    %17 = tpu.matmul %14, %12, %cst_14 {dimension_numbers = #tpu.dot_dimension_numbers<[1], [0], [0], [1], [0, 0, 1, 1], [], []>} : vector<128x4xbf16>, vector<4x256xbf16>, vector<128x256xf32> -> vector<128x256xf32>
    %18 = vector.broadcast %11 : vector<128x1xf32> to vector<128x256xf32>
    %19 = arith.addf %17, %18 : vector<128x256xf32>
    %cst_15 = arith.constant dense<0xFF800000> : vector<256xf32>
    %20 = vector.multi_reduction <maximumf>, %19, %cst_15 [0] : vector<128x256xf32> to vector<256xf32>
    %21 = vector.shape_cast %20 : vector<256xf32> to vector<1x256xf32>
    %22 = vector.broadcast %21 : vector<1x256xf32> to vector<128x256xf32>
    %23 = arith.subf %19, %22 : vector<128x256xf32>
    %24 = math.exp %23 : vector<128x256xf32>
    %cst_16 = arith.constant dense<0.000000e+00> : vector<256xf32>
    %25 = vector.multi_reduction <add>, %24, %cst_16 [0] : vector<128x256xf32> to vector<256xf32>
    %26 = vector.shape_cast %25 : vector<256xf32> to vector<1x256xf32>
    %27 = tpu.reciprocal %26 {approx = true} : vector<1x256xf32> -> vector<1x256xf32>
    %28 = vector.broadcast %27 : vector<1x256xf32> to vector<128x256xf32>
    %29 = arith.mulf %24, %28 : vector<128x256xf32>
    %30 = arith.truncf %29 : vector<128x256xf32> to vector<128x256xbf16>
    %cst_17 = arith.constant dense<0.000000e+00> : vector<4x256xf32>
    %31 = tpu.matmul %16, %30, %cst_17 {dimension_numbers = #tpu.dot_dimension_numbers<[1], [0], [0], [1], [0, 0, 1, 1], [], []>} : vector<4x128xbf16>, vector<128x256xbf16>, vector<4x256xf32> -> vector<4x256xf32>
    %32 = arith.truncf %31 : vector<4x256xf32> to vector<4x256xbf16>
    %33 = vector.extract_strided_slice %5 {offsets = [4, 0], sizes = [4, 256], strides = [1, 1]} : vector<32x256xbf16> to vector<4x256xbf16>
    %c0_18 = arith.constant 0 : index
    %c1 = arith.constant 1 : index
    %c0_19 = arith.constant 0 : index
    %c0_20 = arith.constant 0 : index
    %34 = vector.load %arg3[%c0_18, %c1, %c0_19, %c0_20] : memref<1x8x128x4xbf16, #tpu.memory_space<vmem>>, vector<1x1x128x4xbf16>
    %35 = vector.shape_cast %34 : vector<1x1x128x4xbf16> to vector<128x4xbf16>
    %c0_21 = arith.constant 0 : index
    %c1_22 = arith.constant 1 : index
    %c0_23 = arith.constant 0 : index
    %c0_24 = arith.constant 0 : index
    %36 = vector.load %arg4[%c0_21, %c1_22, %c0_23, %c0_24] : memref<1x8x4x128xbf16, #tpu.memory_space<vmem>>, vector<1x1x4x128xbf16>
    %37 = vector.shape_cast %36 : vector<1x1x4x128xbf16> to vector<4x128xbf16>
    %cst_25 = arith.constant dense<0.000000e+00> : vector<128x256xf32>
    %38 = tpu.matmul %35, %33, %cst_25 {dimension_numbers = #tpu.dot_dimension_numbers<[1], [0], [0], [1], [0, 0, 1, 1], [], []>} : vector<128x4xbf16>, vector<4x256xbf16>, vector<128x256xf32> -> vector<128x256xf32>
    %39 = vector.broadcast %11 : vector<128x1xf32> to vector<128x256xf32>
    %40 = arith.addf %38, %39 : vector<128x256xf32>
    %cst_26 = arith.constant dense<0xFF800000> : vector<256xf32>
    %41 = vector.multi_reduction <maximumf>, %40, %cst_26 [0] : vector<128x256xf32> to vector<256xf32>
    %42 = vector.shape_cast %41 : vector<256xf32> to vector<1x256xf32>
    %43 = vector.broadcast %42 : vector<1x256xf32> to vector<128x256xf32>
    %44 = arith.subf %40, %43 : vector<128x256xf32>
    %45 = math.exp %44 : vector<128x256xf32>
    %cst_27 = arith.constant dense<0.000000e+00> : vector<256xf32>
    %46 = vector.multi_reduction <add>, %45, %cst_27 [0] : vector<128x256xf32> to vector<256xf32>
    %47 = vector.shape_cast %46 : vector<256xf32> to vector<1x256xf32>
    %48 = tpu.reciprocal %47 {approx = true} : vector<1x256xf32> -> vector<1x256xf32>
    %49 = vector.broadcast %48 : vector<1x256xf32> to vector<128x256xf32>
    %50 = arith.mulf %45, %49 : vector<128x256xf32>
    %51 = arith.truncf %50 : vector<128x256xf32> to vector<128x256xbf16>
    %cst_28 = arith.constant dense<0.000000e+00> : vector<4x256xf32>
    %52 = tpu.matmul %37, %51, %cst_28 {dimension_numbers = #tpu.dot_dimension_numbers<[1], [0], [0], [1], [0, 0, 1, 1], [], []>} : vector<4x128xbf16>, vector<128x256xbf16>, vector<4x256xf32> -> vector<4x256xf32>
    %53 = arith.truncf %52 : vector<4x256xf32> to vector<4x256xbf16>
    %54 = vector.extract_strided_slice %5 {offsets = [8, 0], sizes = [4, 256], strides = [1, 1]} : vector<32x256xbf16> to vector<4x256xbf16>
    %c0_29 = arith.constant 0 : index
    %c2 = arith.constant 2 : index
    %c0_30 = arith.constant 0 : index
    %c0_31 = arith.constant 0 : index
    %55 = vector.load %arg3[%c0_29, %c2, %c0_30, %c0_31] : memref<1x8x128x4xbf16, #tpu.memory_space<vmem>>, vector<1x1x128x4xbf16>
    %56 = vector.shape_cast %55 : vector<1x1x128x4xbf16> to vector<128x4xbf16>
    %c0_32 = arith.constant 0 : index
    %c2_33 = arith.constant 2 : index
    %c0_34 = arith.constant 0 : index
    %c0_35 = arith.constant 0 : index
    %57 = vector.load %arg4[%c0_32, %c2_33, %c0_34, %c0_35] : memref<1x8x4x128xbf16, #tpu.memory_space<vmem>>, vector<1x1x4x128xbf16>
    %58 = vector.shape_cast %57 : vector<1x1x4x128xbf16> to vector<4x128xbf16>
    %cst_36 = arith.constant dense<0.000000e+00> : vector<128x256xf32>
    %59 = tpu.matmul %56, %54, %cst_36 {dimension_numbers = #tpu.dot_dimension_numbers<[1], [0], [0], [1], [0, 0, 1, 1], [], []>} : vector<128x4xbf16>, vector<4x256xbf16>, vector<128x256xf32> -> vector<128x256xf32>
    %60 = vector.broadcast %11 : vector<128x1xf32> to vector<128x256xf32>
    %61 = arith.addf %59, %60 : vector<128x256xf32>
    %cst_37 = arith.constant dense<0xFF800000> : vector<256xf32>
    %62 = vector.multi_reduction <maximumf>, %61, %cst_37 [0] : vector<128x256xf32> to vector<256xf32>
    %63 = vector.shape_cast %62 : vector<256xf32> to vector<1x256xf32>
    %64 = vector.broadcast %63 : vector<1x256xf32> to vector<128x256xf32>
    %65 = arith.subf %61, %64 : vector<128x256xf32>
    %66 = math.exp %65 : vector<128x256xf32>
    %cst_38 = arith.constant dense<0.000000e+00> : vector<256xf32>
    %67 = vector.multi_reduction <add>, %66, %cst_38 [0] : vector<128x256xf32> to vector<256xf32>
    %68 = vector.shape_cast %67 : vector<256xf32> to vector<1x256xf32>
    %69 = tpu.reciprocal %68 {approx = true} : vector<1x256xf32> -> vector<1x256xf32>
    %70 = vector.broadcast %69 : vector<1x256xf32> to vector<128x256xf32>
    %71 = arith.mulf %66, %70 : vector<128x256xf32>
    %72 = arith.truncf %71 : vector<128x256xf32> to vector<128x256xbf16>
    %cst_39 = arith.constant dense<0.000000e+00> : vector<4x256xf32>
    %73 = tpu.matmul %58, %72, %cst_39 {dimension_numbers = #tpu.dot_dimension_numbers<[1], [0], [0], [1], [0, 0, 1, 1], [], []>} : vector<4x128xbf16>, vector<128x256xbf16>, vector<4x256xf32> -> vector<4x256xf32>
    %74 = arith.truncf %73 : vector<4x256xf32> to vector<4x256xbf16>
    %75 = vector.extract_strided_slice %5 {offsets = [12, 0], sizes = [4, 256], strides = [1, 1]} : vector<32x256xbf16> to vector<4x256xbf16>
    %c0_40 = arith.constant 0 : index
    %c3 = arith.constant 3 : index
    %c0_41 = arith.constant 0 : index
    %c0_42 = arith.constant 0 : index
    %76 = vector.load %arg3[%c0_40, %c3, %c0_41, %c0_42] : memref<1x8x128x4xbf16, #tpu.memory_space<vmem>>, vector<1x1x128x4xbf16>
    %77 = vector.shape_cast %76 : vector<1x1x128x4xbf16> to vector<128x4xbf16>
    %c0_43 = arith.constant 0 : index
    %c3_44 = arith.constant 3 : index
    %c0_45 = arith.constant 0 : index
    %c0_46 = arith.constant 0 : index
    %78 = vector.load %arg4[%c0_43, %c3_44, %c0_45, %c0_46] : memref<1x8x4x128xbf16, #tpu.memory_space<vmem>>, vector<1x1x4x128xbf16>
    %79 = vector.shape_cast %78 : vector<1x1x4x128xbf16> to vector<4x128xbf16>
    %cst_47 = arith.constant dense<0.000000e+00> : vector<128x256xf32>
    %80 = tpu.matmul %77, %75, %cst_47 {dimension_numbers = #tpu.dot_dimension_numbers<[1], [0], [0], [1], [0, 0, 1, 1], [], []>} : vector<128x4xbf16>, vector<4x256xbf16>, vector<128x256xf32> -> vector<128x256xf32>
    %81 = vector.broadcast %11 : vector<128x1xf32> to vector<128x256xf32>
    %82 = arith.addf %80, %81 : vector<128x256xf32>
    %cst_48 = arith.constant dense<0xFF800000> : vector<256xf32>
    %83 = vector.multi_reduction <maximumf>, %82, %cst_48 [0] : vector<128x256xf32> to vector<256xf32>
    %84 = vector.shape_cast %83 : vector<256xf32> to vector<1x256xf32>
    %85 = vector.broadcast %84 : vector<1x256xf32> to vector<128x256xf32>
    %86 = arith.subf %82, %85 : vector<128x256xf32>
    %87 = math.exp %86 : vector<128x256xf32>
    %cst_49 = arith.constant dense<0.000000e+00> : vector<256xf32>
    %88 = vector.multi_reduction <add>, %87, %cst_49 [0] : vector<128x256xf32> to vector<256xf32>
    %89 = vector.shape_cast %88 : vector<256xf32> to vector<1x256xf32>
    %90 = tpu.reciprocal %89 {approx = true} : vector<1x256xf32> -> vector<1x256xf32>
    %91 = vector.broadcast %90 : vector<1x256xf32> to vector<128x256xf32>
    %92 = arith.mulf %87, %91 : vector<128x256xf32>
    %93 = arith.truncf %92 : vector<128x256xf32> to vector<128x256xbf16>
    %cst_50 = arith.constant dense<0.000000e+00> : vector<4x256xf32>
    %94 = tpu.matmul %79, %93, %cst_50 {dimension_numbers = #tpu.dot_dimension_numbers<[1], [0], [0], [1], [0, 0, 1, 1], [], []>} : vector<4x128xbf16>, vector<128x256xbf16>, vector<4x256xf32> -> vector<4x256xf32>
    %95 = arith.truncf %94 : vector<4x256xf32> to vector<4x256xbf16>
    %96 = vector.extract_strided_slice %5 {offsets = [16, 0], sizes = [4, 256], strides = [1, 1]} : vector<32x256xbf16> to vector<4x256xbf16>
    %c0_51 = arith.constant 0 : index
    %c4 = arith.constant 4 : index
    %c0_52 = arith.constant 0 : index
    %c0_53 = arith.constant 0 : index
    %97 = vector.load %arg3[%c0_51, %c4, %c0_52, %c0_53] : memref<1x8x128x4xbf16, #tpu.memory_space<vmem>>, vector<1x1x128x4xbf16>
    %98 = vector.shape_cast %97 : vector<1x1x128x4xbf16> to vector<128x4xbf16>
    %c0_54 = arith.constant 0 : index
    %c4_55 = arith.constant 4 : index
    %c0_56 = arith.constant 0 : index
    %c0_57 = arith.constant 0 : index
    %99 = vector.load %arg4[%c0_54, %c4_55, %c0_56, %c0_57] : memref<1x8x4x128xbf16, #tpu.memory_space<vmem>>, vector<1x1x4x128xbf16>
    %100 = vector.shape_cast %99 : vector<1x1x4x128xbf16> to vector<4x128xbf16>
    %cst_58 = arith.constant dense<0.000000e+00> : vector<128x256xf32>
    %101 = tpu.matmul %98, %96, %cst_58 {dimension_numbers = #tpu.dot_dimension_numbers<[1], [0], [0], [1], [0, 0, 1, 1], [], []>} : vector<128x4xbf16>, vector<4x256xbf16>, vector<128x256xf32> -> vector<128x256xf32>
    %102 = vector.broadcast %11 : vector<128x1xf32> to vector<128x256xf32>
    %103 = arith.addf %101, %102 : vector<128x256xf32>
    %cst_59 = arith.constant dense<0xFF800000> : vector<256xf32>
    %104 = vector.multi_reduction <maximumf>, %103, %cst_59 [0] : vector<128x256xf32> to vector<256xf32>
    %105 = vector.shape_cast %104 : vector<256xf32> to vector<1x256xf32>
    %106 = vector.broadcast %105 : vector<1x256xf32> to vector<128x256xf32>
    %107 = arith.subf %103, %106 : vector<128x256xf32>
    %108 = math.exp %107 : vector<128x256xf32>
    %cst_60 = arith.constant dense<0.000000e+00> : vector<256xf32>
    %109 = vector.multi_reduction <add>, %108, %cst_60 [0] : vector<128x256xf32> to vector<256xf32>
    %110 = vector.shape_cast %109 : vector<256xf32> to vector<1x256xf32>
    %111 = tpu.reciprocal %110 {approx = true} : vector<1x256xf32> -> vector<1x256xf32>
    %112 = vector.broadcast %111 : vector<1x256xf32> to vector<128x256xf32>
    %113 = arith.mulf %108, %112 : vector<128x256xf32>
    %114 = arith.truncf %113 : vector<128x256xf32> to vector<128x256xbf16>
    %cst_61 = arith.constant dense<0.000000e+00> : vector<4x256xf32>
    %115 = tpu.matmul %100, %114, %cst_61 {dimension_numbers = #tpu.dot_dimension_numbers<[1], [0], [0], [1], [0, 0, 1, 1], [], []>} : vector<4x128xbf16>, vector<128x256xbf16>, vector<4x256xf32> -> vector<4x256xf32>
    %116 = arith.truncf %115 : vector<4x256xf32> to vector<4x256xbf16>
    %117 = vector.extract_strided_slice %5 {offsets = [20, 0], sizes = [4, 256], strides = [1, 1]} : vector<32x256xbf16> to vector<4x256xbf16>
    %c0_62 = arith.constant 0 : index
    %c5 = arith.constant 5 : index
    %c0_63 = arith.constant 0 : index
    %c0_64 = arith.constant 0 : index
    %118 = vector.load %arg3[%c0_62, %c5, %c0_63, %c0_64] : memref<1x8x128x4xbf16, #tpu.memory_space<vmem>>, vector<1x1x128x4xbf16>
    %119 = vector.shape_cast %118 : vector<1x1x128x4xbf16> to vector<128x4xbf16>
    %c0_65 = arith.constant 0 : index
    %c5_66 = arith.constant 5 : index
    %c0_67 = arith.constant 0 : index
    %c0_68 = arith.constant 0 : index
    %120 = vector.load %arg4[%c0_65, %c5_66, %c0_67, %c0_68] : memref<1x8x4x128xbf16, #tpu.memory_space<vmem>>, vector<1x1x4x128xbf16>
    %121 = vector.shape_cast %120 : vector<1x1x4x128xbf16> to vector<4x128xbf16>
    %cst_69 = arith.constant dense<0.000000e+00> : vector<128x256xf32>
    %122 = tpu.matmul %119, %117, %cst_69 {dimension_numbers = #tpu.dot_dimension_numbers<[1], [0], [0], [1], [0, 0, 1, 1], [], []>} : vector<128x4xbf16>, vector<4x256xbf16>, vector<128x256xf32> -> vector<128x256xf32>
    %123 = vector.broadcast %11 : vector<128x1xf32> to vector<128x256xf32>
    %124 = arith.addf %122, %123 : vector<128x256xf32>
    %cst_70 = arith.constant dense<0xFF800000> : vector<256xf32>
    %125 = vector.multi_reduction <maximumf>, %124, %cst_70 [0] : vector<128x256xf32> to vector<256xf32>
    %126 = vector.shape_cast %125 : vector<256xf32> to vector<1x256xf32>
    %127 = vector.broadcast %126 : vector<1x256xf32> to vector<128x256xf32>
    %128 = arith.subf %124, %127 : vector<128x256xf32>
    %129 = math.exp %128 : vector<128x256xf32>
    %cst_71 = arith.constant dense<0.000000e+00> : vector<256xf32>
    %130 = vector.multi_reduction <add>, %129, %cst_71 [0] : vector<128x256xf32> to vector<256xf32>
    %131 = vector.shape_cast %130 : vector<256xf32> to vector<1x256xf32>
    %132 = tpu.reciprocal %131 {approx = true} : vector<1x256xf32> -> vector<1x256xf32>
    %133 = vector.broadcast %132 : vector<1x256xf32> to vector<128x256xf32>
    %134 = arith.mulf %129, %133 : vector<128x256xf32>
    %135 = arith.truncf %134 : vector<128x256xf32> to vector<128x256xbf16>
    %cst_72 = arith.constant dense<0.000000e+00> : vector<4x256xf32>
    %136 = tpu.matmul %121, %135, %cst_72 {dimension_numbers = #tpu.dot_dimension_numbers<[1], [0], [0], [1], [0, 0, 1, 1], [], []>} : vector<4x128xbf16>, vector<128x256xbf16>, vector<4x256xf32> -> vector<4x256xf32>
    %137 = arith.truncf %136 : vector<4x256xf32> to vector<4x256xbf16>
    %138 = vector.extract_strided_slice %5 {offsets = [24, 0], sizes = [4, 256], strides = [1, 1]} : vector<32x256xbf16> to vector<4x256xbf16>
    %c0_73 = arith.constant 0 : index
    %c6 = arith.constant 6 : index
    %c0_74 = arith.constant 0 : index
    %c0_75 = arith.constant 0 : index
    %139 = vector.load %arg3[%c0_73, %c6, %c0_74, %c0_75] : memref<1x8x128x4xbf16, #tpu.memory_space<vmem>>, vector<1x1x128x4xbf16>
    %140 = vector.shape_cast %139 : vector<1x1x128x4xbf16> to vector<128x4xbf16>
    %c0_76 = arith.constant 0 : index
    %c6_77 = arith.constant 6 : index
    %c0_78 = arith.constant 0 : index
    %c0_79 = arith.constant 0 : index
    %141 = vector.load %arg4[%c0_76, %c6_77, %c0_78, %c0_79] : memref<1x8x4x128xbf16, #tpu.memory_space<vmem>>, vector<1x1x4x128xbf16>
    %142 = vector.shape_cast %141 : vector<1x1x4x128xbf16> to vector<4x128xbf16>
    %cst_80 = arith.constant dense<0.000000e+00> : vector<128x256xf32>
    %143 = tpu.matmul %140, %138, %cst_80 {dimension_numbers = #tpu.dot_dimension_numbers<[1], [0], [0], [1], [0, 0, 1, 1], [], []>} : vector<128x4xbf16>, vector<4x256xbf16>, vector<128x256xf32> -> vector<128x256xf32>
    %144 = vector.broadcast %11 : vector<128x1xf32> to vector<128x256xf32>
    %145 = arith.addf %143, %144 : vector<128x256xf32>
    %cst_81 = arith.constant dense<0xFF800000> : vector<256xf32>
    %146 = vector.multi_reduction <maximumf>, %145, %cst_81 [0] : vector<128x256xf32> to vector<256xf32>
    %147 = vector.shape_cast %146 : vector<256xf32> to vector<1x256xf32>
    %148 = vector.broadcast %147 : vector<1x256xf32> to vector<128x256xf32>
    %149 = arith.subf %145, %148 : vector<128x256xf32>
    %150 = math.exp %149 : vector<128x256xf32>
    %cst_82 = arith.constant dense<0.000000e+00> : vector<256xf32>
    %151 = vector.multi_reduction <add>, %150, %cst_82 [0] : vector<128x256xf32> to vector<256xf32>
    %152 = vector.shape_cast %151 : vector<256xf32> to vector<1x256xf32>
    %153 = tpu.reciprocal %152 {approx = true} : vector<1x256xf32> -> vector<1x256xf32>
    %154 = vector.broadcast %153 : vector<1x256xf32> to vector<128x256xf32>
    %155 = arith.mulf %150, %154 : vector<128x256xf32>
    %156 = arith.truncf %155 : vector<128x256xf32> to vector<128x256xbf16>
    %cst_83 = arith.constant dense<0.000000e+00> : vector<4x256xf32>
    %157 = tpu.matmul %142, %156, %cst_83 {dimension_numbers = #tpu.dot_dimension_numbers<[1], [0], [0], [1], [0, 0, 1, 1], [], []>} : vector<4x128xbf16>, vector<128x256xbf16>, vector<4x256xf32> -> vector<4x256xf32>
    %158 = arith.truncf %157 : vector<4x256xf32> to vector<4x256xbf16>
    %159 = vector.extract_strided_slice %5 {offsets = [28, 0], sizes = [4, 256], strides = [1, 1]} : vector<32x256xbf16> to vector<4x256xbf16>
    %c0_84 = arith.constant 0 : index
    %c7 = arith.constant 7 : index
    %c0_85 = arith.constant 0 : index
    %c0_86 = arith.constant 0 : index
    %160 = vector.load %arg3[%c0_84, %c7, %c0_85, %c0_86] : memref<1x8x128x4xbf16, #tpu.memory_space<vmem>>, vector<1x1x128x4xbf16>
    %161 = vector.shape_cast %160 : vector<1x1x128x4xbf16> to vector<128x4xbf16>
    %c0_87 = arith.constant 0 : index
    %c7_88 = arith.constant 7 : index
    %c0_89 = arith.constant 0 : index
    %c0_90 = arith.constant 0 : index
    %162 = vector.load %arg4[%c0_87, %c7_88, %c0_89, %c0_90] : memref<1x8x4x128xbf16, #tpu.memory_space<vmem>>, vector<1x1x4x128xbf16>
    %163 = vector.shape_cast %162 : vector<1x1x4x128xbf16> to vector<4x128xbf16>
    %cst_91 = arith.constant dense<0.000000e+00> : vector<128x256xf32>
    %164 = tpu.matmul %161, %159, %cst_91 {dimension_numbers = #tpu.dot_dimension_numbers<[1], [0], [0], [1], [0, 0, 1, 1], [], []>} : vector<128x4xbf16>, vector<4x256xbf16>, vector<128x256xf32> -> vector<128x256xf32>
    %165 = vector.broadcast %11 : vector<128x1xf32> to vector<128x256xf32>
    %166 = arith.addf %164, %165 : vector<128x256xf32>
    %cst_92 = arith.constant dense<0xFF800000> : vector<256xf32>
    %167 = vector.multi_reduction <maximumf>, %166, %cst_92 [0] : vector<128x256xf32> to vector<256xf32>
    %168 = vector.shape_cast %167 : vector<256xf32> to vector<1x256xf32>
    %169 = vector.broadcast %168 : vector<1x256xf32> to vector<128x256xf32>
    %170 = arith.subf %166, %169 : vector<128x256xf32>
    %171 = math.exp %170 : vector<128x256xf32>
    %cst_93 = arith.constant dense<0.000000e+00> : vector<256xf32>
    %172 = vector.multi_reduction <add>, %171, %cst_93 [0] : vector<128x256xf32> to vector<256xf32>
    %173 = vector.shape_cast %172 : vector<256xf32> to vector<1x256xf32>
    %174 = tpu.reciprocal %173 {approx = true} : vector<1x256xf32> -> vector<1x256xf32>
    %175 = vector.broadcast %174 : vector<1x256xf32> to vector<128x256xf32>
    %176 = arith.mulf %171, %175 : vector<128x256xf32>
    %177 = arith.truncf %176 : vector<128x256xf32> to vector<128x256xbf16>
    %cst_94 = arith.constant dense<0.000000e+00> : vector<4x256xf32>
    %178 = tpu.matmul %163, %177, %cst_94 {dimension_numbers = #tpu.dot_dimension_numbers<[1], [0], [0], [1], [0, 0, 1, 1], [], []>} : vector<4x128xbf16>, vector<128x256xbf16>, vector<4x256xf32> -> vector<4x256xf32>
    %179 = arith.truncf %178 : vector<4x256xf32> to vector<4x256xbf16>
    %180 = tpu.concatenate %32, %53, %74, %95, %116, %137, %158, %179 in 0 : vector<4x256xbf16>, vector<4x256xbf16>, vector<4x256xbf16>, vector<4x256xbf16>, vector<4x256xbf16>, vector<4x256xbf16>, vector<4x256xbf16>, vector<4x256xbf16> -> vector<32x256xbf16>
    %c0_95 = arith.constant 0 : index
    %c0_96 = arith.constant 0 : index
    %181 = vector.load %arg6[%c0_95, %c0_96] : memref<32x32xbf16, #tpu.memory_space<vmem>>, vector<32x32xbf16>
    %cst_97 = arith.constant dense<0.000000e+00> : vector<32x256xf32>
    %182 = tpu.matmul %181, %180, %cst_97 {dimension_numbers = #tpu.dot_dimension_numbers<[1], [0], [0], [1], [0, 0, 1, 1], [], []>} : vector<32x32xbf16>, vector<32x256xbf16>, vector<32x256xf32> -> vector<32x256xf32>
    %c0_98 = arith.constant 0 : index
    %c0_99 = arith.constant 0 : index
    %183 = vector.load %arg7[%c0_98, %c0_99] : memref<32x1xf32, #tpu.memory_space<vmem>>, vector<32x1xf32>
    %184 = vector.broadcast %183 : vector<32x1xf32> to vector<32x256xf32>
    %185 = arith.addf %182, %184 : vector<32x256xf32>
    %186 = arith.addf %185, %1 : vector<32x256xf32>
    %c0_100 = arith.constant 0 : index
    %c0_101 = arith.constant 0 : index
    %c0_102 = arith.constant 0 : index
    %187 = vector.load %arg8[%c0_100, %c0_101, %c0_102] : memref<1x32x256xf32, #tpu.memory_space<vmem>>, vector<1x32x256xf32>
    %188 = vector.shape_cast %187 : vector<1x32x256xf32> to vector<32x256xf32>
    %189 = vector.shape_cast %186 : vector<32x256xf32> to vector<1x32x256xf32>
    tpu.vector_store %arg8[%c0_100, %c0_101, %c0_102], %189 {strides = array<i32>} : memref<1x32x256xf32, #tpu.memory_space<vmem>>, vector<1x32x256xf32>,
    return
  }
  func.func @transform_0(%arg0: i32, %arg1: i32) -> (i32, i32, i32) {
    %c0_i32 = arith.constant 0 : i32
    %c0_i32_0 = arith.constant 0 : i32
    return %arg0, %c0_i32, %arg1 : i32, i32, i32
  }
  func.func @transform_1(%arg0: i32, %arg1: i32) -> (i32, i32, i32, i32) {
    %c0_i32 = arith.constant 0 : i32
    %c0_i32_0 = arith.constant 0 : i32
    %c0_i32_1 = arith.constant 0 : i32
    %c0_i32_2 = arith.constant 0 : i32
    return %arg0, %c0_i32, %c0_i32_0, %c0_i32_1 : i32, i32, i32, i32
  }
  func.func @transform_2(%arg0: i32, %arg1: i32) -> (i32, i32, i32, i32) {
    %c0_i32 = arith.constant 0 : i32
    %c0_i32_0 = arith.constant 0 : i32
    %c0_i32_1 = arith.constant 0 : i32
    %c0_i32_2 = arith.constant 0 : i32
    return %arg0, %c0_i32, %c0_i32_0, %c0_i32_1 : i32, i32, i32, i32
  }
  func.func @transform_3(%arg0: i32, %arg1: i32) -> (i32, i32) {
    %c0_i32 = arith.constant 0 : i32
    %c0_i32_0 = arith.constant 0 : i32
    %c0_i32_1 = arith.constant 0 : i32
    return %c0_i32, %c0_i32_0 : i32, i32
  }
  func.func @transform_4(%arg0: i32, %arg1: i32) -> (i32, i32) {
    %c0_i32 = arith.constant 0 : i32
    %c0_i32_0 = arith.constant 0 : i32
    %c0_i32_1 = arith.constant 0 : i32
    return %c0_i32, %c0_i32_0 : i32, i32
  }
  func.func @transform_5(%arg0: i32, %arg1: i32) -> (i32, i32) {
    %c0_i32 = arith.constant 0 : i32
    %c0_i32_0 = arith.constant 0 : i32
    %c0_i32_1 = arith.constant 0 : i32
    return %c0_i32, %c0_i32_0 : i32, i32
  }
  func.func @transform_6(%arg0: i32, %arg1: i32) -> (i32, i32, i32) {
    %c0_i32 = arith.constant 0 : i32
    %c0_i32_0 = arith.constant 0 : i32
    return %arg0, %c0_i32, %arg1 : i32, i32, i32
  }
}

</mosaic_0001>

<llo_original>
// kernel: tpu_custom_call.1
$region0: #{tpu_custom_call.1}
  #allocation0 [shape = 'u32[]', space=smem, size = 0x4, offset = 0x4, fixed_abs, tag = 'smem constant byte address 0x4 - core index']
  #allocation1 [shape = 'u32[144,128]{1,0:T(1,128)}', space=vmem, size = 0x12000, scoped, tag = 'internal scratch']
  %s0 = inlined_call_operand.vmem [shape: f32[2,32,256], index: 0, kind: input, shape index: {}]
  %s1 = inlined_call_operand.vmem [shape: bf16[2,8,128,4], index: 1, kind: input, shape index: {}]
  %s2 = inlined_call_operand.vmem [shape: bf16[2,8,4,128], index: 2, kind: input, shape index: {}]
  %s3 = inlined_call_operand.vmem [shape: bf16[32,32], index: 3, kind: input, shape index: {}]
  %s4 = inlined_call_operand.vmem [shape: bf16[32,32], index: 4, kind: input, shape index: {}]
  %s5 = inlined_call_operand.vmem [shape: f32[32,1], index: 5, kind: input, shape index: {}]
  %s6 = inlined_call_operand.hbm [shape: f32[2,32,256], index: 6, kind: output, shape index: {}]
  %s7 = sld [smem:[#allocation0]]
  $region57: #{tpu_custom_call.1} parent=0
    _
  %s9 = ssub.s32 1, %s7
  %s10 = scalar_select 0, %s9, %s7
  $region1: #{tpu_custom_call.1} parent=0
    #allocation2 [shape = 'u8[65536]{0}', space=vmem, size = 0x10000, scoped, tag = 'output window, operand 0']
    #allocation3 [shape = 's32[2]{0}', space=sflag, size = 0x8, scoped, tag = 'scoped memory for tpu_custom_call.1']
    %11 = vsyncpa [#allocation3], 0
    %s12 = scalar_lea.sflag [#allocation3], 1
    %13 = vsyncpa %s12, 0
    loop: start=0, step=1, limit=4
    $region2: #{tpu_custom_call.1} parent=1 // loop_pre_header
      _
    $region3: #{tpu_custom_call.1} parent=1 // loop_header
      %s15 = sphi 0, %s19
      %p16 = scmp.ge.s32.totalorder %s15, 4
      %s22 = sphi 0, %s34
      %s23 = sphi 0, %s30
      %s24 = sphi 0, %s22
      %s25 = sphi 0, %s23
      %s26 = sphi 0, %s24
      %s27 = sphi 0, %s25
      %s39 = sphi 0, %s41
      %s42 = sphi 0, %s39
      %s43 = sphi 0, %s42
      %s59 = sphi 0, %s43
      %s65 = sphi 0, %s67
      %s68 = sphi 0, %s65
      %s69 = sphi 0, %s68
      %s85 = sphi 0, %s69
      %s91 = sphi 0, %s93
      %s94 = sphi 0, %s91
      %s95 = sphi 0, %s94
      %s111 = sphi 0, %s95
      %s115 = sphi 0, %s115
      %s117 = sphi 0, %s115
      %s118 = sphi 0, %s117
      %s132 = sphi 0, %s118
      %s136 = sphi 0, %s136
      %s138 = sphi 0, %s136
      %s139 = sphi 0, %s138
      %s153 = sphi 0, %s139
      %s157 = sphi 0, %s157
      %s159 = sphi 0, %s157
      %s160 = sphi 0, %s159
      %s174 = sphi 0, %s160
      %s182 = sphi 0, %s184
      %s185 = sphi 0, %s182
      %s186 = sphi 0, %s185
      %s202 = sphi 0, %s186
    $region4: #{tpu_custom_call.1} parent=1 // loop_header_branch
      %18 = sbr.rel (%p16) target = $region8
    $region5: #{tpu_custom_call.1} parent=1 // loop_body
      %s20 = ssub.s32 %s15, 1
      %s21 = ssub.s32 %s15, 2
      %s28 = sadd.s32 1, %s23
      %p29 = scmp.ge.s32.totalorder %s28, 1
      %s30 = scalar_select %p29, 0, %s28
      %s31 = sadd.s32 1, %s22
      %s32 = scalar_select %p29, %s31, %s22
      %p33 = scmp.ge.s32.totalorder %s32, 2
      %s34 = scalar_select %p33, 0, %s32
      %s35 = ssub.s32 %s22, %s34
      %s36 = ssub.s32 %s23, %s30
      %s37 = sor.u32 %s35, %s36
      %p38 = scmp.eq.s32.totalorder %s37, 0
      %s40 = sadd.s32 %s39, 1
      %s41 = scalar_select %p38, %s39, %s40
      %p44 = pneg %p38
      %p45 = scmp.eq.s32.totalorder %s15, 1
      %p46 = por %p44, %p45
      %p47 = scmp.ne.s32.totalorder %s39, %s42
      %p48 = scmp.eq.s32.totalorder %s15, 0
      %p49 = por %p47, %p48
      %p50 = scmp.ne.s32.totalorder %s39, %s42
      %p51 = scmp.eq.s32.totalorder %s20, 1
      %p52 = por %p50, %p51
      %p53 = scmp.ne.s32.totalorder %s42, %s43
      %p54 = scmp.eq.s32.totalorder %s20, 0
      %p55 = por %p53, %p54
      %p56 = scmp.ne.s32.totalorder %s42, %s43
      %p57 = scmp.eq.s32.totalorder %s21, 1
      %p58 = por %p56, %p57
      %p60 = scmp.ne.s32.totalorder %s43, %s59
      %p61 = scmp.eq.s32.totalorder %s21, 0
      %p62 = por %p60, %p61
      %s63 = ssub.s32 %s22, %s34
      %p64 = scmp.eq.s32.totalorder %s63, 0
      %s66 = sadd.s32 %s65, 1
      %s67 = scalar_select %p64, %s65, %s66
      %p70 = pneg %p64
      %p71 = scmp.eq.s32.totalorder %s15, 1
      %p72 = por %p70, %p71
      %p73 = scmp.ne.s32.totalorder %s65, %s68
      %p74 = scmp.eq.s32.totalorder %s15, 0
      %p75 = por %p73, %p74
      %p76 = scmp.ne.s32.totalorder %s65, %s68
      %p77 = scmp.eq.s32.totalorder %s20, 1
      %p78 = por %p76, %p77
      %p79 = scmp.ne.s32.totalorder %s68, %s69
      %p80 = scmp.eq.s32.totalorder %s20, 0
      %p81 = por %p79, %p80
      %p82 = scmp.ne.s32.totalorder %s68, %s69
      %p83 = scmp.eq.s32.totalorder %s21, 1
      %p84 = por %p82, %p83
      %p86 = scmp.ne.s32.totalorder %s69, %s85
      %p87 = scmp.eq.s32.totalorder %s21, 0
      %p88 = por %p86, %p87
      %s89 = ssub.s32 %s22, %s34
      %p90 = scmp.eq.s32.totalorder %s89, 0
      %s92 = sadd.s32 %s91, 1
      %s93 = scalar_select %p90, %s91, %s92
      %p96 = pneg %p90
      %p97 = scmp.eq.s32.totalorder %s15, 1
      %p98 = por %p96, %p97
      %p99 = scmp.ne.s32.totalorder %s91, %s94
      %p100 = scmp.eq.s32.totalorder %s15, 0
      %p101 = por %p99, %p100
      %p102 = scmp.ne.s32.totalorder %s91, %s94
      %p103 = scmp.eq.s32.totalorder %s20, 1
      %p104 = por %p102, %p103
      %p105 = scmp.ne.s32.totalorder %s94, %s95
      %p106 = scmp.eq.s32.totalorder %s20, 0
      %p107 = por %p105, %p106
      %p108 = scmp.ne.s32.totalorder %s94, %s95
      %p109 = scmp.eq.s32.totalorder %s21, 1
      %p110 = por %p108, %p109
      %p112 = scmp.ne.s32.totalorder %s95, %s111
      %p113 = scmp.eq.s32.totalorder %s21, 0
      %p114 = por %p112, %p113
      %s116 = sadd.s32 %s115, 1
      %p119 = scmp.eq.s32.totalorder %s15, 1
      %p120 = scmp.ne.s32.totalorder %s115, %s117
      %p121 = scmp.eq.s32.totalorder %s15, 0
      %p122 = por %p120, %p121
      %p123 = scmp.ne.s32.totalorder %s115, %s117
      %p124 = scmp.eq.s32.totalorder %s20, 1
      %p125 = por %p123, %p124
      %p126 = scmp.ne.s32.totalorder %s117, %s118
      %p127 = scmp.eq.s32.totalorder %s20, 0
      %p128 = por %p126, %p127
      %p129 = scmp.ne.s32.totalorder %s117, %s118
      %p130 = scmp.eq.s32.totalorder %s21, 1
      %p131 = por %p129, %p130
      %p133 = scmp.ne.s32.totalorder %s118, %s132
      %p134 = scmp.eq.s32.totalorder %s21, 0
      %p135 = por %p133, %p134
      %s137 = sadd.s32 %s136, 1
      %p140 = scmp.eq.s32.totalorder %s15, 1
      %p141 = scmp.ne.s32.totalorder %s136, %s138
      %p142 = scmp.eq.s32.totalorder %s15, 0
      %p143 = por %p141, %p142
      %p144 = scmp.ne.s32.totalorder %s136, %s138
      %p145 = scmp.eq.s32.totalorder %s20, 1
      %p146 = por %p144, %p145
      %p147 = scmp.ne.s32.totalorder %s138, %s139
      %p148 = scmp.eq.s32.totalorder %s20, 0
      %p149 = por %p147, %p148
      %p150 = scmp.ne.s32.totalorder %s138, %s139
      %p151 = scmp.eq.s32.totalorder %s21, 1
      %p152 = por %p150, %p151
      %p154 = scmp.ne.s32.totalorder %s139, %s153
      %p155 = scmp.eq.s32.totalorder %s21, 0
      %p156 = por %p154, %p155
      %s158 = sadd.s32 %s157, 1
      %p161 = scmp.eq.s32.totalorder %s15, 1
      %p162 = scmp.ne.s32.totalorder %s157, %s159
      %p163 = scmp.eq.s32.totalorder %s15, 0
      %p164 = por %p162, %p163
      %p165 = scmp.ne.s32.totalorder %s157, %s159
      %p166 = scmp.eq.s32.totalorder %s20, 1
      %p167 = por %p165, %p166
      %p168 = scmp.ne.s32.totalorder %s159, %s160
      %p169 = scmp.eq.s32.totalorder %s20, 0
      %p170 = por %p168, %p169
      %p171 = scmp.ne.s32.totalorder %s159, %s160
      %p172 = scmp.eq.s32.totalorder %s21, 1
      %p173 = por %p171, %p172
      %p175 = scmp.ne.s32.totalorder %s160, %s174
      %p176 = scmp.eq.s32.totalorder %s21, 0
      %p177 = por %p175, %p176
      %s178 = ssub.s32 %s22, %s34
      %s179 = ssub.s32 %s23, %s30
      %s180 = sor.u32 %s178, %s179
      %p181 = scmp.eq.s32.totalorder %s180, 0
      %s183 = sadd.s32 %s182, 1
      %s184 = scalar_select %p181, %s182, %s183
      %p187 = pneg %p181
      %p188 = scmp.eq.s32.totalorder %s15, 1
      %p189 = por %p187, %p188
      %p190 = scmp.ne.s32.totalorder %s182, %s185
      %p191 = scmp.eq.s32.totalorder %s15, 0
      %p192 = por %p190, %p191
      %p193 = scmp.ne.s32.totalorder %s182, %s185
      %p194 = scmp.eq.s32.totalorder %s20, 1
      %p195 = por %p193, %p194
      %p196 = scmp.ne.s32.totalorder %s185, %s186
      %p197 = scmp.eq.s32.totalorder %s20, 0
      %p198 = por %p196, %p197
      %p199 = scmp.ne.s32.totalorder %s185, %s186
      %p200 = scmp.eq.s32.totalorder %s21, 1
      %p201 = por %p199, %p200
      %p203 = scmp.ne.s32.totalorder %s186, %s202
      %p204 = scmp.eq.s32.totalorder %s21, 0
      %p205 = por %p203, %p204
      %p206 = scmp.le.s32.totalorder 1, %s15
      %p207 = scmp.lt.s32.totalorder %s15, 3
      %p208 = pnand %p206, %p207
      %p209 = pneg %p208
      // Predicated region
      $region9: #{tpu_custom_call.1} parent=5 // pred_check
        _
      $region10: #{tpu_custom_call.1} parent=5 // pred_check_branch
        %211 = sbr.rel (%p208) target = $region12
      $region11: #{tpu_custom_call.1} parent=5 // pred_region
        %s212 = ssub.s32 %s15, 1
        // Predicated region
        $region13: #{tpu_custom_call.1} parent=11 // pred_check
          %p213 = pneg %p128
        $region14: #{tpu_custom_call.1} parent=11 // pred_check_branch
          %215 = sbr.rel (%p213) target = $region16
        $region15: #{tpu_custom_call.1} parent=11 // pred_region
          _
        $region16: #{tpu_custom_call.1} parent=11 // pred_fallthru
          _
        // Predicated region
        $region17: #{tpu_custom_call.1} parent=11 // pred_check
          %p216 = pneg %p149
        $region18: #{tpu_custom_call.1} parent=11 // pred_check_branch
          %218 = sbr.rel (%p216) target = $region20
        $region19: #{tpu_custom_call.1} parent=11 // pred_region
          _
        $region20: #{tpu_custom_call.1} parent=11 // pred_fallthru
          _
        // Predicated region
        $region21: #{tpu_custom_call.1} parent=11 // pred_check
          %p219 = pneg %p170
        $region22: #{tpu_custom_call.1} parent=11 // pred_check_branch
          %221 = sbr.rel (%p219) target = $region24
        $region23: #{tpu_custom_call.1} parent=11 // pred_region
          _
        $region24: #{tpu_custom_call.1} parent=11 // pred_fallthru
          _
      $region12: #{tpu_custom_call.1} parent=5 // pred_fallthru
        _
      %p222 = scmp.lt.s32.totalorder %s15, 2
      // Predicated region
      $region25: #{tpu_custom_call.1} parent=5 // pred_check
        %p223 = pneg %p222
      $region26: #{tpu_custom_call.1} parent=5 // pred_check_branch
        %225 = sbr.rel (%p223) target = $region28
      $region27: #{tpu_custom_call.1} parent=5 // pred_region
        // Predicated region
        $region29: #{tpu_custom_call.1} parent=27 // pred_check
          %p226 = pneg %p49
        $region30: #{tpu_custom_call.1} parent=27 // pred_check_branch
          %228 = sbr.rel (%p226) target = $region32
        $region31: #{tpu_custom_call.1} parent=27 // pred_region
          %s229 = smul.u32 2, %s23
          %p230 = scmp.lt.s32.totalorder %s22, 1
          %s231 = scalar_select %p230, %s22, 1
          %p232 = scmp.lt.s32.totalorder %s229, 1
          %s233 = scalar_select %p232, %s229, 1
          %s234 = smul.addr %s231, 8
          %s235 = sadd.s32 %s233, %s234
          %s236 = smul.addr %s235, 8
          %s237 = scalar_lea.vmem %s0, %s236
          %s238 = smul.u32 2, %s23
        $region32: #{tpu_custom_call.1} parent=27 // pred_fallthru
          _
        // Predicated region
        $region33: #{tpu_custom_call.1} parent=27 // pred_check
          %p239 = pneg %p75
        $region34: #{tpu_custom_call.1} parent=27 // pred_check_branch
          %241 = sbr.rel (%p239) target = $region36
        $region35: #{tpu_custom_call.1} parent=27 // pred_region
          %p242 = scmp.lt.s32.totalorder %s22, 1
          %s243 = scalar_select %p242, %s22, 1
          %s244 = smul.addr %s243, 128
          %s245 = smul.addr %s244, 4
          %s246 = scalar_lea.vmem %s1, %s245
        $region36: #{tpu_custom_call.1} parent=27 // pred_fallthru
          _
        // Predicated region
        $region37: #{tpu_custom_call.1} parent=27 // pred_check
          %p247 = pneg %p101
        $region38: #{tpu_custom_call.1} parent=27 // pred_check_branch
          %249 = sbr.rel (%p247) target = $region40
        $region39: #{tpu_custom_call.1} parent=27 // pred_region
          %p250 = scmp.lt.s32.totalorder %s22, 1
          %s251 = scalar_select %p250, %s22, 1
          %s252 = smul.addr %s251, 8
          %s253 = smul.addr %s252, 2
          %s254 = scalar_lea.vmem %s2, %s253
        $region40: #{tpu_custom_call.1} parent=27 // pred_fallthru
          _
      $region28: #{tpu_custom_call.1} parent=5 // pred_fallthru
        _
      %p255 = scmp.le.s32.totalorder 1, %s15
      %p256 = scmp.lt.s32.totalorder %s15, 3
      %p257 = pnand %p255, %p256
      %p258 = pneg %p257
      // Predicated region
      $region41: #{tpu_custom_call.1} parent=5 // pred_check
        _
      $region42: #{tpu_custom_call.1} parent=5 // pred_check_branch
        %260 = sbr.rel (%p257) target = $region44
      $region43: #{tpu_custom_call.1} parent=5 // pred_region
        %s261 = ssub.s32 %s15, 1
        %s262 = smul.u32 2, %s25
        %p263 = scmp.lt.s32.totalorder %s24, 1
        %s264 = scalar_select %p263, %s24, 1
        %p265 = scmp.lt.s32.totalorder %s262, 1
        %s266 = scalar_select %p265, %s262, 1
        %s267 = smul.addr %s264, 8
        %s268 = sadd.s32 %s266, %s267
        %s269 = smul.addr %s268, 8
        %s270 = scalar_lea.vmem %s0, %s269
        %p271 = pneg %p55
        %p272 = pneg %p52
        %p273 = scmp.lt.s32.totalorder %s24, 1
        %s274 = scalar_select %p273, %s24, 1
        %s275 = smul.addr %s274, 128
        %s276 = smul.addr %s275, 4
        %s277 = scalar_lea.vmem %s1, %s276
        %p278 = pneg %p81
        %p279 = pneg %p78
        %p280 = scmp.lt.s32.totalorder %s24, 1
        %s281 = scalar_select %p280, %s24, 1
        %s282 = smul.addr %s281, 8
        %s283 = smul.addr %s282, 2
        %s284 = scalar_lea.vmem %s2, %s283
        %p285 = pneg %p107
        %p286 = pneg %p104
        %p287 = pneg %p128
        %p288 = pneg %p125
        %p289 = pneg %p149
        %p290 = pneg %p146
        %p291 = pneg %p170
        %p292 = pneg %p167
        %p293 = pneg %p198
        %p294 = pneg %p195
        %s295 = sand.u32 %s185, 1
        %s296 = scalar_lea.sflag [#allocation3], %s295
        %s297 = sand.u32 %s185, 1
        %s298 = smul.addr %s297, 64
        %s299 = scalar_lea.vmem [#allocation2], %s298
        %s300 = smul.u32 2, %s25
        %p301 = scmp.lt.s32.totalorder %s24, 1
        %s302 = scalar_select %p301, %s24, 1
        %p303 = scmp.lt.s32.totalorder %s300, 1
        %s304 = scalar_select %p303, %s300, 1
        %s305 = smul.addr %s302, 8
        %s306 = sadd.s32 %s304, %s305
        %s307 = smul.addr %s306, 8
        %s308 = scalar_lea.vmem %s0, %s307
        %s309 = smul.u32 2, %s25
        %p310 = scmp.lt.s32.totalorder %s24, 1
        %s311 = scalar_select %p310, %s24, 1
        %s312 = smul.addr %s311, 128
        %s313 = smul.addr %s312, 4
        %s314 = scalar_lea.vmem %s1, %s313
        %p315 = scmp.lt.s32.totalorder %s24, 1
        %s316 = scalar_select %p315, %s24, 1
        %s317 = smul.addr %s316, 8
        %s318 = smul.addr %s317, 2
        %s319 = scalar_lea.vmem %s2, %s318
        %s320 = smul.u32 2, %s25
        %v322 = vld [vmem:[%s308] sm:$0xff]
        %v323 = vld [vmem:[%s308 + $0x8] sm:$0xff]
        %v324 = vld [vmem:[%s308 + $0x10] sm:$0xff]
        %v325 = vld [vmem:[%s308 + $0x18] sm:$0xff]
        %v326 = vld [vmem:[%s308 + $0x20] sm:$0xff]
        %v327 = vld [vmem:[%s308 + $0x28] sm:$0xff]
        %v328 = vld [vmem:[%s308 + $0x30] sm:$0xff]
        %v329 = vld [vmem:[%s308 + $0x38] sm:$0xff]
        %v330 = vpack.c.bf16 %v324, %v322
        %v331 = vpack.c.bf16 %v325, %v323
        %v332 = vpack.c.bf16 %v328, %v326
        %v333 = vpack.c.bf16 %v329, %v327
        %v334 = vld [vmem:[%s3] sm:$0xf]
        %v335 = vld [vmem:[%s3 + $0x4] sm:$0xf]
        %v336 = vld [vmem:[%s3 + $0x8] sm:$0xf]
        %v337 = vld [vmem:[%s3 + $0xc] sm:$0xf]
        %v342 = vunpack.c.l.b16 %v334
        %v343 = vunpack.c.l.b16 %v335
        %v344 = vunpack.c.l.b16 %v336
        %v345 = vunpack.c.l.b16 %v337
        %v346 = vpack.c.b16 %v343, %v342
        %v347 = vpack.c.b16 %v345, %v344
        %vm348 = vcmask 261120
        %v350 = vsel %vm348, %v346, 0
        %v353 = vsel %vm348, %v347, 0
        %355 = vmatprep.subr.bf16.mxu0 %v331
        %356 = vmatpush1.bf16.msra.mxu0 %v330
        %357 = vmatprep.subr.bf16.mxu0 %v333
        %358 = vmatpush1.bf16.msra.mxu0 %v332
        %359 = vmatprep.subr.bf16.mxu0 0
        %360 = vmatpush1.bf16.msra.mxu0 0
        %361 = vmatprep.subr.bf16.mxu0 0
        %362 = vmatpush1.bf16.msra.mxu0 0
        %363 = vmatprep.subr.bf16.mxu0 0
        %364 = vmatpush1.bf16.msra.mxu0 0
        %365 = vmatprep.subr.bf16.mxu0 0
        %366 = vmatpush1.bf16.msra.mxu0 0
        %367 = vmatprep.subr.bf16.mxu0 0
        %368 = vmatpush1.bf16.msra.mxu0 0
        %369 = vmatprep.subr.bf16.mxu0 0
        %370 = vmatpush1.bf16.msra.mxu0 0
        %371 = vmatprep.subr.bf16.mxu0 0
        %372 = vmatpush1.bf16.msra.mxu0 0
        %373 = vmatprep.subr.bf16.mxu0 0
        %374 = vmatpush1.bf16.msra.mxu0 0
        %375 = vmatprep.subr.bf16.mxu0 0
        %376 = vmatpush1.bf16.msra.mxu0 0
        %377 = vmatprep.subr.bf16.mxu0 0
        %378 = vmatpush1.bf16.msra.mxu0 0
        %379 = vmatprep.subr.bf16.mxu0 0
        %380 = vmatpush1.bf16.msra.mxu0 0
        %381 = vmatprep.subr.bf16.mxu0 0
        %382 = vmatpush1.bf16.msra.mxu0 0
        %383 = vmatprep.subr.bf16.mxu0 0
        %384 = vmatpush1.bf16.msra.mxu0 0
        %385 = vmatprep.subr.bf16.mxu0 0
        %386 = vmatpush1.bf16.msra.mxu0 0
        %387 = vmatprep.mubr.bf16.mxu0 0
        %388 = vmatmul.mubr.bf16.gmra.mrb[0].mxu0 %v350
        %v389 = vpop.f32.mrb[0].mxu0
        %v390 = vadd.f32 0.0, %v389
        %v391 = vpop.f32.mrb[0].mxu0
        %v392 = vadd.f32 0.0, %v391
        %v393 = vpop.f32.mrb[0].mxu0
        %v394 = vadd.f32 0.0, %v393
        %v395 = vpop.f32.mrb[0].mxu0
        %v396 = vadd.f32 0.0, %v395
        %397 = vmatprep.mubr.bf16.mxu0 0
        %398 = vmatmul.mubr.bf16.gmra.mrb[0].mxu0 %v353
        %v399 = vpop.f32.mrb[0].mxu0
        %v400 = vadd.f32 0.0, %v399
        %v401 = vpop.f32.mrb[0].mxu0
        %v402 = vadd.f32 0.0, %v401
        %v403 = vpop.f32.mrb[0].mxu0
        %v404 = vadd.f32 0.0, %v403
        %v405 = vpop.f32.mrb[0].mxu0
        %v406 = vadd.f32 0.0, %v405
        %407 = vdwg.mxu0
        %v408 = vpack.c.bf16 %v394, %v390
        %v409 = vpack.c.bf16 %v396, %v392
        %v410 = vpack.c.bf16 %v404, %v400
        %v411 = vpack.c.bf16 %v406, %v402
        %v412 = vlaneseq
        %v413 = vshrl.u32 %v412, 7
        %v414 = vadd.s32 %v413, 8
        %v415 = vadd.s32 %v413, 16
        %v416 = vadd.s32 %v413, 24
        %v417 = vadd.s32 %v413, 32
        %v418 = vadd.s32 %v413, 40
        %v419 = vadd.s32 %v413, 48
        %v420 = vadd.s32 %v413, 56
        %v421 = vadd.s32 %v413, 64
        %v422 = vadd.s32 %v413, 72
        %v423 = vadd.s32 %v413, 80
        %v424 = vadd.s32 %v413, 88
        %v425 = vadd.s32 %v413, 96
        %v426 = vadd.s32 %v413, 104
        %v427 = vadd.s32 %v413, 112
        %v428 = vadd.s32 %v413, 120
        %vm429 = vcmp.lt.s32.totalorder %v413, 8
        %vm430 = vcmp.lt.s32.totalorder %v414, 8
        %vm431 = vcmp.lt.s32.totalorder %v415, 8
        %vm432 = vcmp.lt.s32.totalorder %v416, 8
        %vm433 = vcmp.lt.s32.totalorder %v417, 8
        %vm434 = vcmp.lt.s32.totalorder %v418, 8
        %vm435 = vcmp.lt.s32.totalorder %v419, 8
        %vm436 = vcmp.lt.s32.totalorder %v420, 8
        %vm437 = vcmp.lt.s32.totalorder %v421, 8
        %vm438 = vcmp.lt.s32.totalorder %v422, 8
        %vm439 = vcmp.lt.s32.totalorder %v423, 8
        %vm440 = vcmp.lt.s32.totalorder %v424, 8
        %vm441 = vcmp.lt.s32.totalorder %v425, 8
        %vm442 = vcmp.lt.s32.totalorder %v426, 8
        %vm443 = vcmp.lt.s32.totalorder %v427, 8
        %vm444 = vcmp.lt.s32.totalorder %v428, 8
        %v445 = vsel %vm429, 0.0, -1e+09
        %v446 = vsel %vm430, 0.0, -1e+09
        %v447 = vsel %vm431, 0.0, -1e+09
        %v448 = vsel %vm432, 0.0, -1e+09
        %v449 = vsel %vm433, 0.0, -1e+09
        %v450 = vsel %vm434, 0.0, -1e+09
        %v451 = vsel %vm435, 0.0, -1e+09
        %v452 = vsel %vm436, 0.0, -1e+09
        %v453 = vsel %vm437, 0.0, -1e+09
        %v454 = vsel %vm438, 0.0, -1e+09
        %v455 = vsel %vm439, 0.0, -1e+09
        %v456 = vsel %vm440, 0.0, -1e+09
        %v457 = vsel %vm441, 0.0, -1e+09
        %v458 = vsel %vm442, 0.0, -1e+09
        %v459 = vsel %vm443, 0.0, -1e+09
        %v460 = vsel %vm444, 0.0, -1e+09
        %v461 = vld [vmem:[%s314] sm:$0xf]
        %v462 = vld [vmem:[%s314 + $0x4] sm:$0xf]
        %v463 = vld [vmem:[%s314 + $0x8] sm:$0xf]
        %v464 = vld [vmem:[%s314 + $0xc] sm:$0xf]
        %v465 = vld [vmem:[%s314 + $0x10] sm:$0xf]
        %v466 = vld [vmem:[%s314 + $0x14] sm:$0xf]
        %v467 = vld [vmem:[%s314 + $0x18] sm:$0xf]
        %v468 = vld [vmem:[%s314 + $0x1c] sm:$0xf]
        %v469 = vld [vmem:[%s314 + $0x20] sm:$0xf]
        %v470 = vld [vmem:[%s314 + $0x24] sm:$0xf]
        %v471 = vld [vmem:[%s314 + $0x28] sm:$0xf]
        %v472 = vld [vmem:[%s314 + $0x2c] sm:$0xf]
        %v473 = vld [vmem:[%s314 + $0x30] sm:$0xf]
        %v474 = vld [vmem:[%s314 + $0x34] sm:$0xf]
        %v475 = vld [vmem:[%s314 + $0x38] sm:$0xf]
        %v476 = vld [vmem:[%s314 + $0x3c] sm:$0xf]
        %v477 = vld [vmem:[%s319] sm:$0x3]
        %v494 = vunpack.c.l.b16 %v461
        %v495 = vunpack.c.l.b16 %v462
        %v496 = vunpack.c.l.b16 %v463
        %v497 = vunpack.c.l.b16 %v464
        %v498 = vunpack.c.l.b16 %v465
        %v499 = vunpack.c.l.b16 %v466
        %v500 = vunpack.c.l.b16 %v467
        %v501 = vunpack.c.l.b16 %v468
        %v502 = vunpack.c.l.b16 %v469
        %v503 = vunpack.c.l.b16 %v470
        %v504 = vunpack.c.l.b16 %v471
        %v505 = vunpack.c.l.b16 %v472
        %v506 = vunpack.c.l.b16 %v473
        %v507 = vunpack.c.l.b16 %v474
        %v508 = vunpack.c.l.b16 %v475
        %v509 = vunpack.c.l.b16 %v476
        %v510 = vpack.c.b16 %v495, %v494
        %v511 = vpack.c.b16 %v497, %v496
        %v512 = vpack.c.b16 %v499, %v498
        %v513 = vpack.c.b16 %v501, %v500
        %v514 = vpack.c.b16 %v503, %v502
        %v515 = vpack.c.b16 %v505, %v504
        %v516 = vpack.c.b16 %v507, %v506
        %v517 = vpack.c.b16 %v509, %v508
        %vm518 = vcmask 31744
        %v520 = vsel %vm518, %v510, 0
        %v523 = vsel %vm518, %v511, 0
        %v526 = vsel %vm518, %v512, 0
        %v529 = vsel %vm518, %v513, 0
        %v532 = vsel %vm518, %v514, 0
        %v535 = vsel %vm518, %v515, 0
        %v538 = vsel %vm518, %v516, 0
        %v541 = vsel %vm518, %v517, 0
        %vm543 = vcmask 1041408
        %v545 = vsel %vm543, %v408, 0
        %v548 = vsel %vm543, %v409, 0
        %550 = vmatprep.subr.bf16.mxu0 %v548
        %551 = vmatpush1.bf16.msra.mxu0 %v545
        %552 = vmatprep.subr.bf16.mxu0 0
        %553 = vmatpush1.bf16.msra.mxu0 0
        %554 = vmatprep.subr.bf16.mxu0 0
        %555 = vmatpush1.bf16.msra.mxu0 0
        %556 = vmatprep.subr.bf16.mxu0 0
        %557 = vmatpush1.bf16.msra.mxu0 0
        %558 = vmatprep.subr.bf16.mxu0 0
        %559 = vmatpush1.bf16.msra.mxu0 0
        %560 = vmatprep.subr.bf16.mxu0 0
        %561 = vmatpush1.bf16.msra.mxu0 0
        %562 = vmatprep.subr.bf16.mxu0 0
        %563 = vmatpush1.bf16.msra.mxu0 0
        %564 = vmatprep.subr.bf16.mxu0 0
        %565 = vmatpush1.bf16.msra.mxu0 0
        %566 = vmatprep.subr.bf16.mxu0 0
        %567 = vmatpush1.bf16.msra.mxu0 0
        %568 = vmatprep.subr.bf16.mxu0 0
        %569 = vmatpush1.bf16.msra.mxu0 0
        %570 = vmatprep.subr.bf16.mxu0 0
        %571 = vmatpush1.bf16.msra.mxu0 0
        %572 = vmatprep.subr.bf16.mxu0 0
        %573 = vmatpush1.bf16.msra.mxu0 0
        %574 = vmatprep.subr.bf16.mxu0 0
        %575 = vmatpush1.bf16.msra.mxu0 0
        %576 = vmatprep.subr.bf16.mxu0 0
        %577 = vmatpush1.bf16.msra.mxu0 0
        %578 = vmatprep.subr.bf16.mxu0 0
        %579 = vmatpush1.bf16.msra.mxu0 0
        %580 = vmatprep.subr.bf16.mxu0 0
        %581 = vmatpush1.bf16.msra.mxu0 0
        %582 = vmatprep.mubr.bf16.mxu0 0
        %583 = vmatmul.mubr.bf16.gmra.mrb[0].mxu0 %v520
        %v584 = vpop.f32.mrb[0].mxu0
        %v585 = vadd.f32 %v445, %v584
        %v586 = vpop.f32.mrb[0].mxu0
        %v587 = vadd.f32 %v445, %v586
        %v588 = vpop.f32.mrb[0].mxu0
        %v589 = vadd.f32 %v446, %v588
        %v590 = vpop.f32.mrb[0].mxu0
        %v591 = vadd.f32 %v446, %v590
        %592 = vmatprep.mubr.bf16.mxu0 0
        %593 = vmatmul.mubr.bf16.gmra.mrb[0].mxu0 %v523
        %v594 = vpop.f32.mrb[0].mxu0
        %v595 = vadd.f32 %v447, %v594
        %v596 = vpop.f32.mrb[0].mxu0
        %v597 = vadd.f32 %v447, %v596
        %v598 = vpop.f32.mrb[0].mxu0
        %v599 = vadd.f32 %v448, %v598
        %v600 = vpop.f32.mrb[0].mxu0
        %v601 = vadd.f32 %v448, %v600
        %602 = vmatprep.mubr.bf16.mxu0 0
        %603 = vmatmul.mubr.bf16.gmra.mrb[0].mxu0 %v526
        %v604 = vpop.f32.mrb[0].mxu0
        %v605 = vadd.f32 %v449, %v604
        %v606 = vpop.f32.mrb[0].mxu0
        %v607 = vadd.f32 %v449, %v606
        %v608 = vpop.f32.mrb[0].mxu0
        %v609 = vadd.f32 %v450, %v608
        %v610 = vpop.f32.mrb[0].mxu0
        %v611 = vadd.f32 %v450, %v610
        %612 = vmatprep.mubr.bf16.mxu0 0
        %613 = vmatmul.mubr.bf16.gmra.mrb[0].mxu0 %v529
        %v614 = vpop.f32.mrb[0].mxu0
        %v615 = vadd.f32 %v451, %v614
        %v616 = vpop.f32.mrb[0].mxu0
        %v617 = vadd.f32 %v451, %v616
        %v618 = vpop.f32.mrb[0].mxu0
        %v619 = vadd.f32 %v452, %v618
        %v620 = vpop.f32.mrb[0].mxu0
        %v621 = vadd.f32 %v452, %v620
        %622 = vmatprep.mubr.bf16.mxu0 0
        %623 = vmatmul.mubr.bf16.gmra.mrb[0].mxu0 %v532
        %v624 = vpop.f32.mrb[0].mxu0
        %v625 = vadd.f32 %v453, %v624
        %v626 = vpop.f32.mrb[0].mxu0
        %v627 = vadd.f32 %v453, %v626
        %v628 = vpop.f32.mrb[0].mxu0
        %v629 = vadd.f32 %v454, %v628
        %v630 = vpop.f32.mrb[0].mxu0
        %v631 = vadd.f32 %v454, %v630
        %632 = vmatprep.mubr.bf16.mxu0 0
        %633 = vmatmul.mubr.bf16.gmra.mrb[0].mxu0 %v535
        %v634 = vpop.f32.mrb[0].mxu0
        %v635 = vadd.f32 %v455, %v634
        %v636 = vpop.f32.mrb[0].mxu0
        %v637 = vadd.f32 %v455, %v636
        %v638 = vpop.f32.mrb[0].mxu0
        %v639 = vadd.f32 %v456, %v638
        %v640 = vpop.f32.mrb[0].mxu0
        %v641 = vadd.f32 %v456, %v640
        %642 = vmatprep.mubr.bf16.mxu0 0
        %643 = vmatmul.mubr.bf16.gmra.mrb[0].mxu0 %v538
        %v644 = vpop.f32.mrb[0].mxu0
        %v645 = vadd.f32 %v457, %v644
        %v646 = vpop.f32.mrb[0].mxu0
        %v647 = vadd.f32 %v457, %v646
        %v648 = vpop.f32.mrb[0].mxu0
        %v649 = vadd.f32 %v458, %v648
        %v650 = vpop.f32.mrb[0].mxu0
        %v651 = vadd.f32 %v458, %v650
        %652 = vmatprep.mubr.bf16.mxu0 0
        %653 = vmatmul.mubr.bf16.gmra.mrb[0].mxu0 %v541
        %v654 = vpop.f32.mrb[0].mxu0
        %v655 = vadd.f32 %v459, %v654
        %v656 = vpop.f32.mrb[0].mxu0
        %v657 = vadd.f32 %v459, %v656
        %v658 = vpop.f32.mrb[0].mxu0
        %v659 = vadd.f32 %v460, %v658
        %v660 = vpop.f32.mrb[0].mxu0
        %v661 = vadd.f32 %v460, %v660
        %662 = vdwg.mxu0
        %v663 = vmax.f32 %v585, %v595
        %v664 = vmax.f32 %v589, %v599
        %v665 = vmax.f32 %v663, %v605
        %v666 = vmax.f32 %v664, %v609
        %v667 = vmax.f32 %v665, %v615
        %v668 = vmax.f32 %v666, %v619
        %v669 = vmax.f32 %v667, %v625
        %v670 = vmax.f32 %v668, %v629
        %v671 = vmax.f32 %v669, %v635
        %v672 = vmax.f32 %v670, %v639
        %v673 = vmax.f32 %v671, %v645
        %v674 = vmax.f32 %v672, %v649
        %v675 = vmax.f32 %v673, %v655
        %v676 = vmax.f32 %v674, %v659
        %v677 = vmax.f32 %v675, %v676
        %v678 = vrot.slane %v677, 4
        %v679 = vmax.f32 %v677, %v678
        %v680 = vrot.slane %v679, 2
        %v681 = vmax.f32 %v679, %v680
        %v682 = vrot.slane %v681, 1
        %v683 = vmax.f32 %v681, %v682
        %v684 = vmax.f32 %v587, %v597
        %v685 = vmax.f32 %v591, %v601
        %v686 = vmax.f32 %v684, %v607
        %v687 = vmax.f32 %v685, %v611
        %v688 = vmax.f32 %v686, %v617
        %v689 = vmax.f32 %v687, %v621
        %v690 = vmax.f32 %v688, %v627
        %v691 = vmax.f32 %v689, %v631
        %v692 = vmax.f32 %v690, %v637
        %v693 = vmax.f32 %v691, %v641
        %v694 = vmax.f32 %v692, %v647
        %v695 = vmax.f32 %v693, %v651
        %v696 = vmax.f32 %v694, %v657
        %v697 = vmax.f32 %v695, %v661
        %v698 = vmax.f32 %v696, %v697
        %v699 = vrot.slane %v698, 4
        %v700 = vmax.f32 %v698, %v699
        %v701 = vrot.slane %v700, 2
        %v702 = vmax.f32 %v700, %v701
        %v703 = vrot.slane %v702, 1
        %v704 = vmax.f32 %v702, %v703
        %v705 = vsub.f32 %v585, %v683
        %v706 = vsub.f32 %v587, %v704
        %v707 = vsub.f32 %v589, %v683
        %v708 = vsub.f32 %v591, %v704
        %v709 = vsub.f32 %v595, %v683
        %v710 = vsub.f32 %v597, %v704
        %v711 = vsub.f32 %v599, %v683
        %v712 = vsub.f32 %v601, %v704
        %v713 = vsub.f32 %v605, %v683
        %v714 = vsub.f32 %v607, %v704
        %v715 = vsub.f32 %v609, %v683
        %v716 = vsub.f32 %v611, %v704
        %v717 = vsub.f32 %v615, %v683
        %v718 = vsub.f32 %v617, %v704
        %v719 = vsub.f32 %v619, %v683
        %v720 = vsub.f32 %v621, %v704
        %v721 = vsub.f32 %v625, %v683
        %v722 = vsub.f32 %v627, %v704
        %v723 = vsub.f32 %v629, %v683
        %v724 = vsub.f32 %v631, %v704
        %v725 = vsub.f32 %v635, %v683
        %v726 = vsub.f32 %v637, %v704
        %v727 = vsub.f32 %v639, %v683
        %v728 = vsub.f32 %v641, %v704
        %v729 = vsub.f32 %v645, %v683
        %v730 = vsub.f32 %v647, %v704
        %v731 = vsub.f32 %v649, %v683
        %v732 = vsub.f32 %v651, %v704
        %v733 = vsub.f32 %v655, %v683
        %v734 = vsub.f32 %v657, %v704
        %v735 = vsub.f32 %v659, %v683
        %v736 = vsub.f32 %v661, %v704
        %v737 = vmul.f32 %v705, 1.442695
        %v738 = vpow.pop %v737
        %v739 = vmul.f32 %v706, 1.442695
        %v740 = vpow.pop %v739
        %v741 = vmul.f32 %v707, 1.442695
        %v742 = vpow.pop %v741
        %v743 = vmul.f32 %v708, 1.442695
        %v744 = vpow.pop %v743
        %v745 = vmul.f32 %v709, 1.442695
        %v746 = vpow.pop %v745
        %v747 = vmul.f32 %v710, 1.442695
        %v748 = vpow.pop %v747
        %v749 = vmul.f32 %v711, 1.442695
        %v750 = vpow.pop %v749
        %v751 = vmul.f32 %v712, 1.442695
        %v752 = vpow.pop %v751
        %v753 = vmul.f32 %v713, 1.442695
        %v754 = vpow.pop %v753
        %v755 = vmul.f32 %v714, 1.442695
        %v756 = vpow.pop %v755
        %v757 = vmul.f32 %v715, 1.442695
        %v758 = vpow.pop %v757
        %v759 = vmul.f32 %v716, 1.442695
        %v760 = vpow.pop %v759
        %v761 = vmul.f32 %v717, 1.442695
        %v762 = vpow.pop %v761
        %v763 = vmul.f32 %v718, 1.442695
        %v764 = vpow.pop %v763
        %v765 = vmul.f32 %v719, 1.442695
        %v766 = vpow.pop %v765
        %v767 = vmul.f32 %v720, 1.442695
        %v768 = vpow.pop %v767
        %v769 = vmul.f32 %v721, 1.442695
        %v770 = vpow.pop %v769
        %v771 = vmul.f32 %v722, 1.442695
        %v772 = vpow.pop %v771
        %v773 = vmul.f32 %v723, 1.442695
        %v774 = vpow.pop %v773
        %v775 = vmul.f32 %v724, 1.442695
        %v776 = vpow.pop %v775
        %v777 = vmul.f32 %v725, 1.442695
        %v778 = vpow.pop %v777
        %v779 = vmul.f32 %v726, 1.442695
        %v780 = vpow.pop %v779
        %v781 = vmul.f32 %v727, 1.442695
        %v782 = vpow.pop %v781
        %v783 = vmul.f32 %v728, 1.442695
        %v784 = vpow.pop %v783
        %v785 = vmul.f32 %v729, 1.442695
        %v786 = vpow.pop %v785
        %v787 = vmul.f32 %v730, 1.442695
        %v788 = vpow.pop %v787
        %v789 = vmul.f32 %v731, 1.442695
        %v790 = vpow.pop %v789
        %v791 = vmul.f32 %v732, 1.442695
        %v792 = vpow.pop %v791
        %v793 = vmul.f32 %v733, 1.442695
        %v794 = vpow.pop %v793
        %v795 = vmul.f32 %v734, 1.442695
        %v796 = vpow.pop %v795
        %v797 = vmul.f32 %v735, 1.442695
        %v798 = vpow.pop %v797
        %v799 = vmul.f32 %v736, 1.442695
        %v800 = vpow.pop %v799
        %v801 = vadd.f32 %v738, %v742
        %v802 = vadd.f32 %v801, %v746
        %v803 = vadd.f32 %v802, %v750
        %v804 = vadd.f32 %v803, %v754
        %v805 = vadd.f32 %v804, %v758
        %v806 = vadd.f32 %v805, %v762
        %v807 = vadd.f32 %v806, %v766
        %v808 = vadd.f32 %v807, %v770
        %v809 = vadd.f32 %v808, %v774
        %v810 = vadd.f32 %v809, %v778
        %v811 = vadd.f32 %v810, %v782
        %v812 = vadd.f32 %v811, %v786
        %v813 = vadd.f32 %v812, %v790
        %v814 = vadd.f32 %v813, %v794
        %v815 = vadd.f32 %v814, %v798
        %v816 = vrot.slane %v815, 4
        %v817 = vadd.f32 %v815, %v816
        %v818 = vrot.slane %v817, 2
        %v819 = vadd.f32 %v817, %v818
        %v820 = vrot.slane %v819, 1
        %v821 = vadd.f32 %v819, %v820
        %v822 = vadd.f32 %v740, %v744
        %v823 = vadd.f32 %v822, %v748
        %v824 = vadd.f32 %v823, %v752
        %v825 = vadd.f32 %v824, %v756
        %v826 = vadd.f32 %v825, %v760
        %v827 = vadd.f32 %v826, %v764
        %v828 = vadd.f32 %v827, %v768
        %v829 = vadd.f32 %v828, %v772
        %v830 = vadd.f32 %v829, %v776
        %v831 = vadd.f32 %v830, %v780
        %v832 = vadd.f32 %v831, %v784
        %v833 = vadd.f32 %v832, %v788
        %v834 = vadd.f32 %v833, %v792
        %v835 = vadd.f32 %v834, %v796
        %v836 = vadd.f32 %v835, %v800
        %v837 = vrot.slane %v836, 4
        %v838 = vadd.f32 %v836, %v837
        %v839 = vrot.slane %v838, 2
        %v840 = vadd.f32 %v838, %v839
        %v841 = vrot.slane %v840, 1
        %v842 = vadd.f32 %v840, %v841
        %v843 = vrcp.pop %v821
        %v844 = vrcp.pop %v842
        %v845 = vmul.f32 %v738, %v843
        %v846 = vmul.f32 %v740, %v844
        %v847 = vmul.f32 %v742, %v843
        %v848 = vmul.f32 %v744, %v844
        %v849 = vmul.f32 %v746, %v843
        %v850 = vmul.f32 %v748, %v844
        %v851 = vmul.f32 %v750, %v843
        %v852 = vmul.f32 %v752, %v844
        %v853 = vmul.f32 %v754, %v843
        %v854 = vmul.f32 %v756, %v844
        %v855 = vmul.f32 %v758, %v843
        %v856 = vmul.f32 %v760, %v844
        %v857 = vmul.f32 %v762, %v843
        %v858 = vmul.f32 %v764, %v844
        %v859 = vmul.f32 %v766, %v843
        %v860 = vmul.f32 %v768, %v844
        %v861 = vmul.f32 %v770, %v843
        %v862 = vmul.f32 %v772, %v844
        %v863 = vmul.f32 %v774, %v843
        %v864 = vmul.f32 %v776, %v844
        %v865 = vmul.f32 %v778, %v843
        %v866 = vmul.f32 %v780, %v844
        %v867 = vmul.f32 %v782, %v843
        %v868 = vmul.f32 %v784, %v844
        %v869 = vmul.f32 %v786, %v843
        %v870 = vmul.f32 %v788, %v844
        %v871 = vmul.f32 %v790, %v843
        %v872 = vmul.f32 %v792, %v844
        %v873 = vmul.f32 %v794, %v843
        %v874 = vmul.f32 %v796, %v844
        %v875 = vmul.f32 %v798, %v843
        %v876 = vmul.f32 %v800, %v844
        %v877 = vpack.c.bf16 %v847, %v845
        %v878 = vpack.c.bf16 %v848, %v846
        %v879 = vpack.c.bf16 %v851, %v849
        %v880 = vpack.c.bf16 %v852, %v850
        %v881 = vpack.c.bf16 %v855, %v853
        %v882 = vpack.c.bf16 %v856, %v854
        %v883 = vpack.c.bf16 %v859, %v857
        %v884 = vpack.c.bf16 %v860, %v858
        %v885 = vpack.c.bf16 %v863, %v861
        %v886 = vpack.c.bf16 %v864, %v862
        %v887 = vpack.c.bf16 %v867, %v865
        %v888 = vpack.c.bf16 %v868, %v866
        %v889 = vpack.c.bf16 %v871, %v869
        %v890 = vpack.c.bf16 %v872, %v870
        %v891 = vpack.c.bf16 %v875, %v873
        %v892 = vpack.c.bf16 %v876, %v874
        %893 = vmatprep.subr.bf16.mxu0 %v878
        %894 = vmatpush1.bf16.msra.mxu0 %v877
        %895 = vmatprep.subr.bf16.mxu0 %v880
        %896 = vmatpush1.bf16.msra.mxu0 %v879
        %897 = vmatprep.subr.bf16.mxu0 %v882
        %898 = vmatpush1.bf16.msra.mxu0 %v881
        %899 = vmatprep.subr.bf16.mxu0 %v884
        %900 = vmatpush1.bf16.msra.mxu0 %v883
        %901 = vmatprep.subr.bf16.mxu0 %v886
        %902 = vmatpush1.bf16.msra.mxu0 %v885
        %903 = vmatprep.subr.bf16.mxu0 %v888
        %904 = vmatpush1.bf16.msra.mxu0 %v887
        %905 = vmatprep.subr.bf16.mxu0 %v890
        %906 = vmatpush1.bf16.msra.mxu0 %v889
        %907 = vmatprep.subr.bf16.mxu0 %v892
        %908 = vmatpush1.bf16.msra.mxu0 %v891
        %909 = vmatprep.subr.bf16.mxu0 0
        %910 = vmatpush1.bf16.msra.mxu0 0
        %911 = vmatprep.subr.bf16.mxu0 0
        %912 = vmatpush1.bf16.msra.mxu0 0
        %913 = vmatprep.subr.bf16.mxu0 0
        %914 = vmatpush1.bf16.msra.mxu0 0
        %915 = vmatprep.subr.bf16.mxu0 0
        %916 = vmatpush1.bf16.msra.mxu0 0
        %917 = vmatprep.subr.bf16.mxu0 0
        %918 = vmatpush1.bf16.msra.mxu0 0
        %919 = vmatprep.subr.bf16.mxu0 0
        %920 = vmatpush1.bf16.msra.mxu0 0
        %921 = vmatprep.subr.bf16.mxu0 0
        %922 = vmatpush1.bf16.msra.mxu0 0
        %923 = vmatprep.subr.bf16.mxu0 0
        %924 = vmatpush1.bf16.msra.mxu0 0
        %925 = vmatprep.mubr.bf16.mxu0 0
        %926 = vmatmul.mubr.bf16.gmra.mrb[0].mxu0 %v477
        %v927 = vpop.f32.mrb[0].mxu0
        %v928 = vadd.f32 0.0, %v927
        %v929 = vpop.f32.mrb[0].mxu0
        %v930 = vadd.f32 0.0, %v929
        %v931 = vpop.f32.mrb[0].mxu0
        %v932 = vpop.f32.mrb[0].mxu0
        %933 = vdwg.mxu0
        %v934 = vpack.c.bf16 %v928, %v928
        %v935 = vpack.c.bf16 %v930, %v930
        %s936 = scalar_lea.vmem %s314, 64
        %v937 = vld [vmem:[%s936] sm:$0xf]
        %v938 = vld [vmem:[%s936 + $0x4] sm:$0xf]
        %v939 = vld [vmem:[%s936 + $0x8] sm:$0xf]
        %v940 = vld [vmem:[%s936 + $0xc] sm:$0xf]
        %v941 = vld [vmem:[%s936 + $0x10] sm:$0xf]
        %v942 = vld [vmem:[%s936 + $0x14] sm:$0xf]
        %v943 = vld [vmem:[%s936 + $0x18] sm:$0xf]
        %v944 = vld [vmem:[%s936 + $0x1c] sm:$0xf]
        %v945 = vld [vmem:[%s936 + $0x20] sm:$0xf]
        %v946 = vld [vmem:[%s936 + $0x24] sm:$0xf]
        %v947 = vld [vmem:[%s936 + $0x28] sm:$0xf]
        %v948 = vld [vmem:[%s936 + $0x2c] sm:$0xf]
        %v949 = vld [vmem:[%s936 + $0x30] sm:$0xf]
        %v950 = vld [vmem:[%s936 + $0x34] sm:$0xf]
        %v951 = vld [vmem:[%s936 + $0x38] sm:$0xf]
        %v952 = vld [vmem:[%s936 + $0x3c] sm:$0xf]
        %s953 = scalar_lea.vmem %s319, 2
        %v954 = vld [vmem:[%s953] sm:$0x3]
        %v971 = vunpack.c.l.b16 %v937
        %v972 = vunpack.c.l.b16 %v938
        %v973 = vunpack.c.l.b16 %v939
        %v974 = vunpack.c.l.b16 %v940
        %v975 = vunpack.c.l.b16 %v941
        %v976 = vunpack.c.l.b16 %v942
        %v977 = vunpack.c.l.b16 %v943
        %v978 = vunpack.c.l.b16 %v944
        %v979 = vunpack.c.l.b16 %v945
        %v980 = vunpack.c.l.b16 %v946
        %v981 = vunpack.c.l.b16 %v947
        %v982 = vunpack.c.l.b16 %v948
        %v983 = vunpack.c.l.b16 %v949
        %v984 = vunpack.c.l.b16 %v950
        %v985 = vunpack.c.l.b16 %v951
        %v986 = vunpack.c.l.b16 %v952
        %v987 = vpack.c.b16 %v972, %v971
        %v988 = vpack.c.b16 %v974, %v973
        %v989 = vpack.c.b16 %v976, %v975
        %v990 = vpack.c.b16 %v978, %v977
        %v991 = vpack.c.b16 %v980, %v979
        %v992 = vpack.c.b16 %v982, %v981
        %v993 = vpack.c.b16 %v984, %v983
        %v994 = vpack.c.b16 %v986, %v985
        %v997 = vrot.slane %v408, 2
        %v998 = vrot.slane %v409, 2
        %v1000 = vsel %vm518, %v987, 0
        %v1003 = vsel %vm518, %v988, 0
        %v1006 = vsel %vm518, %v989, 0
        %v1009 = vsel %vm518, %v990, 0
        %v1012 = vsel %vm518, %v991, 0
        %v1015 = vsel %vm518, %v992, 0
        %v1018 = vsel %vm518, %v993, 0
        %v1021 = vsel %vm518, %v994, 0
        %v1024 = vsel %vm543, %v997, 0
        %v1027 = vsel %vm543, %v998, 0
        %1029 = vmatprep.subr.bf16.mxu0 %v1027
        %1030 = vmatpush1.bf16.msra.mxu0 %v1024
        %1031 = vmatprep.subr.bf16.mxu0 0
        %1032 = vmatpush1.bf16.msra.mxu0 0
        %1033 = vmatprep.subr.bf16.mxu0 0
        %1034 = vmatpush1.bf16.msra.mxu0 0
        %1035 = vmatprep.subr.bf16.mxu0 0
        %1036 = vmatpush1.bf16.msra.mxu0 0
        %1037 = vmatprep.subr.bf16.mxu0 0
        %1038 = vmatpush1.bf16.msra.mxu0 0
        %1039 = vmatprep.subr.bf16.mxu0 0
        %1040 = vmatpush1.bf16.msra.mxu0 0
        %1041 = vmatprep.subr.bf16.mxu0 0
        %1042 = vmatpush1.bf16.msra.mxu0 0
        %1043 = vmatprep.subr.bf16.mxu0 0
        %1044 = vmatpush1.bf16.msra.mxu0 0
        %1045 = vmatprep.subr.bf16.mxu0 0
        %1046 = vmatpush1.bf16.msra.mxu0 0
        %1047 = vmatprep.subr.bf16.mxu0 0
        %1048 = vmatpush1.bf16.msra.mxu0 0
        %1049 = vmatprep.subr.bf16.mxu0 0
        %1050 = vmatpush1.bf16.msra.mxu0 0
        %1051 = vmatprep.subr.bf16.mxu0 0
        %1052 = vmatpush1.bf16.msra.mxu0 0
        %1053 = vmatprep.subr.bf16.mxu0 0
        %1054 = vmatpush1.bf16.msra.mxu0 0
        %1055 = vmatprep.subr.bf16.mxu0 0
        %1056 = vmatpush1.bf16.msra.mxu0 0
        %1057 = vmatprep.subr.bf16.mxu0 0
        %1058 = vmatpush1.bf16.msra.mxu0 0
        %1059 = vmatprep.subr.bf16.mxu0 0
        %1060 = vmatpush1.bf16.msra.mxu0 0
        %1061 = vmatprep.mubr.bf16.mxu0 0
        %1062 = vmatmul.mubr.bf16.gmra.mrb[0].mxu0 %v1000
        %v1063 = vpop.f32.mrb[0].mxu0
        %v1064 = vadd.f32 %v445, %v1063
        %v1065 = vpop.f32.mrb[0].mxu0
        %v1066 = vadd.f32 %v445, %v1065
        %v1067 = vpop.f32.mrb[0].mxu0
        %v1068 = vadd.f32 %v446, %v1067
        %v1069 = vpop.f32.mrb[0].mxu0
        %v1070 = vadd.f32 %v446, %v1069
        %1071 = vmatprep.mubr.bf16.mxu0 0
        %1072 = vmatmul.mubr.bf16.gmra.mrb[0].mxu0 %v1003
        %v1073 = vpop.f32.mrb[0].mxu0
        %v1074 = vadd.f32 %v447, %v1073
        %v1075 = vpop.f32.mrb[0].mxu0
        %v1076 = vadd.f32 %v447, %v1075
        %v1077 = vpop.f32.mrb[0].mxu0
        %v1078 = vadd.f32 %v448, %v1077
        %v1079 = vpop.f32.mrb[0].mxu0
        %v1080 = vadd.f32 %v448, %v1079
        %1081 = vmatprep.mubr.bf16.mxu0 0
        %1082 = vmatmul.mubr.bf16.gmra.mrb[0].mxu0 %v1006
        %v1083 = vpop.f32.mrb[0].mxu0
        %v1084 = vadd.f32 %v449, %v1083
        %v1085 = vpop.f32.mrb[0].mxu0
        %v1086 = vadd.f32 %v449, %v1085
        %v1087 = vpop.f32.mrb[0].mxu0
        %v1088 = vadd.f32 %v450, %v1087
        %v1089 = vpop.f32.mrb[0].mxu0
        %v1090 = vadd.f32 %v450, %v1089
        %1091 = vmatprep.mubr.bf16.mxu0 0
        %1092 = vmatmul.mubr.bf16.gmra.mrb[0].mxu0 %v1009
        %v1093 = vpop.f32.mrb[0].mxu0
        %v1094 = vadd.f32 %v451, %v1093
        %v1095 = vpop.f32.mrb[0].mxu0
        %v1096 = vadd.f32 %v451, %v1095
        %v1097 = vpop.f32.mrb[0].mxu0
        %v1098 = vadd.f32 %v452, %v1097
        %v1099 = vpop.f32.mrb[0].mxu0
        %v1100 = vadd.f32 %v452, %v1099
        %1101 = vmatprep.mubr.bf16.mxu0 0
        %1102 = vmatmul.mubr.bf16.gmra.mrb[0].mxu0 %v1012
        %v1103 = vpop.f32.mrb[0].mxu0
        %v1104 = vadd.f32 %v453, %v1103
        %v1105 = vpop.f32.mrb[0].mxu0
        %v1106 = vadd.f32 %v453, %v1105
        %v1107 = vpop.f32.mrb[0].mxu0
        %v1108 = vadd.f32 %v454, %v1107
        %v1109 = vpop.f32.mrb[0].mxu0
        %v1110 = vadd.f32 %v454, %v1109
        %1111 = vmatprep.mubr.bf16.mxu0 0
        %1112 = vmatmul.mubr.bf16.gmra.mrb[0].mxu0 %v1015
        %v1113 = vpop.f32.mrb[0].mxu0
        %v1114 = vadd.f32 %v455, %v1113
        %v1115 = vpop.f32.mrb[0].mxu0
        %v1116 = vadd.f32 %v455, %v1115
        %v1117 = vpop.f32.mrb[0].mxu0
        %v1118 = vadd.f32 %v456, %v1117
        %v1119 = vpop.f32.mrb[0].mxu0
        %v1120 = vadd.f32 %v456, %v1119
        %1121 = vmatprep.mubr.bf16.mxu0 0
        %1122 = vmatmul.mubr.bf16.gmra.mrb[0].mxu0 %v1018
        %v1123 = vpop.f32.mrb[0].mxu0
        %v1124 = vadd.f32 %v457, %v1123
        %v1125 = vpop.f32.mrb[0].mxu0
        %v1126 = vadd.f32 %v457, %v1125
        %v1127 = vpop.f32.mrb[0].mxu0
        %v1128 = vadd.f32 %v458, %v1127
        %v1129 = vpop.f32.mrb[0].mxu0
        %v1130 = vadd.f32 %v458, %v1129
        %1131 = vmatprep.mubr.bf16.mxu0 0
        %1132 = vmatmul.mubr.bf16.gmra.mrb[0].mxu0 %v1021
        %v1133 = vpop.f32.mrb[0].mxu0
        %v1134 = vadd.f32 %v459, %v1133
        %v1135 = vpop.f32.mrb[0].mxu0
        %v1136 = vadd.f32 %v459, %v1135
        %v1137 = vpop.f32.mrb[0].mxu0
        %v1138 = vadd.f32 %v460, %v1137
        %v1139 = vpop.f32.mrb[0].mxu0
        %v1140 = vadd.f32 %v460, %v1139
        %1141 = vdwg.mxu0
        %v1142 = vmax.f32 %v1064, %v1074
        %v1143 = vmax.f32 %v1068, %v1078
        %v1144 = vmax.f32 %v1142, %v1084
        %v1145 = vmax.f32 %v1143, %v1088
        %v1146 = vmax.f32 %v1144, %v1094
        %v1147 = vmax.f32 %v1145, %v1098
        %v1148 = vmax.f32 %v1146, %v1104
        %v1149 = vmax.f32 %v1147, %v1108
        %v1150 = vmax.f32 %v1148, %v1114
        %v1151 = vmax.f32 %v1149, %v1118
        %v1152 = vmax.f32 %v1150, %v1124
        %v1153 = vmax.f32 %v1151, %v1128
        %v1154 = vmax.f32 %v1152, %v1134
        %v1155 = vmax.f32 %v1153, %v1138
        %v1156 = vmax.f32 %v1154, %v1155
        %v1157 = vrot.slane %v1156, 4
        %v1158 = vmax.f32 %v1156, %v1157
        %v1159 = vrot.slane %v1158, 2
        %v1160 = vmax.f32 %v1158, %v1159
        %v1161 = vrot.slane %v1160, 1
        %v1162 = vmax.f32 %v1160, %v1161
        %v1163 = vmax.f32 %v1066, %v1076
        %v1164 = vmax.f32 %v1070, %v1080
        %v1165 = vmax.f32 %v1163, %v1086
        %v1166 = vmax.f32 %v1164, %v1090
        %v1167 = vmax.f32 %v1165, %v1096
        %v1168 = vmax.f32 %v1166, %v1100
        %v1169 = vmax.f32 %v1167, %v1106
        %v1170 = vmax.f32 %v1168, %v1110
        %v1171 = vmax.f32 %v1169, %v1116
        %v1172 = vmax.f32 %v1170, %v1120
        %v1173 = vmax.f32 %v1171, %v1126
        %v1174 = vmax.f32 %v1172, %v1130
        %v1175 = vmax.f32 %v1173, %v1136
        %v1176 = vmax.f32 %v1174, %v1140
        %v1177 = vmax.f32 %v1175, %v1176
        %v1178 = vrot.slane %v1177, 4
        %v1179 = vmax.f32 %v1177, %v1178
        %v1180 = vrot.slane %v1179, 2
        %v1181 = vmax.f32 %v1179, %v1180
        %v1182 = vrot.slane %v1181, 1
        %v1183 = vmax.f32 %v1181, %v1182
        %v1184 = vsub.f32 %v1064, %v1162
        %v1185 = vsub.f32 %v1066, %v1183
        %v1186 = vsub.f32 %v1068, %v1162
        %v1187 = vsub.f32 %v1070, %v1183
        %v1188 = vsub.f32 %v1074, %v1162
        %v1189 = vsub.f32 %v1076, %v1183
        %v1190 = vsub.f32 %v1078, %v1162
        %v1191 = vsub.f32 %v1080, %v1183
        %v1192 = vsub.f32 %v1084, %v1162
        %v1193 = vsub.f32 %v1086, %v1183
        %v1194 = vsub.f32 %v1088, %v1162
        %v1195 = vsub.f32 %v1090, %v1183
        %v1196 = vsub.f32 %v1094, %v1162
        %v1197 = vsub.f32 %v1096, %v1183
        %v1198 = vsub.f32 %v1098, %v1162
        %v1199 = vsub.f32 %v1100, %v1183
        %v1200 = vsub.f32 %v1104, %v1162
        %v1201 = vsub.f32 %v1106, %v1183
        %v1202 = vsub.f32 %v1108, %v1162
        %v1203 = vsub.f32 %v1110, %v1183
        %v1204 = vsub.f32 %v1114, %v1162
        %v1205 = vsub.f32 %v1116, %v1183
        %v1206 = vsub.f32 %v1118, %v1162
        %v1207 = vsub.f32 %v1120, %v1183
        %v1208 = vsub.f32 %v1124, %v1162
        %v1209 = vsub.f32 %v1126, %v1183
        %v1210 = vsub.f32 %v1128, %v1162
        %v1211 = vsub.f32 %v1130, %v1183
        %v1212 = vsub.f32 %v1134, %v1162
        %v1213 = vsub.f32 %v1136, %v1183
        %v1214 = vsub.f32 %v1138, %v1162
        %v1215 = vsub.f32 %v1140, %v1183
        %v1216 = vmul.f32 %v1184, 1.442695
        %v1217 = vpow.pop %v1216
        %v1218 = vmul.f32 %v1185, 1.442695
        %v1219 = vpow.pop %v1218
        %v1220 = vmul.f32 %v1186, 1.442695
        %v1221 = vpow.pop %v1220
        %v1222 = vmul.f32 %v1187, 1.442695
        %v1223 = vpow.pop %v1222
        %v1224 = vmul.f32 %v1188, 1.442695
        %v1225 = vpow.pop %v1224
        %v1226 = vmul.f32 %v1189, 1.442695
        %v1227 = vpow.pop %v1226
        %v1228 = vmul.f32 %v1190, 1.442695
        %v1229 = vpow.pop %v1228
        %v1230 = vmul.f32 %v1191, 1.442695
        %v1231 = vpow.pop %v1230
        %v1232 = vmul.f32 %v1192, 1.442695
        %v1233 = vpow.pop %v1232
        %v1234 = vmul.f32 %v1193, 1.442695
        %v1235 = vpow.pop %v1234
        %v1236 = vmul.f32 %v1194, 1.442695
        %v1237 = vpow.pop %v1236
        %v1238 = vmul.f32 %v1195, 1.442695
        %v1239 = vpow.pop %v1238
        %v1240 = vmul.f32 %v1196, 1.442695
        %v1241 = vpow.pop %v1240
        %v1242 = vmul.f32 %v1197, 1.442695
        %v1243 = vpow.pop %v1242
        %v1244 = vmul.f32 %v1198, 1.442695
        %v1245 = vpow.pop %v1244
        %v1246 = vmul.f32 %v1199, 1.442695
        %v1247 = vpow.pop %v1246
        %v1248 = vmul.f32 %v1200, 1.442695
        %v1249 = vpow.pop %v1248
        %v1250 = vmul.f32 %v1201, 1.442695
        %v1251 = vpow.pop %v1250
        %v1252 = vmul.f32 %v1202, 1.442695
        %v1253 = vpow.pop %v1252
        %v1254 = vmul.f32 %v1203, 1.442695
        %v1255 = vpow.pop %v1254
        %v1256 = vmul.f32 %v1204, 1.442695
        %v1257 = vpow.pop %v1256
        %v1258 = vmul.f32 %v1205, 1.442695
        %v1259 = vpow.pop %v1258
        %v1260 = vmul.f32 %v1206, 1.442695
        %v1261 = vpow.pop %v1260
        %v1262 = vmul.f32 %v1207, 1.442695
        %v1263 = vpow.pop %v1262
        %v1264 = vmul.f32 %v1208, 1.442695
        %v1265 = vpow.pop %v1264
        %v1266 = vmul.f32 %v1209, 1.442695
        %v1267 = vpow.pop %v1266
        %v1268 = vmul.f32 %v1210, 1.442695
        %v1269 = vpow.pop %v1268
        %v1270 = vmul.f32 %v1211, 1.442695
        %v1271 = vpow.pop %v1270
        %v1272 = vmul.f32 %v1212, 1.442695
        %v1273 = vpow.pop %v1272
        %v1274 = vmul.f32 %v1213, 1.442695
        %v1275 = vpow.pop %v1274
        %v1276 = vmul.f32 %v1214, 1.442695
        %v1277 = vpow.pop %v1276
        %v1278 = vmul.f32 %v1215, 1.442695
        %v1279 = vpow.pop %v1278
        %v1280 = vadd.f32 %v1217, %v1221
        %v1281 = vadd.f32 %v1280, %v1225
        %v1282 = vadd.f32 %v1281, %v1229
        %v1283 = vadd.f32 %v1282, %v1233
        %v1284 = vadd.f32 %v1283, %v1237
        %v1285 = vadd.f32 %v1284, %v1241
        %v1286 = vadd.f32 %v1285, %v1245
        %v1287 = vadd.f32 %v1286, %v1249
        %v1288 = vadd.f32 %v1287, %v1253
        %v1289 = vadd.f32 %v1288, %v1257
        %v1290 = vadd.f32 %v1289, %v1261
        %v1291 = vadd.f32 %v1290, %v1265
        %v1292 = vadd.f32 %v1291, %v1269
        %v1293 = vadd.f32 %v1292, %v1273
        %v1294 = vadd.f32 %v1293, %v1277
        %v1295 = vrot.slane %v1294, 4
        %v1296 = vadd.f32 %v1294, %v1295
        %v1297 = vrot.slane %v1296, 2
        %v1298 = vadd.f32 %v1296, %v1297
        %v1299 = vrot.slane %v1298, 1
        %v1300 = vadd.f32 %v1298, %v1299
        %v1301 = vadd.f32 %v1219, %v1223
        %v1302 = vadd.f32 %v1301, %v1227
        %v1303 = vadd.f32 %v1302, %v1231
        %v1304 = vadd.f32 %v1303, %v1235
        %v1305 = vadd.f32 %v1304, %v1239
        %v1306 = vadd.f32 %v1305, %v1243
        %v1307 = vadd.f32 %v1306, %v1247
        %v1308 = vadd.f32 %v1307, %v1251
        %v1309 = vadd.f32 %v1308, %v1255
        %v1310 = vadd.f32 %v1309, %v1259
        %v1311 = vadd.f32 %v1310, %v1263
        %v1312 = vadd.f32 %v1311, %v1267
        %v1313 = vadd.f32 %v1312, %v1271
        %v1314 = vadd.f32 %v1313, %v1275
        %v1315 = vadd.f32 %v1314, %v1279
        %v1316 = vrot.slane %v1315, 4
        %v1317 = vadd.f32 %v1315, %v1316
        %v1318 = vrot.slane %v1317, 2
        %v1319 = vadd.f32 %v1317, %v1318
        %v1320 = vrot.slane %v1319, 1
        %v1321 = vadd.f32 %v1319, %v1320
        %v1322 = vrcp.pop %v1300
        %v1323 = vrcp.pop %v1321
        %v1324 = vmul.f32 %v1217, %v1322
        %v1325 = vmul.f32 %v1219, %v1323
        %v1326 = vmul.f32 %v1221, %v1322
        %v1327 = vmul.f32 %v1223, %v1323
        %v1328 = vmul.f32 %v1225, %v1322
        %v1329 = vmul.f32 %v1227, %v1323
        %v1330 = vmul.f32 %v1229, %v1322
        %v1331 = vmul.f32 %v1231, %v1323
        %v1332 = vmul.f32 %v1233, %v1322
        %v1333 = vmul.f32 %v1235, %v1323
        %v1334 = vmul.f32 %v1237, %v1322
        %v1335 = vmul.f32 %v1239, %v1323
        %v1336 = vmul.f32 %v1241, %v1322
        %v1337 = vmul.f32 %v1243, %v1323
        %v1338 = vmul.f32 %v1245, %v1322
        %v1339 = vmul.f32 %v1247, %v1323
        %v1340 = vmul.f32 %v1249, %v1322
        %v1341 = vmul.f32 %v1251, %v1323
        %v1342 = vmul.f32 %v1253, %v1322
        %v1343 = vmul.f32 %v1255, %v1323
        %v1344 = vmul.f32 %v1257, %v1322
        %v1345 = vmul.f32 %v1259, %v1323
        %v1346 = vmul.f32 %v1261, %v1322
        %v1347 = vmul.f32 %v1263, %v1323
        %v1348 = vmul.f32 %v1265, %v1322
        %v1349 = vmul.f32 %v1267, %v1323
        %v1350 = vmul.f32 %v1269, %v1322
        %v1351 = vmul.f32 %v1271, %v1323
        %v1352 = vmul.f32 %v1273, %v1322
        %v1353 = vmul.f32 %v1275, %v1323
        %v1354 = vmul.f32 %v1277, %v1322
        %v1355 = vmul.f32 %v1279, %v1323
        %v1356 = vpack.c.bf16 %v1326, %v1324
        %v1357 = vpack.c.bf16 %v1327, %v1325
        %v1358 = vpack.c.bf16 %v1330, %v1328
        %v1359 = vpack.c.bf16 %v1331, %v1329
        %v1360 = vpack.c.bf16 %v1334, %v1332
        %v1361 = vpack.c.bf16 %v1335, %v1333
        %v1362 = vpack.c.bf16 %v1338, %v1336
        %v1363 = vpack.c.bf16 %v1339, %v1337
        %v1364 = vpack.c.bf16 %v1342, %v1340
        %v1365 = vpack.c.bf16 %v1343, %v1341
        %v1366 = vpack.c.bf16 %v1346, %v1344
        %v1367 = vpack.c.bf16 %v1347, %v1345
        %v1368 = vpack.c.bf16 %v1350, %v1348
        %v1369 = vpack.c.bf16 %v1351, %v1349
        %v1370 = vpack.c.bf16 %v1354, %v1352
        %v1371 = vpack.c.bf16 %v1355, %v1353
        %1372 = vmatprep.subr.bf16.mxu0 %v1357
        %1373 = vmatpush1.bf16.msra.mxu0 %v1356
        %1374 = vmatprep.subr.bf16.mxu0 %v1359
        %1375 = vmatpush1.bf16.msra.mxu0 %v1358
        %1376 = vmatprep.subr.bf16.mxu0 %v1361
        %1377 = vmatpush1.bf16.msra.mxu0 %v1360
        %1378 = vmatprep.subr.bf16.mxu0 %v1363
        %1379 = vmatpush1.bf16.msra.mxu0 %v1362
        %1380 = vmatprep.subr.bf16.mxu0 %v1365
        %1381 = vmatpush1.bf16.msra.mxu0 %v1364
        %1382 = vmatprep.subr.bf16.mxu0 %v1367
        %1383 = vmatpush1.bf16.msra.mxu0 %v1366
        %1384 = vmatprep.subr.bf16.mxu0 %v1369
        %1385 = vmatpush1.bf16.msra.mxu0 %v1368
        %1386 = vmatprep.subr.bf16.mxu0 %v1371
        %1387 = vmatpush1.bf16.msra.mxu0 %v1370
        %1388 = vmatprep.subr.bf16.mxu0 0
        %1389 = vmatpush1.bf16.msra.mxu0 0
        %1390 = vmatprep.subr.bf16.mxu0 0
        %1391 = vmatpush1.bf16.msra.mxu0 0
        %1392 = vmatprep.subr.bf16.mxu0 0
        %1393 = vmatpush1.bf16.msra.mxu0 0
        %1394 = vmatprep.subr.bf16.mxu0 0
        %1395 = vmatpush1.bf16.msra.mxu0 0
        %1396 = vmatprep.subr.bf16.mxu0 0
        %1397 = vmatpush1.bf16.msra.mxu0 0
        %1398 = vmatprep.subr.bf16.mxu0 0
        %1399 = vmatpush1.bf16.msra.mxu0 0
        %1400 = vmatprep.subr.bf16.mxu0 0
        %1401 = vmatpush1.bf16.msra.mxu0 0
        %1402 = vmatprep.subr.bf16.mxu0 0
        %1403 = vmatpush1.bf16.msra.mxu0 0
        %1404 = vmatprep.mubr.bf16.mxu0 0
        %1405 = vmatmul.mubr.bf16.gmra.mrb[0].mxu0 %v954
        %v1406 = vpop.f32.mrb[0].mxu0
        %v1407 = vadd.f32 0.0, %v1406
        %v1408 = vpop.f32.mrb[0].mxu0
        %v1409 = vadd.f32 0.0, %v1408
        %v1410 = vpop.f32.mrb[0].mxu0
        %v1411 = vpop.f32.mrb[0].mxu0
        %1412 = vdwg.mxu0
        %v1413 = vpack.c.bf16 %v1407, %v1407
        %v1414 = vpack.c.bf16 %v1409, %v1409
        %s1415 = scalar_lea.vmem %s314, 128
        %v1416 = vld [vmem:[%s1415] sm:$0xf]
        %v1417 = vld [vmem:[%s1415 + $0x4] sm:$0xf]
        %v1418 = vld [vmem:[%s1415 + $0x8] sm:$0xf]
        %v1419 = vld [vmem:[%s1415 + $0xc] sm:$0xf]
        %v1420 = vld [vmem:[%s1415 + $0x10] sm:$0xf]
        %v1421 = vld [vmem:[%s1415 + $0x14] sm:$0xf]
        %v1422 = vld [vmem:[%s1415 + $0x18] sm:$0xf]
        %v1423 = vld [vmem:[%s1415 + $0x1c] sm:$0xf]
        %v1424 = vld [vmem:[%s1415 + $0x20] sm:$0xf]
        %v1425 = vld [vmem:[%s1415 + $0x24] sm:$0xf]
        %v1426 = vld [vmem:[%s1415 + $0x28] sm:$0xf]
        %v1427 = vld [vmem:[%s1415 + $0x2c] sm:$0xf]
        %v1428 = vld [vmem:[%s1415 + $0x30] sm:$0xf]
        %v1429 = vld [vmem:[%s1415 + $0x34] sm:$0xf]
        %v1430 = vld [vmem:[%s1415 + $0x38] sm:$0xf]
        %v1431 = vld [vmem:[%s1415 + $0x3c] sm:$0xf]
        %s1432 = scalar_lea.vmem %s319, 4
        %v1433 = vld [vmem:[%s1432] sm:$0x3]
        %v1450 = vunpack.c.l.b16 %v1416
        %v1451 = vunpack.c.l.b16 %v1417
        %v1452 = vunpack.c.l.b16 %v1418
        %v1453 = vunpack.c.l.b16 %v1419
        %v1454 = vunpack.c.l.b16 %v1420
        %v1455 = vunpack.c.l.b16 %v1421
        %v1456 = vunpack.c.l.b16 %v1422
        %v1457 = vunpack.c.l.b16 %v1423
        %v1458 = vunpack.c.l.b16 %v1424
        %v1459 = vunpack.c.l.b16 %v1425
        %v1460 = vunpack.c.l.b16 %v1426
        %v1461 = vunpack.c.l.b16 %v1427
        %v1462 = vunpack.c.l.b16 %v1428
        %v1463 = vunpack.c.l.b16 %v1429
        %v1464 = vunpack.c.l.b16 %v1430
        %v1465 = vunpack.c.l.b16 %v1431
        %v1466 = vpack.c.b16 %v1451, %v1450
        %v1467 = vpack.c.b16 %v1453, %v1452
        %v1468 = vpack.c.b16 %v1455, %v1454
        %v1469 = vpack.c.b16 %v1457, %v1456
        %v1470 = vpack.c.b16 %v1459, %v1458
        %v1471 = vpack.c.b16 %v1461, %v1460
        %v1472 = vpack.c.b16 %v1463, %v1462
        %v1473 = vpack.c.b16 %v1465, %v1464
        %v1474 = vrot.slane %v408, 4
        %v1475 = vrot.slane %v409, 4
        %v1477 = vsel %vm518, %v1466, 0
        %v1480 = vsel %vm518, %v1467, 0
        %v1483 = vsel %vm518, %v1468, 0
        %v1486 = vsel %vm518, %v1469, 0
        %v1489 = vsel %vm518, %v1470, 0
        %v1492 = vsel %vm518, %v1471, 0
        %v1495 = vsel %vm518, %v1472, 0
        %v1498 = vsel %vm518, %v1473, 0
        %v1501 = vsel %vm543, %v1474, 0
        %v1504 = vsel %vm543, %v1475, 0
        %1506 = vmatprep.subr.bf16.mxu0 %v1504
        %1507 = vmatpush1.bf16.msra.mxu0 %v1501
        %1508 = vmatprep.subr.bf16.mxu0 0
        %1509 = vmatpush1.bf16.msra.mxu0 0
        %1510 = vmatprep.subr.bf16.mxu0 0
        %1511 = vmatpush1.bf16.msra.mxu0 0
        %1512 = vmatprep.subr.bf16.mxu0 0
        %1513 = vmatpush1.bf16.msra.mxu0 0
        %1514 = vmatprep.subr.bf16.mxu0 0
        %1515 = vmatpush1.bf16.msra.mxu0 0
        %1516 = vmatprep.subr.bf16.mxu0 0
        %1517 = vmatpush1.bf16.msra.mxu0 0
        %1518 = vmatprep.subr.bf16.mxu0 0
        %1519 = vmatpush1.bf16.msra.mxu0 0
        %1520 = vmatprep.subr.bf16.mxu0 0
        %1521 = vmatpush1.bf16.msra.mxu0 0
        %1522 = vmatprep.subr.bf16.mxu0 0
        %1523 = vmatpush1.bf16.msra.mxu0 0
        %1524 = vmatprep.subr.bf16.mxu0 0
        %1525 = vmatpush1.bf16.msra.mxu0 0
        %1526 = vmatprep.subr.bf16.mxu0 0
        %1527 = vmatpush1.bf16.msra.mxu0 0
        %1528 = vmatprep.subr.bf16.mxu0 0
        %1529 = vmatpush1.bf16.msra.mxu0 0
        %1530 = vmatprep.subr.bf16.mxu0 0
        %1531 = vmatpush1.bf16.msra.mxu0 0
        %1532 = vmatprep.subr.bf16.mxu0 0
        %1533 = vmatpush1.bf16.msra.mxu0 0
        %1534 = vmatprep.subr.bf16.mxu0 0
        %1535 = vmatpush1.bf16.msra.mxu0 0
        %1536 = vmatprep.subr.bf16.mxu0 0
        %1537 = vmatpush1.bf16.msra.mxu0 0
        %1538 = vmatprep.mubr.bf16.mxu0 0
        %1539 = vmatmul.mubr.bf16.gmra.mrb[0].mxu0 %v1477
        %v1540 = vpop.f32.mrb[0].mxu0
        %v1541 = vadd.f32 %v445, %v1540
        %v1542 = vpop.f32.mrb[0].mxu0
        %v1543 = vadd.f32 %v445, %v1542
        %v1544 = vpop.f32.mrb[0].mxu0
        %v1545 = vadd.f32 %v446, %v1544
        %v1546 = vpop.f32.mrb[0].mxu0
        %v1547 = vadd.f32 %v446, %v1546
        %1548 = vmatprep.mubr.bf16.mxu0 0
        %1549 = vmatmul.mubr.bf16.gmra.mrb[0].mxu0 %v1480
        %v1550 = vpop.f32.mrb[0].mxu0
        %v1551 = vadd.f32 %v447, %v1550
        %v1552 = vpop.f32.mrb[0].mxu0
        %v1553 = vadd.f32 %v447, %v1552
        %v1554 = vpop.f32.mrb[0].mxu0
        %v1555 = vadd.f32 %v448, %v1554
        %v1556 = vpop.f32.mrb[0].mxu0
        %v1557 = vadd.f32 %v448, %v1556
        %1558 = vmatprep.mubr.bf16.mxu0 0
        %1559 = vmatmul.mubr.bf16.gmra.mrb[0].mxu0 %v1483
        %v1560 = vpop.f32.mrb[0].mxu0
        %v1561 = vadd.f32 %v449, %v1560
        %v1562 = vpop.f32.mrb[0].mxu0
        %v1563 = vadd.f32 %v449, %v1562
        %v1564 = vpop.f32.mrb[0].mxu0
        %v1565 = vadd.f32 %v450, %v1564
        %v1566 = vpop.f32.mrb[0].mxu0
        %v1567 = vadd.f32 %v450, %v1566
        %1568 = vmatprep.mubr.bf16.mxu0 0
        %1569 = vmatmul.mubr.bf16.gmra.mrb[0].mxu0 %v1486
        %v1570 = vpop.f32.mrb[0].mxu0
        %v1571 = vadd.f32 %v451, %v1570
        %v1572 = vpop.f32.mrb[0].mxu0
        %v1573 = vadd.f32 %v451, %v1572
        %v1574 = vpop.f32.mrb[0].mxu0
        %v1575 = vadd.f32 %v452, %v1574
        %v1576 = vpop.f32.mrb[0].mxu0
        %v1577 = vadd.f32 %v452, %v1576
        %1578 = vmatprep.mubr.bf16.mxu0 0
        %1579 = vmatmul.mubr.bf16.gmra.mrb[0].mxu0 %v1489
        %v1580 = vpop.f32.mrb[0].mxu0
        %v1581 = vadd.f32 %v453, %v1580
        %v1582 = vpop.f32.mrb[0].mxu0
        %v1583 = vadd.f32 %v453, %v1582
        %v1584 = vpop.f32.mrb[0].mxu0
        %v1585 = vadd.f32 %v454, %v1584
        %v1586 = vpop.f32.mrb[0].mxu0
        %v1587 = vadd.f32 %v454, %v1586
        %1588 = vmatprep.mubr.bf16.mxu0 0
        %1589 = vmatmul.mubr.bf16.gmra.mrb[0].mxu0 %v1492
        %v1590 = vpop.f32.mrb[0].mxu0
        %v1591 = vadd.f32 %v455, %v1590
        %v1592 = vpop.f32.mrb[0].mxu0
        %v1593 = vadd.f32 %v455, %v1592
        %v1594 = vpop.f32.mrb[0].mxu0
        %v1595 = vadd.f32 %v456, %v1594
        %v1596 = vpop.f32.mrb[0].mxu0
        %v1597 = vadd.f32 %v456, %v1596
        %1598 = vmatprep.mubr.bf16.mxu0 0
        %1599 = vmatmul.mubr.bf16.gmra.mrb[0].mxu0 %v1495
        %v1600 = vpop.f32.mrb[0].mxu0
        %v1601 = vadd.f32 %v457, %v1600
        %v1602 = vpop.f32.mrb[0].mxu0
        %v1603 = vadd.f32 %v457, %v1602
        %v1604 = vpop.f32.mrb[0].mxu0
        %v1605 = vadd.f32 %v458, %v1604
        %v1606 = vpop.f32.mrb[0].mxu0
        %v1607 = vadd.f32 %v458, %v1606
        %1608 = vmatprep.mubr.bf16.mxu0 0
        %1609 = vmatmul.mubr.bf16.gmra.mrb[0].mxu0 %v1498
        %v1610 = vpop.f32.mrb[0].mxu0
        %v1611 = vadd.f32 %v459, %v1610
        %v1612 = vpop.f32.mrb[0].mxu0
        %v1613 = vadd.f32 %v459, %v1612
        %v1614 = vpop.f32.mrb[0].mxu0
        %v1615 = vadd.f32 %v460, %v1614
        %v1616 = vpop.f32.mrb[0].mxu0
        %v1617 = vadd.f32 %v460, %v1616
        %1618 = vdwg.mxu0
        %v1619 = vmax.f32 %v1541, %v1551
        %v1620 = vmax.f32 %v1545, %v1555
        %v1621 = vmax.f32 %v1619, %v1561
        %v1622 = vmax.f32 %v1620, %v1565
        %v1623 = vmax.f32 %v1621, %v1571
        %v1624 = vmax.f32 %v1622, %v1575
        %v1625 = vmax.f32 %v1623, %v1581
        %v1626 = vmax.f32 %v1624, %v1585
        %v1627 = vmax.f32 %v1625, %v1591
        %v1628 = vmax.f32 %v1626, %v1595
        %v1629 = vmax.f32 %v1627, %v1601
        %v1630 = vmax.f32 %v1628, %v1605
        %v1631 = vmax.f32 %v1629, %v1611
        %v1632 = vmax.f32 %v1630, %v1615
        %v1633 = vmax.f32 %v1631, %v1632
        %v1634 = vrot.slane %v1633, 4
        %v1635 = vmax.f32 %v1633, %v1634
        %v1636 = vrot.slane %v1635, 2
        %v1637 = vmax.f32 %v1635, %v1636
        %v1638 = vrot.slane %v1637, 1
        %v1639 = vmax.f32 %v1637, %v1638
        %v1640 = vmax.f32 %v1543, %v1553
        %v1641 = vmax.f32 %v1547, %v1557
        %v1642 = vmax.f32 %v1640, %v1563
        %v1643 = vmax.f32 %v1641, %v1567
        %v1644 = vmax.f32 %v1642, %v1573
        %v1645 = vmax.f32 %v1643, %v1577
        %v1646 = vmax.f32 %v1644, %v1583
        %v1647 = vmax.f32 %v1645, %v1587
        %v1648 = vmax.f32 %v1646, %v1593
        %v1649 = vmax.f32 %v1647, %v1597
        %v1650 = vmax.f32 %v1648, %v1603
        %v1651 = vmax.f32 %v1649, %v1607
        %v1652 = vmax.f32 %v1650, %v1613
        %v1653 = vmax.f32 %v1651, %v1617
        %v1654 = vmax.f32 %v1652, %v1653
        %v1655 = vrot.slane %v1654, 4
        %v1656 = vmax.f32 %v1654, %v1655
        %v1657 = vrot.slane %v1656, 2
        %v1658 = vmax.f32 %v1656, %v1657
        %v1659 = vrot.slane %v1658, 1
        %v1660 = vmax.f32 %v1658, %v1659
        %v1661 = vsub.f32 %v1541, %v1639
        %v1662 = vsub.f32 %v1543, %v1660
        %v1663 = vsub.f32 %v1545, %v1639
        %v1664 = vsub.f32 %v1547, %v1660
        %v1665 = vsub.f32 %v1551, %v1639
        %v1666 = vsub.f32 %v1553, %v1660
        %v1667 = vsub.f32 %v1555, %v1639
        %v1668 = vsub.f32 %v1557, %v1660
        %v1669 = vsub.f32 %v1561, %v1639
        %v1670 = vsub.f32 %v1563, %v1660
        %v1671 = vsub.f32 %v1565, %v1639
        %v1672 = vsub.f32 %v1567, %v1660
        %v1673 = vsub.f32 %v1571, %v1639
        %v1674 = vsub.f32 %v1573, %v1660
        %v1675 = vsub.f32 %v1575, %v1639
        %v1676 = vsub.f32 %v1577, %v1660
        %v1677 = vsub.f32 %v1581, %v1639
        %v1678 = vsub.f32 %v1583, %v1660
        %v1679 = vsub.f32 %v1585, %v1639
        %v1680 = vsub.f32 %v1587, %v1660
        %v1681 = vsub.f32 %v1591, %v1639
        %v1682 = vsub.f32 %v1593, %v1660
        %v1683 = vsub.f32 %v1595, %v1639
        %v1684 = vsub.f32 %v1597, %v1660
        %v1685 = vsub.f32 %v1601, %v1639
        %v1686 = vsub.f32 %v1603, %v1660
        %v1687 = vsub.f32 %v1605, %v1639
        %v1688 = vsub.f32 %v1607, %v1660
        %v1689 = vsub.f32 %v1611, %v1639
        %v1690 = vsub.f32 %v1613, %v1660
        %v1691 = vsub.f32 %v1615, %v1639
        %v1692 = vsub.f32 %v1617, %v1660
        %v1693 = vmul.f32 %v1661, 1.442695
        %v1694 = vpow.pop %v1693
        %v1695 = vmul.f32 %v1662, 1.442695
        %v1696 = vpow.pop %v1695
        %v1697 = vmul.f32 %v1663, 1.442695
        %v1698 = vpow.pop %v1697
        %v1699 = vmul.f32 %v1664, 1.442695
        %v1700 = vpow.pop %v1699
        %v1701 = vmul.f32 %v1665, 1.442695
        %v1702 = vpow.pop %v1701
        %v1703 = vmul.f32 %v1666, 1.442695
        %v1704 = vpow.pop %v1703
        %v1705 = vmul.f32 %v1667, 1.442695
        %v1706 = vpow.pop %v1705
        %v1707 = vmul.f32 %v1668, 1.442695
        %v1708 = vpow.pop %v1707
        %v1709 = vmul.f32 %v1669, 1.442695
        %v1710 = vpow.pop %v1709
        %v1711 = vmul.f32 %v1670, 1.442695
        %v1712 = vpow.pop %v1711
        %v1713 = vmul.f32 %v1671, 1.442695
        %v1714 = vpow.pop %v1713
        %v1715 = vmul.f32 %v1672, 1.442695
        %v1716 = vpow.pop %v1715
        %v1717 = vmul.f32 %v1673, 1.442695
        %v1718 = vpow.pop %v1717
        %v1719 = vmul.f32 %v1674, 1.442695
        %v1720 = vpow.pop %v1719
        %v1721 = vmul.f32 %v1675, 1.442695
        %v1722 = vpow.pop %v1721
        %v1723 = vmul.f32 %v1676, 1.442695
        %v1724 = vpow.pop %v1723
        %v1725 = vmul.f32 %v1677, 1.442695
        %v1726 = vpow.pop %v1725
        %v1727 = vmul.f32 %v1678, 1.442695
        %v1728 = vpow.pop %v1727
        %v1729 = vmul.f32 %v1679, 1.442695
        %v1730 = vpow.pop %v1729
        %v1731 = vmul.f32 %v1680, 1.442695
        %v1732 = vpow.pop %v1731
        %v1733 = vmul.f32 %v1681, 1.442695
        %v1734 = vpow.pop %v1733
        %v1735 = vmul.f32 %v1682, 1.442695
        %v1736 = vpow.pop %v1735
        %v1737 = vmul.f32 %v1683, 1.442695
        %v1738 = vpow.pop %v1737
        %v1739 = vmul.f32 %v1684, 1.442695
        %v1740 = vpow.pop %v1739
        %v1741 = vmul.f32 %v1685, 1.442695
        %v1742 = vpow.pop %v1741
        %v1743 = vmul.f32 %v1686, 1.442695
        %v1744 = vpow.pop %v1743
        %v1745 = vmul.f32 %v1687, 1.442695
        %v1746 = vpow.pop %v1745
        %v1747 = vmul.f32 %v1688, 1.442695
        %v1748 = vpow.pop %v1747
        %v1749 = vmul.f32 %v1689, 1.442695
        %v1750 = vpow.pop %v1749
        %v1751 = vmul.f32 %v1690, 1.442695
        %v1752 = vpow.pop %v1751
        %v1753 = vmul.f32 %v1691, 1.442695
        %v1754 = vpow.pop %v1753
        %v1755 = vmul.f32 %v1692, 1.442695
        %v1756 = vpow.pop %v1755
        %v1757 = vadd.f32 %v1694, %v1698
        %v1758 = vadd.f32 %v1757, %v1702
        %v1759 = vadd.f32 %v1758, %v1706
        %v1760 = vadd.f32 %v1759, %v1710
        %v1761 = vadd.f32 %v1760, %v1714
        %v1762 = vadd.f32 %v1761, %v1718
        %v1763 = vadd.f32 %v1762, %v1722
        %v1764 = vadd.f32 %v1763, %v1726
        %v1765 = vadd.f32 %v1764, %v1730
        %v1766 = vadd.f32 %v1765, %v1734
        %v1767 = vadd.f32 %v1766, %v1738
        %v1768 = vadd.f32 %v1767, %v1742
        %v1769 = vadd.f32 %v1768, %v1746
        %v1770 = vadd.f32 %v1769, %v1750
        %v1771 = vadd.f32 %v1770, %v1754
        %v1772 = vrot.slane %v1771, 4
        %v1773 = vadd.f32 %v1771, %v1772
        %v1774 = vrot.slane %v1773, 2
        %v1775 = vadd.f32 %v1773, %v1774
        %v1776 = vrot.slane %v1775, 1
        %v1777 = vadd.f32 %v1775, %v1776
        %v1778 = vadd.f32 %v1696, %v1700
        %v1779 = vadd.f32 %v1778, %v1704
        %v1780 = vadd.f32 %v1779, %v1708
        %v1781 = vadd.f32 %v1780, %v1712
        %v1782 = vadd.f32 %v1781, %v1716
        %v1783 = vadd.f32 %v1782, %v1720
        %v1784 = vadd.f32 %v1783, %v1724
        %v1785 = vadd.f32 %v1784, %v1728
        %v1786 = vadd.f32 %v1785, %v1732
        %v1787 = vadd.f32 %v1786, %v1736
        %v1788 = vadd.f32 %v1787, %v1740
        %v1789 = vadd.f32 %v1788, %v1744
        %v1790 = vadd.f32 %v1789, %v1748
        %v1791 = vadd.f32 %v1790, %v1752
        %v1792 = vadd.f32 %v1791, %v1756
        %v1793 = vrot.slane %v1792, 4
        %v1794 = vadd.f32 %v1792, %v1793
        %v1795 = vrot.slane %v1794, 2
        %v1796 = vadd.f32 %v1794, %v1795
        %v1797 = vrot.slane %v1796, 1
        %v1798 = vadd.f32 %v1796, %v1797
        %v1799 = vrcp.pop %v1777
        %v1800 = vrcp.pop %v1798
        %v1801 = vmul.f32 %v1694, %v1799
        %v1802 = vmul.f32 %v1696, %v1800
        %v1803 = vmul.f32 %v1698, %v1799
        %v1804 = vmul.f32 %v1700, %v1800
        %v1805 = vmul.f32 %v1702, %v1799
        %v1806 = vmul.f32 %v1704, %v1800
        %v1807 = vmul.f32 %v1706, %v1799
        %v1808 = vmul.f32 %v1708, %v1800
        %v1809 = vmul.f32 %v1710, %v1799
        %v1810 = vmul.f32 %v1712, %v1800
        %v1811 = vmul.f32 %v1714, %v1799
        %v1812 = vmul.f32 %v1716, %v1800
        %v1813 = vmul.f32 %v1718, %v1799
        %v1814 = vmul.f32 %v1720, %v1800
        %v1815 = vmul.f32 %v1722, %v1799
        %v1816 = vmul.f32 %v1724, %v1800
        %v1817 = vmul.f32 %v1726, %v1799
        %v1818 = vmul.f32 %v1728, %v1800
        %v1819 = vmul.f32 %v1730, %v1799
        %v1820 = vmul.f32 %v1732, %v1800
        %v1821 = vmul.f32 %v1734, %v1799
        %v1822 = vmul.f32 %v1736, %v1800
        %v1823 = vmul.f32 %v1738, %v1799
        %v1824 = vmul.f32 %v1740, %v1800
        %v1825 = vmul.f32 %v1742, %v1799
        %v1826 = vmul.f32 %v1744, %v1800
        %v1827 = vmul.f32 %v1746, %v1799
        %v1828 = vmul.f32 %v1748, %v1800
        %v1829 = vmul.f32 %v1750, %v1799
        %v1830 = vmul.f32 %v1752, %v1800
        %v1831 = vmul.f32 %v1754, %v1799
        %v1832 = vmul.f32 %v1756, %v1800
        %v1833 = vpack.c.bf16 %v1803, %v1801
        %v1834 = vpack.c.bf16 %v1804, %v1802
        %v1835 = vpack.c.bf16 %v1807, %v1805
        %v1836 = vpack.c.bf16 %v1808, %v1806
        %v1837 = vpack.c.bf16 %v1811, %v1809
        %v1838 = vpack.c.bf16 %v1812, %v1810
        %v1839 = vpack.c.bf16 %v1815, %v1813
        %v1840 = vpack.c.bf16 %v1816, %v1814
        %v1841 = vpack.c.bf16 %v1819, %v1817
        %v1842 = vpack.c.bf16 %v1820, %v1818
        %v1843 = vpack.c.bf16 %v1823, %v1821
        %v1844 = vpack.c.bf16 %v1824, %v1822
        %v1845 = vpack.c.bf16 %v1827, %v1825
        %v1846 = vpack.c.bf16 %v1828, %v1826
        %v1847 = vpack.c.bf16 %v1831, %v1829
        %v1848 = vpack.c.bf16 %v1832, %v1830
        %1849 = vmatprep.subr.bf16.mxu0 %v1834
        %1850 = vmatpush1.bf16.msra.mxu0 %v1833
        %1851 = vmatprep.subr.bf16.mxu0 %v1836
        %1852 = vmatpush1.bf16.msra.mxu0 %v1835
        %1853 = vmatprep.subr.bf16.mxu0 %v1838
        %1854 = vmatpush1.bf16.msra.mxu0 %v1837
        %1855 = vmatprep.subr.bf16.mxu0 %v1840
        %1856 = vmatpush1.bf16.msra.mxu0 %v1839
        %1857 = vmatprep.subr.bf16.mxu0 %v1842
        %1858 = vmatpush1.bf16.msra.mxu0 %v1841
        %1859 = vmatprep.subr.bf16.mxu0 %v1844
        %1860 = vmatpush1.bf16.msra.mxu0 %v1843
        %1861 = vmatprep.subr.bf16.mxu0 %v1846
        %1862 = vmatpush1.bf16.msra.mxu0 %v1845
        %1863 = vmatprep.subr.bf16.mxu0 %v1848
        %1864 = vmatpush1.bf16.msra.mxu0 %v1847
        %1865 = vmatprep.subr.bf16.mxu0 0
        %1866 = vmatpush1.bf16.msra.mxu0 0
        %1867 = vmatprep.subr.bf16.mxu0 0
        %1868 = vmatpush1.bf16.msra.mxu0 0
        %1869 = vmatprep.subr.bf16.mxu0 0
        %1870 = vmatpush1.bf16.msra.mxu0 0
        %1871 = vmatprep.subr.bf16.mxu0 0
        %1872 = vmatpush1.bf16.msra.mxu0 0
        %1873 = vmatprep.subr.bf16.mxu0 0
        %1874 = vmatpush1.bf16.msra.mxu0 0
        %1875 = vmatprep.subr.bf16.mxu0 0
        %1876 = vmatpush1.bf16.msra.mxu0 0
        %1877 = vmatprep.subr.bf16.mxu0 0
        %1878 = vmatpush1.bf16.msra.mxu0 0
        %1879 = vmatprep.subr.bf16.mxu0 0
        %1880 = vmatpush1.bf16.msra.mxu0 0
        %1881 = vmatprep.mubr.bf16.mxu0 0
        %1882 = vmatmul.mubr.bf16.gmra.mrb[0].mxu0 %v1433
        %v1883 = vpop.f32.mrb[0].mxu0
        %v1884 = vadd.f32 0.0, %v1883
        %v1885 = vpop.f32.mrb[0].mxu0
        %v1886 = vadd.f32 0.0, %v1885
        %v1887 = vpop.f32.mrb[0].mxu0
        %v1888 = vpop.f32.mrb[0].mxu0
        %1889 = vdwg.mxu0
        %v1890 = vpack.c.bf16 %v1884, %v1884
        %v1891 = vpack.c.bf16 %v1886, %v1886
        %s1892 = scalar_lea.vmem %s314, 192
        %v1893 = vld [vmem:[%s1892] sm:$0xf]
        %v1894 = vld [vmem:[%s1892 + $0x4] sm:$0xf]
        %v1895 = vld [vmem:[%s1892 + $0x8] sm:$0xf]
        %v1896 = vld [vmem:[%s1892 + $0xc] sm:$0xf]
        %v1897 = vld [vmem:[%s1892 + $0x10] sm:$0xf]
        %v1898 = vld [vmem:[%s1892 + $0x14] sm:$0xf]
        %v1899 = vld [vmem:[%s1892 + $0x18] sm:$0xf]
        %v1900 = vld [vmem:[%s1892 + $0x1c] sm:$0xf]
        %v1901 = vld [vmem:[%s1892 + $0x20] sm:$0xf]
        %v1902 = vld [vmem:[%s1892 + $0x24] sm:$0xf]
        %v1903 = vld [vmem:[%s1892 + $0x28] sm:$0xf]
        %v1904 = vld [vmem:[%s1892 + $0x2c] sm:$0xf]
        %v1905 = vld [vmem:[%s1892 + $0x30] sm:$0xf]
        %v1906 = vld [vmem:[%s1892 + $0x34] sm:$0xf]
        %v1907 = vld [vmem:[%s1892 + $0x38] sm:$0xf]
        %v1908 = vld [vmem:[%s1892 + $0x3c] sm:$0xf]
        %s1909 = scalar_lea.vmem %s319, 6
        %v1910 = vld [vmem:[%s1909] sm:$0x3]
        %v1927 = vunpack.c.l.b16 %v1893
        %v1928 = vunpack.c.l.b16 %v1894
        %v1929 = vunpack.c.l.b16 %v1895
        %v1930 = vunpack.c.l.b16 %v1896
        %v1931 = vunpack.c.l.b16 %v1897
        %v1932 = vunpack.c.l.b16 %v1898
        %v1933 = vunpack.c.l.b16 %v1899
        %v1934 = vunpack.c.l.b16 %v1900
        %v1935 = vunpack.c.l.b16 %v1901
        %v1936 = vunpack.c.l.b16 %v1902
        %v1937 = vunpack.c.l.b16 %v1903
        %v1938 = vunpack.c.l.b16 %v1904
        %v1939 = vunpack.c.l.b16 %v1905
        %v1940 = vunpack.c.l.b16 %v1906
        %v1941 = vunpack.c.l.b16 %v1907
        %v1942 = vunpack.c.l.b16 %v1908
        %v1943 = vpack.c.b16 %v1928, %v1927
        %v1944 = vpack.c.b16 %v1930, %v1929
        %v1945 = vpack.c.b16 %v1932, %v1931
        %v1946 = vpack.c.b16 %v1934, %v1933
        %v1947 = vpack.c.b16 %v1936, %v1935
        %v1948 = vpack.c.b16 %v1938, %v1937
        %v1949 = vpack.c.b16 %v1940, %v1939
        %v1950 = vpack.c.b16 %v1942, %v1941
        %v1951 = vrot.slane %v408, 6
        %v1952 = vrot.slane %v409, 6
        %v1954 = vsel %vm518, %v1943, 0
        %v1957 = vsel %vm518, %v1944, 0
        %v1960 = vsel %vm518, %v1945, 0
        %v1963 = vsel %vm518, %v1946, 0
        %v1966 = vsel %vm518, %v1947, 0
        %v1969 = vsel %vm518, %v1948, 0
        %v1972 = vsel %vm518, %v1949, 0
        %v1975 = vsel %vm518, %v1950, 0
        %v1978 = vsel %vm543, %v1951, 0
        %v1981 = vsel %vm543, %v1952, 0
        %1983 = vmatprep.subr.bf16.mxu0 %v1981
        %1984 = vmatpush1.bf16.msra.mxu0 %v1978
        %1985 = vmatprep.subr.bf16.mxu0 0
        %1986 = vmatpush1.bf16.msra.mxu0 0
        %1987 = vmatprep.subr.bf16.mxu0 0
        %1988 = vmatpush1.bf16.msra.mxu0 0
        %1989 = vmatprep.subr.bf16.mxu0 0
        %1990 = vmatpush1.bf16.msra.mxu0 0
        %1991 = vmatprep.subr.bf16.mxu0 0
        %1992 = vmatpush1.bf16.msra.mxu0 0
        %1993 = vmatprep.subr.bf16.mxu0 0
        %1994 = vmatpush1.bf16.msra.mxu0 0
        %1995 = vmatprep.subr.bf16.mxu0 0
        %1996 = vmatpush1.bf16.msra.mxu0 0
        %1997 = vmatprep.subr.bf16.mxu0 0
        %1998 = vmatpush1.bf16.msra.mxu0 0
        %1999 = vmatprep.subr.bf16.mxu0 0
        %2000 = vmatpush1.bf16.msra.mxu0 0
        %2001 = vmatprep.subr.bf16.mxu0 0
        %2002 = vmatpush1.bf16.msra.mxu0 0
        %2003 = vmatprep.subr.bf16.mxu0 0
        %2004 = vmatpush1.bf16.msra.mxu0 0
        %2005 = vmatprep.subr.bf16.mxu0 0
        %2006 = vmatpush1.bf16.msra.mxu0 0
        %2007 = vmatprep.subr.bf16.mxu0 0
        %2008 = vmatpush1.bf16.msra.mxu0 0
        %2009 = vmatprep.subr.bf16.mxu0 0
        %2010 = vmatpush1.bf16.msra.mxu0 0
        %2011 = vmatprep.subr.bf16.mxu0 0
        %2012 = vmatpush1.bf16.msra.mxu0 0
        %2013 = vmatprep.subr.bf16.mxu0 0
        %2014 = vmatpush1.bf16.msra.mxu0 0
        %2015 = vmatprep.mubr.bf16.mxu0 0
        %2016 = vmatmul.mubr.bf16.gmra.mrb[0].mxu0 %v1954
        %v2017 = vpop.f32.mrb[0].mxu0
        %v2018 = vadd.f32 %v445, %v2017
        %v2019 = vpop.f32.mrb[0].mxu0
        %v2020 = vadd.f32 %v445, %v2019
        %v2021 = vpop.f32.mrb[0].mxu0
        %v2022 = vadd.f32 %v446, %v2021
        %v2023 = vpop.f32.mrb[0].mxu0
        %v2024 = vadd.f32 %v446, %v2023
        %2025 = vmatprep.mubr.bf16.mxu0 0
        %2026 = vmatmul.mubr.bf16.gmra.mrb[0].mxu0 %v1957
        %v2027 = vpop.f32.mrb[0].mxu0
        %v2028 = vadd.f32 %v447, %v2027
        %v2029 = vpop.f32.mrb[0].mxu0
        %v2030 = vadd.f32 %v447, %v2029
        %v2031 = vpop.f32.mrb[0].mxu0
        %v2032 = vadd.f32 %v448, %v2031
        %v2033 = vpop.f32.mrb[0].mxu0
        %v2034 = vadd.f32 %v448, %v2033
        %2035 = vmatprep.mubr.bf16.mxu0 0
        %2036 = vmatmul.mubr.bf16.gmra.mrb[0].mxu0 %v1960
        %v2037 = vpop.f32.mrb[0].mxu0
        %v2038 = vadd.f32 %v449, %v2037
        %v2039 = vpop.f32.mrb[0].mxu0
        %v2040 = vadd.f32 %v449, %v2039
        %v2041 = vpop.f32.mrb[0].mxu0
        %v2042 = vadd.f32 %v450, %v2041
        %v2043 = vpop.f32.mrb[0].mxu0
        %v2044 = vadd.f32 %v450, %v2043
        %2045 = vmatprep.mubr.bf16.mxu0 0
        %2046 = vmatmul.mubr.bf16.gmra.mrb[0].mxu0 %v1963
        %v2047 = vpop.f32.mrb[0].mxu0
        %v2048 = vadd.f32 %v451, %v2047
        %v2049 = vpop.f32.mrb[0].mxu0
        %v2050 = vadd.f32 %v451, %v2049
        %v2051 = vpop.f32.mrb[0].mxu0
        %v2052 = vadd.f32 %v452, %v2051
        %v2053 = vpop.f32.mrb[0].mxu0
        %v2054 = vadd.f32 %v452, %v2053
        %2055 = vmatprep.mubr.bf16.mxu0 0
        %2056 = vmatmul.mubr.bf16.gmra.mrb[0].mxu0 %v1966
        %v2057 = vpop.f32.mrb[0].mxu0
        %v2058 = vadd.f32 %v453, %v2057
        %v2059 = vpop.f32.mrb[0].mxu0
        %v2060 = vadd.f32 %v453, %v2059
        %v2061 = vpop.f32.mrb[0].mxu0
        %v2062 = vadd.f32 %v454, %v2061
        %v2063 = vpop.f32.mrb[0].mxu0
        %v2064 = vadd.f32 %v454, %v2063
        %2065 = vmatprep.mubr.bf16.mxu0 0
        %2066 = vmatmul.mubr.bf16.gmra.mrb[0].mxu0 %v1969
        %v2067 = vpop.f32.mrb[0].mxu0
        %v2068 = vadd.f32 %v455, %v2067
        %v2069 = vpop.f32.mrb[0].mxu0
        %v2070 = vadd.f32 %v455, %v2069
        %v2071 = vpop.f32.mrb[0].mxu0
        %v2072 = vadd.f32 %v456, %v2071
        %v2073 = vpop.f32.mrb[0].mxu0
        %v2074 = vadd.f32 %v456, %v2073
        %2075 = vmatprep.mubr.bf16.mxu0 0
        %2076 = vmatmul.mubr.bf16.gmra.mrb[0].mxu0 %v1972
        %v2077 = vpop.f32.mrb[0].mxu0
        %v2078 = vadd.f32 %v457, %v2077
        %v2079 = vpop.f32.mrb[0].mxu0
        %v2080 = vadd.f32 %v457, %v2079
        %v2081 = vpop.f32.mrb[0].mxu0
        %v2082 = vadd.f32 %v458, %v2081
        %v2083 = vpop.f32.mrb[0].mxu0
        %v2084 = vadd.f32 %v458, %v2083
        %2085 = vmatprep.mubr.bf16.mxu0 0
        %2086 = vmatmul.mubr.bf16.gmra.mrb[0].mxu0 %v1975
        %v2087 = vpop.f32.mrb[0].mxu0
        %v2088 = vadd.f32 %v459, %v2087
        %v2089 = vpop.f32.mrb[0].mxu0
        %v2090 = vadd.f32 %v459, %v2089
        %v2091 = vpop.f32.mrb[0].mxu0
        %v2092 = vadd.f32 %v460, %v2091
        %v2093 = vpop.f32.mrb[0].mxu0
        %v2094 = vadd.f32 %v460, %v2093
        %2095 = vdwg.mxu0
        %v2096 = vmax.f32 %v2018, %v2028
        %v2097 = vmax.f32 %v2022, %v2032
        %v2098 = vmax.f32 %v2096, %v2038
        %v2099 = vmax.f32 %v2097, %v2042
        %v2100 = vmax.f32 %v2098, %v2048
        %v2101 = vmax.f32 %v2099, %v2052
        %v2102 = vmax.f32 %v2100, %v2058
        %v2103 = vmax.f32 %v2101, %v2062
        %v2104 = vmax.f32 %v2102, %v2068
        %v2105 = vmax.f32 %v2103, %v2072
        %v2106 = vmax.f32 %v2104, %v2078
        %v2107 = vmax.f32 %v2105, %v2082
        %v2108 = vmax.f32 %v2106, %v2088
        %v2109 = vmax.f32 %v2107, %v2092
        %v2110 = vmax.f32 %v2108, %v2109
        %v2111 = vrot.slane %v2110, 4
        %v2112 = vmax.f32 %v2110, %v2111
        %v2113 = vrot.slane %v2112, 2
        %v2114 = vmax.f32 %v2112, %v2113
        %v2115 = vrot.slane %v2114, 1
        %v2116 = vmax.f32 %v2114, %v2115
        %v2117 = vmax.f32 %v2020, %v2030
        %v2118 = vmax.f32 %v2024, %v2034
        %v2119 = vmax.f32 %v2117, %v2040
        %v2120 = vmax.f32 %v2118, %v2044
        %v2121 = vmax.f32 %v2119, %v2050
        %v2122 = vmax.f32 %v2120, %v2054
        %v2123 = vmax.f32 %v2121, %v2060
        %v2124 = vmax.f32 %v2122, %v2064
        %v2125 = vmax.f32 %v2123, %v2070
        %v2126 = vmax.f32 %v2124, %v2074
        %v2127 = vmax.f32 %v2125, %v2080
        %v2128 = vmax.f32 %v2126, %v2084
        %v2129 = vmax.f32 %v2127, %v2090
        %v2130 = vmax.f32 %v2128, %v2094
        %v2131 = vmax.f32 %v2129, %v2130
        %v2132 = vrot.slane %v2131, 4
        %v2133 = vmax.f32 %v2131, %v2132
        %v2134 = vrot.slane %v2133, 2
        %v2135 = vmax.f32 %v2133, %v2134
        %v2136 = vrot.slane %v2135, 1
        %v2137 = vmax.f32 %v2135, %v2136
        %v2138 = vsub.f32 %v2018, %v2116
        %v2139 = vsub.f32 %v2020, %v2137
        %v2140 = vsub.f32 %v2022, %v2116
        %v2141 = vsub.f32 %v2024, %v2137
        %v2142 = vsub.f32 %v2028, %v2116
        %v2143 = vsub.f32 %v2030, %v2137
        %v2144 = vsub.f32 %v2032, %v2116
        %v2145 = vsub.f32 %v2034, %v2137
        %v2146 = vsub.f32 %v2038, %v2116
        %v2147 = vsub.f32 %v2040, %v2137
        %v2148 = vsub.f32 %v2042, %v2116
        %v2149 = vsub.f32 %v2044, %v2137
        %v2150 = vsub.f32 %v2048, %v2116
        %v2151 = vsub.f32 %v2050, %v2137
        %v2152 = vsub.f32 %v2052, %v2116
        %v2153 = vsub.f32 %v2054, %v2137
        %v2154 = vsub.f32 %v2058, %v2116
        %v2155 = vsub.f32 %v2060, %v2137
        %v2156 = vsub.f32 %v2062, %v2116
        %v2157 = vsub.f32 %v2064, %v2137
        %v2158 = vsub.f32 %v2068, %v2116
        %v2159 = vsub.f32 %v2070, %v2137
        %v2160 = vsub.f32 %v2072, %v2116
        %v2161 = vsub.f32 %v2074, %v2137
        %v2162 = vsub.f32 %v2078, %v2116
        %v2163 = vsub.f32 %v2080, %v2137
        %v2164 = vsub.f32 %v2082, %v2116
        %v2165 = vsub.f32 %v2084, %v2137
        %v2166 = vsub.f32 %v2088, %v2116
        %v2167 = vsub.f32 %v2090, %v2137
        %v2168 = vsub.f32 %v2092, %v2116
        %v2169 = vsub.f32 %v2094, %v2137
        %v2170 = vmul.f32 %v2138, 1.442695
        %v2171 = vpow.pop %v2170
        %v2172 = vmul.f32 %v2139, 1.442695
        %v2173 = vpow.pop %v2172
        %v2174 = vmul.f32 %v2140, 1.442695
        %v2175 = vpow.pop %v2174
        %v2176 = vmul.f32 %v2141, 1.442695
        %v2177 = vpow.pop %v2176
        %v2178 = vmul.f32 %v2142, 1.442695
        %v2179 = vpow.pop %v2178
        %v2180 = vmul.f32 %v2143, 1.442695
        %v2181 = vpow.pop %v2180
        %v2182 = vmul.f32 %v2144, 1.442695
        %v2183 = vpow.pop %v2182
        %v2184 = vmul.f32 %v2145, 1.442695
        %v2185 = vpow.pop %v2184
        %v2186 = vmul.f32 %v2146, 1.442695
        %v2187 = vpow.pop %v2186
        %v2188 = vmul.f32 %v2147, 1.442695
        %v2189 = vpow.pop %v2188
        %v2190 = vmul.f32 %v2148, 1.442695
        %v2191 = vpow.pop %v2190
        %v2192 = vmul.f32 %v2149, 1.442695
        %v2193 = vpow.pop %v2192
        %v2194 = vmul.f32 %v2150, 1.442695
        %v2195 = vpow.pop %v2194
        %v2196 = vmul.f32 %v2151, 1.442695
        %v2197 = vpow.pop %v2196
        %v2198 = vmul.f32 %v2152, 1.442695
        %v2199 = vpow.pop %v2198
        %v2200 = vmul.f32 %v2153, 1.442695
        %v2201 = vpow.pop %v2200
        %v2202 = vmul.f32 %v2154, 1.442695
        %v2203 = vpow.pop %v2202
        %v2204 = vmul.f32 %v2155, 1.442695
        %v2205 = vpow.pop %v2204
        %v2206 = vmul.f32 %v2156, 1.442695
        %v2207 = vpow.pop %v2206
        %v2208 = vmul.f32 %v2157, 1.442695
        %v2209 = vpow.pop %v2208
        %v2210 = vmul.f32 %v2158, 1.442695
        %v2211 = vpow.pop %v2210
        %v2212 = vmul.f32 %v2159, 1.442695
        %v2213 = vpow.pop %v2212
        %v2214 = vmul.f32 %v2160, 1.442695
        %v2215 = vpow.pop %v2214
        %v2216 = vmul.f32 %v2161, 1.442695
        %v2217 = vpow.pop %v2216
        %v2218 = vmul.f32 %v2162, 1.442695
        %v2219 = vpow.pop %v2218
        %v2220 = vmul.f32 %v2163, 1.442695
        %v2221 = vpow.pop %v2220
        %v2222 = vmul.f32 %v2164, 1.442695
        %v2223 = vpow.pop %v2222
        %v2224 = vmul.f32 %v2165, 1.442695
        %v2225 = vpow.pop %v2224
        %v2226 = vmul.f32 %v2166, 1.442695
        %v2227 = vpow.pop %v2226
        %v2228 = vmul.f32 %v2167, 1.442695
        %v2229 = vpow.pop %v2228
        %v2230 = vmul.f32 %v2168, 1.442695
        %v2231 = vpow.pop %v2230
        %v2232 = vmul.f32 %v2169, 1.442695
        %v2233 = vpow.pop %v2232
        %v2234 = vadd.f32 %v2171, %v2175
        %v2235 = vadd.f32 %v2234, %v2179
        %v2236 = vadd.f32 %v2235, %v2183
        %v2237 = vadd.f32 %v2236, %v2187
        %v2238 = vadd.f32 %v2237, %v2191
        %v2239 = vadd.f32 %v2238, %v2195
        %v2240 = vadd.f32 %v2239, %v2199
        %v2241 = vadd.f32 %v2240, %v2203
        %v2242 = vadd.f32 %v2241, %v2207
        %v2243 = vadd.f32 %v2242, %v2211
        %v2244 = vadd.f32 %v2243, %v2215
        %v2245 = vadd.f32 %v2244, %v2219
        %v2246 = vadd.f32 %v2245, %v2223
        %v2247 = vadd.f32 %v2246, %v2227
        %v2248 = vadd.f32 %v2247, %v2231
        %v2249 = vrot.slane %v2248, 4
        %v2250 = vadd.f32 %v2248, %v2249
        %v2251 = vrot.slane %v2250, 2
        %v2252 = vadd.f32 %v2250, %v2251
        %v2253 = vrot.slane %v2252, 1
        %v2254 = vadd.f32 %v2252, %v2253
        %v2255 = vadd.f32 %v2173, %v2177
        %v2256 = vadd.f32 %v2255, %v2181
        %v2257 = vadd.f32 %v2256, %v2185
        %v2258 = vadd.f32 %v2257, %v2189
        %v2259 = vadd.f32 %v2258, %v2193
        %v2260 = vadd.f32 %v2259, %v2197
        %v2261 = vadd.f32 %v2260, %v2201
        %v2262 = vadd.f32 %v2261, %v2205
        %v2263 = vadd.f32 %v2262, %v2209
        %v2264 = vadd.f32 %v2263, %v2213
        %v2265 = vadd.f32 %v2264, %v2217
        %v2266 = vadd.f32 %v2265, %v2221
        %v2267 = vadd.f32 %v2266, %v2225
        %v2268 = vadd.f32 %v2267, %v2229
        %v2269 = vadd.f32 %v2268, %v2233
        %v2270 = vrot.slane %v2269, 4
        %v2271 = vadd.f32 %v2269, %v2270
        %v2272 = vrot.slane %v2271, 2
        %v2273 = vadd.f32 %v2271, %v2272
        %v2274 = vrot.slane %v2273, 1
        %v2275 = vadd.f32 %v2273, %v2274
        %v2276 = vrcp.pop %v2254
        %v2277 = vrcp.pop %v2275
        %v2278 = vmul.f32 %v2171, %v2276
        %v2279 = vmul.f32 %v2173, %v2277
        %v2280 = vmul.f32 %v2175, %v2276
        %v2281 = vmul.f32 %v2177, %v2277
        %v2282 = vmul.f32 %v2179, %v2276
        %v2283 = vmul.f32 %v2181, %v2277
        %v2284 = vmul.f32 %v2183, %v2276
        %v2285 = vmul.f32 %v2185, %v2277
        %v2286 = vmul.f32 %v2187, %v2276
        %v2287 = vmul.f32 %v2189, %v2277
        %v2288 = vmul.f32 %v2191, %v2276
        %v2289 = vmul.f32 %v2193, %v2277
        %v2290 = vmul.f32 %v2195, %v2276
        %v2291 = vmul.f32 %v2197, %v2277
        %v2292 = vmul.f32 %v2199, %v2276
        %v2293 = vmul.f32 %v2201, %v2277
        %v2294 = vmul.f32 %v2203, %v2276
        %v2295 = vmul.f32 %v2205, %v2277
        %v2296 = vmul.f32 %v2207, %v2276
        %v2297 = vmul.f32 %v2209, %v2277
        %v2298 = vmul.f32 %v2211, %v2276
        %v2299 = vmul.f32 %v2213, %v2277
        %v2300 = vmul.f32 %v2215, %v2276
        %v2301 = vmul.f32 %v2217, %v2277
        %v2302 = vmul.f32 %v2219, %v2276
        %v2303 = vmul.f32 %v2221, %v2277
        %v2304 = vmul.f32 %v2223, %v2276
        %v2305 = vmul.f32 %v2225, %v2277
        %v2306 = vmul.f32 %v2227, %v2276
        %v2307 = vmul.f32 %v2229, %v2277
        %v2308 = vmul.f32 %v2231, %v2276
        %v2309 = vmul.f32 %v2233, %v2277
        %v2310 = vpack.c.bf16 %v2280, %v2278
        %v2311 = vpack.c.bf16 %v2281, %v2279
        %v2312 = vpack.c.bf16 %v2284, %v2282
        %v2313 = vpack.c.bf16 %v2285, %v2283
        %v2314 = vpack.c.bf16 %v2288, %v2286
        %v2315 = vpack.c.bf16 %v2289, %v2287
        %v2316 = vpack.c.bf16 %v2292, %v2290
        %v2317 = vpack.c.bf16 %v2293, %v2291
        %v2318 = vpack.c.bf16 %v2296, %v2294
        %v2319 = vpack.c.bf16 %v2297, %v2295
        %v2320 = vpack.c.bf16 %v2300, %v2298
        %v2321 = vpack.c.bf16 %v2301, %v2299
        %v2322 = vpack.c.bf16 %v2304, %v2302
        %v2323 = vpack.c.bf16 %v2305, %v2303
        %v2324 = vpack.c.bf16 %v2308, %v2306
        %v2325 = vpack.c.bf16 %v2309, %v2307
        %2326 = vmatprep.subr.bf16.mxu0 %v2311
        %2327 = vmatpush1.bf16.msra.mxu0 %v2310
        %2328 = vmatprep.subr.bf16.mxu0 %v2313
        %2329 = vmatpush1.bf16.msra.mxu0 %v2312
        %2330 = vmatprep.subr.bf16.mxu0 %v2315
        %2331 = vmatpush1.bf16.msra.mxu0 %v2314
        %2332 = vmatprep.subr.bf16.mxu0 %v2317
        %2333 = vmatpush1.bf16.msra.mxu0 %v2316
        %2334 = vmatprep.subr.bf16.mxu0 %v2319
        %2335 = vmatpush1.bf16.msra.mxu0 %v2318
        %2336 = vmatprep.subr.bf16.mxu0 %v2321
        %2337 = vmatpush1.bf16.msra.mxu0 %v2320
        %2338 = vmatprep.subr.bf16.mxu0 %v2323
        %2339 = vmatpush1.bf16.msra.mxu0 %v2322
        %2340 = vmatprep.subr.bf16.mxu0 %v2325
        %2341 = vmatpush1.bf16.msra.mxu0 %v2324
        %2342 = vmatprep.subr.bf16.mxu0 0
        %2343 = vmatpush1.bf16.msra.mxu0 0
        %2344 = vmatprep.subr.bf16.mxu0 0
        %2345 = vmatpush1.bf16.msra.mxu0 0
        %2346 = vmatprep.subr.bf16.mxu0 0
        %2347 = vmatpush1.bf16.msra.mxu0 0
        %2348 = vmatprep.subr.bf16.mxu0 0
        %2349 = vmatpush1.bf16.msra.mxu0 0
        %2350 = vmatprep.subr.bf16.mxu0 0
        %2351 = vmatpush1.bf16.msra.mxu0 0
        %2352 = vmatprep.subr.bf16.mxu0 0
        %2353 = vmatpush1.bf16.msra.mxu0 0
        %2354 = vmatprep.subr.bf16.mxu0 0
        %2355 = vmatpush1.bf16.msra.mxu0 0
        %2356 = vmatprep.subr.bf16.mxu0 0
        %2357 = vmatpush1.bf16.msra.mxu0 0
        %2358 = vmatprep.mubr.bf16.mxu0 0
        %2359 = vmatmul.mubr.bf16.gmra.mrb[0].mxu0 %v1910
        %v2360 = vpop.f32.mrb[0].mxu0
        %v2361 = vadd.f32 0.0, %v2360
        %v2362 = vpop.f32.mrb[0].mxu0
        %v2363 = vadd.f32 0.0, %v2362
        %v2364 = vpop.f32.mrb[0].mxu0
        %v2365 = vpop.f32.mrb[0].mxu0
        %2366 = vdwg.mxu0
        %v2367 = vpack.c.bf16 %v2361, %v2361
        %v2368 = vpack.c.bf16 %v2363, %v2363
        %s2369 = scalar_lea.vmem %s314, 256
        %v2370 = vld [vmem:[%s2369] sm:$0xf]
        %v2371 = vld [vmem:[%s2369 + $0x4] sm:$0xf]
        %v2372 = vld [vmem:[%s2369 + $0x8] sm:$0xf]
        %v2373 = vld [vmem:[%s2369 + $0xc] sm:$0xf]
        %v2374 = vld [vmem:[%s2369 + $0x10] sm:$0xf]
        %v2375 = vld [vmem:[%s2369 + $0x14] sm:$0xf]
        %v2376 = vld [vmem:[%s2369 + $0x18] sm:$0xf]
        %v2377 = vld [vmem:[%s2369 + $0x1c] sm:$0xf]
        %v2378 = vld [vmem:[%s2369 + $0x20] sm:$0xf]
        %v2379 = vld [vmem:[%s2369 + $0x24] sm:$0xf]
        %v2380 = vld [vmem:[%s2369 + $0x28] sm:$0xf]
        %v2381 = vld [vmem:[%s2369 + $0x2c] sm:$0xf]
        %v2382 = vld [vmem:[%s2369 + $0x30] sm:$0xf]
        %v2383 = vld [vmem:[%s2369 + $0x34] sm:$0xf]
        %v2384 = vld [vmem:[%s2369 + $0x38] sm:$0xf]
        %v2385 = vld [vmem:[%s2369 + $0x3c] sm:$0xf]
        %s2386 = scalar_lea.vmem %s319, 8
        %v2387 = vld [vmem:[%s2386] sm:$0x3]
        %v2404 = vunpack.c.l.b16 %v2370
        %v2405 = vunpack.c.l.b16 %v2371
        %v2406 = vunpack.c.l.b16 %v2372
        %v2407 = vunpack.c.l.b16 %v2373
        %v2408 = vunpack.c.l.b16 %v2374
        %v2409 = vunpack.c.l.b16 %v2375
        %v2410 = vunpack.c.l.b16 %v2376
        %v2411 = vunpack.c.l.b16 %v2377
        %v2412 = vunpack.c.l.b16 %v2378
        %v2413 = vunpack.c.l.b16 %v2379
        %v2414 = vunpack.c.l.b16 %v2380
        %v2415 = vunpack.c.l.b16 %v2381
        %v2416 = vunpack.c.l.b16 %v2382
        %v2417 = vunpack.c.l.b16 %v2383
        %v2418 = vunpack.c.l.b16 %v2384
        %v2419 = vunpack.c.l.b16 %v2385
        %v2420 = vpack.c.b16 %v2405, %v2404
        %v2421 = vpack.c.b16 %v2407, %v2406
        %v2422 = vpack.c.b16 %v2409, %v2408
        %v2423 = vpack.c.b16 %v2411, %v2410
        %v2424 = vpack.c.b16 %v2413, %v2412
        %v2425 = vpack.c.b16 %v2415, %v2414
        %v2426 = vpack.c.b16 %v2417, %v2416
        %v2427 = vpack.c.b16 %v2419, %v2418
        %v2429 = vsel %vm518, %v2420, 0
        %v2432 = vsel %vm518, %v2421, 0
        %v2435 = vsel %vm518, %v2422, 0
        %v2438 = vsel %vm518, %v2423, 0
        %v2441 = vsel %vm518, %v2424, 0
        %v2444 = vsel %vm518, %v2425, 0
        %v2447 = vsel %vm518, %v2426, 0
        %v2450 = vsel %vm518, %v2427, 0
        %v2453 = vsel %vm543, %v410, 0
        %v2456 = vsel %vm543, %v411, 0
        %2458 = vmatprep.subr.bf16.mxu0 %v2456
        %2459 = vmatpush1.bf16.msra.mxu0 %v2453
        %2460 = vmatprep.subr.bf16.mxu0 0
        %2461 = vmatpush1.bf16.msra.mxu0 0
        %2462 = vmatprep.subr.bf16.mxu0 0
        %2463 = vmatpush1.bf16.msra.mxu0 0
        %2464 = vmatprep.subr.bf16.mxu0 0
        %2465 = vmatpush1.bf16.msra.mxu0 0
        %2466 = vmatprep.subr.bf16.mxu0 0
        %2467 = vmatpush1.bf16.msra.mxu0 0
        %2468 = vmatprep.subr.bf16.mxu0 0
        %2469 = vmatpush1.bf16.msra.mxu0 0
        %2470 = vmatprep.subr.bf16.mxu0 0
        %2471 = vmatpush1.bf16.msra.mxu0 0
        %2472 = vmatprep.subr.bf16.mxu0 0
        %2473 = vmatpush1.bf16.msra.mxu0 0
        %2474 = vmatprep.subr.bf16.mxu0 0
        %2475 = vmatpush1.bf16.msra.mxu0 0
        %2476 = vmatprep.subr.bf16.mxu0 0
        %2477 = vmatpush1.bf16.msra.mxu0 0
        %2478 = vmatprep.subr.bf16.mxu0 0
        %2479 = vmatpush1.bf16.msra.mxu0 0
        %2480 = vmatprep.subr.bf16.mxu0 0
        %2481 = vmatpush1.bf16.msra.mxu0 0
        %2482 = vmatprep.subr.bf16.mxu0 0
        %2483 = vmatpush1.bf16.msra.mxu0 0
        %2484 = vmatprep.subr.bf16.mxu0 0
        %2485 = vmatpush1.bf16.msra.mxu0 0
        %2486 = vmatprep.subr.bf16.mxu0 0
        %2487 = vmatpush1.bf16.msra.mxu0 0
        %2488 = vmatprep.subr.bf16.mxu0 0
        %2489 = vmatpush1.bf16.msra.mxu0 0
        %2490 = vmatprep.mubr.bf16.mxu0 0
        %2491 = vmatmul.mubr.bf16.gmra.mrb[0].mxu0 %v2429
        %v2492 = vpop.f32.mrb[0].mxu0
        %v2493 = vadd.f32 %v445, %v2492
        %v2494 = vpop.f32.mrb[0].mxu0
        %v2495 = vadd.f32 %v445, %v2494
        %v2496 = vpop.f32.mrb[0].mxu0
        %v2497 = vadd.f32 %v446, %v2496
        %v2498 = vpop.f32.mrb[0].mxu0
        %v2499 = vadd.f32 %v446, %v2498
        %2500 = vmatprep.mubr.bf16.mxu0 0
        %2501 = vmatmul.mubr.bf16.gmra.mrb[0].mxu0 %v2432
        %v2502 = vpop.f32.mrb[0].mxu0
        %v2503 = vadd.f32 %v447, %v2502
        %v2504 = vpop.f32.mrb[0].mxu0
        %v2505 = vadd.f32 %v447, %v2504
        %v2506 = vpop.f32.mrb[0].mxu0
        %v2507 = vadd.f32 %v448, %v2506
        %v2508 = vpop.f32.mrb[0].mxu0
        %v2509 = vadd.f32 %v448, %v2508
        %2510 = vmatprep.mubr.bf16.mxu0 0
        %2511 = vmatmul.mubr.bf16.gmra.mrb[0].mxu0 %v2435
        %v2512 = vpop.f32.mrb[0].mxu0
        %v2513 = vadd.f32 %v449, %v2512
        %v2514 = vpop.f32.mrb[0].mxu0
        %v2515 = vadd.f32 %v449, %v2514
        %v2516 = vpop.f32.mrb[0].mxu0
        %v2517 = vadd.f32 %v450, %v2516
        %v2518 = vpop.f32.mrb[0].mxu0
        %v2519 = vadd.f32 %v450, %v2518
        %2520 = vmatprep.mubr.bf16.mxu0 0
        %2521 = vmatmul.mubr.bf16.gmra.mrb[0].mxu0 %v2438
        %v2522 = vpop.f32.mrb[0].mxu0
        %v2523 = vadd.f32 %v451, %v2522
        %v2524 = vpop.f32.mrb[0].mxu0
        %v2525 = vadd.f32 %v451, %v2524
        %v2526 = vpop.f32.mrb[0].mxu0
        %v2527 = vadd.f32 %v452, %v2526
        %v2528 = vpop.f32.mrb[0].mxu0
        %v2529 = vadd.f32 %v452, %v2528
        %2530 = vmatprep.mubr.bf16.mxu0 0
        %2531 = vmatmul.mubr.bf16.gmra.mrb[0].mxu0 %v2441
        %v2532 = vpop.f32.mrb[0].mxu0
        %v2533 = vadd.f32 %v453, %v2532
        %v2534 = vpop.f32.mrb[0].mxu0
        %v2535 = vadd.f32 %v453, %v2534
        %v2536 = vpop.f32.mrb[0].mxu0
        %v2537 = vadd.f32 %v454, %v2536
        %v2538 = vpop.f32.mrb[0].mxu0
        %v2539 = vadd.f32 %v454, %v2538
        %2540 = vmatprep.mubr.bf16.mxu0 0
        %2541 = vmatmul.mubr.bf16.gmra.mrb[0].mxu0 %v2444
        %v2542 = vpop.f32.mrb[0].mxu0
        %v2543 = vadd.f32 %v455, %v2542
        %v2544 = vpop.f32.mrb[0].mxu0
        %v2545 = vadd.f32 %v455, %v2544
        %v2546 = vpop.f32.mrb[0].mxu0
        %v2547 = vadd.f32 %v456, %v2546
        %v2548 = vpop.f32.mrb[0].mxu0
        %v2549 = vadd.f32 %v456, %v2548
        %2550 = vmatprep.mubr.bf16.mxu0 0
        %2551 = vmatmul.mubr.bf16.gmra.mrb[0].mxu0 %v2447
        %v2552 = vpop.f32.mrb[0].mxu0
        %v2553 = vadd.f32 %v457, %v2552
        %v2554 = vpop.f32.mrb[0].mxu0
        %v2555 = vadd.f32 %v457, %v2554
        %v2556 = vpop.f32.mrb[0].mxu0
        %v2557 = vadd.f32 %v458, %v2556
        %v2558 = vpop.f32.mrb[0].mxu0
        %v2559 = vadd.f32 %v458, %v2558
        %2560 = vmatprep.mubr.bf16.mxu0 0
        %2561 = vmatmul.mubr.bf16.gmra.mrb[0].mxu0 %v2450
        %v2562 = vpop.f32.mrb[0].mxu0
        %v2563 = vadd.f32 %v459, %v2562
        %v2564 = vpop.f32.mrb[0].mxu0
        %v2565 = vadd.f32 %v459, %v2564
        %v2566 = vpop.f32.mrb[0].mxu0
        %v2567 = vadd.f32 %v460, %v2566
        %v2568 = vpop.f32.mrb[0].mxu0
        %v2569 = vadd.f32 %v460, %v2568
        %2570 = vdwg.mxu0
        %v2571 = vmax.f32 %v2493, %v2503
        %v2572 = vmax.f32 %v2497, %v2507
        %v2573 = vmax.f32 %v2571, %v2513
        %v2574 = vmax.f32 %v2572, %v2517
        %v2575 = vmax.f32 %v2573, %v2523
        %v2576 = vmax.f32 %v2574, %v2527
        %v2577 = vmax.f32 %v2575, %v2533
        %v2578 = vmax.f32 %v2576, %v2537
        %v2579 = vmax.f32 %v2577, %v2543
        %v2580 = vmax.f32 %v2578, %v2547
        %v2581 = vmax.f32 %v2579, %v2553
        %v2582 = vmax.f32 %v2580, %v2557
        %v2583 = vmax.f32 %v2581, %v2563
        %v2584 = vmax.f32 %v2582, %v2567
        %v2585 = vmax.f32 %v2583, %v2584
        %v2586 = vrot.slane %v2585, 4
        %v2587 = vmax.f32 %v2585, %v2586
        %v2588 = vrot.slane %v2587, 2
        %v2589 = vmax.f32 %v2587, %v2588
        %v2590 = vrot.slane %v2589, 1
        %v2591 = vmax.f32 %v2589, %v2590
        %v2592 = vmax.f32 %v2495, %v2505
        %v2593 = vmax.f32 %v2499, %v2509
        %v2594 = vmax.f32 %v2592, %v2515
        %v2595 = vmax.f32 %v2593, %v2519
        %v2596 = vmax.f32 %v2594, %v2525
        %v2597 = vmax.f32 %v2595, %v2529
        %v2598 = vmax.f32 %v2596, %v2535
        %v2599 = vmax.f32 %v2597, %v2539
        %v2600 = vmax.f32 %v2598, %v2545
        %v2601 = vmax.f32 %v2599, %v2549
        %v2602 = vmax.f32 %v2600, %v2555
        %v2603 = vmax.f32 %v2601, %v2559
        %v2604 = vmax.f32 %v2602, %v2565
        %v2605 = vmax.f32 %v2603, %v2569
        %v2606 = vmax.f32 %v2604, %v2605
        %v2607 = vrot.slane %v2606, 4
        %v2608 = vmax.f32 %v2606, %v2607
        %v2609 = vrot.slane %v2608, 2
        %v2610 = vmax.f32 %v2608, %v2609
        %v2611 = vrot.slane %v2610, 1
        %v2612 = vmax.f32 %v2610, %v2611
        %v2613 = vsub.f32 %v2493, %v2591
        %v2614 = vsub.f32 %v2495, %v2612
        %v2615 = vsub.f32 %v2497, %v2591
        %v2616 = vsub.f32 %v2499, %v2612
        %v2617 = vsub.f32 %v2503, %v2591
        %v2618 = vsub.f32 %v2505, %v2612
        %v2619 = vsub.f32 %v2507, %v2591
        %v2620 = vsub.f32 %v2509, %v2612
        %v2621 = vsub.f32 %v2513, %v2591
        %v2622 = vsub.f32 %v2515, %v2612
        %v2623 = vsub.f32 %v2517, %v2591
        %v2624 = vsub.f32 %v2519, %v2612
        %v2625 = vsub.f32 %v2523, %v2591
        %v2626 = vsub.f32 %v2525, %v2612
        %v2627 = vsub.f32 %v2527, %v2591
        %v2628 = vsub.f32 %v2529, %v2612
        %v2629 = vsub.f32 %v2533, %v2591
        %v2630 = vsub.f32 %v2535, %v2612
        %v2631 = vsub.f32 %v2537, %v2591
        %v2632 = vsub.f32 %v2539, %v2612
        %v2633 = vsub.f32 %v2543, %v2591
        %v2634 = vsub.f32 %v2545, %v2612
        %v2635 = vsub.f32 %v2547, %v2591
        %v2636 = vsub.f32 %v2549, %v2612
        %v2637 = vsub.f32 %v2553, %v2591
        %v2638 = vsub.f32 %v2555, %v2612
        %v2639 = vsub.f32 %v2557, %v2591
        %v2640 = vsub.f32 %v2559, %v2612
        %v2641 = vsub.f32 %v2563, %v2591
        %v2642 = vsub.f32 %v2565, %v2612
        %v2643 = vsub.f32 %v2567, %v2591
        %v2644 = vsub.f32 %v2569, %v2612
        %v2645 = vmul.f32 %v2613, 1.442695
        %v2646 = vpow.pop %v2645
        %v2647 = vmul.f32 %v2614, 1.442695
        %v2648 = vpow.pop %v2647
        %v2649 = vmul.f32 %v2615, 1.442695
        %v2650 = vpow.pop %v2649
        %v2651 = vmul.f32 %v2616, 1.442695
        %v2652 = vpow.pop %v2651
        %v2653 = vmul.f32 %v2617, 1.442695
        %v2654 = vpow.pop %v2653
        %v2655 = vmul.f32 %v2618, 1.442695
        %v2656 = vpow.pop %v2655
        %v2657 = vmul.f32 %v2619, 1.442695
        %v2658 = vpow.pop %v2657
        %v2659 = vmul.f32 %v2620, 1.442695
        %v2660 = vpow.pop %v2659
        %v2661 = vmul.f32 %v2621, 1.442695
        %v2662 = vpow.pop %v2661
        %v2663 = vmul.f32 %v2622, 1.442695
        %v2664 = vpow.pop %v2663
        %v2665 = vmul.f32 %v2623, 1.442695
        %v2666 = vpow.pop %v2665
        %v2667 = vmul.f32 %v2624, 1.442695
        %v2668 = vpow.pop %v2667
        %v2669 = vmul.f32 %v2625, 1.442695
        %v2670 = vpow.pop %v2669
        %v2671 = vmul.f32 %v2626, 1.442695
        %v2672 = vpow.pop %v2671
        %v2673 = vmul.f32 %v2627, 1.442695
        %v2674 = vpow.pop %v2673
        %v2675 = vmul.f32 %v2628, 1.442695
        %v2676 = vpow.pop %v2675
        %v2677 = vmul.f32 %v2629, 1.442695
        %v2678 = vpow.pop %v2677
        %v2679 = vmul.f32 %v2630, 1.442695
        %v2680 = vpow.pop %v2679
        %v2681 = vmul.f32 %v2631, 1.442695
        %v2682 = vpow.pop %v2681
        %v2683 = vmul.f32 %v2632, 1.442695
        %v2684 = vpow.pop %v2683
        %v2685 = vmul.f32 %v2633, 1.442695
        %v2686 = vpow.pop %v2685
        %v2687 = vmul.f32 %v2634, 1.442695
        %v2688 = vpow.pop %v2687
        %v2689 = vmul.f32 %v2635, 1.442695
        %v2690 = vpow.pop %v2689
        %v2691 = vmul.f32 %v2636, 1.442695
        %v2692 = vpow.pop %v2691
        %v2693 = vmul.f32 %v2637, 1.442695
        %v2694 = vpow.pop %v2693
        %v2695 = vmul.f32 %v2638, 1.442695
        %v2696 = vpow.pop %v2695
        %v2697 = vmul.f32 %v2639, 1.442695
        %v2698 = vpow.pop %v2697
        %v2699 = vmul.f32 %v2640, 1.442695
        %v2700 = vpow.pop %v2699
        %v2701 = vmul.f32 %v2641, 1.442695
        %v2702 = vpow.pop %v2701
        %v2703 = vmul.f32 %v2642, 1.442695
        %v2704 = vpow.pop %v2703
        %v2705 = vmul.f32 %v2643, 1.442695
        %v2706 = vpow.pop %v2705
        %v2707 = vmul.f32 %v2644, 1.442695
        %v2708 = vpow.pop %v2707
        %v2709 = vadd.f32 %v2646, %v2650
        %v2710 = vadd.f32 %v2709, %v2654
        %v2711 = vadd.f32 %v2710, %v2658
        %v2712 = vadd.f32 %v2711, %v2662
        %v2713 = vadd.f32 %v2712, %v2666
        %v2714 = vadd.f32 %v2713, %v2670
        %v2715 = vadd.f32 %v2714, %v2674
        %v2716 = vadd.f32 %v2715, %v2678
        %v2717 = vadd.f32 %v2716, %v2682
        %v2718 = vadd.f32 %v2717, %v2686
        %v2719 = vadd.f32 %v2718, %v2690
        %v2720 = vadd.f32 %v2719, %v2694
        %v2721 = vadd.f32 %v2720, %v2698
        %v2722 = vadd.f32 %v2721, %v2702
        %v2723 = vadd.f32 %v2722, %v2706
        %v2724 = vrot.slane %v2723, 4
        %v2725 = vadd.f32 %v2723, %v2724
        %v2726 = vrot.slane %v2725, 2
        %v2727 = vadd.f32 %v2725, %v2726
        %v2728 = vrot.slane %v2727, 1
        %v2729 = vadd.f32 %v2727, %v2728
        %v2730 = vadd.f32 %v2648, %v2652
        %v2731 = vadd.f32 %v2730, %v2656
        %v2732 = vadd.f32 %v2731, %v2660
        %v2733 = vadd.f32 %v2732, %v2664
        %v2734 = vadd.f32 %v2733, %v2668
        %v2735 = vadd.f32 %v2734, %v2672
        %v2736 = vadd.f32 %v2735, %v2676
        %v2737 = vadd.f32 %v2736, %v2680
        %v2738 = vadd.f32 %v2737, %v2684
        %v2739 = vadd.f32 %v2738, %v2688
        %v2740 = vadd.f32 %v2739, %v2692
        %v2741 = vadd.f32 %v2740, %v2696
        %v2742 = vadd.f32 %v2741, %v2700
        %v2743 = vadd.f32 %v2742, %v2704
        %v2744 = vadd.f32 %v2743, %v2708
        %v2745 = vrot.slane %v2744, 4
        %v2746 = vadd.f32 %v2744, %v2745
        %v2747 = vrot.slane %v2746, 2
        %v2748 = vadd.f32 %v2746, %v2747
        %v2749 = vrot.slane %v2748, 1
        %v2750 = vadd.f32 %v2748, %v2749
        %v2751 = vrcp.pop %v2729
        %v2752 = vrcp.pop %v2750
        %v2753 = vmul.f32 %v2646, %v2751
        %v2754 = vmul.f32 %v2648, %v2752
        %v2755 = vmul.f32 %v2650, %v2751
        %v2756 = vmul.f32 %v2652, %v2752
        %v2757 = vmul.f32 %v2654, %v2751
        %v2758 = vmul.f32 %v2656, %v2752
        %v2759 = vmul.f32 %v2658, %v2751
        %v2760 = vmul.f32 %v2660, %v2752
        %v2761 = vmul.f32 %v2662, %v2751
        %v2762 = vmul.f32 %v2664, %v2752
        %v2763 = vmul.f32 %v2666, %v2751
        %v2764 = vmul.f32 %v2668, %v2752
        %v2765 = vmul.f32 %v2670, %v2751
        %v2766 = vmul.f32 %v2672, %v2752
        %v2767 = vmul.f32 %v2674, %v2751
        %v2768 = vmul.f32 %v2676, %v2752
        %v2769 = vmul.f32 %v2678, %v2751
        %v2770 = vmul.f32 %v2680, %v2752
        %v2771 = vmul.f32 %v2682, %v2751
        %v2772 = vmul.f32 %v2684, %v2752
        %v2773 = vmul.f32 %v2686, %v2751
        %v2774 = vmul.f32 %v2688, %v2752
        %v2775 = vmul.f32 %v2690, %v2751
        %v2776 = vmul.f32 %v2692, %v2752
        %v2777 = vmul.f32 %v2694, %v2751
        %v2778 = vmul.f32 %v2696, %v2752
        %v2779 = vmul.f32 %v2698, %v2751
        %v2780 = vmul.f32 %v2700, %v2752
        %v2781 = vmul.f32 %v2702, %v2751
        %v2782 = vmul.f32 %v2704, %v2752
        %v2783 = vmul.f32 %v2706, %v2751
        %v2784 = vmul.f32 %v2708, %v2752
        %v2785 = vpack.c.bf16 %v2755, %v2753
        %v2786 = vpack.c.bf16 %v2756, %v2754
        %v2787 = vpack.c.bf16 %v2759, %v2757
        %v2788 = vpack.c.bf16 %v2760, %v2758
        %v2789 = vpack.c.bf16 %v2763, %v2761
        %v2790 = vpack.c.bf16 %v2764, %v2762
        %v2791 = vpack.c.bf16 %v2767, %v2765
        %v2792 = vpack.c.bf16 %v2768, %v2766
        %v2793 = vpack.c.bf16 %v2771, %v2769
        %v2794 = vpack.c.bf16 %v2772, %v2770
        %v2795 = vpack.c.bf16 %v2775, %v2773
        %v2796 = vpack.c.bf16 %v2776, %v2774
        %v2797 = vpack.c.bf16 %v2779, %v2777
        %v2798 = vpack.c.bf16 %v2780, %v2778
        %v2799 = vpack.c.bf16 %v2783, %v2781
        %v2800 = vpack.c.bf16 %v2784, %v2782
        %2801 = vmatprep.subr.bf16.mxu0 %v2786
        %2802 = vmatpush1.bf16.msra.mxu0 %v2785
        %2803 = vmatprep.subr.bf16.mxu0 %v2788
        %2804 = vmatpush1.bf16.msra.mxu0 %v2787
        %2805 = vmatprep.subr.bf16.mxu0 %v2790
        %2806 = vmatpush1.bf16.msra.mxu0 %v2789
        %2807 = vmatprep.subr.bf16.mxu0 %v2792
        %2808 = vmatpush1.bf16.msra.mxu0 %v2791
        %2809 = vmatprep.subr.bf16.mxu0 %v2794
        %2810 = vmatpush1.bf16.msra.mxu0 %v2793
        %2811 = vmatprep.subr.bf16.mxu0 %v2796
        %2812 = vmatpush1.bf16.msra.mxu0 %v2795
        %2813 = vmatprep.subr.bf16.mxu0 %v2798
        %2814 = vmatpush1.bf16.msra.mxu0 %v2797
        %2815 = vmatprep.subr.bf16.mxu0 %v2800
        %2816 = vmatpush1.bf16.msra.mxu0 %v2799
        %2817 = vmatprep.subr.bf16.mxu0 0
        %2818 = vmatpush1.bf16.msra.mxu0 0
        %2819 = vmatprep.subr.bf16.mxu0 0
        %2820 = vmatpush1.bf16.msra.mxu0 0
        %2821 = vmatprep.subr.bf16.mxu0 0
        %2822 = vmatpush1.bf16.msra.mxu0 0
        %2823 = vmatprep.subr.bf16.mxu0 0
        %2824 = vmatpush1.bf16.msra.mxu0 0
        %2825 = vmatprep.subr.bf16.mxu0 0
        %2826 = vmatpush1.bf16.msra.mxu0 0
        %2827 = vmatprep.subr.bf16.mxu0 0
        %2828 = vmatpush1.bf16.msra.mxu0 0
        %2829 = vmatprep.subr.bf16.mxu0 0
        %2830 = vmatpush1.bf16.msra.mxu0 0
        %2831 = vmatprep.subr.bf16.mxu0 0
        %2832 = vmatpush1.bf16.msra.mxu0 0
        %2833 = vmatprep.mubr.bf16.mxu0 0
        %2834 = vmatmul.mubr.bf16.gmra.mrb[0].mxu0 %v2387
        %v2835 = vpop.f32.mrb[0].mxu0
        %v2836 = vadd.f32 0.0, %v2835
        %v2837 = vpop.f32.mrb[0].mxu0
        %v2838 = vadd.f32 0.0, %v2837
        %v2839 = vpop.f32.mrb[0].mxu0
        %v2840 = vpop.f32.mrb[0].mxu0
        %2841 = vdwg.mxu0
        %v2842 = vpack.c.bf16 %v2836, %v2836
        %v2843 = vpack.c.bf16 %v2838, %v2838
        %s2844 = scalar_lea.vmem %s314, 320
        %v2845 = vld [vmem:[%s2844] sm:$0xf]
        %v2846 = vld [vmem:[%s2844 + $0x4] sm:$0xf]
        %v2847 = vld [vmem:[%s2844 + $0x8] sm:$0xf]
        %v2848 = vld [vmem:[%s2844 + $0xc] sm:$0xf]
        %v2849 = vld [vmem:[%s2844 + $0x10] sm:$0xf]
        %v2850 = vld [vmem:[%s2844 + $0x14] sm:$0xf]
        %v2851 = vld [vmem:[%s2844 + $0x18] sm:$0xf]
        %v2852 = vld [vmem:[%s2844 + $0x1c] sm:$0xf]
        %v2853 = vld [vmem:[%s2844 + $0x20] sm:$0xf]
        %v2854 = vld [vmem:[%s2844 + $0x24] sm:$0xf]
        %v2855 = vld [vmem:[%s2844 + $0x28] sm:$0xf]
        %v2856 = vld [vmem:[%s2844 + $0x2c] sm:$0xf]
        %v2857 = vld [vmem:[%s2844 + $0x30] sm:$0xf]
        %v2858 = vld [vmem:[%s2844 + $0x34] sm:$0xf]
        %v2859 = vld [vmem:[%s2844 + $0x38] sm:$0xf]
        %v2860 = vld [vmem:[%s2844 + $0x3c] sm:$0xf]
        %s2861 = scalar_lea.vmem %s319, 10
        %v2862 = vld [vmem:[%s2861] sm:$0x3]
        %v2879 = vunpack.c.l.b16 %v2845
        %v2880 = vunpack.c.l.b16 %v2846
        %v2881 = vunpack.c.l.b16 %v2847
        %v2882 = vunpack.c.l.b16 %v2848
        %v2883 = vunpack.c.l.b16 %v2849
        %v2884 = vunpack.c.l.b16 %v2850
        %v2885 = vunpack.c.l.b16 %v2851
        %v2886 = vunpack.c.l.b16 %v2852
        %v2887 = vunpack.c.l.b16 %v2853
        %v2888 = vunpack.c.l.b16 %v2854
        %v2889 = vunpack.c.l.b16 %v2855
        %v2890 = vunpack.c.l.b16 %v2856
        %v2891 = vunpack.c.l.b16 %v2857
        %v2892 = vunpack.c.l.b16 %v2858
        %v2893 = vunpack.c.l.b16 %v2859
        %v2894 = vunpack.c.l.b16 %v2860
        %v2895 = vpack.c.b16 %v2880, %v2879
        %v2896 = vpack.c.b16 %v2882, %v2881
        %v2897 = vpack.c.b16 %v2884, %v2883
        %v2898 = vpack.c.b16 %v2886, %v2885
        %v2899 = vpack.c.b16 %v2888, %v2887
        %v2900 = vpack.c.b16 %v2890, %v2889
        %v2901 = vpack.c.b16 %v2892, %v2891
        %v2902 = vpack.c.b16 %v2894, %v2893
        %v2905 = vrot.slane %v410, 2
        %v2906 = vrot.slane %v411, 2
        %v2908 = vsel %vm518, %v2895, 0
        %v2911 = vsel %vm518, %v2896, 0
        %v2914 = vsel %vm518, %v2897, 0
        %v2917 = vsel %vm518, %v2898, 0
        %v2920 = vsel %vm518, %v2899, 0
        %v2923 = vsel %vm518, %v2900, 0
        %v2926 = vsel %vm518, %v2901, 0
        %v2929 = vsel %vm518, %v2902, 0
        %v2932 = vsel %vm543, %v2905, 0
        %v2935 = vsel %vm543, %v2906, 0
        %2937 = vmatprep.subr.bf16.mxu0 %v2935
        %2938 = vmatpush1.bf16.msra.mxu0 %v2932
        %2939 = vmatprep.subr.bf16.mxu0 0
        %2940 = vmatpush1.bf16.msra.mxu0 0
        %2941 = vmatprep.subr.bf16.mxu0 0
        %2942 = vmatpush1.bf16.msra.mxu0 0
        %2943 = vmatprep.subr.bf16.mxu0 0
        %2944 = vmatpush1.bf16.msra.mxu0 0
        %2945 = vmatprep.subr.bf16.mxu0 0
        %2946 = vmatpush1.bf16.msra.mxu0 0
        %2947 = vmatprep.subr.bf16.mxu0 0
        %2948 = vmatpush1.bf16.msra.mxu0 0
        %2949 = vmatprep.subr.bf16.mxu0 0
        %2950 = vmatpush1.bf16.msra.mxu0 0
        %2951 = vmatprep.subr.bf16.mxu0 0
        %2952 = vmatpush1.bf16.msra.mxu0 0
        %2953 = vmatprep.subr.bf16.mxu0 0
        %2954 = vmatpush1.bf16.msra.mxu0 0
        %2955 = vmatprep.subr.bf16.mxu0 0
        %2956 = vmatpush1.bf16.msra.mxu0 0
        %2957 = vmatprep.subr.bf16.mxu0 0
        %2958 = vmatpush1.bf16.msra.mxu0 0
        %2959 = vmatprep.subr.bf16.mxu0 0
        %2960 = vmatpush1.bf16.msra.mxu0 0
        %2961 = vmatprep.subr.bf16.mxu0 0
        %2962 = vmatpush1.bf16.msra.mxu0 0
        %2963 = vmatprep.subr.bf16.mxu0 0
        %2964 = vmatpush1.bf16.msra.mxu0 0
        %2965 = vmatprep.subr.bf16.mxu0 0
        %2966 = vmatpush1.bf16.msra.mxu0 0
        %2967 = vmatprep.subr.bf16.mxu0 0
        %2968 = vmatpush1.bf16.msra.mxu0 0
        %2969 = vmatprep.mubr.bf16.mxu0 0
        %2970 = vmatmul.mubr.bf16.gmra.mrb[0].mxu0 %v2908
        %v2971 = vpop.f32.mrb[0].mxu0
        %v2972 = vadd.f32 %v445, %v2971
        %v2973 = vpop.f32.mrb[0].mxu0
        %v2974 = vadd.f32 %v445, %v2973
        %v2975 = vpop.f32.mrb[0].mxu0
        %v2976 = vadd.f32 %v446, %v2975
        %v2977 = vpop.f32.mrb[0].mxu0
        %v2978 = vadd.f32 %v446, %v2977
        %2979 = vmatprep.mubr.bf16.mxu0 0
        %2980 = vmatmul.mubr.bf16.gmra.mrb[0].mxu0 %v2911
        %v2981 = vpop.f32.mrb[0].mxu0
        %v2982 = vadd.f32 %v447, %v2981
        %v2983 = vpop.f32.mrb[0].mxu0
        %v2984 = vadd.f32 %v447, %v2983
        %v2985 = vpop.f32.mrb[0].mxu0
        %v2986 = vadd.f32 %v448, %v2985
        %v2987 = vpop.f32.mrb[0].mxu0
        %v2988 = vadd.f32 %v448, %v2987
        %2989 = vmatprep.mubr.bf16.mxu0 0
        %2990 = vmatmul.mubr.bf16.gmra.mrb[0].mxu0 %v2914
        %v2991 = vpop.f32.mrb[0].mxu0
        %v2992 = vadd.f32 %v449, %v2991
        %v2993 = vpop.f32.mrb[0].mxu0
        %v2994 = vadd.f32 %v449, %v2993
        %v2995 = vpop.f32.mrb[0].mxu0
        %v2996 = vadd.f32 %v450, %v2995
        %v2997 = vpop.f32.mrb[0].mxu0
        %v2998 = vadd.f32 %v450, %v2997
        %2999 = vmatprep.mubr.bf16.mxu0 0
        %3000 = vmatmul.mubr.bf16.gmra.mrb[0].mxu0 %v2917
        %v3001 = vpop.f32.mrb[0].mxu0
        %v3002 = vadd.f32 %v451, %v3001
        %v3003 = vpop.f32.mrb[0].mxu0
        %v3004 = vadd.f32 %v451, %v3003
        %v3005 = vpop.f32.mrb[0].mxu0
        %v3006 = vadd.f32 %v452, %v3005
        %v3007 = vpop.f32.mrb[0].mxu0
        %v3008 = vadd.f32 %v452, %v3007
        %3009 = vmatprep.mubr.bf16.mxu0 0
        %3010 = vmatmul.mubr.bf16.gmra.mrb[0].mxu0 %v2920
        %v3011 = vpop.f32.mrb[0].mxu0
        %v3012 = vadd.f32 %v453, %v3011
        %v3013 = vpop.f32.mrb[0].mxu0
        %v3014 = vadd.f32 %v453, %v3013
        %v3015 = vpop.f32.mrb[0].mxu0
        %v3016 = vadd.f32 %v454, %v3015
        %v3017 = vpop.f32.mrb[0].mxu0
        %v3018 = vadd.f32 %v454, %v3017
        %3019 = vmatprep.mubr.bf16.mxu0 0
        %3020 = vmatmul.mubr.bf16.gmra.mrb[0].mxu0 %v2923
        %v3021 = vpop.f32.mrb[0].mxu0
        %v3022 = vadd.f32 %v455, %v3021
        %v3023 = vpop.f32.mrb[0].mxu0
        %v3024 = vadd.f32 %v455, %v3023
        %v3025 = vpop.f32.mrb[0].mxu0
        %v3026 = vadd.f32 %v456, %v3025
        %v3027 = vpop.f32.mrb[0].mxu0
        %v3028 = vadd.f32 %v456, %v3027
        %3029 = vmatprep.mubr.bf16.mxu0 0
        %3030 = vmatmul.mubr.bf16.gmra.mrb[0].mxu0 %v2926
        %v3031 = vpop.f32.mrb[0].mxu0
        %v3032 = vadd.f32 %v457, %v3031
        %v3033 = vpop.f32.mrb[0].mxu0
        %v3034 = vadd.f32 %v457, %v3033
        %v3035 = vpop.f32.mrb[0].mxu0
        %v3036 = vadd.f32 %v458, %v3035
        %v3037 = vpop.f32.mrb[0].mxu0
        %v3038 = vadd.f32 %v458, %v3037
        %3039 = vmatprep.mubr.bf16.mxu0 0
        %3040 = vmatmul.mubr.bf16.gmra.mrb[0].mxu0 %v2929
        %v3041 = vpop.f32.mrb[0].mxu0
        %v3042 = vadd.f32 %v459, %v3041
        %v3043 = vpop.f32.mrb[0].mxu0
        %v3044 = vadd.f32 %v459, %v3043
        %v3045 = vpop.f32.mrb[0].mxu0
        %v3046 = vadd.f32 %v460, %v3045
        %v3047 = vpop.f32.mrb[0].mxu0
        %v3048 = vadd.f32 %v460, %v3047
        %3049 = vdwg.mxu0
        %v3050 = vmax.f32 %v2972, %v2982
        %v3051 = vmax.f32 %v2976, %v2986
        %v3052 = vmax.f32 %v3050, %v2992
        %v3053 = vmax.f32 %v3051, %v2996
        %v3054 = vmax.f32 %v3052, %v3002
        %v3055 = vmax.f32 %v3053, %v3006
        %v3056 = vmax.f32 %v3054, %v3012
        %v3057 = vmax.f32 %v3055, %v3016
        %v3058 = vmax.f32 %v3056, %v3022
        %v3059 = vmax.f32 %v3057, %v3026
        %v3060 = vmax.f32 %v3058, %v3032
        %v3061 = vmax.f32 %v3059, %v3036
        %v3062 = vmax.f32 %v3060, %v3042
        %v3063 = vmax.f32 %v3061, %v3046
        %v3064 = vmax.f32 %v3062, %v3063
        %v3065 = vrot.slane %v3064, 4
        %v3066 = vmax.f32 %v3064, %v3065
        %v3067 = vrot.slane %v3066, 2
        %v3068 = vmax.f32 %v3066, %v3067
        %v3069 = vrot.slane %v3068, 1
        %v3070 = vmax.f32 %v3068, %v3069
        %v3071 = vmax.f32 %v2974, %v2984
        %v3072 = vmax.f32 %v2978, %v2988
        %v3073 = vmax.f32 %v3071, %v2994
        %v3074 = vmax.f32 %v3072, %v2998
        %v3075 = vmax.f32 %v3073, %v3004
        %v3076 = vmax.f32 %v3074, %v3008
        %v3077 = vmax.f32 %v3075, %v3014
        %v3078 = vmax.f32 %v3076, %v3018
        %v3079 = vmax.f32 %v3077, %v3024
        %v3080 = vmax.f32 %v3078, %v3028
        %v3081 = vmax.f32 %v3079, %v3034
        %v3082 = vmax.f32 %v3080, %v3038
        %v3083 = vmax.f32 %v3081, %v3044
        %v3084 = vmax.f32 %v3082, %v3048
        %v3085 = vmax.f32 %v3083, %v3084
        %v3086 = vrot.slane %v3085, 4
        %v3087 = vmax.f32 %v3085, %v3086
        %v3088 = vrot.slane %v3087, 2
        %v3089 = vmax.f32 %v3087, %v3088
        %v3090 = vrot.slane %v3089, 1
        %v3091 = vmax.f32 %v3089, %v3090
        %v3092 = vsub.f32 %v2972, %v3070
        %v3093 = vsub.f32 %v2974, %v3091
        %v3094 = vsub.f32 %v2976, %v3070
        %v3095 = vsub.f32 %v2978, %v3091
        %v3096 = vsub.f32 %v2982, %v3070
        %v3097 = vsub.f32 %v2984, %v3091
        %v3098 = vsub.f32 %v2986, %v3070
        %v3099 = vsub.f32 %v2988, %v3091
        %v3100 = vsub.f32 %v2992, %v3070
        %v3101 = vsub.f32 %v2994, %v3091
        %v3102 = vsub.f32 %v2996, %v3070
        %v3103 = vsub.f32 %v2998, %v3091
        %v3104 = vsub.f32 %v3002, %v3070
        %v3105 = vsub.f32 %v3004, %v3091
        %v3106 = vsub.f32 %v3006, %v3070
        %v3107 = vsub.f32 %v3008, %v3091
        %v3108 = vsub.f32 %v3012, %v3070
        %v3109 = vsub.f32 %v3014, %v3091
        %v3110 = vsub.f32 %v3016, %v3070
        %v3111 = vsub.f32 %v3018, %v3091
        %v3112 = vsub.f32 %v3022, %v3070
        %v3113 = vsub.f32 %v3024, %v3091
        %v3114 = vsub.f32 %v3026, %v3070
        %v3115 = vsub.f32 %v3028, %v3091
        %v3116 = vsub.f32 %v3032, %v3070
        %v3117 = vsub.f32 %v3034, %v3091
        %v3118 = vsub.f32 %v3036, %v3070
        %v3119 = vsub.f32 %v3038, %v3091
        %v3120 = vsub.f32 %v3042, %v3070
        %v3121 = vsub.f32 %v3044, %v3091
        %v3122 = vsub.f32 %v3046, %v3070
        %v3123 = vsub.f32 %v3048, %v3091
        %v3124 = vmul.f32 %v3092, 1.442695
        %v3125 = vpow.pop %v3124
        %v3126 = vmul.f32 %v3093, 1.442695
        %v3127 = vpow.pop %v3126
        %v3128 = vmul.f32 %v3094, 1.442695
        %v3129 = vpow.pop %v3128
        %v3130 = vmul.f32 %v3095, 1.442695
        %v3131 = vpow.pop %v3130
        %v3132 = vmul.f32 %v3096, 1.442695
        %v3133 = vpow.pop %v3132
        %v3134 = vmul.f32 %v3097, 1.442695
        %v3135 = vpow.pop %v3134
        %v3136 = vmul.f32 %v3098, 1.442695
        %v3137 = vpow.pop %v3136
        %v3138 = vmul.f32 %v3099, 1.442695
        %v3139 = vpow.pop %v3138
        %v3140 = vmul.f32 %v3100, 1.442695
        %v3141 = vpow.pop %v3140
        %v3142 = vmul.f32 %v3101, 1.442695
        %v3143 = vpow.pop %v3142
        %v3144 = vmul.f32 %v3102, 1.442695
        %v3145 = vpow.pop %v3144
        %v3146 = vmul.f32 %v3103, 1.442695
        %v3147 = vpow.pop %v3146
        %v3148 = vmul.f32 %v3104, 1.442695
        %v3149 = vpow.pop %v3148
        %v3150 = vmul.f32 %v3105, 1.442695
        %v3151 = vpow.pop %v3150
        %v3152 = vmul.f32 %v3106, 1.442695
        %v3153 = vpow.pop %v3152
        %v3154 = vmul.f32 %v3107, 1.442695
        %v3155 = vpow.pop %v3154
        %v3156 = vmul.f32 %v3108, 1.442695
        %v3157 = vpow.pop %v3156
        %v3158 = vmul.f32 %v3109, 1.442695
        %v3159 = vpow.pop %v3158
        %v3160 = vmul.f32 %v3110, 1.442695
        %v3161 = vpow.pop %v3160
        %v3162 = vmul.f32 %v3111, 1.442695
        %v3163 = vpow.pop %v3162
        %v3164 = vmul.f32 %v3112, 1.442695
        %v3165 = vpow.pop %v3164
        %v3166 = vmul.f32 %v3113, 1.442695
        %v3167 = vpow.pop %v3166
        %v3168 = vmul.f32 %v3114, 1.442695
        %v3169 = vpow.pop %v3168
        %v3170 = vmul.f32 %v3115, 1.442695
        %v3171 = vpow.pop %v3170
        %v3172 = vmul.f32 %v3116, 1.442695
        %v3173 = vpow.pop %v3172
        %v3174 = vmul.f32 %v3117, 1.442695
        %v3175 = vpow.pop %v3174
        %v3176 = vmul.f32 %v3118, 1.442695
        %v3177 = vpow.pop %v3176
        %v3178 = vmul.f32 %v3119, 1.442695
        %v3179 = vpow.pop %v3178
        %v3180 = vmul.f32 %v3120, 1.442695
        %v3181 = vpow.pop %v3180
        %v3182 = vmul.f32 %v3121, 1.442695
        %v3183 = vpow.pop %v3182
        %v3184 = vmul.f32 %v3122, 1.442695
        %v3185 = vpow.pop %v3184
        %v3186 = vmul.f32 %v3123, 1.442695
        %v3187 = vpow.pop %v3186
        %v3188 = vadd.f32 %v3125, %v3129
        %v3189 = vadd.f32 %v3188, %v3133
        %v3190 = vadd.f32 %v3189, %v3137
        %v3191 = vadd.f32 %v3190, %v3141
        %v3192 = vadd.f32 %v3191, %v3145
        %v3193 = vadd.f32 %v3192, %v3149
        %v3194 = vadd.f32 %v3193, %v3153
        %v3195 = vadd.f32 %v3194, %v3157
        %v3196 = vadd.f32 %v3195, %v3161
        %v3197 = vadd.f32 %v3196, %v3165
        %v3198 = vadd.f32 %v3197, %v3169
        %v3199 = vadd.f32 %v3198, %v3173
        %v3200 = vadd.f32 %v3199, %v3177
        %v3201 = vadd.f32 %v3200, %v3181
        %v3202 = vadd.f32 %v3201, %v3185
        %v3203 = vrot.slane %v3202, 4
        %v3204 = vadd.f32 %v3202, %v3203
        %v3205 = vrot.slane %v3204, 2
        %v3206 = vadd.f32 %v3204, %v3205
        %v3207 = vrot.slane %v3206, 1
        %v3208 = vadd.f32 %v3206, %v3207
        %v3209 = vadd.f32 %v3127, %v3131
        %v3210 = vadd.f32 %v3209, %v3135
        %v3211 = vadd.f32 %v3210, %v3139
        %v3212 = vadd.f32 %v3211, %v3143
        %v3213 = vadd.f32 %v3212, %v3147
        %v3214 = vadd.f32 %v3213, %v3151
        %v3215 = vadd.f32 %v3214, %v3155
        %v3216 = vadd.f32 %v3215, %v3159
        %v3217 = vadd.f32 %v3216, %v3163
        %v3218 = vadd.f32 %v3217, %v3167
        %v3219 = vadd.f32 %v3218, %v3171
        %v3220 = vadd.f32 %v3219, %v3175
        %v3221 = vadd.f32 %v3220, %v3179
        %v3222 = vadd.f32 %v3221, %v3183
        %v3223 = vadd.f32 %v3222, %v3187
        %v3224 = vrot.slane %v3223, 4
        %v3225 = vadd.f32 %v3223, %v3224
        %v3226 = vrot.slane %v3225, 2
        %v3227 = vadd.f32 %v3225, %v3226
        %v3228 = vrot.slane %v3227, 1
        %v3229 = vadd.f32 %v3227, %v3228
        %v3230 = vrcp.pop %v3208
        %v3231 = vrcp.pop %v3229
        %v3232 = vmul.f32 %v3125, %v3230
        %v3233 = vmul.f32 %v3127, %v3231
        %v3234 = vmul.f32 %v3129, %v3230
        %v3235 = vmul.f32 %v3131, %v3231
        %v3236 = vmul.f32 %v3133, %v3230
        %v3237 = vmul.f32 %v3135, %v3231
        %v3238 = vmul.f32 %v3137, %v3230
        %v3239 = vmul.f32 %v3139, %v3231
        %v3240 = vmul.f32 %v3141, %v3230
        %v3241 = vmul.f32 %v3143, %v3231
        %v3242 = vmul.f32 %v3145, %v3230
        %v3243 = vmul.f32 %v3147, %v3231
        %v3244 = vmul.f32 %v3149, %v3230
        %v3245 = vmul.f32 %v3151, %v3231
        %v3246 = vmul.f32 %v3153, %v3230
        %v3247 = vmul.f32 %v3155, %v3231
        %v3248 = vmul.f32 %v3157, %v3230
        %v3249 = vmul.f32 %v3159, %v3231
        %v3250 = vmul.f32 %v3161, %v3230
        %v3251 = vmul.f32 %v3163, %v3231
        %v3252 = vmul.f32 %v3165, %v3230
        %v3253 = vmul.f32 %v3167, %v3231
        %v3254 = vmul.f32 %v3169, %v3230
        %v3255 = vmul.f32 %v3171, %v3231
        %v3256 = vmul.f32 %v3173, %v3230
        %v3257 = vmul.f32 %v3175, %v3231
        %v3258 = vmul.f32 %v3177, %v3230
        %v3259 = vmul.f32 %v3179, %v3231
        %v3260 = vmul.f32 %v3181, %v3230
        %v3261 = vmul.f32 %v3183, %v3231
        %v3262 = vmul.f32 %v3185, %v3230
        %v3263 = vmul.f32 %v3187, %v3231
        %v3264 = vpack.c.bf16 %v3234, %v3232
        %v3265 = vpack.c.bf16 %v3235, %v3233
        %v3266 = vpack.c.bf16 %v3238, %v3236
        %v3267 = vpack.c.bf16 %v3239, %v3237
        %v3268 = vpack.c.bf16 %v3242, %v3240
        %v3269 = vpack.c.bf16 %v3243, %v3241
        %v3270 = vpack.c.bf16 %v3246, %v3244
        %v3271 = vpack.c.bf16 %v3247, %v3245
        %v3272 = vpack.c.bf16 %v3250, %v3248
        %v3273 = vpack.c.bf16 %v3251, %v3249
        %v3274 = vpack.c.bf16 %v3254, %v3252
        %v3275 = vpack.c.bf16 %v3255, %v3253
        %v3276 = vpack.c.bf16 %v3258, %v3256
        %v3277 = vpack.c.bf16 %v3259, %v3257
        %v3278 = vpack.c.bf16 %v3262, %v3260
        %v3279 = vpack.c.bf16 %v3263, %v3261
        %3280 = vmatprep.subr.bf16.mxu0 %v3265
        %3281 = vmatpush1.bf16.msra.mxu0 %v3264
        %3282 = vmatprep.subr.bf16.mxu0 %v3267
        %3283 = vmatpush1.bf16.msra.mxu0 %v3266
        %3284 = vmatprep.subr.bf16.mxu0 %v3269
        %3285 = vmatpush1.bf16.msra.mxu0 %v3268
        %3286 = vmatprep.subr.bf16.mxu0 %v3271
        %3287 = vmatpush1.bf16.msra.mxu0 %v3270
        %3288 = vmatprep.subr.bf16.mxu0 %v3273
        %3289 = vmatpush1.bf16.msra.mxu0 %v3272
        %3290 = vmatprep.subr.bf16.mxu0 %v3275
        %3291 = vmatpush1.bf16.msra.mxu0 %v3274
        %3292 = vmatprep.subr.bf16.mxu0 %v3277
        %3293 = vmatpush1.bf16.msra.mxu0 %v3276
        %3294 = vmatprep.subr.bf16.mxu0 %v3279
        %3295 = vmatpush1.bf16.msra.mxu0 %v3278
        %3296 = vmatprep.subr.bf16.mxu0 0
        %3297 = vmatpush1.bf16.msra.mxu0 0
        %3298 = vmatprep.subr.bf16.mxu0 0
        %3299 = vmatpush1.bf16.msra.mxu0 0
        %3300 = vmatprep.subr.bf16.mxu0 0
        %3301 = vmatpush1.bf16.msra.mxu0 0
        %3302 = vmatprep.subr.bf16.mxu0 0
        %3303 = vmatpush1.bf16.msra.mxu0 0
        %3304 = vmatprep.subr.bf16.mxu0 0
        %3305 = vmatpush1.bf16.msra.mxu0 0
        %3306 = vmatprep.subr.bf16.mxu0 0
        %3307 = vmatpush1.bf16.msra.mxu0 0
        %3308 = vmatprep.subr.bf16.mxu0 0
        %3309 = vmatpush1.bf16.msra.mxu0 0
        %3310 = vmatprep.subr.bf16.mxu0 0
        %3311 = vmatpush1.bf16.msra.mxu0 0
        %3312 = vmatprep.mubr.bf16.mxu0 0
        %3313 = vmatmul.mubr.bf16.gmra.mrb[0].mxu0 %v2862
        %v3314 = vpop.f32.mrb[0].mxu0
        %v3315 = vadd.f32 0.0, %v3314
        %v3316 = vpop.f32.mrb[0].mxu0
        %v3317 = vadd.f32 0.0, %v3316
        %v3318 = vpop.f32.mrb[0].mxu0
        %v3319 = vpop.f32.mrb[0].mxu0
        %3320 = vdwg.mxu0
        %v3321 = vpack.c.bf16 %v3315, %v3315
        %v3322 = vpack.c.bf16 %v3317, %v3317
        %s3323 = scalar_lea.vmem %s314, 384
        %v3324 = vld [vmem:[%s3323] sm:$0xf]
        %v3325 = vld [vmem:[%s3323 + $0x4] sm:$0xf]
        %v3326 = vld [vmem:[%s3323 + $0x8] sm:$0xf]
        %v3327 = vld [vmem:[%s3323 + $0xc] sm:$0xf]
        %v3328 = vld [vmem:[%s3323 + $0x10] sm:$0xf]
        %v3329 = vld [vmem:[%s3323 + $0x14] sm:$0xf]
        %v3330 = vld [vmem:[%s3323 + $0x18] sm:$0xf]
        %v3331 = vld [vmem:[%s3323 + $0x1c] sm:$0xf]
        %v3332 = vld [vmem:[%s3323 + $0x20] sm:$0xf]
        %v3333 = vld [vmem:[%s3323 + $0x24] sm:$0xf]
        %v3334 = vld [vmem:[%s3323 + $0x28] sm:$0xf]
        %v3335 = vld [vmem:[%s3323 + $0x2c] sm:$0xf]
        %v3336 = vld [vmem:[%s3323 + $0x30] sm:$0xf]
        %v3337 = vld [vmem:[%s3323 + $0x34] sm:$0xf]
        %v3338 = vld [vmem:[%s3323 + $0x38] sm:$0xf]
        %v3339 = vld [vmem:[%s3323 + $0x3c] sm:$0xf]
        %s3340 = scalar_lea.vmem %s319, 12
        %v3341 = vld [vmem:[%s3340] sm:$0x3]
        %v3358 = vunpack.c.l.b16 %v3324
        %v3359 = vunpack.c.l.b16 %v3325
        %v3360 = vunpack.c.l.b16 %v3326
        %v3361 = vunpack.c.l.b16 %v3327
        %v3362 = vunpack.c.l.b16 %v3328
        %v3363 = vunpack.c.l.b16 %v3329
        %v3364 = vunpack.c.l.b16 %v3330
        %v3365 = vunpack.c.l.b16 %v3331
        %v3366 = vunpack.c.l.b16 %v3332
        %v3367 = vunpack.c.l.b16 %v3333
        %v3368 = vunpack.c.l.b16 %v3334
        %v3369 = vunpack.c.l.b16 %v3335
        %v3370 = vunpack.c.l.b16 %v3336
        %v3371 = vunpack.c.l.b16 %v3337
        %v3372 = vunpack.c.l.b16 %v3338
        %v3373 = vunpack.c.l.b16 %v3339
        %v3374 = vpack.c.b16 %v3359, %v3358
        %v3375 = vpack.c.b16 %v3361, %v3360
        %v3376 = vpack.c.b16 %v3363, %v3362
        %v3377 = vpack.c.b16 %v3365, %v3364
        %v3378 = vpack.c.b16 %v3367, %v3366
        %v3379 = vpack.c.b16 %v3369, %v3368
        %v3380 = vpack.c.b16 %v3371, %v3370
        %v3381 = vpack.c.b16 %v3373, %v3372
        %v3382 = vrot.slane %v410, 4
        %v3383 = vrot.slane %v411, 4
        %v3385 = vsel %vm518, %v3374, 0
        %v3388 = vsel %vm518, %v3375, 0
        %v3391 = vsel %vm518, %v3376, 0
        %v3394 = vsel %vm518, %v3377, 0
        %v3397 = vsel %vm518, %v3378, 0
        %v3400 = vsel %vm518, %v3379, 0
        %v3403 = vsel %vm518, %v3380, 0
        %v3406 = vsel %vm518, %v3381, 0
        %v3409 = vsel %vm543, %v3382, 0
        %v3412 = vsel %vm543, %v3383, 0
        %3414 = vmatprep.subr.bf16.mxu0 %v3412
        %3415 = vmatpush1.bf16.msra.mxu0 %v3409
        %3416 = vmatprep.subr.bf16.mxu0 0
        %3417 = vmatpush1.bf16.msra.mxu0 0
        %3418 = vmatprep.subr.bf16.mxu0 0
        %3419 = vmatpush1.bf16.msra.mxu0 0
        %3420 = vmatprep.subr.bf16.mxu0 0
        %3421 = vmatpush1.bf16.msra.mxu0 0
        %3422 = vmatprep.subr.bf16.mxu0 0
        %3423 = vmatpush1.bf16.msra.mxu0 0
        %3424 = vmatprep.subr.bf16.mxu0 0
        %3425 = vmatpush1.bf16.msra.mxu0 0
        %3426 = vmatprep.subr.bf16.mxu0 0
        %3427 = vmatpush1.bf16.msra.mxu0 0
        %3428 = vmatprep.subr.bf16.mxu0 0
        %3429 = vmatpush1.bf16.msra.mxu0 0
        %3430 = vmatprep.subr.bf16.mxu0 0
        %3431 = vmatpush1.bf16.msra.mxu0 0
        %3432 = vmatprep.subr.bf16.mxu0 0
        %3433 = vmatpush1.bf16.msra.mxu0 0
        %3434 = vmatprep.subr.bf16.mxu0 0
        %3435 = vmatpush1.bf16.msra.mxu0 0
        %3436 = vmatprep.subr.bf16.mxu0 0
        %3437 = vmatpush1.bf16.msra.mxu0 0
        %3438 = vmatprep.subr.bf16.mxu0 0
        %3439 = vmatpush1.bf16.msra.mxu0 0
        %3440 = vmatprep.subr.bf16.mxu0 0
        %3441 = vmatpush1.bf16.msra.mxu0 0
        %3442 = vmatprep.subr.bf16.mxu0 0
        %3443 = vmatpush1.bf16.msra.mxu0 0
        %3444 = vmatprep.subr.bf16.mxu0 0
        %3445 = vmatpush1.bf16.msra.mxu0 0
        %3446 = vmatprep.mubr.bf16.mxu0 0
        %3447 = vmatmul.mubr.bf16.gmra.mrb[0].mxu0 %v3385
        %v3448 = vpop.f32.mrb[0].mxu0
        %v3449 = vadd.f32 %v445, %v3448
        %v3450 = vpop.f32.mrb[0].mxu0
        %v3451 = vadd.f32 %v445, %v3450
        %v3452 = vpop.f32.mrb[0].mxu0
        %v3453 = vadd.f32 %v446, %v3452
        %v3454 = vpop.f32.mrb[0].mxu0
        %v3455 = vadd.f32 %v446, %v3454
        %3456 = vmatprep.mubr.bf16.mxu0 0
        %3457 = vmatmul.mubr.bf16.gmra.mrb[0].mxu0 %v3388
        %v3458 = vpop.f32.mrb[0].mxu0
        %v3459 = vadd.f32 %v447, %v3458
        %v3460 = vpop.f32.mrb[0].mxu0
        %v3461 = vadd.f32 %v447, %v3460
        %v3462 = vpop.f32.mrb[0].mxu0
        %v3463 = vadd.f32 %v448, %v3462
        %v3464 = vpop.f32.mrb[0].mxu0
        %v3465 = vadd.f32 %v448, %v3464
        %3466 = vmatprep.mubr.bf16.mxu0 0
        %3467 = vmatmul.mubr.bf16.gmra.mrb[0].mxu0 %v3391
        %v3468 = vpop.f32.mrb[0].mxu0
        %v3469 = vadd.f32 %v449, %v3468
        %v3470 = vpop.f32.mrb[0].mxu0
        %v3471 = vadd.f32 %v449, %v3470
        %v3472 = vpop.f32.mrb[0].mxu0
        %v3473 = vadd.f32 %v450, %v3472
        %v3474 = vpop.f32.mrb[0].mxu0
        %v3475 = vadd.f32 %v450, %v3474
        %3476 = vmatprep.mubr.bf16.mxu0 0
        %3477 = vmatmul.mubr.bf16.gmra.mrb[0].mxu0 %v3394
        %v3478 = vpop.f32.mrb[0].mxu0
        %v3479 = vadd.f32 %v451, %v3478
        %v3480 = vpop.f32.mrb[0].mxu0
        %v3481 = vadd.f32 %v451, %v3480
        %v3482 = vpop.f32.mrb[0].mxu0
        %v3483 = vadd.f32 %v452, %v3482
        %v3484 = vpop.f32.mrb[0].mxu0
        %v3485 = vadd.f32 %v452, %v3484
        %3486 = vmatprep.mubr.bf16.mxu0 0
        %3487 = vmatmul.mubr.bf16.gmra.mrb[0].mxu0 %v3397
        %v3488 = vpop.f32.mrb[0].mxu0
        %v3489 = vadd.f32 %v453, %v3488
        %v3490 = vpop.f32.mrb[0].mxu0
        %v3491 = vadd.f32 %v453, %v3490
        %v3492 = vpop.f32.mrb[0].mxu0
        %v3493 = vadd.f32 %v454, %v3492
        %v3494 = vpop.f32.mrb[0].mxu0
        %v3495 = vadd.f32 %v454, %v3494
        %3496 = vmatprep.mubr.bf16.mxu0 0
        %3497 = vmatmul.mubr.bf16.gmra.mrb[0].mxu0 %v3400
        %v3498 = vpop.f32.mrb[0].mxu0
        %v3499 = vadd.f32 %v455, %v3498
        %v3500 = vpop.f32.mrb[0].mxu0
        %v3501 = vadd.f32 %v455, %v3500
        %v3502 = vpop.f32.mrb[0].mxu0
        %v3503 = vadd.f32 %v456, %v3502
        %v3504 = vpop.f32.mrb[0].mxu0
        %v3505 = vadd.f32 %v456, %v3504
        %3506 = vmatprep.mubr.bf16.mxu0 0
        %3507 = vmatmul.mubr.bf16.gmra.mrb[0].mxu0 %v3403
        %v3508 = vpop.f32.mrb[0].mxu0
        %v3509 = vadd.f32 %v457, %v3508
        %v3510 = vpop.f32.mrb[0].mxu0
        %v3511 = vadd.f32 %v457, %v3510
        %v3512 = vpop.f32.mrb[0].mxu0
        %v3513 = vadd.f32 %v458, %v3512
        %v3514 = vpop.f32.mrb[0].mxu0
        %v3515 = vadd.f32 %v458, %v3514
        %3516 = vmatprep.mubr.bf16.mxu0 0
        %3517 = vmatmul.mubr.bf16.gmra.mrb[0].mxu0 %v3406
        %v3518 = vpop.f32.mrb[0].mxu0
        %v3519 = vadd.f32 %v459, %v3518
        %v3520 = vpop.f32.mrb[0].mxu0
        %v3521 = vadd.f32 %v459, %v3520
        %v3522 = vpop.f32.mrb[0].mxu0
        %v3523 = vadd.f32 %v460, %v3522
        %v3524 = vpop.f32.mrb[0].mxu0
        %v3525 = vadd.f32 %v460, %v3524
        %3526 = vdwg.mxu0
        %v3527 = vmax.f32 %v3449, %v3459
        %v3528 = vmax.f32 %v3453, %v3463
        %v3529 = vmax.f32 %v3527, %v3469
        %v3530 = vmax.f32 %v3528, %v3473
        %v3531 = vmax.f32 %v3529, %v3479
        %v3532 = vmax.f32 %v3530, %v3483
        %v3533 = vmax.f32 %v3531, %v3489
        %v3534 = vmax.f32 %v3532, %v3493
        %v3535 = vmax.f32 %v3533, %v3499
        %v3536 = vmax.f32 %v3534, %v3503
        %v3537 = vmax.f32 %v3535, %v3509
        %v3538 = vmax.f32 %v3536, %v3513
        %v3539 = vmax.f32 %v3537, %v3519
        %v3540 = vmax.f32 %v3538, %v3523
        %v3541 = vmax.f32 %v3539, %v3540
        %v3542 = vrot.slane %v3541, 4
        %v3543 = vmax.f32 %v3541, %v3542
        %v3544 = vrot.slane %v3543, 2
        %v3545 = vmax.f32 %v3543, %v3544
        %v3546 = vrot.slane %v3545, 1
        %v3547 = vmax.f32 %v3545, %v3546
        %v3548 = vmax.f32 %v3451, %v3461
        %v3549 = vmax.f32 %v3455, %v3465
        %v3550 = vmax.f32 %v3548, %v3471
        %v3551 = vmax.f32 %v3549, %v3475
        %v3552 = vmax.f32 %v3550, %v3481
        %v3553 = vmax.f32 %v3551, %v3485
        %v3554 = vmax.f32 %v3552, %v3491
        %v3555 = vmax.f32 %v3553, %v3495
        %v3556 = vmax.f32 %v3554, %v3501
        %v3557 = vmax.f32 %v3555, %v3505
        %v3558 = vmax.f32 %v3556, %v3511
        %v3559 = vmax.f32 %v3557, %v3515
        %v3560 = vmax.f32 %v3558, %v3521
        %v3561 = vmax.f32 %v3559, %v3525
        %v3562 = vmax.f32 %v3560, %v3561
        %v3563 = vrot.slane %v3562, 4
        %v3564 = vmax.f32 %v3562, %v3563
        %v3565 = vrot.slane %v3564, 2
        %v3566 = vmax.f32 %v3564, %v3565
        %v3567 = vrot.slane %v3566, 1
        %v3568 = vmax.f32 %v3566, %v3567
        %v3569 = vsub.f32 %v3449, %v3547
        %v3570 = vsub.f32 %v3451, %v3568
        %v3571 = vsub.f32 %v3453, %v3547
        %v3572 = vsub.f32 %v3455, %v3568
        %v3573 = vsub.f32 %v3459, %v3547
        %v3574 = vsub.f32 %v3461, %v3568
        %v3575 = vsub.f32 %v3463, %v3547
        %v3576 = vsub.f32 %v3465, %v3568
        %v3577 = vsub.f32 %v3469, %v3547
        %v3578 = vsub.f32 %v3471, %v3568
        %v3579 = vsub.f32 %v3473, %v3547
        %v3580 = vsub.f32 %v3475, %v3568
        %v3581 = vsub.f32 %v3479, %v3547
        %v3582 = vsub.f32 %v3481, %v3568
        %v3583 = vsub.f32 %v3483, %v3547
        %v3584 = vsub.f32 %v3485, %v3568
        %v3585 = vsub.f32 %v3489, %v3547
        %v3586 = vsub.f32 %v3491, %v3568
        %v3587 = vsub.f32 %v3493, %v3547
        %v3588 = vsub.f32 %v3495, %v3568
        %v3589 = vsub.f32 %v3499, %v3547
        %v3590 = vsub.f32 %v3501, %v3568
        %v3591 = vsub.f32 %v3503, %v3547
        %v3592 = vsub.f32 %v3505, %v3568
        %v3593 = vsub.f32 %v3509, %v3547
        %v3594 = vsub.f32 %v3511, %v3568
        %v3595 = vsub.f32 %v3513, %v3547
        %v3596 = vsub.f32 %v3515, %v3568
        %v3597 = vsub.f32 %v3519, %v3547
        %v3598 = vsub.f32 %v3521, %v3568
        %v3599 = vsub.f32 %v3523, %v3547
        %v3600 = vsub.f32 %v3525, %v3568
        %v3601 = vmul.f32 %v3569, 1.442695
        %v3602 = vpow.pop %v3601
        %v3603 = vmul.f32 %v3570, 1.442695
        %v3604 = vpow.pop %v3603
        %v3605 = vmul.f32 %v3571, 1.442695
        %v3606 = vpow.pop %v3605
        %v3607 = vmul.f32 %v3572, 1.442695
        %v3608 = vpow.pop %v3607
        %v3609 = vmul.f32 %v3573, 1.442695
        %v3610 = vpow.pop %v3609
        %v3611 = vmul.f32 %v3574, 1.442695
        %v3612 = vpow.pop %v3611
        %v3613 = vmul.f32 %v3575, 1.442695
        %v3614 = vpow.pop %v3613
        %v3615 = vmul.f32 %v3576, 1.442695
        %v3616 = vpow.pop %v3615
        %v3617 = vmul.f32 %v3577, 1.442695
        %v3618 = vpow.pop %v3617
        %v3619 = vmul.f32 %v3578, 1.442695
        %v3620 = vpow.pop %v3619
        %v3621 = vmul.f32 %v3579, 1.442695
        %v3622 = vpow.pop %v3621
        %v3623 = vmul.f32 %v3580, 1.442695
        %v3624 = vpow.pop %v3623
        %v3625 = vmul.f32 %v3581, 1.442695
        %v3626 = vpow.pop %v3625
        %v3627 = vmul.f32 %v3582, 1.442695
        %v3628 = vpow.pop %v3627
        %v3629 = vmul.f32 %v3583, 1.442695
        %v3630 = vpow.pop %v3629
        %v3631 = vmul.f32 %v3584, 1.442695
        %v3632 = vpow.pop %v3631
        %v3633 = vmul.f32 %v3585, 1.442695
        %v3634 = vpow.pop %v3633
        %v3635 = vmul.f32 %v3586, 1.442695
        %v3636 = vpow.pop %v3635
        %v3637 = vmul.f32 %v3587, 1.442695
        %v3638 = vpow.pop %v3637
        %v3639 = vmul.f32 %v3588, 1.442695
        %v3640 = vpow.pop %v3639
        %v3641 = vmul.f32 %v3589, 1.442695
        %v3642 = vpow.pop %v3641
        %v3643 = vmul.f32 %v3590, 1.442695
        %v3644 = vpow.pop %v3643
        %v3645 = vmul.f32 %v3591, 1.442695
        %v3646 = vpow.pop %v3645
        %v3647 = vmul.f32 %v3592, 1.442695
        %v3648 = vpow.pop %v3647
        %v3649 = vmul.f32 %v3593, 1.442695
        %v3650 = vpow.pop %v3649
        %v3651 = vmul.f32 %v3594, 1.442695
        %v3652 = vpow.pop %v3651
        %v3653 = vmul.f32 %v3595, 1.442695
        %v3654 = vpow.pop %v3653
        %v3655 = vmul.f32 %v3596, 1.442695
        %v3656 = vpow.pop %v3655
        %v3657 = vmul.f32 %v3597, 1.442695
        %v3658 = vpow.pop %v3657
        %v3659 = vmul.f32 %v3598, 1.442695
        %v3660 = vpow.pop %v3659
        %v3661 = vmul.f32 %v3599, 1.442695
        %v3662 = vpow.pop %v3661
        %v3663 = vmul.f32 %v3600, 1.442695
        %v3664 = vpow.pop %v3663
        %v3665 = vadd.f32 %v3602, %v3606
        %v3666 = vadd.f32 %v3665, %v3610
        %v3667 = vadd.f32 %v3666, %v3614
        %v3668 = vadd.f32 %v3667, %v3618
        %v3669 = vadd.f32 %v3668, %v3622
        %v3670 = vadd.f32 %v3669, %v3626
        %v3671 = vadd.f32 %v3670, %v3630
        %v3672 = vadd.f32 %v3671, %v3634
        %v3673 = vadd.f32 %v3672, %v3638
        %v3674 = vadd.f32 %v3673, %v3642
        %v3675 = vadd.f32 %v3674, %v3646
        %v3676 = vadd.f32 %v3675, %v3650
        %v3677 = vadd.f32 %v3676, %v3654
        %v3678 = vadd.f32 %v3677, %v3658
        %v3679 = vadd.f32 %v3678, %v3662
        %v3680 = vrot.slane %v3679, 4
        %v3681 = vadd.f32 %v3679, %v3680
        %v3682 = vrot.slane %v3681, 2
        %v3683 = vadd.f32 %v3681, %v3682
        %v3684 = vrot.slane %v3683, 1
        %v3685 = vadd.f32 %v3683, %v3684
        %v3686 = vadd.f32 %v3604, %v3608
        %v3687 = vadd.f32 %v3686, %v3612
        %v3688 = vadd.f32 %v3687, %v3616
        %v3689 = vadd.f32 %v3688, %v3620
        %v3690 = vadd.f32 %v3689, %v3624
        %v3691 = vadd.f32 %v3690, %v3628
        %v3692 = vadd.f32 %v3691, %v3632
        %v3693 = vadd.f32 %v3692, %v3636
        %v3694 = vadd.f32 %v3693, %v3640
        %v3695 = vadd.f32 %v3694, %v3644
        %v3696 = vadd.f32 %v3695, %v3648
        %v3697 = vadd.f32 %v3696, %v3652
        %v3698 = vadd.f32 %v3697, %v3656
        %v3699 = vadd.f32 %v3698, %v3660
        %v3700 = vadd.f32 %v3699, %v3664
        %v3701 = vrot.slane %v3700, 4
        %v3702 = vadd.f32 %v3700, %v3701
        %v3703 = vrot.slane %v3702, 2
        %v3704 = vadd.f32 %v3702, %v3703
        %v3705 = vrot.slane %v3704, 1
        %v3706 = vadd.f32 %v3704, %v3705
        %v3707 = vrcp.pop %v3685
        %v3708 = vrcp.pop %v3706
        %v3709 = vmul.f32 %v3602, %v3707
        %v3710 = vmul.f32 %v3604, %v3708
        %v3711 = vmul.f32 %v3606, %v3707
        %v3712 = vmul.f32 %v3608, %v3708
        %v3713 = vmul.f32 %v3610, %v3707
        %v3714 = vmul.f32 %v3612, %v3708
        %v3715 = vmul.f32 %v3614, %v3707
        %v3716 = vmul.f32 %v3616, %v3708
        %v3717 = vmul.f32 %v3618, %v3707
        %v3718 = vmul.f32 %v3620, %v3708
        %v3719 = vmul.f32 %v3622, %v3707
        %v3720 = vmul.f32 %v3624, %v3708
        %v3721 = vmul.f32 %v3626, %v3707
        %v3722 = vmul.f32 %v3628, %v3708
        %v3723 = vmul.f32 %v3630, %v3707
        %v3724 = vmul.f32 %v3632, %v3708
        %v3725 = vmul.f32 %v3634, %v3707
        %v3726 = vmul.f32 %v3636, %v3708
        %v3727 = vmul.f32 %v3638, %v3707
        %v3728 = vmul.f32 %v3640, %v3708
        %v3729 = vmul.f32 %v3642, %v3707
        %v3730 = vmul.f32 %v3644, %v3708
        %v3731 = vmul.f32 %v3646, %v3707
        %v3732 = vmul.f32 %v3648, %v3708
        %v3733 = vmul.f32 %v3650, %v3707
        %v3734 = vmul.f32 %v3652, %v3708
        %v3735 = vmul.f32 %v3654, %v3707
        %v3736 = vmul.f32 %v3656, %v3708
        %v3737 = vmul.f32 %v3658, %v3707
        %v3738 = vmul.f32 %v3660, %v3708
        %v3739 = vmul.f32 %v3662, %v3707
        %v3740 = vmul.f32 %v3664, %v3708
        %v3741 = vpack.c.bf16 %v3711, %v3709
        %v3742 = vpack.c.bf16 %v3712, %v3710
        %v3743 = vpack.c.bf16 %v3715, %v3713
        %v3744 = vpack.c.bf16 %v3716, %v3714
        %v3745 = vpack.c.bf16 %v3719, %v3717
        %v3746 = vpack.c.bf16 %v3720, %v3718
        %v3747 = vpack.c.bf16 %v3723, %v3721
        %v3748 = vpack.c.bf16 %v3724, %v3722
        %v3749 = vpack.c.bf16 %v3727, %v3725
        %v3750 = vpack.c.bf16 %v3728, %v3726
        %v3751 = vpack.c.bf16 %v3731, %v3729
        %v3752 = vpack.c.bf16 %v3732, %v3730
        %v3753 = vpack.c.bf16 %v3735, %v3733
        %v3754 = vpack.c.bf16 %v3736, %v3734
        %v3755 = vpack.c.bf16 %v3739, %v3737
        %v3756 = vpack.c.bf16 %v3740, %v3738
        %3757 = vmatprep.subr.bf16.mxu0 %v3742
        %3758 = vmatpush1.bf16.msra.mxu0 %v3741
        %3759 = vmatprep.subr.bf16.mxu0 %v3744
        %3760 = vmatpush1.bf16.msra.mxu0 %v3743
        %3761 = vmatprep.subr.bf16.mxu0 %v3746
        %3762 = vmatpush1.bf16.msra.mxu0 %v3745
        %3763 = vmatprep.subr.bf16.mxu0 %v3748
        %3764 = vmatpush1.bf16.msra.mxu0 %v3747
        %3765 = vmatprep.subr.bf16.mxu0 %v3750
        %3766 = vmatpush1.bf16.msra.mxu0 %v3749
        %3767 = vmatprep.subr.bf16.mxu0 %v3752
        %3768 = vmatpush1.bf16.msra.mxu0 %v3751
        %3769 = vmatprep.subr.bf16.mxu0 %v3754
        %3770 = vmatpush1.bf16.msra.mxu0 %v3753
        %3771 = vmatprep.subr.bf16.mxu0 %v3756
        %3772 = vmatpush1.bf16.msra.mxu0 %v3755
        %3773 = vmatprep.subr.bf16.mxu0 0
        %3774 = vmatpush1.bf16.msra.mxu0 0
        %3775 = vmatprep.subr.bf16.mxu0 0
        %3776 = vmatpush1.bf16.msra.mxu0 0
        %3777 = vmatprep.subr.bf16.mxu0 0
        %3778 = vmatpush1.bf16.msra.mxu0 0
        %3779 = vmatprep.subr.bf16.mxu0 0
        %3780 = vmatpush1.bf16.msra.mxu0 0
        %3781 = vmatprep.subr.bf16.mxu0 0
        %3782 = vmatpush1.bf16.msra.mxu0 0
        %3783 = vmatprep.subr.bf16.mxu0 0
        %3784 = vmatpush1.bf16.msra.mxu0 0
        %3785 = vmatprep.subr.bf16.mxu0 0
        %3786 = vmatpush1.bf16.msra.mxu0 0
        %3787 = vmatprep.subr.bf16.mxu0 0
        %3788 = vmatpush1.bf16.msra.mxu0 0
        %3789 = vmatprep.mubr.bf16.mxu0 0
        %3790 = vmatmul.mubr.bf16.gmra.mrb[0].mxu0 %v3341
        %v3791 = vpop.f32.mrb[0].mxu0
        %v3792 = vadd.f32 0.0, %v3791
        %v3793 = vpop.f32.mrb[0].mxu0
        %v3794 = vadd.f32 0.0, %v3793
        %v3795 = vpop.f32.mrb[0].mxu0
        %v3796 = vpop.f32.mrb[0].mxu0
        %3797 = vdwg.mxu0
        %v3798 = vpack.c.bf16 %v3792, %v3792
        %v3799 = vpack.c.bf16 %v3794, %v3794
        %s3800 = scalar_lea.vmem %s314, 448
        %v3801 = vld [vmem:[%s3800] sm:$0xf]
        %v3802 = vld [vmem:[%s3800 + $0x4] sm:$0xf]
        %v3803 = vld [vmem:[%s3800 + $0x8] sm:$0xf]
        %v3804 = vld [vmem:[%s3800 + $0xc] sm:$0xf]
        %v3805 = vld [vmem:[%s3800 + $0x10] sm:$0xf]
        %v3806 = vld [vmem:[%s3800 + $0x14] sm:$0xf]
        %v3807 = vld [vmem:[%s3800 + $0x18] sm:$0xf]
        %v3808 = vld [vmem:[%s3800 + $0x1c] sm:$0xf]
        %v3809 = vld [vmem:[%s3800 + $0x20] sm:$0xf]
        %v3810 = vld [vmem:[%s3800 + $0x24] sm:$0xf]
        %v3811 = vld [vmem:[%s3800 + $0x28] sm:$0xf]
        %v3812 = vld [vmem:[%s3800 + $0x2c] sm:$0xf]
        %v3813 = vld [vmem:[%s3800 + $0x30] sm:$0xf]
        %v3814 = vld [vmem:[%s3800 + $0x34] sm:$0xf]
        %v3815 = vld [vmem:[%s3800 + $0x38] sm:$0xf]
        %v3816 = vld [vmem:[%s3800 + $0x3c] sm:$0xf]
        %s3817 = scalar_lea.vmem %s319, 14
        %v3818 = vld [vmem:[%s3817] sm:$0x3]
        %v3835 = vunpack.c.l.b16 %v3801
        %v3836 = vunpack.c.l.b16 %v3802
        %v3837 = vunpack.c.l.b16 %v3803
        %v3838 = vunpack.c.l.b16 %v3804
        %v3839 = vunpack.c.l.b16 %v3805
        %v3840 = vunpack.c.l.b16 %v3806
        %v3841 = vunpack.c.l.b16 %v3807
        %v3842 = vunpack.c.l.b16 %v3808
        %v3843 = vunpack.c.l.b16 %v3809
        %v3844 = vunpack.c.l.b16 %v3810
        %v3845 = vunpack.c.l.b16 %v3811
        %v3846 = vunpack.c.l.b16 %v3812
        %v3847 = vunpack.c.l.b16 %v3813
        %v3848 = vunpack.c.l.b16 %v3814
        %v3849 = vunpack.c.l.b16 %v3815
        %v3850 = vunpack.c.l.b16 %v3816
        %v3851 = vpack.c.b16 %v3836, %v3835
        %v3852 = vpack.c.b16 %v3838, %v3837
        %v3853 = vpack.c.b16 %v3840, %v3839
        %v3854 = vpack.c.b16 %v3842, %v3841
        %v3855 = vpack.c.b16 %v3844, %v3843
        %v3856 = vpack.c.b16 %v3846, %v3845
        %v3857 = vpack.c.b16 %v3848, %v3847
        %v3858 = vpack.c.b16 %v3850, %v3849
        %v3859 = vrot.slane %v410, 6
        %v3860 = vrot.slane %v411, 6
        %v3862 = vsel %vm518, %v3851, 0
        %v3865 = vsel %vm518, %v3852, 0
        %v3868 = vsel %vm518, %v3853, 0
        %v3871 = vsel %vm518, %v3854, 0
        %v3874 = vsel %vm518, %v3855, 0
        %v3877 = vsel %vm518, %v3856, 0
        %v3880 = vsel %vm518, %v3857, 0
        %v3883 = vsel %vm518, %v3858, 0
        %v3886 = vsel %vm543, %v3859, 0
        %v3889 = vsel %vm543, %v3860, 0
        %3891 = vmatprep.subr.bf16.mxu0 %v3889
        %3892 = vmatpush1.bf16.msra.mxu0 %v3886
        %3893 = vmatprep.subr.bf16.mxu0 0
        %3894 = vmatpush1.bf16.msra.mxu0 0
        %3895 = vmatprep.subr.bf16.mxu0 0
        %3896 = vmatpush1.bf16.msra.mxu0 0
        %3897 = vmatprep.subr.bf16.mxu0 0
        %3898 = vmatpush1.bf16.msra.mxu0 0
        %3899 = vmatprep.subr.bf16.mxu0 0
        %3900 = vmatpush1.bf16.msra.mxu0 0
        %3901 = vmatprep.subr.bf16.mxu0 0
        %3902 = vmatpush1.bf16.msra.mxu0 0
        %3903 = vmatprep.subr.bf16.mxu0 0
        %3904 = vmatpush1.bf16.msra.mxu0 0
        %3905 = vmatprep.subr.bf16.mxu0 0
        %3906 = vmatpush1.bf16.msra.mxu0 0
        %3907 = vmatprep.subr.bf16.mxu0 0
        %3908 = vmatpush1.bf16.msra.mxu0 0
        %3909 = vmatprep.subr.bf16.mxu0 0
        %3910 = vmatpush1.bf16.msra.mxu0 0
        %3911 = vmatprep.subr.bf16.mxu0 0
        %3912 = vmatpush1.bf16.msra.mxu0 0
        %3913 = vmatprep.subr.bf16.mxu0 0
        %3914 = vmatpush1.bf16.msra.mxu0 0
        %3915 = vmatprep.subr.bf16.mxu0 0
        %3916 = vmatpush1.bf16.msra.mxu0 0
        %3917 = vmatprep.subr.bf16.mxu0 0
        %3918 = vmatpush1.bf16.msra.mxu0 0
        %3919 = vmatprep.subr.bf16.mxu0 0
        %3920 = vmatpush1.bf16.msra.mxu0 0
        %3921 = vmatprep.subr.bf16.mxu0 0
        %3922 = vmatpush1.bf16.msra.mxu0 0
        %3923 = vmatprep.mubr.bf16.mxu0 0
        %3924 = vmatmul.mubr.bf16.gmra.mrb[0].mxu0 %v3862
        %v3925 = vpop.f32.mrb[0].mxu0
        %v3926 = vadd.f32 %v445, %v3925
        %v3927 = vpop.f32.mrb[0].mxu0
        %v3928 = vadd.f32 %v445, %v3927
        %v3929 = vpop.f32.mrb[0].mxu0
        %v3930 = vadd.f32 %v446, %v3929
        %v3931 = vpop.f32.mrb[0].mxu0
        %v3932 = vadd.f32 %v446, %v3931
        %3933 = vmatprep.mubr.bf16.mxu0 0
        %3934 = vmatmul.mubr.bf16.gmra.mrb[0].mxu0 %v3865
        %v3935 = vpop.f32.mrb[0].mxu0
        %v3936 = vadd.f32 %v447, %v3935
        %v3937 = vpop.f32.mrb[0].mxu0
        %v3938 = vadd.f32 %v447, %v3937
        %v3939 = vpop.f32.mrb[0].mxu0
        %v3940 = vadd.f32 %v448, %v3939
        %v3941 = vpop.f32.mrb[0].mxu0
        %v3942 = vadd.f32 %v448, %v3941
        %3943 = vmatprep.mubr.bf16.mxu0 0
        %3944 = vmatmul.mubr.bf16.gmra.mrb[0].mxu0 %v3868
        %v3945 = vpop.f32.mrb[0].mxu0
        %v3946 = vadd.f32 %v449, %v3945
        %v3947 = vpop.f32.mrb[0].mxu0
        %v3948 = vadd.f32 %v449, %v3947
        %v3949 = vpop.f32.mrb[0].mxu0
        %v3950 = vadd.f32 %v450, %v3949
        %v3951 = vpop.f32.mrb[0].mxu0
        %v3952 = vadd.f32 %v450, %v3951
        %3953 = vmatprep.mubr.bf16.mxu0 0
        %3954 = vmatmul.mubr.bf16.gmra.mrb[0].mxu0 %v3871
        %v3955 = vpop.f32.mrb[0].mxu0
        %v3956 = vadd.f32 %v451, %v3955
        %v3957 = vpop.f32.mrb[0].mxu0
        %v3958 = vadd.f32 %v451, %v3957
        %v3959 = vpop.f32.mrb[0].mxu0
        %v3960 = vadd.f32 %v452, %v3959
        %v3961 = vpop.f32.mrb[0].mxu0
        %v3962 = vadd.f32 %v452, %v3961
        %3963 = vmatprep.mubr.bf16.mxu0 0
        %3964 = vmatmul.mubr.bf16.gmra.mrb[0].mxu0 %v3874
        %v3965 = vpop.f32.mrb[0].mxu0
        %v3966 = vadd.f32 %v453, %v3965
        %v3967 = vpop.f32.mrb[0].mxu0
        %v3968 = vadd.f32 %v453, %v3967
        %v3969 = vpop.f32.mrb[0].mxu0
        %v3970 = vadd.f32 %v454, %v3969
        %v3971 = vpop.f32.mrb[0].mxu0
        %v3972 = vadd.f32 %v454, %v3971
        %3973 = vmatprep.mubr.bf16.mxu0 0
        %3974 = vmatmul.mubr.bf16.gmra.mrb[0].mxu0 %v3877
        %v3975 = vpop.f32.mrb[0].mxu0
        %v3976 = vadd.f32 %v455, %v3975
        %v3977 = vpop.f32.mrb[0].mxu0
        %v3978 = vadd.f32 %v455, %v3977
        %v3979 = vpop.f32.mrb[0].mxu0
        %v3980 = vadd.f32 %v456, %v3979
        %v3981 = vpop.f32.mrb[0].mxu0
        %v3982 = vadd.f32 %v456, %v3981
        %3983 = vmatprep.mubr.bf16.mxu0 0
        %3984 = vmatmul.mubr.bf16.gmra.mrb[0].mxu0 %v3880
        %v3985 = vpop.f32.mrb[0].mxu0
        %v3986 = vadd.f32 %v457, %v3985
        %v3987 = vpop.f32.mrb[0].mxu0
        %v3988 = vadd.f32 %v457, %v3987
        %v3989 = vpop.f32.mrb[0].mxu0
        %v3990 = vadd.f32 %v458, %v3989
        %v3991 = vpop.f32.mrb[0].mxu0
        %v3992 = vadd.f32 %v458, %v3991
        %3993 = vmatprep.mubr.bf16.mxu0 0
        %3994 = vmatmul.mubr.bf16.gmra.mrb[0].mxu0 %v3883
        %v3995 = vpop.f32.mrb[0].mxu0
        %v3996 = vadd.f32 %v459, %v3995
        %v3997 = vpop.f32.mrb[0].mxu0
        %v3998 = vadd.f32 %v459, %v3997
        %v3999 = vpop.f32.mrb[0].mxu0
        %v4000 = vadd.f32 %v460, %v3999
        %v4001 = vpop.f32.mrb[0].mxu0
        %v4002 = vadd.f32 %v460, %v4001
        %4003 = vdwg.mxu0
        %v4004 = vmax.f32 %v3926, %v3936
        %v4005 = vmax.f32 %v3930, %v3940
        %v4006 = vmax.f32 %v4004, %v3946
        %v4007 = vmax.f32 %v4005, %v3950
        %v4008 = vmax.f32 %v4006, %v3956
        %v4009 = vmax.f32 %v4007, %v3960
        %v4010 = vmax.f32 %v4008, %v3966
        %v4011 = vmax.f32 %v4009, %v3970
        %v4012 = vmax.f32 %v4010, %v3976
        %v4013 = vmax.f32 %v4011, %v3980
        %v4014 = vmax.f32 %v4012, %v3986
        %v4015 = vmax.f32 %v4013, %v3990
        %v4016 = vmax.f32 %v4014, %v3996
        %v4017 = vmax.f32 %v4015, %v4000
        %v4018 = vmax.f32 %v4016, %v4017
        %v4019 = vrot.slane %v4018, 4
        %v4020 = vmax.f32 %v4018, %v4019
        %v4021 = vrot.slane %v4020, 2
        %v4022 = vmax.f32 %v4020, %v4021
        %v4023 = vrot.slane %v4022, 1
        %v4024 = vmax.f32 %v4022, %v4023
        %v4025 = vmax.f32 %v3928, %v3938
        %v4026 = vmax.f32 %v3932, %v3942
        %v4027 = vmax.f32 %v4025, %v3948
        %v4028 = vmax.f32 %v4026, %v3952
        %v4029 = vmax.f32 %v4027, %v3958
        %v4030 = vmax.f32 %v4028, %v3962
        %v4031 = vmax.f32 %v4029, %v3968
        %v4032 = vmax.f32 %v4030, %v3972
        %v4033 = vmax.f32 %v4031, %v3978
        %v4034 = vmax.f32 %v4032, %v3982
        %v4035 = vmax.f32 %v4033, %v3988
        %v4036 = vmax.f32 %v4034, %v3992
        %v4037 = vmax.f32 %v4035, %v3998
        %v4038 = vmax.f32 %v4036, %v4002
        %v4039 = vmax.f32 %v4037, %v4038
        %v4040 = vrot.slane %v4039, 4
        %v4041 = vmax.f32 %v4039, %v4040
        %v4042 = vrot.slane %v4041, 2
        %v4043 = vmax.f32 %v4041, %v4042
        %v4044 = vrot.slane %v4043, 1
        %v4045 = vmax.f32 %v4043, %v4044
        %v4046 = vsub.f32 %v3926, %v4024
        %v4047 = vsub.f32 %v3928, %v4045
        %v4048 = vsub.f32 %v3930, %v4024
        %v4049 = vsub.f32 %v3932, %v4045
        %v4050 = vsub.f32 %v3936, %v4024
        %v4051 = vsub.f32 %v3938, %v4045
        %v4052 = vsub.f32 %v3940, %v4024
        %v4053 = vsub.f32 %v3942, %v4045
        %v4054 = vsub.f32 %v3946, %v4024
        %v4055 = vsub.f32 %v3948, %v4045
        %v4056 = vsub.f32 %v3950, %v4024
        %v4057 = vsub.f32 %v3952, %v4045
        %v4058 = vsub.f32 %v3956, %v4024
        %v4059 = vsub.f32 %v3958, %v4045
        %v4060 = vsub.f32 %v3960, %v4024
        %v4061 = vsub.f32 %v3962, %v4045
        %v4062 = vsub.f32 %v3966, %v4024
        %v4063 = vsub.f32 %v3968, %v4045
        %v4064 = vsub.f32 %v3970, %v4024
        %v4065 = vsub.f32 %v3972, %v4045
        %v4066 = vsub.f32 %v3976, %v4024
        %v4067 = vsub.f32 %v3978, %v4045
        %v4068 = vsub.f32 %v3980, %v4024
        %v4069 = vsub.f32 %v3982, %v4045
        %v4070 = vsub.f32 %v3986, %v4024
        %v4071 = vsub.f32 %v3988, %v4045
        %v4072 = vsub.f32 %v3990, %v4024
        %v4073 = vsub.f32 %v3992, %v4045
        %v4074 = vsub.f32 %v3996, %v4024
        %v4075 = vsub.f32 %v3998, %v4045
        %v4076 = vsub.f32 %v4000, %v4024
        %v4077 = vsub.f32 %v4002, %v4045
        %v4078 = vmul.f32 %v4046, 1.442695
        %v4079 = vpow.pop %v4078
        %v4080 = vmul.f32 %v4047, 1.442695
        %v4081 = vpow.pop %v4080
        %v4082 = vmul.f32 %v4048, 1.442695
        %v4083 = vpow.pop %v4082
        %v4084 = vmul.f32 %v4049, 1.442695
        %v4085 = vpow.pop %v4084
        %v4086 = vmul.f32 %v4050, 1.442695
        %v4087 = vpow.pop %v4086
        %v4088 = vmul.f32 %v4051, 1.442695
        %v4089 = vpow.pop %v4088
        %v4090 = vmul.f32 %v4052, 1.442695
        %v4091 = vpow.pop %v4090
        %v4092 = vmul.f32 %v4053, 1.442695
        %v4093 = vpow.pop %v4092
        %v4094 = vmul.f32 %v4054, 1.442695
        %v4095 = vpow.pop %v4094
        %v4096 = vmul.f32 %v4055, 1.442695
        %v4097 = vpow.pop %v4096
        %v4098 = vmul.f32 %v4056, 1.442695
        %v4099 = vpow.pop %v4098
        %v4100 = vmul.f32 %v4057, 1.442695
        %v4101 = vpow.pop %v4100
        %v4102 = vmul.f32 %v4058, 1.442695
        %v4103 = vpow.pop %v4102
        %v4104 = vmul.f32 %v4059, 1.442695
        %v4105 = vpow.pop %v4104
        %v4106 = vmul.f32 %v4060, 1.442695
        %v4107 = vpow.pop %v4106
        %v4108 = vmul.f32 %v4061, 1.442695
        %v4109 = vpow.pop %v4108
        %v4110 = vmul.f32 %v4062, 1.442695
        %v4111 = vpow.pop %v4110
        %v4112 = vmul.f32 %v4063, 1.442695
        %v4113 = vpow.pop %v4112
        %v4114 = vmul.f32 %v4064, 1.442695
        %v4115 = vpow.pop %v4114
        %v4116 = vmul.f32 %v4065, 1.442695
        %v4117 = vpow.pop %v4116
        %v4118 = vmul.f32 %v4066, 1.442695
        %v4119 = vpow.pop %v4118
        %v4120 = vmul.f32 %v4067, 1.442695
        %v4121 = vpow.pop %v4120
        %v4122 = vmul.f32 %v4068, 1.442695
        %v4123 = vpow.pop %v4122
        %v4124 = vmul.f32 %v4069, 1.442695
        %v4125 = vpow.pop %v4124
        %v4126 = vmul.f32 %v4070, 1.442695
        %v4127 = vpow.pop %v4126
        %v4128 = vmul.f32 %v4071, 1.442695
        %v4129 = vpow.pop %v4128
        %v4130 = vmul.f32 %v4072, 1.442695
        %v4131 = vpow.pop %v4130
        %v4132 = vmul.f32 %v4073, 1.442695
        %v4133 = vpow.pop %v4132
        %v4134 = vmul.f32 %v4074, 1.442695
        %v4135 = vpow.pop %v4134
        %v4136 = vmul.f32 %v4075, 1.442695
        %v4137 = vpow.pop %v4136
        %v4138 = vmul.f32 %v4076, 1.442695
        %v4139 = vpow.pop %v4138
        %v4140 = vmul.f32 %v4077, 1.442695
        %v4141 = vpow.pop %v4140
        %v4142 = vadd.f32 %v4079, %v4083
        %v4143 = vadd.f32 %v4142, %v4087
        %v4144 = vadd.f32 %v4143, %v4091
        %v4145 = vadd.f32 %v4144, %v4095
        %v4146 = vadd.f32 %v4145, %v4099
        %v4147 = vadd.f32 %v4146, %v4103
        %v4148 = vadd.f32 %v4147, %v4107
        %v4149 = vadd.f32 %v4148, %v4111
        %v4150 = vadd.f32 %v4149, %v4115
        %v4151 = vadd.f32 %v4150, %v4119
        %v4152 = vadd.f32 %v4151, %v4123
        %v4153 = vadd.f32 %v4152, %v4127
        %v4154 = vadd.f32 %v4153, %v4131
        %v4155 = vadd.f32 %v4154, %v4135
        %v4156 = vadd.f32 %v4155, %v4139
        %v4157 = vrot.slane %v4156, 4
        %v4158 = vadd.f32 %v4156, %v4157
        %v4159 = vrot.slane %v4158, 2
        %v4160 = vadd.f32 %v4158, %v4159
        %v4161 = vrot.slane %v4160, 1
        %v4162 = vadd.f32 %v4160, %v4161
        %v4163 = vadd.f32 %v4081, %v4085
        %v4164 = vadd.f32 %v4163, %v4089
        %v4165 = vadd.f32 %v4164, %v4093
        %v4166 = vadd.f32 %v4165, %v4097
        %v4167 = vadd.f32 %v4166, %v4101
        %v4168 = vadd.f32 %v4167, %v4105
        %v4169 = vadd.f32 %v4168, %v4109
        %v4170 = vadd.f32 %v4169, %v4113
        %v4171 = vadd.f32 %v4170, %v4117
        %v4172 = vadd.f32 %v4171, %v4121
        %v4173 = vadd.f32 %v4172, %v4125
        %v4174 = vadd.f32 %v4173, %v4129
        %v4175 = vadd.f32 %v4174, %v4133
        %v4176 = vadd.f32 %v4175, %v4137
        %v4177 = vadd.f32 %v4176, %v4141
        %v4178 = vrot.slane %v4177, 4
        %v4179 = vadd.f32 %v4177, %v4178
        %v4180 = vrot.slane %v4179, 2
        %v4181 = vadd.f32 %v4179, %v4180
        %v4182 = vrot.slane %v4181, 1
        %v4183 = vadd.f32 %v4181, %v4182
        %v4184 = vrcp.pop %v4162
        %v4185 = vrcp.pop %v4183
        %v4186 = vmul.f32 %v4079, %v4184
        %v4187 = vmul.f32 %v4081, %v4185
        %v4188 = vmul.f32 %v4083, %v4184
        %v4189 = vmul.f32 %v4085, %v4185
        %v4190 = vmul.f32 %v4087, %v4184
        %v4191 = vmul.f32 %v4089, %v4185
        %v4192 = vmul.f32 %v4091, %v4184
        %v4193 = vmul.f32 %v4093, %v4185
        %v4194 = vmul.f32 %v4095, %v4184
        %v4195 = vmul.f32 %v4097, %v4185
        %v4196 = vmul.f32 %v4099, %v4184
        %v4197 = vmul.f32 %v4101, %v4185
        %v4198 = vmul.f32 %v4103, %v4184
        %v4199 = vmul.f32 %v4105, %v4185
        %v4200 = vmul.f32 %v4107, %v4184
        %v4201 = vmul.f32 %v4109, %v4185
        %v4202 = vmul.f32 %v4111, %v4184
        %v4203 = vmul.f32 %v4113, %v4185
        %v4204 = vmul.f32 %v4115, %v4184
        %v4205 = vmul.f32 %v4117, %v4185
        %v4206 = vmul.f32 %v4119, %v4184
        %v4207 = vmul.f32 %v4121, %v4185
        %v4208 = vmul.f32 %v4123, %v4184
        %v4209 = vmul.f32 %v4125, %v4185
        %v4210 = vmul.f32 %v4127, %v4184
        %v4211 = vmul.f32 %v4129, %v4185
        %v4212 = vmul.f32 %v4131, %v4184
        %v4213 = vmul.f32 %v4133, %v4185
        %v4214 = vmul.f32 %v4135, %v4184
        %v4215 = vmul.f32 %v4137, %v4185
        %v4216 = vmul.f32 %v4139, %v4184
        %v4217 = vmul.f32 %v4141, %v4185
        %v4218 = vpack.c.bf16 %v4188, %v4186
        %v4219 = vpack.c.bf16 %v4189, %v4187
        %v4220 = vpack.c.bf16 %v4192, %v4190
        %v4221 = vpack.c.bf16 %v4193, %v4191
        %v4222 = vpack.c.bf16 %v4196, %v4194
        %v4223 = vpack.c.bf16 %v4197, %v4195
        %v4224 = vpack.c.bf16 %v4200, %v4198
        %v4225 = vpack.c.bf16 %v4201, %v4199
        %v4226 = vpack.c.bf16 %v4204, %v4202
        %v4227 = vpack.c.bf16 %v4205, %v4203
        %v4228 = vpack.c.bf16 %v4208, %v4206
        %v4229 = vpack.c.bf16 %v4209, %v4207
        %v4230 = vpack.c.bf16 %v4212, %v4210
        %v4231 = vpack.c.bf16 %v4213, %v4211
        %v4232 = vpack.c.bf16 %v4216, %v4214
        %v4233 = vpack.c.bf16 %v4217, %v4215
        %4234 = vmatprep.subr.bf16.mxu0 %v4219
        %4235 = vmatpush1.bf16.msra.mxu0 %v4218
        %4236 = vmatprep.subr.bf16.mxu0 %v4221
        %4237 = vmatpush1.bf16.msra.mxu0 %v4220
        %4238 = vmatprep.subr.bf16.mxu0 %v4223
        %4239 = vmatpush1.bf16.msra.mxu0 %v4222
        %4240 = vmatprep.subr.bf16.mxu0 %v4225
        %4241 = vmatpush1.bf16.msra.mxu0 %v4224
        %4242 = vmatprep.subr.bf16.mxu0 %v4227
        %4243 = vmatpush1.bf16.msra.mxu0 %v4226
        %4244 = vmatprep.subr.bf16.mxu0 %v4229
        %4245 = vmatpush1.bf16.msra.mxu0 %v4228
        %4246 = vmatprep.subr.bf16.mxu0 %v4231
        %4247 = vmatpush1.bf16.msra.mxu0 %v4230
        %4248 = vmatprep.subr.bf16.mxu0 %v4233
        %4249 = vmatpush1.bf16.msra.mxu0 %v4232
        %4250 = vmatprep.subr.bf16.mxu0 0
        %4251 = vmatpush1.bf16.msra.mxu0 0
        %4252 = vmatprep.subr.bf16.mxu0 0
        %4253 = vmatpush1.bf16.msra.mxu0 0
        %4254 = vmatprep.subr.bf16.mxu0 0
        %4255 = vmatpush1.bf16.msra.mxu0 0
        %4256 = vmatprep.subr.bf16.mxu0 0
        %4257 = vmatpush1.bf16.msra.mxu0 0
        %4258 = vmatprep.subr.bf16.mxu0 0
        %4259 = vmatpush1.bf16.msra.mxu0 0
        %4260 = vmatprep.subr.bf16.mxu0 0
        %4261 = vmatpush1.bf16.msra.mxu0 0
        %4262 = vmatprep.subr.bf16.mxu0 0
        %4263 = vmatpush1.bf16.msra.mxu0 0
        %4264 = vmatprep.subr.bf16.mxu0 0
        %4265 = vmatpush1.bf16.msra.mxu0 0
        %4266 = vmatprep.mubr.bf16.mxu0 0
        %4267 = vmatmul.mubr.bf16.gmra.mrb[0].mxu0 %v3818
        %v4268 = vpop.f32.mrb[0].mxu0
        %v4269 = vadd.f32 0.0, %v4268
        %v4270 = vpop.f32.mrb[0].mxu0
        %v4271 = vadd.f32 0.0, %v4270
        %v4272 = vpop.f32.mrb[0].mxu0
        %v4273 = vpop.f32.mrb[0].mxu0
        %4274 = vdwg.mxu0
        %v4275 = vpack.c.bf16 %v4269, %v4269
        %v4276 = vpack.c.bf16 %v4271, %v4271
        %v4279 = vrot.slane %v1413, 6
        %v4280 = vrot.slane %v1414, 6
        %v4283 = vrot.slane %v1890, 4
        %v4284 = vrot.slane %v1891, 4
        %v4287 = vrot.slane %v2367, 2
        %v4288 = vrot.slane %v2368, 2
        %v4291 = vrot.slane %v3321, 6
        %v4292 = vrot.slane %v3322, 6
        %v4295 = vrot.slane %v3798, 4
        %v4296 = vrot.slane %v3799, 4
        %v4299 = vrot.slane %v4275, 2
        %v4300 = vrot.slane %v4276, 2
        %v4303 = vsel %vm543, %v934, %v4279
        %v4306 = vsel %vm543, %v935, %v4280
        %vm4307 = vcmask 1043456
        %v4309 = vsel %vm4307, %v4303, %v4283
        %v4311 = vsel %vm4307, %v4306, %v4284
        %vm4312 = vcmask 1045504
        %v4314 = vsel %vm4312, %v4309, %v4287
        %v4317 = vsel %vm4312, %v4311, %v4288
        %v4321 = vsel %vm543, %v2842, %v4291
        %v4324 = vsel %vm543, %v2843, %v4292
        %v4326 = vsel %vm4307, %v4321, %v4295
        %v4328 = vsel %vm4307, %v4324, %v4296
        %v4330 = vsel %vm4312, %v4326, %v4299
        %v4333 = vsel %vm4312, %v4328, %v4300
        %v4335 = vld [vmem:[%s4] sm:$0xf]
        %v4336 = vld [vmem:[%s4 + $0x4] sm:$0xf]
        %v4337 = vld [vmem:[%s4 + $0x8] sm:$0xf]
        %v4338 = vld [vmem:[%s4 + $0xc] sm:$0xf]
        %v4339 = vld [vmem:[%s5] sm:$0xff]
        %v4340 = vld [vmem:[%s5 + $0x8] sm:$0xff]
        %v4341 = vld [vmem:[%s5 + $0x10] sm:$0xff]
        %v4342 = vld [vmem:[%s5 + $0x18] sm:$0xff]
        %4344 = vset.pattern.permute.xlu0 0
        %4345 = vperm.xlu0 %4344, %v4339
        %v4346 = vpop.permute.xlu0 %4345
        %4349 = vset.pattern.permute.xlu0 0
        %4350 = vperm.xlu0 %4349, %v4340
        %v4351 = vpop.permute.xlu0 %4350
        %4354 = vset.pattern.permute.xlu0 0
        %4355 = vperm.xlu0 %4354, %v4341
        %v4356 = vpop.permute.xlu0 %4355
        %4359 = vset.pattern.permute.xlu0 0
        %4360 = vperm.xlu0 %4359, %v4342
        %v4361 = vpop.permute.xlu0 %4360
        %v4367 = vunpack.c.l.b16 %v4335
        %v4368 = vunpack.c.l.b16 %v4336
        %v4369 = vunpack.c.l.b16 %v4337
        %v4370 = vunpack.c.l.b16 %v4338
        %v4371 = vpack.c.b16 %v4368, %v4367
        %v4372 = vpack.c.b16 %v4370, %v4369
        %v4374 = vsel %vm348, %v4371, 0
        %v4377 = vsel %vm348, %v4372, 0
        %4379 = vmatprep.subr.bf16.mxu0 %v4317
        %4380 = vmatpush1.bf16.msra.mxu0 %v4314
        %4381 = vmatprep.subr.bf16.mxu0 %v4333
        %4382 = vmatpush1.bf16.msra.mxu0 %v4330
        %4383 = vmatprep.subr.bf16.mxu0 0
        %4384 = vmatpush1.bf16.msra.mxu0 0
        %4385 = vmatprep.subr.bf16.mxu0 0
        %4386 = vmatpush1.bf16.msra.mxu0 0
        %4387 = vmatprep.subr.bf16.mxu0 0
        %4388 = vmatpush1.bf16.msra.mxu0 0
        %4389 = vmatprep.subr.bf16.mxu0 0
        %4390 = vmatpush1.bf16.msra.mxu0 0
        %4391 = vmatprep.subr.bf16.mxu0 0
        %4392 = vmatpush1.bf16.msra.mxu0 0
        %4393 = vmatprep.subr.bf16.mxu0 0
        %4394 = vmatpush1.bf16.msra.mxu0 0
        %4395 = vmatprep.subr.bf16.mxu0 0
        %4396 = vmatpush1.bf16.msra.mxu0 0
        %4397 = vmatprep.subr.bf16.mxu0 0
        %4398 = vmatpush1.bf16.msra.mxu0 0
        %4399 = vmatprep.subr.bf16.mxu0 0
        %4400 = vmatpush1.bf16.msra.mxu0 0
        %4401 = vmatprep.subr.bf16.mxu0 0
        %4402 = vmatpush1.bf16.msra.mxu0 0
        %4403 = vmatprep.subr.bf16.mxu0 0
        %4404 = vmatpush1.bf16.msra.mxu0 0
        %4405 = vmatprep.subr.bf16.mxu0 0
        %4406 = vmatpush1.bf16.msra.mxu0 0
        %4407 = vmatprep.subr.bf16.mxu0 0
        %4408 = vmatpush1.bf16.msra.mxu0 0
        %4409 = vmatprep.subr.bf16.mxu0 0
        %4410 = vmatpush1.bf16.msra.mxu0 0
        %4411 = vmatprep.mubr.bf16.mxu0 0
        %4412 = vmatmul.mubr.bf16.gmra.mrb[0].mxu0 %v4374
        %v4413 = vpop.f32.mrb[0].mxu0
        %v4414 = vadd.f32 %v4346, %v4413
        %v4415 = vpop.f32.mrb[0].mxu0
        %v4416 = vadd.f32 %v4346, %v4415
        %v4417 = vpop.f32.mrb[0].mxu0
        %v4418 = vadd.f32 %v4351, %v4417
        %v4419 = vpop.f32.mrb[0].mxu0
        %v4420 = vadd.f32 %v4351, %v4419
        %4421 = vmatprep.mubr.bf16.mxu0 0
        %4422 = vmatmul.mubr.bf16.gmra.mrb[0].mxu0 %v4377
        %v4423 = vpop.f32.mrb[0].mxu0
        %v4424 = vadd.f32 %v4356, %v4423
        %v4425 = vpop.f32.mrb[0].mxu0
        %v4426 = vadd.f32 %v4356, %v4425
        %v4427 = vpop.f32.mrb[0].mxu0
        %v4428 = vadd.f32 %v4361, %v4427
        %v4429 = vpop.f32.mrb[0].mxu0
        %v4430 = vadd.f32 %v4361, %v4429
        %4431 = vdwg.mxu0
        %v4432 = vadd.f32 %v4414, %v322
        %v4433 = vadd.f32 %v4416, %v323
        %v4434 = vadd.f32 %v4418, %v324
        %v4435 = vadd.f32 %v4420, %v325
        %v4436 = vadd.f32 %v4424, %v326
        %v4437 = vadd.f32 %v4426, %v327
        %v4438 = vadd.f32 %v4428, %v328
        %v4439 = vadd.f32 %v4430, %v329
        %4440 = vst [vmem:[%s299] sm:$0xff] %v4432
        %4441 = vst [vmem:[%s299 + $0x8] sm:$0xff] %v4433
        %4442 = vst [vmem:[%s299 + $0x10] sm:$0xff] %v4434
        %4443 = vst [vmem:[%s299 + $0x18] sm:$0xff] %v4435
        %4444 = vst [vmem:[%s299 + $0x20] sm:$0xff] %v4436
        %4445 = vst [vmem:[%s299 + $0x28] sm:$0xff] %v4437
        %4446 = vst [vmem:[%s299 + $0x30] sm:$0xff] %v4438
        %4447 = vst [vmem:[%s299 + $0x38] sm:$0xff] %v4439
        %s4448 = sand.u32 %s185, 1
        %s4449 = scalar_lea.sflag [#allocation3], %s4448
        %s4450 = sand.u32 %s185, 1
        %s4451 = smul.addr %s4450, 64
        %s4452 = scalar_lea.vmem [#allocation2], %s4451
        // Predicated region
        $region45: #{tpu_custom_call.1} parent=43 // pred_check
          %p4453 = pneg %p195
        $region46: #{tpu_custom_call.1} parent=43 // pred_check_branch
          %4455 = sbr.rel (%p4453) target = $region48
        $region47: #{tpu_custom_call.1} parent=43 // pred_region
          %s4456 = smul.u32 2, %s25
          %s4458 = ssub.s32 1024, 1024
          %4459 = vsyncadd %s4449, %s4458
          %s4460 = smul.addr %s24, 8
          %s4461 = sadd.s32 %s4456, %s4460
          %s4462 = smul.addr %s4461, 128
          %s4463 = scalar_lea.hbm %s6, %s4462
          %s4464 = sshll.u32 %s4452, 4
          %s4465 = int_to_ptr.vmem [resolvable:$true] %s4464
          %4470 = dma.vmem_to_hbm [thread:$0]  %s4465, 1024, %s4463, %s4449, 256, 256, 16
        $region48: #{tpu_custom_call.1} parent=43 // pred_fallthru
          _
      $region44: #{tpu_custom_call.1} parent=5 // pred_fallthru
        _
      %p4471 = scmp.le.s32.totalorder 2, %s15
      // Predicated region
      $region49: #{tpu_custom_call.1} parent=5 // pred_check
        %p4472 = pneg %p4471
      $region50: #{tpu_custom_call.1} parent=5 // pred_check_branch
        %4474 = sbr.rel (%p4472) target = $region52
      $region51: #{tpu_custom_call.1} parent=5 // pred_region
        %s4475 = ssub.s32 %s15, 2
        // Predicated region
        $region53: #{tpu_custom_call.1} parent=51 // pred_check
          %p4476 = pneg %p201
        $region54: #{tpu_custom_call.1} parent=51 // pred_check_branch
          %4478 = sbr.rel (%p4476) target = $region56
        $region55: #{tpu_custom_call.1} parent=51 // pred_region
          %s4479 = sand.u32 %s186, 1
          %s4480 = scalar_lea.sflag [#allocation3], %s4479
          %s4481 = sand.u32 %s186, 1
          %s4482 = smul.addr %s4481, 64
          %s4483 = scalar_lea.vmem [#allocation2], %s4482
          %4484 = dma.done %s4480, 1024
        $region56: #{tpu_custom_call.1} parent=51 // pred_fallthru
          _
      $region52: #{tpu_custom_call.1} parent=5 // pred_fallthru
        _
    $region6: #{tpu_custom_call.1} parent=1 // loop_footer
      %s19 = sadd.s32 1, %s15
    $region7: #{tpu_custom_call.1} parent=1 // loop_footer_branch
      %14 = sbr.rel target = $region3
    $region8: #{tpu_custom_call.1} parent=1 // loop_exit
      _
    %4485 = vsyncpa [#allocation3], 1
    %s4486 = scalar_lea.sflag [#allocation3], 1
    %4487 = vsyncpa %s4486, 1

// kernel: tpu_custom_call.1
$region0: #{tpu_custom_call.1}
  #allocation0 [shape = 'u32[]', space=smem, size = 0x4, offset = 0x4, fixed_abs, tag = 'smem constant byte address 0x4 - core index']
  #allocation1 [shape = 'u32[144,128]{1,0:T(1,128)}', space=vmem, size = 0x12000, scoped, tag = 'internal scratch']
  %s0 = inlined_call_operand.vmem [shape: f32[2,32,256], index: 0, kind: input, shape index: {}]
  %s1 = inlined_call_operand.vmem [shape: bf16[2,8,128,4], index: 1, kind: input, shape index: {}]
  %s2 = inlined_call_operand.vmem [shape: bf16[2,8,4,128], index: 2, kind: input, shape index: {}]
  %s3 = inlined_call_operand.vmem [shape: bf16[32,32], index: 3, kind: input, shape index: {}]
  %s4 = inlined_call_operand.vmem [shape: bf16[32,32], index: 4, kind: input, shape index: {}]
  %s5 = inlined_call_operand.vmem [shape: f32[32,1], index: 5, kind: input, shape index: {}]
  %s6 = inlined_call_operand.hbm [shape: f32[2,32,256], index: 6, kind: output, shape index: {}]
  %s7 = sld [smem:[#allocation0]]
  $region57: #{tpu_custom_call.1} parent=0
    _
  %s9 = ssub.s32 1, %s7
  %s10 = scalar_select 0, %s9, %s7
  $region1: #{tpu_custom_call.1} parent=0
    #allocation2 [shape = 'u8[65536]{0}', space=vmem, size = 0x10000, scoped, tag = 'output window, operand 0']
    #allocation3 [shape = 's32[2]{0}', space=sflag, size = 0x8, scoped, tag = 'scoped memory for tpu_custom_call.1']
    %11 = vsyncpa [#allocation3], 0
    %s12 = scalar_lea.sflag [#allocation3], 1
    %13 = vsyncpa %s12, 0
    loop: start=0, step=1, limit=4
    $region2: #{tpu_custom_call.1} parent=1 // loop_pre_header
      _
    $region3: #{tpu_custom_call.1} parent=1 // loop_header
      %s15 = sphi 0, %s19
      %p16 = scmp.ge.s32.totalorder %s15, 4
      %s22 = sphi 0, %s34
      %s23 = sphi 0, %s30
      %s24 = sphi 0, %s22
      %s25 = sphi 0, %s23
      %s26 = sphi 0, %s24
      %s27 = sphi 0, %s25
      %s39 = sphi 0, %s41
      %s42 = sphi 0, %s39
      %s43 = sphi 0, %s42
      %s59 = sphi 0, %s43
      %s65 = sphi 0, %s67
      %s68 = sphi 0, %s65
      %s69 = sphi 0, %s68
      %s85 = sphi 0, %s69
      %s91 = sphi 0, %s93
      %s94 = sphi 0, %s91
      %s95 = sphi 0, %s94
      %s111 = sphi 0, %s95
      %s115 = sphi 0, %s115
      %s117 = sphi 0, %s115
      %s118 = sphi 0, %s117
      %s132 = sphi 0, %s118
      %s136 = sphi 0, %s136
      %s138 = sphi 0, %s136
      %s139 = sphi 0, %s138
      %s153 = sphi 0, %s139
      %s157 = sphi 0, %s157
      %s159 = sphi 0, %s157
      %s160 = sphi 0, %s159
      %s174 = sphi 0, %s160
      %s182 = sphi 0, %s184
      %s185 = sphi 0, %s182
      %s186 = sphi 0, %s185
      %s202 = sphi 0, %s186
    $region4: #{tpu_custom_call.1} parent=1 // loop_header_branch
      %18 = sbr.rel (%p16) target = $region8
    $region5: #{tpu_custom_call.1} parent=1 // loop_body
      %s20 = ssub.s32 %s15, 1
      %s21 = ssub.s32 %s15, 2
      %s28 = sadd.s32 1, %s23
      %p29 = scmp.ge.s32.totalorder %s28, 1
      %s30 = scalar_select %p29, 0, %s28
      %s31 = sadd.s32 1, %s22
      %s32 = scalar_select %p29, %s31, %s22
      %p33 = scmp.ge.s32.totalorder %s32, 2
      %s34 = scalar_select %p33, 0, %s32
      %s35 = ssub.s32 %s22, %s34
      %s36 = ssub.s32 %s23, %s30
      %s37 = sor.u32 %s35, %s36
      %p38 = scmp.eq.s32.totalorder %s37, 0
      %s40 = sadd.s32 %s39, 1
      %s41 = scalar_select %p38, %s39, %s40
      %p44 = pneg %p38
      %p45 = scmp.eq.s32.totalorder %s15, 1
      %p46 = por %p44, %p45
      %p47 = scmp.ne.s32.totalorder %s39, %s42
      %p48 = scmp.eq.s32.totalorder %s15, 0
      %p49 = por %p47, %p48
      %p50 = scmp.ne.s32.totalorder %s39, %s42
      %p51 = scmp.eq.s32.totalorder %s20, 1
      %p52 = por %p50, %p51
      %p53 = scmp.ne.s32.totalorder %s42, %s43
      %p54 = scmp.eq.s32.totalorder %s20, 0
      %p55 = por %p53, %p54
      %p56 = scmp.ne.s32.totalorder %s42, %s43
      %p57 = scmp.eq.s32.totalorder %s21, 1
      %p58 = por %p56, %p57
      %p60 = scmp.ne.s32.totalorder %s43, %s59
      %p61 = scmp.eq.s32.totalorder %s21, 0
      %p62 = por %p60, %p61
      %s63 = ssub.s32 %s22, %s34
      %p64 = scmp.eq.s32.totalorder %s63, 0
      %s66 = sadd.s32 %s65, 1
      %s67 = scalar_select %p64, %s65, %s66
      %p70 = pneg %p64
      %p71 = scmp.eq.s32.totalorder %s15, 1
      %p72 = por %p70, %p71
      %p73 = scmp.ne.s32.totalorder %s65, %s68
      %p74 = scmp.eq.s32.totalorder %s15, 0
      %p75 = por %p73, %p74
      %p76 = scmp.ne.s32.totalorder %s65, %s68
      %p77 = scmp.eq.s32.totalorder %s20, 1
      %p78 = por %p76, %p77
      %p79 = scmp.ne.s32.totalorder %s68, %s69
      %p80 = scmp.eq.s32.totalorder %s20, 0
      %p81 = por %p79, %p80
      %p82 = scmp.ne.s32.totalorder %s68, %s69
      %p83 = scmp.eq.s32.totalorder %s21, 1
      %p84 = por %p82, %p83
      %p86 = scmp.ne.s32.totalorder %s69, %s85
      %p87 = scmp.eq.s32.totalorder %s21, 0
      %p88 = por %p86, %p87
      %s89 = ssub.s32 %s22, %s34
      %p90 = scmp.eq.s32.totalorder %s89, 0
      %s92 = sadd.s32 %s91, 1
      %s93 = scalar_select %p90, %s91, %s92
      %p96 = pneg %p90
      %p97 = scmp.eq.s32.totalorder %s15, 1
      %p98 = por %p96, %p97
      %p99 = scmp.ne.s32.totalorder %s91, %s94
      %p100 = scmp.eq.s32.totalorder %s15, 0
      %p101 = por %p99, %p100
      %p102 = scmp.ne.s32.totalorder %s91, %s94
      %p103 = scmp.eq.s32.totalorder %s20, 1
      %p104 = por %p102, %p103
      %p105 = scmp.ne.s32.totalorder %s94, %s95
      %p106 = scmp.eq.s32.totalorder %s20, 0
      %p107 = por %p105, %p106
      %p108 = scmp.ne.s32.totalorder %s94, %s95
      %p109 = scmp.eq.s32.totalorder %s21, 1
      %p110 = por %p108, %p109
      %p112 = scmp.ne.s32.totalorder %s95, %s111
      %p113 = scmp.eq.s32.totalorder %s21, 0
      %p114 = por %p112, %p113
      %s116 = sadd.s32 %s115, 1
      %p119 = scmp.eq.s32.totalorder %s15, 1
      %p120 = scmp.ne.s32.totalorder %s115, %s117
      %p121 = scmp.eq.s32.totalorder %s15, 0
      %p122 = por %p120, %p121
      %p123 = scmp.ne.s32.totalorder %s115, %s117
      %p124 = scmp.eq.s32.totalorder %s20, 1
      %p125 = por %p123, %p124
      %p126 = scmp.ne.s32.totalorder %s117, %s118
      %p127 = scmp.eq.s32.totalorder %s20, 0
      %p128 = por %p126, %p127
      %p129 = scmp.ne.s32.totalorder %s117, %s118
      %p130 = scmp.eq.s32.totalorder %s21, 1
      %p131 = por %p129, %p130
      %p133 = scmp.ne.s32.totalorder %s118, %s132
      %p134 = scmp.eq.s32.totalorder %s21, 0
      %p135 = por %p133, %p134
      %s137 = sadd.s32 %s136, 1
      %p140 = scmp.eq.s32.totalorder %s15, 1
      %p141 = scmp.ne.s32.totalorder %s136, %s138
      %p142 = scmp.eq.s32.totalorder %s15, 0
      %p143 = por %p141, %p142
      %p144 = scmp.ne.s32.totalorder %s136, %s138
      %p145 = scmp.eq.s32.totalorder %s20, 1
      %p146 = por %p144, %p145
      %p147 = scmp.ne.s32.totalorder %s138, %s139
      %p148 = scmp.eq.s32.totalorder %s20, 0
      %p149 = por %p147, %p148
      %p150 = scmp.ne.s32.totalorder %s138, %s139
      %p151 = scmp.eq.s32.totalorder %s21, 1
      %p152 = por %p150, %p151
      %p154 = scmp.ne.s32.totalorder %s139, %s153
      %p155 = scmp.eq.s32.totalorder %s21, 0
      %p156 = por %p154, %p155
      %s158 = sadd.s32 %s157, 1
      %p161 = scmp.eq.s32.totalorder %s15, 1
      %p162 = scmp.ne.s32.totalorder %s157, %s159
      %p163 = scmp.eq.s32.totalorder %s15, 0
      %p164 = por %p162, %p163
      %p165 = scmp.ne.s32.totalorder %s157, %s159
      %p166 = scmp.eq.s32.totalorder %s20, 1
      %p167 = por %p165, %p166
      %p168 = scmp.ne.s32.totalorder %s159, %s160
      %p169 = scmp.eq.s32.totalorder %s20, 0
      %p170 = por %p168, %p169
      %p171 = scmp.ne.s32.totalorder %s159, %s160
      %p172 = scmp.eq.s32.totalorder %s21, 1
      %p173 = por %p171, %p172
      %p175 = scmp.ne.s32.totalorder %s160, %s174
      %p176 = scmp.eq.s32.totalorder %s21, 0
      %p177 = por %p175, %p176
      %s178 = ssub.s32 %s22, %s34
      %s179 = ssub.s32 %s23, %s30
      %s180 = sor.u32 %s178, %s179
      %p181 = scmp.eq.s32.totalorder %s180, 0
      %s183 = sadd.s32 %s182, 1
      %s184 = scalar_select %p181, %s182, %s183
      %p187 = pneg %p181
      %p188 = scmp.eq.s32.totalorder %s15, 1
      %p189 = por %p187, %p188
      %p190 = scmp.ne.s32.totalorder %s182, %s185
      %p191 = scmp.eq.s32.totalorder %s15, 0
      %p192 = por %p190, %p191
      %p193 = scmp.ne.s32.totalorder %s182, %s185
      %p194 = scmp.eq.s32.totalorder %s20, 1
      %p195 = por %p193, %p194
      %p196 = scmp.ne.s32.totalorder %s185, %s186
      %p197 = scmp.eq.s32.totalorder %s20, 0
      %p198 = por %p196, %p197
      %p199 = scmp.ne.s32.totalorder %s185, %s186
      %p200 = scmp.eq.s32.totalorder %s21, 1
      %p201 = por %p199, %p200
      %p203 = scmp.ne.s32.totalorder %s186, %s202
      %p204 = scmp.eq.s32.totalorder %s21, 0
      %p205 = por %p203, %p204
      %p206 = scmp.le.s32.totalorder 1, %s15
      %p207 = scmp.lt.s32.totalorder %s15, 3
      %p208 = pnand %p206, %p207
      %p209 = pneg %p208
      // Predicated region
      $region9: #{tpu_custom_call.1} parent=5 // pred_check
        _
      $region10: #{tpu_custom_call.1} parent=5 // pred_check_branch
        %211 = sbr.rel (%p208) target = $region12
      $region11: #{tpu_custom_call.1} parent=5 // pred_region
        %s212 = ssub.s32 %s15, 1
        // Predicated region
        $region13: #{tpu_custom_call.1} parent=11 // pred_check
          %p213 = pneg %p128
        $region14: #{tpu_custom_call.1} parent=11 // pred_check_branch
          %215 = sbr.rel (%p213) target = $region16
        $region15: #{tpu_custom_call.1} parent=11 // pred_region
          _
        $region16: #{tpu_custom_call.1} parent=11 // pred_fallthru
          _
        // Predicated region
        $region17: #{tpu_custom_call.1} parent=11 // pred_check
          %p216 = pneg %p149
        $region18: #{tpu_custom_call.1} parent=11 // pred_check_branch
          %218 = sbr.rel (%p216) target = $region20
        $region19: #{tpu_custom_call.1} parent=11 // pred_region
          _
        $region20: #{tpu_custom_call.1} parent=11 // pred_fallthru
          _
        // Predicated region
        $region21: #{tpu_custom_call.1} parent=11 // pred_check
          %p219 = pneg %p170
        $region22: #{tpu_custom_call.1} parent=11 // pred_check_branch
          %221 = sbr.rel (%p219) target = $region24
        $region23: #{tpu_custom_call.1} parent=11 // pred_region
          _
        $region24: #{tpu_custom_call.1} parent=11 // pred_fallthru
          _
      $region12: #{tpu_custom_call.1} parent=5 // pred_fallthru
        _
      %p222 = scmp.lt.s32.totalorder %s15, 2
      // Predicated region
      $region25: #{tpu_custom_call.1} parent=5 // pred_check
        %p223 = pneg %p222
      $region26: #{tpu_custom_call.1} parent=5 // pred_check_branch
        %225 = sbr.rel (%p223) target = $region28
      $region27: #{tpu_custom_call.1} parent=5 // pred_region
        // Predicated region
        $region29: #{tpu_custom_call.1} parent=27 // pred_check
          %p226 = pneg %p49
        $region30: #{tpu_custom_call.1} parent=27 // pred_check_branch
          %228 = sbr.rel (%p226) target = $region32
        $region31: #{tpu_custom_call.1} parent=27 // pred_region
          %s229 = smul.u32 2, %s23
          %p230 = scmp.lt.s32.totalorder %s22, 1
          %s231 = scalar_select %p230, %s22, 1
          %p232 = scmp.lt.s32.totalorder %s229, 1
          %s233 = scalar_select %p232, %s229, 1
          %s234 = smul.addr %s231, 8
          %s235 = sadd.s32 %s233, %s234
          %s236 = smul.addr %s235, 8
          %s237 = scalar_lea.vmem %s0, %s236
          %s238 = smul.u32 2, %s23
        $region32: #{tpu_custom_call.1} parent=27 // pred_fallthru
          _
        // Predicated region
        $region33: #{tpu_custom_call.1} parent=27 // pred_check
          %p239 = pneg %p75
        $region34: #{tpu_custom_call.1} parent=27 // pred_check_branch
          %241 = sbr.rel (%p239) target = $region36
        $region35: #{tpu_custom_call.1} parent=27 // pred_region
          %p242 = scmp.lt.s32.totalorder %s22, 1
          %s243 = scalar_select %p242, %s22, 1
          %s244 = smul.addr %s243, 128
          %s245 = smul.addr %s244, 4
          %s246 = scalar_lea.vmem %s1, %s245
        $region36: #{tpu_custom_call.1} parent=27 // pred_fallthru
          _
        // Predicated region
        $region37: #{tpu_custom_call.1} parent=27 // pred_check
          %p247 = pneg %p101
        $region38: #{tpu_custom_call.1} parent=27 // pred_check_branch
          %249 = sbr.rel (%p247) target = $region40
        $region39: #{tpu_custom_call.1} parent=27 // pred_region
          %p250 = scmp.lt.s32.totalorder %s22, 1
          %s251 = scalar_select %p250, %s22, 1
          %s252 = smul.addr %s251, 8
          %s253 = smul.addr %s252, 2
          %s254 = scalar_lea.vmem %s2, %s253
        $region40: #{tpu_custom_call.1} parent=27 // pred_fallthru
          _
      $region28: #{tpu_custom_call.1} parent=5 // pred_fallthru
        _
      %p255 = scmp.le.s32.totalorder 1, %s15
      %p256 = scmp.lt.s32.totalorder %s15, 3
      %p257 = pnand %p255, %p256
      %p258 = pneg %p257
      // Predicated region
      $region41: #{tpu_custom_call.1} parent=5 // pred_check
        _
      $region42: #{tpu_custom_call.1} parent=5 // pred_check_branch
        %260 = sbr.rel (%p257) target = $region44
      $region43: #{tpu_custom_call.1} parent=5 // pred_region
        %s261 = ssub.s32 %s15, 1
        %s262 = smul.u32 2, %s25
        %p263 = scmp.lt.s32.totalorder %s24, 1
        %s264 = scalar_select %p263, %s24, 1
        %p265 = scmp.lt.s32.totalorder %s262, 1
        %s266 = scalar_select %p265, %s262, 1
        %s267 = smul.addr %s264, 8
        %s268 = sadd.s32 %s266, %s267
        %s269 = smul.addr %s268, 8
        %s270 = scalar_lea.vmem %s0, %s269
        %p271 = pneg %p55
        %p272 = pneg %p52
        %p273 = scmp.lt.s32.totalorder %s24, 1
        %s274 = scalar_select %p273, %s24, 1
        %s275 = smul.addr %s274, 128
        %s276 = smul.addr %s275, 4
        %s277 = scalar_lea.vmem %s1, %s276
        %p278 = pneg %p81
        %p279 = pneg %p78
        %p280 = scmp.lt.s32.totalorder %s24, 1
        %s281 = scalar_select %p280, %s24, 1
        %s282 = smul.addr %s281, 8
        %s283 = smul.addr %s282, 2
        %s284 = scalar_lea.vmem %s2, %s283
        %p285 = pneg %p107
        %p286 = pneg %p104
        %p287 = pneg %p128
        %p288 = pneg %p125
        %p289 = pneg %p149
        %p290 = pneg %p146
        %p291 = pneg %p170
        %p292 = pneg %p167
        %p293 = pneg %p198
        %p294 = pneg %p195
        %s295 = sand.u32 %s185, 1
        %s296 = scalar_lea.sflag [#allocation3], %s295
        %s297 = sand.u32 %s185, 1
        %s298 = smul.addr %s297, 64
        %s299 = scalar_lea.vmem [#allocation2], %s298
        %s300 = smul.u32 2, %s25
        %p301 = scmp.lt.s32.totalorder %s24, 1
        %s302 = scalar_select %p301, %s24, 1
        %p303 = scmp.lt.s32.totalorder %s300, 1
        %s304 = scalar_select %p303, %s300, 1
        %s305 = smul.addr %s302, 8
        %s306 = sadd.s32 %s304, %s305
        %s307 = smul.addr %s306, 8
        %s308 = scalar_lea.vmem %s0, %s307
        %s309 = smul.u32 2, %s25
        %p310 = scmp.lt.s32.totalorder %s24, 1
        %s311 = scalar_select %p310, %s24, 1
        %s312 = smul.addr %s311, 128
        %s313 = smul.addr %s312, 4
        %s314 = scalar_lea.vmem %s1, %s313
        %p315 = scmp.lt.s32.totalorder %s24, 1
        %s316 = scalar_select %p315, %s24, 1
        %s317 = smul.addr %s316, 8
        %s318 = smul.addr %s317, 2
        %s319 = scalar_lea.vmem %s2, %s318
        %s320 = smul.u32 2, %s25
        %v322 = vld [vmem:[%s308] sm:$0xff]
        %v323 = vld [vmem:[%s308 + $0x8] sm:$0xff]
        %v324 = vld [vmem:[%s308 + $0x10] sm:$0xff]
        %v325 = vld [vmem:[%s308 + $0x18] sm:$0xff]
        %v326 = vld [vmem:[%s308 + $0x20] sm:$0xff]
        %v327 = vld [vmem:[%s308 + $0x28] sm:$0xff]
        %v328 = vld [vmem:[%s308 + $0x30] sm:$0xff]
        %v329 = vld [vmem:[%s308 + $0x38] sm:$0xff]
        %v330 = vpack.c.bf16 %v324, %v322
        %v331 = vpack.c.bf16 %v325, %v323
        %v332 = vpack.c.bf16 %v328, %v326
        %v333 = vpack.c.bf16 %v329, %v327
        %v334 = vld [vmem:[%s3] sm:$0xf]
        %v335 = vld [vmem:[%s3 + $0x4] sm:$0xf]
        %v336 = vld [vmem:[%s3 + $0x8] sm:$0xf]
        %v337 = vld [vmem:[%s3 + $0xc] sm:$0xf]
        %v342 = vunpack.c.l.b16 %v334
        %v343 = vunpack.c.l.b16 %v335
        %v344 = vunpack.c.l.b16 %v336
        %v345 = vunpack.c.l.b16 %v337
        %v346 = vpack.c.b16 %v343, %v342
        %v347 = vpack.c.b16 %v345, %v344
        %vm348 = vcmask 261120
        %v350 = vsel %vm348, %v346, 0
        %v353 = vsel %vm348, %v347, 0
        %355 = vmatprep.subr.bf16.mxu0 %v331
        %356 = vmatpush1.bf16.msra.mxu0 %v330
        %357 = vmatprep.subr.bf16.mxu0 %v333
        %358 = vmatpush1.bf16.msra.mxu0 %v332
        %359 = vmatprep.subr.bf16.mxu0 0
        %360 = vmatpush1.bf16.msra.mxu0 0
        %361 = vmatprep.subr.bf16.mxu0 0
        %362 = vmatpush1.bf16.msra.mxu0 0
        %363 = vmatprep.subr.bf16.mxu0 0
        %364 = vmatpush1.bf16.msra.mxu0 0
        %365 = vmatprep.subr.bf16.mxu0 0
        %366 = vmatpush1.bf16.msra.mxu0 0
        %367 = vmatprep.subr.bf16.mxu0 0
        %368 = vmatpush1.bf16.msra.mxu0 0
        %369 = vmatprep.subr.bf16.mxu0 0
        %370 = vmatpush1.bf16.msra.mxu0 0
        %371 = vmatprep.subr.bf16.mxu0 0
        %372 = vmatpush1.bf16.msra.mxu0 0
        %373 = vmatprep.subr.bf16.mxu0 0
        %374 = vmatpush1.bf16.msra.mxu0 0
        %375 = vmatprep.subr.bf16.mxu0 0
        %376 = vmatpush1.bf16.msra.mxu0 0
        %377 = vmatprep.subr.bf16.mxu0 0
        %378 = vmatpush1.bf16.msra.mxu0 0
        %379 = vmatprep.subr.bf16.mxu0 0
        %380 = vmatpush1.bf16.msra.mxu0 0
        %381 = vmatprep.subr.bf16.mxu0 0
        %382 = vmatpush1.bf16.msra.mxu0 0
        %383 = vmatprep.subr.bf16.mxu0 0
        %384 = vmatpush1.bf16.msra.mxu0 0
        %385 = vmatprep.subr.bf16.mxu0 0
        %386 = vmatpush1.bf16.msra.mxu0 0
        %387 = vmatprep.mubr.bf16.mxu0 0
        %388 = vmatmul.mubr.bf16.gmra.mrb[0].mxu0 %v350
        %v389 = vpop.f32.mrb[0].mxu0
        %v390 = vadd.f32 0.0, %v389
        %v391 = vpop.f32.mrb[0].mxu0
        %v392 = vadd.f32 0.0, %v391
        %v393 = vpop.f32.mrb[0].mxu0
        %v394 = vadd.f32 0.0, %v393
        %v395 = vpop.f32.mrb[0].mxu0
        %v396 = vadd.f32 0.0, %v395
        %397 = vmatprep.mubr.bf16.mxu0 0
        %398 = vmatmul.mubr.bf16.gmra.mrb[0].mxu0 %v353
        %v399 = vpop.f32.mrb[0].mxu0
        %v400 = vadd.f32 0.0, %v399
        %v401 = vpop.f32.mrb[0].mxu0
        %v402 = vadd.f32 0.0, %v401
        %v403 = vpop.f32.mrb[0].mxu0
        %v404 = vadd.f32 0.0, %v403
        %v405 = vpop.f32.mrb[0].mxu0
        %v406 = vadd.f32 0.0, %v405
        %407 = vdwg.mxu0
        %v408 = vpack.c.bf16 %v394, %v390
        %v409 = vpack.c.bf16 %v396, %v392
        %v410 = vpack.c.bf16 %v404, %v400
        %v411 = vpack.c.bf16 %v406, %v402
        %v412 = vlaneseq
        %v413 = vshrl.u32 %v412, 7
        %v414 = vadd.s32 %v413, 8
        %v415 = vadd.s32 %v413, 16
        %v416 = vadd.s32 %v413, 24
        %v417 = vadd.s32 %v413, 32
        %v418 = vadd.s32 %v413, 40
        %v419 = vadd.s32 %v413, 48
        %v420 = vadd.s32 %v413, 56
        %v421 = vadd.s32 %v413, 64
        %v422 = vadd.s32 %v413, 72
        %v423 = vadd.s32 %v413, 80
        %v424 = vadd.s32 %v413, 88
        %v425 = vadd.s32 %v413, 96
        %v426 = vadd.s32 %v413, 104
        %v427 = vadd.s32 %v413, 112
        %v428 = vadd.s32 %v413, 120
        %vm429 = vcmp.lt.s32.totalorder %v413, 8
        %vm430 = vcmp.lt.s32.totalorder %v414, 8
        %vm431 = vcmp.lt.s32.totalorder %v415, 8
        %vm432 = vcmp.lt.s32.totalorder %v416, 8
        %vm433 = vcmp.lt.s32.totalorder %v417, 8
        %vm434 = vcmp.lt.s32.totalorder %v418, 8
        %vm435 = vcmp.lt.s32.totalorder %v419, 8
        %vm436 = vcmp.lt.s32.totalorder %v420, 8
        %vm437 = vcmp.lt.s32.totalorder %v421, 8
        %vm438 = vcmp.lt.s32.totalorder %v422, 8
        %vm439 = vcmp.lt.s32.totalorder %v423, 8
        %vm440 = vcmp.lt.s32.totalorder %v424, 8
        %vm441 = vcmp.lt.s32.totalorder %v425, 8
        %vm442 = vcmp.lt.s32.totalorder %v426, 8
        %vm443 = vcmp.lt.s32.totalorder %v427, 8
        %vm444 = vcmp.lt.s32.totalorder %v428, 8
        %v445 = vsel %vm429, 0.0, -1e+09
        %v446 = vsel %vm430, 0.0, -1e+09
        %v447 = vsel %vm431, 0.0, -1e+09
        %v448 = vsel %vm432, 0.0, -1e+09
        %v449 = vsel %vm433, 0.0, -1e+09
        %v450 = vsel %vm434, 0.0, -1e+09
        %v451 = vsel %vm435, 0.0, -1e+09
        %v452 = vsel %vm436, 0.0, -1e+09
        %v453 = vsel %vm437, 0.0, -1e+09
        %v454 = vsel %vm438, 0.0, -1e+09
        %v455 = vsel %vm439, 0.0, -1e+09
        %v456 = vsel %vm440, 0.0, -1e+09
        %v457 = vsel %vm441, 0.0, -1e+09
        %v458 = vsel %vm442, 0.0, -1e+09
        %v459 = vsel %vm443, 0.0, -1e+09
        %v460 = vsel %vm444, 0.0, -1e+09
        %v461 = vld [vmem:[%s314] sm:$0xf]
        %v462 = vld [vmem:[%s314 + $0x4] sm:$0xf]
        %v463 = vld [vmem:[%s314 + $0x8] sm:$0xf]
        %v464 = vld [vmem:[%s314 + $0xc] sm:$0xf]
        %v465 = vld [vmem:[%s314 + $0x10] sm:$0xf]
        %v466 = vld [vmem:[%s314 + $0x14] sm:$0xf]
        %v467 = vld [vmem:[%s314 + $0x18] sm:$0xf]
        %v468 = vld [vmem:[%s314 + $0x1c] sm:$0xf]
        %v469 = vld [vmem:[%s314 + $0x20] sm:$0xf]
        %v470 = vld [vmem:[%s314 + $0x24] sm:$0xf]
        %v471 = vld [vmem:[%s314 + $0x28] sm:$0xf]
        %v472 = vld [vmem:[%s314 + $0x2c] sm:$0xf]
        %v473 = vld [vmem:[%s314 + $0x30] sm:$0xf]
        %v474 = vld [vmem:[%s314 + $0x34] sm:$0xf]
        %v475 = vld [vmem:[%s314 + $0x38] sm:$0xf]
        %v476 = vld [vmem:[%s314 + $0x3c] sm:$0xf]
        %v477 = vld [vmem:[%s319] sm:$0x3]
        %v494 = vunpack.c.l.b16 %v461
        %v495 = vunpack.c.l.b16 %v462
        %v496 = vunpack.c.l.b16 %v463
        %v497 = vunpack.c.l.b16 %v464
        %v498 = vunpack.c.l.b16 %v465
        %v499 = vunpack.c.l.b16 %v466
        %v500 = vunpack.c.l.b16 %v467
        %v501 = vunpack.c.l.b16 %v468
        %v502 = vunpack.c.l.b16 %v469
        %v503 = vunpack.c.l.b16 %v470
        %v504 = vunpack.c.l.b16 %v471
        %v505 = vunpack.c.l.b16 %v472
        %v506 = vunpack.c.l.b16 %v473
        %v507 = vunpack.c.l.b16 %v474
        %v508 = vunpack.c.l.b16 %v475
        %v509 = vunpack.c.l.b16 %v476
        %v510 = vpack.c.b16 %v495, %v494
        %v511 = vpack.c.b16 %v497, %v496
        %v512 = vpack.c.b16 %v499, %v498
        %v513 = vpack.c.b16 %v501, %v500
        %v514 = vpack.c.b16 %v503, %v502
        %v515 = vpack.c.b16 %v505, %v504
        %v516 = vpack.c.b16 %v507, %v506
        %v517 = vpack.c.b16 %v509, %v508
        %vm518 = vcmask 31744
        %v520 = vsel %vm518, %v510, 0
        %v523 = vsel %vm518, %v511, 0
        %v526 = vsel %vm518, %v512, 0
        %v529 = vsel %vm518, %v513, 0
        %v532 = vsel %vm518, %v514, 0
        %v535 = vsel %vm518, %v515, 0
        %v538 = vsel %vm518, %v516, 0
        %v541 = vsel %vm518, %v517, 0
        %vm543 = vcmask 1041408
        %v545 = vsel %vm543, %v408, 0
        %v548 = vsel %vm543, %v409, 0
        %550 = vmatprep.subr.bf16.mxu0 %v548
        %551 = vmatpush1.bf16.msra.mxu0 %v545
        %552 = vmatprep.subr.bf16.mxu0 0
        %553 = vmatpush1.bf16.msra.mxu0 0
        %554 = vmatprep.subr.bf16.mxu0 0
        %555 = vmatpush1.bf16.msra.mxu0 0
        %556 = vmatprep.subr.bf16.mxu0 0
        %557 = vmatpush1.bf16.msra.mxu0 0
        %558 = vmatprep.subr.bf16.mxu0 0
        %559 = vmatpush1.bf16.msra.mxu0 0
        %560 = vmatprep.subr.bf16.mxu0 0
        %561 = vmatpush1.bf16.msra.mxu0 0
        %562 = vmatprep.subr.bf16.mxu0 0
        %563 = vmatpush1.bf16.msra.mxu0 0
        %564 = vmatprep.subr.bf16.mxu0 0
        %565 = vmatpush1.bf16.msra.mxu0 0
        %566 = vmatprep.subr.bf16.mxu0 0
        %567 = vmatpush1.bf16.msra.mxu0 0
        %568 = vmatprep.subr.bf16.mxu0 0
        %569 = vmatpush1.bf16.msra.mxu0 0
        %570 = vmatprep.subr.bf16.mxu0 0
        %571 = vmatpush1.bf16.msra.mxu0 0
        %572 = vmatprep.subr.bf16.mxu0 0
        %573 = vmatpush1.bf16.msra.mxu0 0
        %574 = vmatprep.subr.bf16.mxu0 0
        %575 = vmatpush1.bf16.msra.mxu0 0
        %576 = vmatprep.subr.bf16.mxu0 0
        %577 = vmatpush1.bf16.msra.mxu0 0
        %578 = vmatprep.subr.bf16.mxu0 0
        %579 = vmatpush1.bf16.msra.mxu0 0
        %580 = vmatprep.subr.bf16.mxu0 0
        %581 = vmatpush1.bf16.msra.mxu0 0
        %582 = vmatprep.mubr.bf16.mxu0 0
        %583 = vmatmul.mubr.bf16.gmra.mrb[0].mxu0 %v520
        %v584 = vpop.f32.mrb[0].mxu0
        %v585 = vadd.f32 %v445, %v584
        %v586 = vpop.f32.mrb[0].mxu0
        %v587 = vadd.f32 %v445, %v586
        %v588 = vpop.f32.mrb[0].mxu0
        %v589 = vadd.f32 %v446, %v588
        %v590 = vpop.f32.mrb[0].mxu0
        %v591 = vadd.f32 %v446, %v590
        %592 = vmatprep.mubr.bf16.mxu0 0
        %593 = vmatmul.mubr.bf16.gmra.mrb[0].mxu0 %v523
        %v594 = vpop.f32.mrb[0].mxu0
        %v595 = vadd.f32 %v447, %v594
        %v596 = vpop.f32.mrb[0].mxu0
        %v597 = vadd.f32 %v447, %v596
        %v598 = vpop.f32.mrb[0].mxu0
        %v599 = vadd.f32 %v448, %v598
        %v600 = vpop.f32.mrb[0].mxu0
        %v601 = vadd.f32 %v448, %v600
        %602 = vmatprep.mubr.bf16.mxu0 0
        %603 = vmatmul.mubr.bf16.gmra.mrb[0].mxu0 %v526
        %v604 = vpop.f32.mrb[0].mxu0
        %v605 = vadd.f32 %v449, %v604
        %v606 = vpop.f32.mrb[0].mxu0
        %v607 = vadd.f32 %v449, %v606
        %v608 = vpop.f32.mrb[0].mxu0
        %v609 = vadd.f32 %v450, %v608
        %v610 = vpop.f32.mrb[0].mxu0
        %v611 = vadd.f32 %v450, %v610
        %612 = vmatprep.mubr.bf16.mxu0 0
        %613 = vmatmul.mubr.bf16.gmra.mrb[0].mxu0 %v529
        %v614 = vpop.f32.mrb[0].mxu0
        %v615 = vadd.f32 %v451, %v614
        %v616 = vpop.f32.mrb[0].mxu0
        %v617 = vadd.f32 %v451, %v616
        %v618 = vpop.f32.mrb[0].mxu0
        %v619 = vadd.f32 %v452, %v618
        %v620 = vpop.f32.mrb[0].mxu0
        %v621 = vadd.f32 %v452, %v620
        %622 = vmatprep.mubr.bf16.mxu0 0
        %623 = vmatmul.mubr.bf16.gmra.mrb[0].mxu0 %v532
        %v624 = vpop.f32.mrb[0].mxu0
        %v625 = vadd.f32 %v453, %v624
        %v626 = vpop.f32.mrb[0].mxu0
        %v627 = vadd.f32 %v453, %v626
        %v628 = vpop.f32.mrb[0].mxu0
        %v629 = vadd.f32 %v454, %v628
        %v630 = vpop.f32.mrb[0].mxu0
        %v631 = vadd.f32 %v454, %v630
        %632 = vmatprep.mubr.bf16.mxu0 0
        %633 = vmatmul.mubr.bf16.gmra.mrb[0].mxu0 %v535
        %v634 = vpop.f32.mrb[0].mxu0
        %v635 = vadd.f32 %v455, %v634
        %v636 = vpop.f32.mrb[0].mxu0
        %v637 = vadd.f32 %v455, %v636
        %v638 = vpop.f32.mrb[0].mxu0
        %v639 = vadd.f32 %v456, %v638
        %v640 = vpop.f32.mrb[0].mxu0
        %v641 = vadd.f32 %v456, %v640
        %642 = vmatprep.mubr.bf16.mxu0 0
        %643 = vmatmul.mubr.bf16.gmra.mrb[0].mxu0 %v538
        %v644 = vpop.f32.mrb[0].mxu0
        %v645 = vadd.f32 %v457, %v644
        %v646 = vpop.f32.mrb[0].mxu0
        %v647 = vadd.f32 %v457, %v646
        %v648 = vpop.f32.mrb[0].mxu0
        %v649 = vadd.f32 %v458, %v648
        %v650 = vpop.f32.mrb[0].mxu0
        %v651 = vadd.f32 %v458, %v650
        %652 = vmatprep.mubr.bf16.mxu0 0
        %653 = vmatmul.mubr.bf16.gmra.mrb[0].mxu0 %v541
        %v654 = vpop.f32.mrb[0].mxu0
        %v655 = vadd.f32 %v459, %v654
        %v656 = vpop.f32.mrb[0].mxu0
        %v657 = vadd.f32 %v459, %v656
        %v658 = vpop.f32.mrb[0].mxu0
        %v659 = vadd.f32 %v460, %v658
        %v660 = vpop.f32.mrb[0].mxu0
        %v661 = vadd.f32 %v460, %v660
        %662 = vdwg.mxu0
        %v663 = vmax.f32 %v585, %v595
        %v664 = vmax.f32 %v589, %v599
        %v665 = vmax.f32 %v663, %v605
        %v666 = vmax.f32 %v664, %v609
        %v667 = vmax.f32 %v665, %v615
        %v668 = vmax.f32 %v666, %v619
        %v669 = vmax.f32 %v667, %v625
        %v670 = vmax.f32 %v668, %v629
        %v671 = vmax.f32 %v669, %v635
        %v672 = vmax.f32 %v670, %v639
        %v673 = vmax.f32 %v671, %v645
        %v674 = vmax.f32 %v672, %v649
        %v675 = vmax.f32 %v673, %v655
        %v676 = vmax.f32 %v674, %v659
        %v677 = vmax.f32 %v675, %v676
        %v678 = vrot.slane %v677, 4
        %v679 = vmax.f32 %v677, %v678
        %v680 = vrot.slane %v679, 2
        %v681 = vmax.f32 %v679, %v680
        %v682 = vrot.slane %v681, 1
        %v683 = vmax.f32 %v681, %v682
        %v684 = vmax.f32 %v587, %v597
        %v685 = vmax.f32 %v591, %v601
        %v686 = vmax.f32 %v684, %v607
        %v687 = vmax.f32 %v685, %v611
        %v688 = vmax.f32 %v686, %v617
        %v689 = vmax.f32 %v687, %v621
        %v690 = vmax.f32 %v688, %v627
        %v691 = vmax.f32 %v689, %v631
        %v692 = vmax.f32 %v690, %v637
        %v693 = vmax.f32 %v691, %v641
        %v694 = vmax.f32 %v692, %v647
        %v695 = vmax.f32 %v693, %v651
        %v696 = vmax.f32 %v694, %v657
        %v697 = vmax.f32 %v695, %v661
        %v698 = vmax.f32 %v696, %v697
        %v699 = vrot.slane %v698, 4
        %v700 = vmax.f32 %v698, %v699
        %v701 = vrot.slane %v700, 2
        %v702 = vmax.f32 %v700, %v701
        %v703 = vrot.slane %v702, 1
        %v704 = vmax.f32 %v702, %v703
        %v705 = vsub.f32 %v585, %v683
        %v706 = vsub.f32 %v587, %v704
        %v707 = vsub.f32 %v589, %v683
        %v708 = vsub.f32 %v591, %v704
        %v709 = vsub.f32 %v595, %v683
        %v710 = vsub.f32 %v597, %v704
        %v711 = vsub.f32 %v599, %v683
        %v712 = vsub.f32 %v601, %v704
        %v713 = vsub.f32 %v605, %v683
        %v714 = vsub.f32 %v607, %v704
        %v715 = vsub.f32 %v609, %v683
        %v716 = vsub.f32 %v611, %v704
        %v717 = vsub.f32 %v615, %v683
        %v718 = vsub.f32 %v617, %v704
        %v719 = vsub.f32 %v619, %v683
        %v720 = vsub.f32 %v621, %v704
        %v721 = vsub.f32 %v625, %v683
        %v722 = vsub.f32 %v627, %v704
        %v723 = vsub.f32 %v629, %v683
        %v724 = vsub.f32 %v631, %v704
        %v725 = vsub.f32 %v635, %v683
        %v726 = vsub.f32 %v637, %v704
        %v727 = vsub.f32 %v639, %v683
        %v728 = vsub.f32 %v641, %v704
        %v729 = vsub.f32 %v645, %v683
        %v730 = vsub.f32 %v647, %v704
        %v731 = vsub.f32 %v649, %v683
        %v732 = vsub.f32 %v651, %v704
        %v733 = vsub.f32 %v655, %v683
        %v734 = vsub.f32 %v657, %v704
        %v735 = vsub.f32 %v659, %v683
        %v736 = vsub.f32 %v661, %v704
        %v737 = vmul.f32 %v705, 1.442695
        %v738 = vpow.pop %v737
        %v739 = vmul.f32 %v706, 1.442695
        %v740 = vpow.pop %v739
        %v741 = vmul.f32 %v707, 1.442695
        %v742 = vpow.pop %v741
        %v743 = vmul.f32 %v708, 1.442695
        %v744 = vpow.pop %v743
        %v745 = vmul.f32 %v709, 1.442695
        %v746 = vpow.pop %v745
        %v747 = vmul.f32 %v710, 1.442695
        %v748 = vpow.pop %v747
        %v749 = vmul.f32 %v711, 1.442695
        %v750 = vpow.pop %v749
        %v751 = vmul.f32 %v712, 1.442695
        %v752 = vpow.pop %v751
        %v753 = vmul.f32 %v713, 1.442695
        %v754 = vpow.pop %v753
        %v755 = vmul.f32 %v714, 1.442695
        %v756 = vpow.pop %v755
        %v757 = vmul.f32 %v715, 1.442695
        %v758 = vpow.pop %v757
        %v759 = vmul.f32 %v716, 1.442695
        %v760 = vpow.pop %v759
        %v761 = vmul.f32 %v717, 1.442695
        %v762 = vpow.pop %v761
        %v763 = vmul.f32 %v718, 1.442695
        %v764 = vpow.pop %v763
        %v765 = vmul.f32 %v719, 1.442695
        %v766 = vpow.pop %v765
        %v767 = vmul.f32 %v720, 1.442695
        %v768 = vpow.pop %v767
        %v769 = vmul.f32 %v721, 1.442695
        %v770 = vpow.pop %v769
        %v771 = vmul.f32 %v722, 1.442695
        %v772 = vpow.pop %v771
        %v773 = vmul.f32 %v723, 1.442695
        %v774 = vpow.pop %v773
        %v775 = vmul.f32 %v724, 1.442695
        %v776 = vpow.pop %v775
        %v777 = vmul.f32 %v725, 1.442695
        %v778 = vpow.pop %v777
        %v779 = vmul.f32 %v726, 1.442695
        %v780 = vpow.pop %v779
        %v781 = vmul.f32 %v727, 1.442695
        %v782 = vpow.pop %v781
        %v783 = vmul.f32 %v728, 1.442695
        %v784 = vpow.pop %v783
        %v785 = vmul.f32 %v729, 1.442695
        %v786 = vpow.pop %v785
        %v787 = vmul.f32 %v730, 1.442695
        %v788 = vpow.pop %v787
        %v789 = vmul.f32 %v731, 1.442695
        %v790 = vpow.pop %v789
        %v791 = vmul.f32 %v732, 1.442695
        %v792 = vpow.pop %v791
        %v793 = vmul.f32 %v733, 1.442695
        %v794 = vpow.pop %v793
        %v795 = vmul.f32 %v734, 1.442695
        %v796 = vpow.pop %v795
        %v797 = vmul.f32 %v735, 1.442695
        %v798 = vpow.pop %v797
        %v799 = vmul.f32 %v736, 1.442695
        %v800 = vpow.pop %v799
        %v801 = vadd.f32 %v738, %v742
        %v802 = vadd.f32 %v801, %v746
        %v803 = vadd.f32 %v802, %v750
        %v804 = vadd.f32 %v803, %v754
        %v805 = vadd.f32 %v804, %v758
        %v806 = vadd.f32 %v805, %v762
        %v807 = vadd.f32 %v806, %v766
        %v808 = vadd.f32 %v807, %v770
        %v809 = vadd.f32 %v808, %v774
        %v810 = vadd.f32 %v809, %v778
        %v811 = vadd.f32 %v810, %v782
        %v812 = vadd.f32 %v811, %v786
        %v813 = vadd.f32 %v812, %v790
        %v814 = vadd.f32 %v813, %v794
        %v815 = vadd.f32 %v814, %v798
        %v816 = vrot.slane %v815, 4
        %v817 = vadd.f32 %v815, %v816
        %v818 = vrot.slane %v817, 2
        %v819 = vadd.f32 %v817, %v818
        %v820 = vrot.slane %v819, 1
        %v821 = vadd.f32 %v819, %v820
        %v822 = vadd.f32 %v740, %v744
        %v823 = vadd.f32 %v822, %v748
        %v824 = vadd.f32 %v823, %v752
        %v825 = vadd.f32 %v824, %v756
        %v826 = vadd.f32 %v825, %v760
        %v827 = vadd.f32 %v826, %v764
        %v828 = vadd.f32 %v827, %v768
        %v829 = vadd.f32 %v828, %v772
        %v830 = vadd.f32 %v829, %v776
        %v831 = vadd.f32 %v830, %v780
        %v832 = vadd.f32 %v831, %v784
        %v833 = vadd.f32 %v832, %v788
        %v834 = vadd.f32 %v833, %v792
        %v835 = vadd.f32 %v834, %v796
        %v836 = vadd.f32 %v835, %v800
        %v837 = vrot.slane %v836, 4
        %v838 = vadd.f32 %v836, %v837
        %v839 = vrot.slane %v838, 2
        %v840 = vadd.f32 %v838, %v839
        %v841 = vrot.slane %v840, 1
        %v842 = vadd.f32 %v840, %v841
        %v843 = vrcp.pop %v821
        %v844 = vrcp.pop %v842
        %v845 = vmul.f32 %v738, %v843
        %v846 = vmul.f32 %v740, %v844
        %v847 = vmul.f32 %v742, %v843
        %v848 = vmul.f32 %v744, %v844
        %v849 = vmul.f32 %v746, %v843
        %v850 = vmul.f32 %v748, %v844
        %v851 = vmul.f32 %v750, %v843
        %v852 = vmul.f32 %v752, %v844
        %v853 = vmul.f32 %v754, %v843
        %v854 = vmul.f32 %v756, %v844
        %v855 = vmul.f32 %v758, %v843
        %v856 = vmul.f32 %v760, %v844
        %v857 = vmul.f32 %v762, %v843
        %v858 = vmul.f32 %v764, %v844
        %v859 = vmul.f32 %v766, %v843
        %v860 = vmul.f32 %v768, %v844
        %v861 = vmul.f32 %v770, %v843
        %v862 = vmul.f32 %v772, %v844
        %v863 = vmul.f32 %v774, %v843
        %v864 = vmul.f32 %v776, %v844
        %v865 = vmul.f32 %v778, %v843
        %v866 = vmul.f32 %v780, %v844
        %v867 = vmul.f32 %v782, %v843
        %v868 = vmul.f32 %v784, %v844
        %v869 = vmul.f32 %v786, %v843
        %v870 = vmul.f32 %v788, %v844
        %v871 = vmul.f32 %v790, %v843
        %v872 = vmul.f32 %v792, %v844
        %v873 = vmul.f32 %v794, %v843
        %v874 = vmul.f32 %v796, %v844
        %v875 = vmul.f32 %v798, %v843
        %v876 = vmul.f32 %v800, %v844
        %v877 = vpack.c.bf16 %v847, %v845
        %v878 = vpack.c.bf16 %v848, %v846
        %v879 = vpack.c.bf16 %v851, %v849
        %v880 = vpack.c.bf16 %v852, %v850
        %v881 = vpack.c.bf16 %v855, %v853
        %v882 = vpack.c.bf16 %v856, %v854
        %v883 = vpack.c.bf16 %v859, %v857
        %v884 = vpack.c.bf16 %v860, %v858
        %v885 = vpack.c.bf16 %v863, %v861
        %v886 = vpack.c.bf16 %v864, %v862
        %v887 = vpack.c.bf16 %v867, %v865
        %v888 = vpack.c.bf16 %v868, %v866
        %v889 = vpack.c.bf16 %v871, %v869
        %v890 = vpack.c.bf16 %v872, %v870
        %v891 = vpack.c.bf16 %v875, %v873
        %v892 = vpack.c.bf16 %v876, %v874
        %893 = vmatprep.subr.bf16.mxu0 %v878
        %894 = vmatpush1.bf16.msra.mxu0 %v877
        %895 = vmatprep.subr.bf16.mxu0 %v880
        %896 = vmatpush1.bf16.msra.mxu0 %v879
        %897 = vmatprep.subr.bf16.mxu0 %v882
        %898 = vmatpush1.bf16.msra.mxu0 %v881
        %899 = vmatprep.subr.bf16.mxu0 %v884
        %900 = vmatpush1.bf16.msra.mxu0 %v883
        %901 = vmatprep.subr.bf16.mxu0 %v886
        %902 = vmatpush1.bf16.msra.mxu0 %v885
        %903 = vmatprep.subr.bf16.mxu0 %v888
        %904 = vmatpush1.bf16.msra.mxu0 %v887
        %905 = vmatprep.subr.bf16.mxu0 %v890
        %906 = vmatpush1.bf16.msra.mxu0 %v889
        %907 = vmatprep.subr.bf16.mxu0 %v892
        %908 = vmatpush1.bf16.msra.mxu0 %v891
        %909 = vmatprep.subr.bf16.mxu0 0
        %910 = vmatpush1.bf16.msra.mxu0 0
        %911 = vmatprep.subr.bf16.mxu0 0
        %912 = vmatpush1.bf16.msra.mxu0 0
        %913 = vmatprep.subr.bf16.mxu0 0
        %914 = vmatpush1.bf16.msra.mxu0 0
        %915 = vmatprep.subr.bf16.mxu0 0
        %916 = vmatpush1.bf16.msra.mxu0 0
        %917 = vmatprep.subr.bf16.mxu0 0
        %918 = vmatpush1.bf16.msra.mxu0 0
        %919 = vmatprep.subr.bf16.mxu0 0
        %920 = vmatpush1.bf16.msra.mxu0 0
        %921 = vmatprep.subr.bf16.mxu0 0
        %922 = vmatpush1.bf16.msra.mxu0 0
        %923 = vmatprep.subr.bf16.mxu0 0
        %924 = vmatpush1.bf16.msra.mxu0 0
        %925 = vmatprep.mubr.bf16.mxu0 0
        %926 = vmatmul.mubr.bf16.gmra.mrb[0].mxu0 %v477
        %v927 = vpop.f32.mrb[0].mxu0
        %v928 = vadd.f32 0.0, %v927
        %v929 = vpop.f32.mrb[0].mxu0
        %v930 = vadd.f32 0.0, %v929
        %v931 = vpop.f32.mrb[0].mxu0
        %v932 = vpop.f32.mrb[0].mxu0
        %933 = vdwg.mxu0
        %v934 = vpack.c.bf16 %v928, %v928
        %v935 = vpack.c.bf16 %v930, %v930
        %s936 = scalar_lea.vmem %s314, 64
        %v937 = vld [vmem:[%s936] sm:$0xf]
        %v938 = vld [vmem:[%s936 + $0x4] sm:$0xf]
        %v939 = vld [vmem:[%s936 + $0x8] sm:$0xf]
        %v940 = vld [vmem:[%s936 + $0xc] sm:$0xf]
        %v941 = vld [vmem:[%s936 + $0x10] sm:$0xf]
        %v942 = vld [vmem:[%s936 + $0x14] sm:$0xf]
        %v943 = vld [vmem:[%s936 + $0x18] sm:$0xf]
        %v944 = vld [vmem:[%s936 + $0x1c] sm:$0xf]
        %v945 = vld [vmem:[%s936 + $0x20] sm:$0xf]
        %v946 = vld [vmem:[%s936 + $0x24] sm:$0xf]
        %v947 = vld [vmem:[%s936 + $0x28] sm:$0xf]
        %v948 = vld [vmem:[%s936 + $0x2c] sm:$0xf]
        %v949 = vld [vmem:[%s936 + $0x30] sm:$0xf]
        %v950 = vld [vmem:[%s936 + $0x34] sm:$0xf]
        %v951 = vld [vmem:[%s936 + $0x38] sm:$0xf]
        %v952 = vld [vmem:[%s936 + $0x3c] sm:$0xf]
        %s953 = scalar_lea.vmem %s319, 2
        %v954 = vld [vmem:[%s953] sm:$0x3]
        %v971 = vunpack.c.l.b16 %v937
        %v972 = vunpack.c.l.b16 %v938
        %v973 = vunpack.c.l.b16 %v939
        %v974 = vunpack.c.l.b16 %v940
        %v975 = vunpack.c.l.b16 %v941
        %v976 = vunpack.c.l.b16 %v942
        %v977 = vunpack.c.l.b16 %v943
        %v978 = vunpack.c.l.b16 %v944
        %v979 = vunpack.c.l.b16 %v945
        %v980 = vunpack.c.l.b16 %v946
        %v981 = vunpack.c.l.b16 %v947
        %v982 = vunpack.c.l.b16 %v948
        %v983 = vunpack.c.l.b16 %v949
        %v984 = vunpack.c.l.b16 %v950
        %v985 = vunpack.c.l.b16 %v951
        %v986 = vunpack.c.l.b16 %v952
        %v987 = vpack.c.b16 %v972, %v971
        %v988 = vpack.c.b16 %v974, %v973
        %v989 = vpack.c.b16 %v976, %v975
        %v990 = vpack.c.b16 %v978, %v977
        %v991 = vpack.c.b16 %v980, %v979
        %v992 = vpack.c.b16 %v982, %v981
        %v993 = vpack.c.b16 %v984, %v983
        %v994 = vpack.c.b16 %v986, %v985
        %v997 = vrot.slane %v408, 2
        %v998 = vrot.slane %v409, 2
        %v1000 = vsel %vm518, %v987, 0
        %v1003 = vsel %vm518, %v988, 0
        %v1006 = vsel %vm518, %v989, 0
        %v1009 = vsel %vm518, %v990, 0
        %v1012 = vsel %vm518, %v991, 0
        %v1015 = vsel %vm518, %v992, 0
        %v1018 = vsel %vm518, %v993, 0
        %v1021 = vsel %vm518, %v994, 0
        %v1024 = vsel %vm543, %v997, 0
        %v1027 = vsel %vm543, %v998, 0
        %1029 = vmatprep.subr.bf16.mxu0 %v1027
        %1030 = vmatpush1.bf16.msra.mxu0 %v1024
        %1031 = vmatprep.subr.bf16.mxu0 0
        %1032 = vmatpush1.bf16.msra.mxu0 0
        %1033 = vmatprep.subr.bf16.mxu0 0
        %1034 = vmatpush1.bf16.msra.mxu0 0
        %1035 = vmatprep.subr.bf16.mxu0 0
        %1036 = vmatpush1.bf16.msra.mxu0 0
        %1037 = vmatprep.subr.bf16.mxu0 0
        %1038 = vmatpush1.bf16.msra.mxu0 0
        %1039 = vmatprep.subr.bf16.mxu0 0
        %1040 = vmatpush1.bf16.msra.mxu0 0
        %1041 = vmatprep.subr.bf16.mxu0 0
        %1042 = vmatpush1.bf16.msra.mxu0 0
        %1043 = vmatprep.subr.bf16.mxu0 0
        %1044 = vmatpush1.bf16.msra.mxu0 0
        %1045 = vmatprep.subr.bf16.mxu0 0
        %1046 = vmatpush1.bf16.msra.mxu0 0
        %1047 = vmatprep.subr.bf16.mxu0 0
        %1048 = vmatpush1.bf16.msra.mxu0 0
        %1049 = vmatprep.subr.bf16.mxu0 0
        %1050 = vmatpush1.bf16.msra.mxu0 0
        %1051 = vmatprep.subr.bf16.mxu0 0
        %1052 = vmatpush1.bf16.msra.mxu0 0
        %1053 = vmatprep.subr.bf16.mxu0 0
        %1054 = vmatpush1.bf16.msra.mxu0 0
        %1055 = vmatprep.subr.bf16.mxu0 0
        %1056 = vmatpush1.bf16.msra.mxu0 0
        %1057 = vmatprep.subr.bf16.mxu0 0
        %1058 = vmatpush1.bf16.msra.mxu0 0
        %1059 = vmatprep.subr.bf16.mxu0 0
        %1060 = vmatpush1.bf16.msra.mxu0 0
        %1061 = vmatprep.mubr.bf16.mxu0 0
        %1062 = vmatmul.mubr.bf16.gmra.mrb[0].mxu0 %v1000
        %v1063 = vpop.f32.mrb[0].mxu0
        %v1064 = vadd.f32 %v445, %v1063
        %v1065 = vpop.f32.mrb[0].mxu0
        %v1066 = vadd.f32 %v445, %v1065
        %v1067 = vpop.f32.mrb[0].mxu0
        %v1068 = vadd.f32 %v446, %v1067
        %v1069 = vpop.f32.mrb[0].mxu0
        %v1070 = vadd.f32 %v446, %v1069
        %1071 = vmatprep.mubr.bf16.mxu0 0
        %1072 = vmatmul.mubr.bf16.gmra.mrb[0].mxu0 %v1003
        %v1073 = vpop.f32.mrb[0].mxu0
        %v1074 = vadd.f32 %v447, %v1073
        %v1075 = vpop.f32.mrb[0].mxu0
        %v1076 = vadd.f32 %v447, %v1075
        %v1077 = vpop.f32.mrb[0].mxu0
        %v1078 = vadd.f32 %v448, %v1077
        %v1079 = vpop.f32.mrb[0].mxu0
        %v1080 = vadd.f32 %v448, %v1079
        %1081 = vmatprep.mubr.bf16.mxu0 0
        %1082 = vmatmul.mubr.bf16.gmra.mrb[0].mxu0 %v1006
        %v1083 = vpop.f32.mrb[0].mxu0
        %v1084 = vadd.f32 %v449, %v1083
        %v1085 = vpop.f32.mrb[0].mxu0
        %v1086 = vadd.f32 %v449, %v1085
        %v1087 = vpop.f32.mrb[0].mxu0
        %v1088 = vadd.f32 %v450, %v1087
        %v1089 = vpop.f32.mrb[0].mxu0
        %v1090 = vadd.f32 %v450, %v1089
        %1091 = vmatprep.mubr.bf16.mxu0 0
        %1092 = vmatmul.mubr.bf16.gmra.mrb[0].mxu0 %v1009
        %v1093 = vpop.f32.mrb[0].mxu0
        %v1094 = vadd.f32 %v451, %v1093
        %v1095 = vpop.f32.mrb[0].mxu0
        %v1096 = vadd.f32 %v451, %v1095
        %v1097 = vpop.f32.mrb[0].mxu0
        %v1098 = vadd.f32 %v452, %v1097
        %v1099 = vpop.f32.mrb[0].mxu0
        %v1100 = vadd.f32 %v452, %v1099
        %1101 = vmatprep.mubr.bf16.mxu0 0
        %1102 = vmatmul.mubr.bf16.gmra.mrb[0].mxu0 %v1012
        %v1103 = vpop.f32.mrb[0].mxu0
        %v1104 = vadd.f32 %v453, %v1103
        %v1105 = vpop.f32.mrb[0].mxu0
        %v1106 = vadd.f32 %v453, %v1105
        %v1107 = vpop.f32.mrb[0].mxu0
        %v1108 = vadd.f32 %v454, %v1107
        %v1109 = vpop.f32.mrb[0].mxu0
        %v1110 = vadd.f32 %v454, %v1109
        %1111 = vmatprep.mubr.bf16.mxu0 0
        %1112 = vmatmul.mubr.bf16.gmra.mrb[0].mxu0 %v1015
        %v1113 = vpop.f32.mrb[0].mxu0
        %v1114 = vadd.f32 %v455, %v1113
        %v1115 = vpop.f32.mrb[0].mxu0
        %v1116 = vadd.f32 %v455, %v1115
        %v1117 = vpop.f32.mrb[0].mxu0
        %v1118 = vadd.f32 %v456, %v1117
        %v1119 = vpop.f32.mrb[0].mxu0
        %v1120 = vadd.f32 %v456, %v1119
        %1121 = vmatprep.mubr.bf16.mxu0 0
        %1122 = vmatmul.mubr.bf16.gmra.mrb[0].mxu0 %v1018
        %v1123 = vpop.f32.mrb[0].mxu0
        %v1124 = vadd.f32 %v457, %v1123
        %v1125 = vpop.f32.mrb[0].mxu0
        %v1126 = vadd.f32 %v457, %v1125
        %v1127 = vpop.f32.mrb[0].mxu0
        %v1128 = vadd.f32 %v458, %v1127
        %v1129 = vpop.f32.mrb[0].mxu0
        %v1130 = vadd.f32 %v458, %v1129
        %1131 = vmatprep.mubr.bf16.mxu0 0
        %1132 = vmatmul.mubr.bf16.gmra.mrb[0].mxu0 %v1021
        %v1133 = vpop.f32.mrb[0].mxu0
        %v1134 = vadd.f32 %v459, %v1133
        %v1135 = vpop.f32.mrb[0].mxu0
        %v1136 = vadd.f32 %v459, %v1135
        %v1137 = vpop.f32.mrb[0].mxu0
        %v1138 = vadd.f32 %v460, %v1137
        %v1139 = vpop.f32.mrb[0].mxu0
        %v1140 = vadd.f32 %v460, %v1139
        %1141 = vdwg.mxu0
        %v1142 = vmax.f32 %v1064, %v1074
        %v1143 = vmax.f32 %v1068, %v1078
        %v1144 = vmax.f32 %v1142, %v1084
        %v1145 = vmax.f32 %v1143, %v1088
        %v1146 = vmax.f32 %v1144, %v1094
        %v1147 = vmax.f32 %v1145, %v1098
        %v1148 = vmax.f32 %v1146, %v1104
        %v1149 = vmax.f32 %v1147, %v1108
        %v1150 = vmax.f32 %v1148, %v1114
        %v1151 = vmax.f32 %v1149, %v1118
        %v1152 = vmax.f32 %v1150, %v1124
        %v1153 = vmax.f32 %v1151, %v1128
        %v1154 = vmax.f32 %v1152, %v1134
        %v1155 = vmax.f32 %v1153, %v1138
        %v1156 = vmax.f32 %v1154, %v1155
        %v1157 = vrot.slane %v1156, 4
        %v1158 = vmax.f32 %v1156, %v1157
        %v1159 = vrot.slane %v1158, 2
        %v1160 = vmax.f32 %v1158, %v1159
        %v1161 = vrot.slane %v1160, 1
        %v1162 = vmax.f32 %v1160, %v1161
        %v1163 = vmax.f32 %v1066, %v1076
        %v1164 = vmax.f32 %v1070, %v1080
        %v1165 = vmax.f32 %v1163, %v1086
        %v1166 = vmax.f32 %v1164, %v1090
        %v1167 = vmax.f32 %v1165, %v1096
        %v1168 = vmax.f32 %v1166, %v1100
        %v1169 = vmax.f32 %v1167, %v1106
        %v1170 = vmax.f32 %v1168, %v1110
        %v1171 = vmax.f32 %v1169, %v1116
        %v1172 = vmax.f32 %v1170, %v1120
        %v1173 = vmax.f32 %v1171, %v1126
        %v1174 = vmax.f32 %v1172, %v1130
        %v1175 = vmax.f32 %v1173, %v1136
        %v1176 = vmax.f32 %v1174, %v1140
        %v1177 = vmax.f32 %v1175, %v1176
        %v1178 = vrot.slane %v1177, 4
        %v1179 = vmax.f32 %v1177, %v1178
        %v1180 = vrot.slane %v1179, 2
        %v1181 = vmax.f32 %v1179, %v1180
        %v1182 = vrot.slane %v1181, 1
        %v1183 = vmax.f32 %v1181, %v1182
        %v1184 = vsub.f32 %v1064, %v1162
        %v1185 = vsub.f32 %v1066, %v1183
        %v1186 = vsub.f32 %v1068, %v1162
        %v1187 = vsub.f32 %v1070, %v1183
        %v1188 = vsub.f32 %v1074, %v1162
        %v1189 = vsub.f32 %v1076, %v1183
        %v1190 = vsub.f32 %v1078, %v1162
        %v1191 = vsub.f32 %v1080, %v1183
        %v1192 = vsub.f32 %v1084, %v1162
        %v1193 = vsub.f32 %v1086, %v1183
        %v1194 = vsub.f32 %v1088, %v1162
        %v1195 = vsub.f32 %v1090, %v1183
        %v1196 = vsub.f32 %v1094, %v1162
        %v1197 = vsub.f32 %v1096, %v1183
        %v1198 = vsub.f32 %v1098, %v1162
        %v1199 = vsub.f32 %v1100, %v1183
        %v1200 = vsub.f32 %v1104, %v1162
        %v1201 = vsub.f32 %v1106, %v1183
        %v1202 = vsub.f32 %v1108, %v1162
        %v1203 = vsub.f32 %v1110, %v1183
        %v1204 = vsub.f32 %v1114, %v1162
        %v1205 = vsub.f32 %v1116, %v1183
        %v1206 = vsub.f32 %v1118, %v1162
        %v1207 = vsub.f32 %v1120, %v1183
        %v1208 = vsub.f32 %v1124, %v1162
        %v1209 = vsub.f32 %v1126, %v1183
        %v1210 = vsub.f32 %v1128, %v1162
        %v1211 = vsub.f32 %v1130, %v1183
        %v1212 = vsub.f32 %v1134, %v1162
        %v1213 = vsub.f32 %v1136, %v1183
        %v1214 = vsub.f32 %v1138, %v1162
        %v1215 = vsub.f32 %v1140, %v1183
        %v1216 = vmul.f32 %v1184, 1.442695
        %v1217 = vpow.pop %v1216
        %v1218 = vmul.f32 %v1185, 1.442695
        %v1219 = vpow.pop %v1218
        %v1220 = vmul.f32 %v1186, 1.442695
        %v1221 = vpow.pop %v1220
        %v1222 = vmul.f32 %v1187, 1.442695
        %v1223 = vpow.pop %v1222
        %v1224 = vmul.f32 %v1188, 1.442695
        %v1225 = vpow.pop %v1224
        %v1226 = vmul.f32 %v1189, 1.442695
        %v1227 = vpow.pop %v1226
        %v1228 = vmul.f32 %v1190, 1.442695
        %v1229 = vpow.pop %v1228
        %v1230 = vmul.f32 %v1191, 1.442695
        %v1231 = vpow.pop %v1230
        %v1232 = vmul.f32 %v1192, 1.442695
        %v1233 = vpow.pop %v1232
        %v1234 = vmul.f32 %v1193, 1.442695
        %v1235 = vpow.pop %v1234
        %v1236 = vmul.f32 %v1194, 1.442695
        %v1237 = vpow.pop %v1236
        %v1238 = vmul.f32 %v1195, 1.442695
        %v1239 = vpow.pop %v1238
        %v1240 = vmul.f32 %v1196, 1.442695
        %v1241 = vpow.pop %v1240
        %v1242 = vmul.f32 %v1197, 1.442695
        %v1243 = vpow.pop %v1242
        %v1244 = vmul.f32 %v1198, 1.442695
        %v1245 = vpow.pop %v1244
        %v1246 = vmul.f32 %v1199, 1.442695
        %v1247 = vpow.pop %v1246
        %v1248 = vmul.f32 %v1200, 1.442695
        %v1249 = vpow.pop %v1248
        %v1250 = vmul.f32 %v1201, 1.442695
        %v1251 = vpow.pop %v1250
        %v1252 = vmul.f32 %v1202, 1.442695
        %v1253 = vpow.pop %v1252
        %v1254 = vmul.f32 %v1203, 1.442695
        %v1255 = vpow.pop %v1254
        %v1256 = vmul.f32 %v1204, 1.442695
        %v1257 = vpow.pop %v1256
        %v1258 = vmul.f32 %v1205, 1.442695
        %v1259 = vpow.pop %v1258
        %v1260 = vmul.f32 %v1206, 1.442695
        %v1261 = vpow.pop %v1260
        %v1262 = vmul.f32 %v1207, 1.442695
        %v1263 = vpow.pop %v1262
        %v1264 = vmul.f32 %v1208, 1.442695
        %v1265 = vpow.pop %v1264
        %v1266 = vmul.f32 %v1209, 1.442695
        %v1267 = vpow.pop %v1266
        %v1268 = vmul.f32 %v1210, 1.442695
        %v1269 = vpow.pop %v1268
        %v1270 = vmul.f32 %v1211, 1.442695
        %v1271 = vpow.pop %v1270
        %v1272 = vmul.f32 %v1212, 1.442695
        %v1273 = vpow.pop %v1272
        %v1274 = vmul.f32 %v1213, 1.442695
        %v1275 = vpow.pop %v1274
        %v1276 = vmul.f32 %v1214, 1.442695
        %v1277 = vpow.pop %v1276
        %v1278 = vmul.f32 %v1215, 1.442695
        %v1279 = vpow.pop %v1278
        %v1280 = vadd.f32 %v1217, %v1221
        %v1281 = vadd.f32 %v1280, %v1225
        %v1282 = vadd.f32 %v1281, %v1229
        %v1283 = vadd.f32 %v1282, %v1233
        %v1284 = vadd.f32 %v1283, %v1237
        %v1285 = vadd.f32 %v1284, %v1241
        %v1286 = vadd.f32 %v1285, %v1245
        %v1287 = vadd.f32 %v1286, %v1249
        %v1288 = vadd.f32 %v1287, %v1253
        %v1289 = vadd.f32 %v1288, %v1257
        %v1290 = vadd.f32 %v1289, %v1261
        %v1291 = vadd.f32 %v1290, %v1265
        %v1292 = vadd.f32 %v1291, %v1269
        %v1293 = vadd.f32 %v1292, %v1273
        %v1294 = vadd.f32 %v1293, %v1277
        %v1295 = vrot.slane %v1294, 4
        %v1296 = vadd.f32 %v1294, %v1295
        %v1297 = vrot.slane %v1296, 2
        %v1298 = vadd.f32 %v1296, %v1297
        %v1299 = vrot.slane %v1298, 1
        %v1300 = vadd.f32 %v1298, %v1299
        %v1301 = vadd.f32 %v1219, %v1223
        %v1302 = vadd.f32 %v1301, %v1227
        %v1303 = vadd.f32 %v1302, %v1231
        %v1304 = vadd.f32 %v1303, %v1235
        %v1305 = vadd.f32 %v1304, %v1239
        %v1306 = vadd.f32 %v1305, %v1243
        %v1307 = vadd.f32 %v1306, %v1247
        %v1308 = vadd.f32 %v1307, %v1251
        %v1309 = vadd.f32 %v1308, %v1255
        %v1310 = vadd.f32 %v1309, %v1259
        %v1311 = vadd.f32 %v1310, %v1263
        %v1312 = vadd.f32 %v1311, %v1267
        %v1313 = vadd.f32 %v1312, %v1271
        %v1314 = vadd.f32 %v1313, %v1275
        %v1315 = vadd.f32 %v1314, %v1279
        %v1316 = vrot.slane %v1315, 4
        %v1317 = vadd.f32 %v1315, %v1316
        %v1318 = vrot.slane %v1317, 2
        %v1319 = vadd.f32 %v1317, %v1318
        %v1320 = vrot.slane %v1319, 1
        %v1321 = vadd.f32 %v1319, %v1320
        %v1322 = vrcp.pop %v1300
        %v1323 = vrcp.pop %v1321
        %v1324 = vmul.f32 %v1217, %v1322
        %v1325 = vmul.f32 %v1219, %v1323
        %v1326 = vmul.f32 %v1221, %v1322
        %v1327 = vmul.f32 %v1223, %v1323
        %v1328 = vmul.f32 %v1225, %v1322
        %v1329 = vmul.f32 %v1227, %v1323
        %v1330 = vmul.f32 %v1229, %v1322
        %v1331 = vmul.f32 %v1231, %v1323
        %v1332 = vmul.f32 %v1233, %v1322
        %v1333 = vmul.f32 %v1235, %v1323
        %v1334 = vmul.f32 %v1237, %v1322
        %v1335 = vmul.f32 %v1239, %v1323
        %v1336 = vmul.f32 %v1241, %v1322
        %v1337 = vmul.f32 %v1243, %v1323
        %v1338 = vmul.f32 %v1245, %v1322
        %v1339 = vmul.f32 %v1247, %v1323
        %v1340 = vmul.f32 %v1249, %v1322
        %v1341 = vmul.f32 %v1251, %v1323
        %v1342 = vmul.f32 %v1253, %v1322
        %v1343 = vmul.f32 %v1255, %v1323
        %v1344 = vmul.f32 %v1257, %v1322
        %v1345 = vmul.f32 %v1259, %v1323
        %v1346 = vmul.f32 %v1261, %v1322
        %v1347 = vmul.f32 %v1263, %v1323
        %v1348 = vmul.f32 %v1265, %v1322
        %v1349 = vmul.f32 %v1267, %v1323
        %v1350 = vmul.f32 %v1269, %v1322
        %v1351 = vmul.f32 %v1271, %v1323
        %v1352 = vmul.f32 %v1273, %v1322
        %v1353 = vmul.f32 %v1275, %v1323
        %v1354 = vmul.f32 %v1277, %v1322
        %v1355 = vmul.f32 %v1279, %v1323
        %v1356 = vpack.c.bf16 %v1326, %v1324
        %v1357 = vpack.c.bf16 %v1327, %v1325
        %v1358 = vpack.c.bf16 %v1330, %v1328
        %v1359 = vpack.c.bf16 %v1331, %v1329
        %v1360 = vpack.c.bf16 %v1334, %v1332
        %v1361 = vpack.c.bf16 %v1335, %v1333
        %v1362 = vpack.c.bf16 %v1338, %v1336
        %v1363 = vpack.c.bf16 %v1339, %v1337
        %v1364 = vpack.c.bf16 %v1342, %v1340
        %v1365 = vpack.c.bf16 %v1343, %v1341
        %v1366 = vpack.c.bf16 %v1346, %v1344
        %v1367 = vpack.c.bf16 %v1347, %v1345
        %v1368 = vpack.c.bf16 %v1350, %v1348
        %v1369 = vpack.c.bf16 %v1351, %v1349
        %v1370 = vpack.c.bf16 %v1354, %v1352
        %v1371 = vpack.c.bf16 %v1355, %v1353
        %1372 = vmatprep.subr.bf16.mxu0 %v1357
        %1373 = vmatpush1.bf16.msra.mxu0 %v1356
        %1374 = vmatprep.subr.bf16.mxu0 %v1359
        %1375 = vmatpush1.bf16.msra.mxu0 %v1358
        %1376 = vmatprep.subr.bf16.mxu0 %v1361
        %1377 = vmatpush1.bf16.msra.mxu0 %v1360
        %1378 = vmatprep.subr.bf16.mxu0 %v1363
        %1379 = vmatpush1.bf16.msra.mxu0 %v1362
        %1380 = vmatprep.subr.bf16.mxu0 %v1365
        %1381 = vmatpush1.bf16.msra.mxu0 %v1364
        %1382 = vmatprep.subr.bf16.mxu0 %v1367
        %1383 = vmatpush1.bf16.msra.mxu0 %v1366
        %1384 = vmatprep.subr.bf16.mxu0 %v1369
        %1385 = vmatpush1.bf16.msra.mxu0 %v1368
        %1386 = vmatprep.subr.bf16.mxu0 %v1371
        %1387 = vmatpush1.bf16.msra.mxu0 %v1370
        %1388 = vmatprep.subr.bf16.mxu0 0
        %1389 = vmatpush1.bf16.msra.mxu0 0
        %1390 = vmatprep.subr.bf16.mxu0 0
        %1391 = vmatpush1.bf16.msra.mxu0 0
        %1392 = vmatprep.subr.bf16.mxu0 0
        %1393 = vmatpush1.bf16.msra.mxu0 0
        %1394 = vmatprep.subr.bf16.mxu0 0
        %1395 = vmatpush1.bf16.msra.mxu0 0
        %1396 = vmatprep.subr.bf16.mxu0 0
        %1397 = vmatpush1.bf16.msra.mxu0 0
        %1398 = vmatprep.subr.bf16.mxu0 0
        %1399 = vmatpush1.bf16.msra.mxu0 0
        %1400 = vmatprep.subr.bf16.mxu0 0
        %1401 = vmatpush1.bf16.msra.mxu0 0
        %1402 = vmatprep.subr.bf16.mxu0 0
        %1403 = vmatpush1.bf16.msra.mxu0 0
        %1404 = vmatprep.mubr.bf16.mxu0 0
        %1405 = vmatmul.mubr.bf16.gmra.mrb[0].mxu0 %v954
        %v1406 = vpop.f32.mrb[0].mxu0
        %v1407 = vadd.f32 0.0, %v1406
        %v1408 = vpop.f32.mrb[0].mxu0
        %v1409 = vadd.f32 0.0, %v1408
        %v1410 = vpop.f32.mrb[0].mxu0
        %v1411 = vpop.f32.mrb[0].mxu0
        %1412 = vdwg.mxu0
        %v1413 = vpack.c.bf16 %v1407, %v1407
        %v1414 = vpack.c.bf16 %v1409, %v1409
        %s1415 = scalar_lea.vmem %s314, 128
        %v1416 = vld [vmem:[%s1415] sm:$0xf]
        %v1417 = vld [vmem:[%s1415 + $0x4] sm:$0xf]
        %v1418 = vld [vmem:[%s1415 + $0x8] sm:$0xf]
        %v1419 = vld [vmem:[%s1415 + $0xc] sm:$0xf]
        %v1420 = vld [vmem:[%s1415 + $0x10] sm:$0xf]
        %v1421 = vld [vmem:[%s1415 + $0x14] sm:$0xf]
        %v1422 = vld [vmem:[%s1415 + $0x18] sm:$0xf]
        %v1423 = vld [vmem:[%s1415 + $0x1c] sm:$0xf]
        %v1424 = vld [vmem:[%s1415 + $0x20] sm:$0xf]
        %v1425 = vld [vmem:[%s1415 + $0x24] sm:$0xf]
        %v1426 = vld [vmem:[%s1415 + $0x28] sm:$0xf]
        %v1427 = vld [vmem:[%s1415 + $0x2c] sm:$0xf]
        %v1428 = vld [vmem:[%s1415 + $0x30] sm:$0xf]
        %v1429 = vld [vmem:[%s1415 + $0x34] sm:$0xf]
        %v1430 = vld [vmem:[%s1415 + $0x38] sm:$0xf]
        %v1431 = vld [vmem:[%s1415 + $0x3c] sm:$0xf]
        %s1432 = scalar_lea.vmem %s319, 4
        %v1433 = vld [vmem:[%s1432] sm:$0x3]
        %v1450 = vunpack.c.l.b16 %v1416
        %v1451 = vunpack.c.l.b16 %v1417
        %v1452 = vunpack.c.l.b16 %v1418
        %v1453 = vunpack.c.l.b16 %v1419
        %v1454 = vunpack.c.l.b16 %v1420
        %v1455 = vunpack.c.l.b16 %v1421
        %v1456 = vunpack.c.l.b16 %v1422
        %v1457 = vunpack.c.l.b16 %v1423
        %v1458 = vunpack.c.l.b16 %v1424
        %v1459 = vunpack.c.l.b16 %v1425
        %v1460 = vunpack.c.l.b16 %v1426
        %v1461 = vunpack.c.l.b16 %v1427
        %v1462 = vunpack.c.l.b16 %v1428
        %v1463 = vunpack.c.l.b16 %v1429
        %v1464 = vunpack.c.l.b16 %v1430
        %v1465 = vunpack.c.l.b16 %v1431
        %v1466 = vpack.c.b16 %v1451, %v1450
        %v1467 = vpack.c.b16 %v1453, %v1452
        %v1468 = vpack.c.b16 %v1455, %v1454
        %v1469 = vpack.c.b16 %v1457, %v1456
        %v1470 = vpack.c.b16 %v1459, %v1458
        %v1471 = vpack.c.b16 %v1461, %v1460
        %v1472 = vpack.c.b16 %v1463, %v1462
        %v1473 = vpack.c.b16 %v1465, %v1464
        %v1474 = vrot.slane %v408, 4
        %v1475 = vrot.slane %v409, 4
        %v1477 = vsel %vm518, %v1466, 0
        %v1480 = vsel %vm518, %v1467, 0
        %v1483 = vsel %vm518, %v1468, 0
        %v1486 = vsel %vm518, %v1469, 0
        %v1489 = vsel %vm518, %v1470, 0
        %v1492 = vsel %vm518, %v1471, 0
        %v1495 = vsel %vm518, %v1472, 0
        %v1498 = vsel %vm518, %v1473, 0
        %v1501 = vsel %vm543, %v1474, 0
        %v1504 = vsel %vm543, %v1475, 0
        %1506 = vmatprep.subr.bf16.mxu0 %v1504
        %1507 = vmatpush1.bf16.msra.mxu0 %v1501
        %1508 = vmatprep.subr.bf16.mxu0 0
        %1509 = vmatpush1.bf16.msra.mxu0 0
        %1510 = vmatprep.subr.bf16.mxu0 0
        %1511 = vmatpush1.bf16.msra.mxu0 0
        %1512 = vmatprep.subr.bf16.mxu0 0
        %1513 = vmatpush1.bf16.msra.mxu0 0
        %1514 = vmatprep.subr.bf16.mxu0 0
        %1515 = vmatpush1.bf16.msra.mxu0 0
        %1516 = vmatprep.subr.bf16.mxu0 0
        %1517 = vmatpush1.bf16.msra.mxu0 0
        %1518 = vmatprep.subr.bf16.mxu0 0
        %1519 = vmatpush1.bf16.msra.mxu0 0
        %1520 = vmatprep.subr.bf16.mxu0 0
        %1521 = vmatpush1.bf16.msra.mxu0 0
        %1522 = vmatprep.subr.bf16.mxu0 0
        %1523 = vmatpush1.bf16.msra.mxu0 0
        %1524 = vmatprep.subr.bf16.mxu0 0
        %1525 = vmatpush1.bf16.msra.mxu0 0
        %1526 = vmatprep.subr.bf16.mxu0 0
        %1527 = vmatpush1.bf16.msra.mxu0 0
        %1528 = vmatprep.subr.bf16.mxu0 0
        %1529 = vmatpush1.bf16.msra.mxu0 0
        %1530 = vmatprep.subr.bf16.mxu0 0
        %1531 = vmatpush1.bf16.msra.mxu0 0
        %1532 = vmatprep.subr.bf16.mxu0 0
        %1533 = vmatpush1.bf16.msra.mxu0 0
        %1534 = vmatprep.subr.bf16.mxu0 0
        %1535 = vmatpush1.bf16.msra.mxu0 0
        %1536 = vmatprep.subr.bf16.mxu0 0
        %1537 = vmatpush1.bf16.msra.mxu0 0
        %1538 = vmatprep.mubr.bf16.mxu0 0
        %1539 = vmatmul.mubr.bf16.gmra.mrb[0].mxu0 %v1477
        %v1540 = vpop.f32.mrb[0].mxu0
        %v1541 = vadd.f32 %v445, %v1540
        %v1542 = vpop.f32.mrb[0].mxu0
        %v1543 = vadd.f32 %v445, %v1542
        %v1544 = vpop.f32.mrb[0].mxu0
        %v1545 = vadd.f32 %v446, %v1544
        %v1546 = vpop.f32.mrb[0].mxu0
        %v1547 = vadd.f32 %v446, %v1546
        %1548 = vmatprep.mubr.bf16.mxu0 0
        %1549 = vmatmul.mubr.bf16.gmra.mrb[0].mxu0 %v1480
        %v1550 = vpop.f32.mrb[0].mxu0
        %v1551 = vadd.f32 %v447, %v1550
        %v1552 = vpop.f32.mrb[0].mxu0
        %v1553 = vadd.f32 %v447, %v1552
        %v1554 = vpop.f32.mrb[0].mxu0
        %v1555 = vadd.f32 %v448, %v1554
        %v1556 = vpop.f32.mrb[0].mxu0
        %v1557 = vadd.f32 %v448, %v1556
        %1558 = vmatprep.mubr.bf16.mxu0 0
        %1559 = vmatmul.mubr.bf16.gmra.mrb[0].mxu0 %v1483
        %v1560 = vpop.f32.mrb[0].mxu0
        %v1561 = vadd.f32 %v449, %v1560
        %v1562 = vpop.f32.mrb[0].mxu0
        %v1563 = vadd.f32 %v449, %v1562
        %v1564 = vpop.f32.mrb[0].mxu0
        %v1565 = vadd.f32 %v450, %v1564
        %v1566 = vpop.f32.mrb[0].mxu0
        %v1567 = vadd.f32 %v450, %v1566
        %1568 = vmatprep.mubr.bf16.mxu0 0
        %1569 = vmatmul.mubr.bf16.gmra.mrb[0].mxu0 %v1486
        %v1570 = vpop.f32.mrb[0].mxu0
        %v1571 = vadd.f32 %v451, %v1570
        %v1572 = vpop.f32.mrb[0].mxu0
        %v1573 = vadd.f32 %v451, %v1572
        %v1574 = vpop.f32.mrb[0].mxu0
        %v1575 = vadd.f32 %v452, %v1574
        %v1576 = vpop.f32.mrb[0].mxu0
        %v1577 = vadd.f32 %v452, %v1576
        %1578 = vmatprep.mubr.bf16.mxu0 0
        %1579 = vmatmul.mubr.bf16.gmra.mrb[0].mxu0 %v1489
        %v1580 = vpop.f32.mrb[0].mxu0
        %v1581 = vadd.f32 %v453, %v1580
        %v1582 = vpop.f32.mrb[0].mxu0
        %v1583 = vadd.f32 %v453, %v1582
        %v1584 = vpop.f32.mrb[0].mxu0
        %v1585 = vadd.f32 %v454, %v1584
        %v1586 = vpop.f32.mrb[0].mxu0
        %v1587 = vadd.f32 %v454, %v1586
        %1588 = vmatprep.mubr.bf16.mxu0 0
        %1589 = vmatmul.mubr.bf16.gmra.mrb[0].mxu0 %v1492
        %v1590 = vpop.f32.mrb[0].mxu0
        %v1591 = vadd.f32 %v455, %v1590
        %v1592 = vpop.f32.mrb[0].mxu0
        %v1593 = vadd.f32 %v455, %v1592
        %v1594 = vpop.f32.mrb[0].mxu0
        %v1595 = vadd.f32 %v456, %v1594
        %v1596 = vpop.f32.mrb[0].mxu0
        %v1597 = vadd.f32 %v456, %v1596
        %1598 = vmatprep.mubr.bf16.mxu0 0
        %1599 = vmatmul.mubr.bf16.gmra.mrb[0].mxu0 %v1495
        %v1600 = vpop.f32.mrb[0].mxu0
        %v1601 = vadd.f32 %v457, %v1600
        %v1602 = vpop.f32.mrb[0].mxu0
        %v1603 = vadd.f32 %v457, %v1602
        %v1604 = vpop.f32.mrb[0].mxu0
        %v1605 = vadd.f32 %v458, %v1604
        %v1606 = vpop.f32.mrb[0].mxu0
        %v1607 = vadd.f32 %v458, %v1606
        %1608 = vmatprep.mubr.bf16.mxu0 0
        %1609 = vmatmul.mubr.bf16.gmra.mrb[0].mxu0 %v1498
        %v1610 = vpop.f32.mrb[0].mxu0
        %v1611 = vadd.f32 %v459, %v1610
        %v1612 = vpop.f32.mrb[0].mxu0
        %v1613 = vadd.f32 %v459, %v1612
        %v1614 = vpop.f32.mrb[0].mxu0
        %v1615 = vadd.f32 %v460, %v1614
        %v1616 = vpop.f32.mrb[0].mxu0
        %v1617 = vadd.f32 %v460, %v1616
        %1618 = vdwg.mxu0
        %v1619 = vmax.f32 %v1541, %v1551
        %v1620 = vmax.f32 %v1545, %v1555
        %v1621 = vmax.f32 %v1619, %v1561
        %v1622 = vmax.f32 %v1620, %v1565
        %v1623 = vmax.f32 %v1621, %v1571
        %v1624 = vmax.f32 %v1622, %v1575
        %v1625 = vmax.f32 %v1623, %v1581
        %v1626 = vmax.f32 %v1624, %v1585
        %v1627 = vmax.f32 %v1625, %v1591
        %v1628 = vmax.f32 %v1626, %v1595
        %v1629 = vmax.f32 %v1627, %v1601
        %v1630 = vmax.f32 %v1628, %v1605
        %v1631 = vmax.f32 %v1629, %v1611
        %v1632 = vmax.f32 %v1630, %v1615
        %v1633 = vmax.f32 %v1631, %v1632
        %v1634 = vrot.slane %v1633, 4
        %v1635 = vmax.f32 %v1633, %v1634
        %v1636 = vrot.slane %v1635, 2
        %v1637 = vmax.f32 %v1635, %v1636
        %v1638 = vrot.slane %v1637, 1
        %v1639 = vmax.f32 %v1637, %v1638
        %v1640 = vmax.f32 %v1543, %v1553
        %v1641 = vmax.f32 %v1547, %v1557
        %v1642 = vmax.f32 %v1640, %v1563
        %v1643 = vmax.f32 %v1641, %v1567
        %v1644 = vmax.f32 %v1642, %v1573
        %v1645 = vmax.f32 %v1643, %v1577
        %v1646 = vmax.f32 %v1644, %v1583
        %v1647 = vmax.f32 %v1645, %v1587
        %v1648 = vmax.f32 %v1646, %v1593
        %v1649 = vmax.f32 %v1647, %v1597
        %v1650 = vmax.f32 %v1648, %v1603
        %v1651 = vmax.f32 %v1649, %v1607
        %v1652 = vmax.f32 %v1650, %v1613
        %v1653 = vmax.f32 %v1651, %v1617
        %v1654 = vmax.f32 %v1652, %v1653
        %v1655 = vrot.slane %v1654, 4
        %v1656 = vmax.f32 %v1654, %v1655
        %v1657 = vrot.slane %v1656, 2
        %v1658 = vmax.f32 %v1656, %v1657
        %v1659 = vrot.slane %v1658, 1
        %v1660 = vmax.f32 %v1658, %v1659
        %v1661 = vsub.f32 %v1541, %v1639
        %v1662 = vsub.f32 %v1543, %v1660
        %v1663 = vsub.f32 %v1545, %v1639
        %v1664 = vsub.f32 %v1547, %v1660
        %v1665 = vsub.f32 %v1551, %v1639
        %v1666 = vsub.f32 %v1553, %v1660
        %v1667 = vsub.f32 %v1555, %v1639
        %v1668 = vsub.f32 %v1557, %v1660
        %v1669 = vsub.f32 %v1561, %v1639
        %v1670 = vsub.f32 %v1563, %v1660
        %v1671 = vsub.f32 %v1565, %v1639
        %v1672 = vsub.f32 %v1567, %v1660
        %v1673 = vsub.f32 %v1571, %v1639
        %v1674 = vsub.f32 %v1573, %v1660
        %v1675 = vsub.f32 %v1575, %v1639
        %v1676 = vsub.f32 %v1577, %v1660
        %v1677 = vsub.f32 %v1581, %v1639
        %v1678 = vsub.f32 %v1583, %v1660
        %v1679 = vsub.f32 %v1585, %v1639
        %v1680 = vsub.f32 %v1587, %v1660
        %v1681 = vsub.f32 %v1591, %v1639
        %v1682 = vsub.f32 %v1593, %v1660
        %v1683 = vsub.f32 %v1595, %v1639
        %v1684 = vsub.f32 %v1597, %v1660
        %v1685 = vsub.f32 %v1601, %v1639
        %v1686 = vsub.f32 %v1603, %v1660
        %v1687 = vsub.f32 %v1605, %v1639
        %v1688 = vsub.f32 %v1607, %v1660
        %v1689 = vsub.f32 %v1611, %v1639
        %v1690 = vsub.f32 %v1613, %v1660
        %v1691 = vsub.f32 %v1615, %v1639
        %v1692 = vsub.f32 %v1617, %v1660
        %v1693 = vmul.f32 %v1661, 1.442695
        %v1694 = vpow.pop %v1693
        %v1695 = vmul.f32 %v1662, 1.442695
        %v1696 = vpow.pop %v1695
        %v1697 = vmul.f32 %v1663, 1.442695
        %v1698 = vpow.pop %v1697
        %v1699 = vmul.f32 %v1664, 1.442695
        %v1700 = vpow.pop %v1699
        %v1701 = vmul.f32 %v1665, 1.442695
        %v1702 = vpow.pop %v1701
        %v1703 = vmul.f32 %v1666, 1.442695
        %v1704 = vpow.pop %v1703
        %v1705 = vmul.f32 %v1667, 1.442695
        %v1706 = vpow.pop %v1705
        %v1707 = vmul.f32 %v1668, 1.442695
        %v1708 = vpow.pop %v1707
        %v1709 = vmul.f32 %v1669, 1.442695
        %v1710 = vpow.pop %v1709
        %v1711 = vmul.f32 %v1670, 1.442695
        %v1712 = vpow.pop %v1711
        %v1713 = vmul.f32 %v1671, 1.442695
        %v1714 = vpow.pop %v1713
        %v1715 = vmul.f32 %v1672, 1.442695
        %v1716 = vpow.pop %v1715
        %v1717 = vmul.f32 %v1673, 1.442695
        %v1718 = vpow.pop %v1717
        %v1719 = vmul.f32 %v1674, 1.442695
        %v1720 = vpow.pop %v1719
        %v1721 = vmul.f32 %v1675, 1.442695
        %v1722 = vpow.pop %v1721
        %v1723 = vmul.f32 %v1676, 1.442695
        %v1724 = vpow.pop %v1723
        %v1725 = vmul.f32 %v1677, 1.442695
        %v1726 = vpow.pop %v1725
        %v1727 = vmul.f32 %v1678, 1.442695
        %v1728 = vpow.pop %v1727
        %v1729 = vmul.f32 %v1679, 1.442695
        %v1730 = vpow.pop %v1729
        %v1731 = vmul.f32 %v1680, 1.442695
        %v1732 = vpow.pop %v1731
        %v1733 = vmul.f32 %v1681, 1.442695
        %v1734 = vpow.pop %v1733
        %v1735 = vmul.f32 %v1682, 1.442695
        %v1736 = vpow.pop %v1735
        %v1737 = vmul.f32 %v1683, 1.442695
        %v1738 = vpow.pop %v1737
        %v1739 = vmul.f32 %v1684, 1.442695
        %v1740 = vpow.pop %v1739
        %v1741 = vmul.f32 %v1685, 1.442695
        %v1742 = vpow.pop %v1741
        %v1743 = vmul.f32 %v1686, 1.442695
        %v1744 = vpow.pop %v1743
        %v1745 = vmul.f32 %v1687, 1.442695
        %v1746 = vpow.pop %v1745
        %v1747 = vmul.f32 %v1688, 1.442695
        %v1748 = vpow.pop %v1747
        %v1749 = vmul.f32 %v1689, 1.442695
        %v1750 = vpow.pop %v1749
        %v1751 = vmul.f32 %v1690, 1.442695
        %v1752 = vpow.pop %v1751
        %v1753 = vmul.f32 %v1691, 1.442695
        %v1754 = vpow.pop %v1753
        %v1755 = vmul.f32 %v1692, 1.442695
        %v1756 = vpow.pop %v1755
        %v1757 = vadd.f32 %v1694, %v1698
        %v1758 = vadd.f32 %v1757, %v1702
        %v1759 = vadd.f32 %v1758, %v1706
        %v1760 = vadd.f32 %v1759, %v1710
        %v1761 = vadd.f32 %v1760, %v1714
        %v1762 = vadd.f32 %v1761, %v1718
        %v1763 = vadd.f32 %v1762, %v1722
        %v1764 = vadd.f32 %v1763, %v1726
        %v1765 = vadd.f32 %v1764, %v1730
        %v1766 = vadd.f32 %v1765, %v1734
        %v1767 = vadd.f32 %v1766, %v1738
        %v1768 = vadd.f32 %v1767, %v1742
        %v1769 = vadd.f32 %v1768, %v1746
        %v1770 = vadd.f32 %v1769, %v1750
        %v1771 = vadd.f32 %v1770, %v1754
        %v1772 = vrot.slane %v1771, 4
        %v1773 = vadd.f32 %v1771, %v1772
        %v1774 = vrot.slane %v1773, 2
        %v1775 = vadd.f32 %v1773, %v1774
        %v1776 = vrot.slane %v1775, 1
        %v1777 = vadd.f32 %v1775, %v1776
        %v1778 = vadd.f32 %v1696, %v1700
        %v1779 = vadd.f32 %v1778, %v1704
        %v1780 = vadd.f32 %v1779, %v1708
        %v1781 = vadd.f32 %v1780, %v1712
        %v1782 = vadd.f32 %v1781, %v1716
        %v1783 = vadd.f32 %v1782, %v1720
        %v1784 = vadd.f32 %v1783, %v1724
        %v1785 = vadd.f32 %v1784, %v1728
        %v1786 = vadd.f32 %v1785, %v1732
        %v1787 = vadd.f32 %v1786, %v1736
        %v1788 = vadd.f32 %v1787, %v1740
        %v1789 = vadd.f32 %v1788, %v1744
        %v1790 = vadd.f32 %v1789, %v1748
        %v1791 = vadd.f32 %v1790, %v1752
        %v1792 = vadd.f32 %v1791, %v1756
        %v1793 = vrot.slane %v1792, 4
        %v1794 = vadd.f32 %v1792, %v1793
        %v1795 = vrot.slane %v1794, 2
        %v1796 = vadd.f32 %v1794, %v1795
        %v1797 = vrot.slane %v1796, 1
        %v1798 = vadd.f32 %v1796, %v1797
        %v1799 = vrcp.pop %v1777
        %v1800 = vrcp.pop %v1798
        %v1801 = vmul.f32 %v1694, %v1799
        %v1802 = vmul.f32 %v1696, %v1800
        %v1803 = vmul.f32 %v1698, %v1799
        %v1804 = vmul.f32 %v1700, %v1800
        %v1805 = vmul.f32 %v1702, %v1799
        %v1806 = vmul.f32 %v1704, %v1800
        %v1807 = vmul.f32 %v1706, %v1799
        %v1808 = vmul.f32 %v1708, %v1800
        %v1809 = vmul.f32 %v1710, %v1799
        %v1810 = vmul.f32 %v1712, %v1800
        %v1811 = vmul.f32 %v1714, %v1799
        %v1812 = vmul.f32 %v1716, %v1800
        %v1813 = vmul.f32 %v1718, %v1799
        %v1814 = vmul.f32 %v1720, %v1800
        %v1815 = vmul.f32 %v1722, %v1799
        %v1816 = vmul.f32 %v1724, %v1800
        %v1817 = vmul.f32 %v1726, %v1799
        %v1818 = vmul.f32 %v1728, %v1800
        %v1819 = vmul.f32 %v1730, %v1799
        %v1820 = vmul.f32 %v1732, %v1800
        %v1821 = vmul.f32 %v1734, %v1799
        %v1822 = vmul.f32 %v1736, %v1800
        %v1823 = vmul.f32 %v1738, %v1799
        %v1824 = vmul.f32 %v1740, %v1800
        %v1825 = vmul.f32 %v1742, %v1799
        %v1826 = vmul.f32 %v1744, %v1800
        %v1827 = vmul.f32 %v1746, %v1799
        %v1828 = vmul.f32 %v1748, %v1800
        %v1829 = vmul.f32 %v1750, %v1799
        %v1830 = vmul.f32 %v1752, %v1800
        %v1831 = vmul.f32 %v1754, %v1799
        %v1832 = vmul.f32 %v1756, %v1800
        %v1833 = vpack.c.bf16 %v1803, %v1801
        %v1834 = vpack.c.bf16 %v1804, %v1802
        %v1835 = vpack.c.bf16 %v1807, %v1805
        %v1836 = vpack.c.bf16 %v1808, %v1806
        %v1837 = vpack.c.bf16 %v1811, %v1809
        %v1838 = vpack.c.bf16 %v1812, %v1810
        %v1839 = vpack.c.bf16 %v1815, %v1813
        %v1840 = vpack.c.bf16 %v1816, %v1814
        %v1841 = vpack.c.bf16 %v1819, %v1817
        %v1842 = vpack.c.bf16 %v1820, %v1818
        %v1843 = vpack.c.bf16 %v1823, %v1821
        %v1844 = vpack.c.bf16 %v1824, %v1822
        %v1845 = vpack.c.bf16 %v1827, %v1825
        %v1846 = vpack.c.bf16 %v1828, %v1826
        %v1847 = vpack.c.bf16 %v1831, %v1829
        %v1848 = vpack.c.bf16 %v1832, %v1830
        %1849 = vmatprep.subr.bf16.mxu0 %v1834
        %1850 = vmatpush1.bf16.msra.mxu0 %v1833
        %1851 = vmatprep.subr.bf16.mxu0 %v1836
        %1852 = vmatpush1.bf16.msra.mxu0 %v1835
        %1853 = vmatprep.subr.bf16.mxu0 %v1838
        %1854 = vmatpush1.bf16.msra.mxu0 %v1837
        %1855 = vmatprep.subr.bf16.mxu0 %v1840
        %1856 = vmatpush1.bf16.msra.mxu0 %v1839
        %1857 = vmatprep.subr.bf16.mxu0 %v1842
        %1858 = vmatpush1.bf16.msra.mxu0 %v1841
        %1859 = vmatprep.subr.bf16.mxu0 %v1844
        %1860 = vmatpush1.bf16.msra.mxu0 %v1843
        %1861 = vmatprep.subr.bf16.mxu0 %v1846
        %1862 = vmatpush1.bf16.msra.mxu0 %v1845
        %1863 = vmatprep.subr.bf16.mxu0 %v1848
        %1864 = vmatpush1.bf16.msra.mxu0 %v1847
        %1865 = vmatprep.subr.bf16.mxu0 0
        %1866 = vmatpush1.bf16.msra.mxu0 0
        %1867 = vmatprep.subr.bf16.mxu0 0
        %1868 = vmatpush1.bf16.msra.mxu0 0
        %1869 = vmatprep.subr.bf16.mxu0 0
        %1870 = vmatpush1.bf16.msra.mxu0 0
        %1871 = vmatprep.subr.bf16.mxu0 0
        %1872 = vmatpush1.bf16.msra.mxu0 0
        %1873 = vmatprep.subr.bf16.mxu0 0
        %1874 = vmatpush1.bf16.msra.mxu0 0
        %1875 = vmatprep.subr.bf16.mxu0 0
        %1876 = vmatpush1.bf16.msra.mxu0 0
        %1877 = vmatprep.subr.bf16.mxu0 0
        %1878 = vmatpush1.bf16.msra.mxu0 0
        %1879 = vmatprep.subr.bf16.mxu0 0
        %1880 = vmatpush1.bf16.msra.mxu0 0
        %1881 = vmatprep.mubr.bf16.mxu0 0
        %1882 = vmatmul.mubr.bf16.gmra.mrb[0].mxu0 %v1433
        %v1883 = vpop.f32.mrb[0].mxu0
        %v1884 = vadd.f32 0.0, %v1883
        %v1885 = vpop.f32.mrb[0].mxu0
        %v1886 = vadd.f32 0.0, %v1885
        %v1887 = vpop.f32.mrb[0].mxu0
        %v1888 = vpop.f32.mrb[0].mxu0
        %1889 = vdwg.mxu0
        %v1890 = vpack.c.bf16 %v1884, %v1884
        %v1891 = vpack.c.bf16 %v1886, %v1886
        %s1892 = scalar_lea.vmem %s314, 192
        %v1893 = vld [vmem:[%s1892] sm:$0xf]
        %v1894 = vld [vmem:[%s1892 + $0x4] sm:$0xf]
        %v1895 = vld [vmem:[%s1892 + $0x8] sm:$0xf]
        %v1896 = vld [vmem:[%s1892 + $0xc] sm:$0xf]
        %v1897 = vld [vmem:[%s1892 + $0x10] sm:$0xf]
        %v1898 = vld [vmem:[%s1892 + $0x14] sm:$0xf]
        %v1899 = vld [vmem:[%s1892 + $0x18] sm:$0xf]
        %v1900 = vld [vmem:[%s1892 + $0x1c] sm:$0xf]
        %v1901 = vld [vmem:[%s1892 + $0x20] sm:$0xf]
        %v1902 = vld [vmem:[%s1892 + $0x24] sm:$0xf]
        %v1903 = vld [vmem:[%s1892 + $0x28] sm:$0xf]
        %v1904 = vld [vmem:[%s1892 + $0x2c] sm:$0xf]
        %v1905 = vld [vmem:[%s1892 + $0x30] sm:$0xf]
        %v1906 = vld [vmem:[%s1892 + $0x34] sm:$0xf]
        %v1907 = vld [vmem:[%s1892 + $0x38] sm:$0xf]
        %v1908 = vld [vmem:[%s1892 + $0x3c] sm:$0xf]
        %s1909 = scalar_lea.vmem %s319, 6
        %v1910 = vld [vmem:[%s1909] sm:$0x3]
        %v1927 = vunpack.c.l.b16 %v1893
        %v1928 = vunpack.c.l.b16 %v1894
        %v1929 = vunpack.c.l.b16 %v1895
        %v1930 = vunpack.c.l.b16 %v1896
        %v1931 = vunpack.c.l.b16 %v1897
        %v1932 = vunpack.c.l.b16 %v1898
        %v1933 = vunpack.c.l.b16 %v1899
        %v1934 = vunpack.c.l.b16 %v1900
        %v1935 = vunpack.c.l.b16 %v1901
        %v1936 = vunpack.c.l.b16 %v1902
        %v1937 = vunpack.c.l.b16 %v1903
        %v1938 = vunpack.c.l.b16 %v1904
        %v1939 = vunpack.c.l.b16 %v1905
        %v1940 = vunpack.c.l.b16 %v1906
        %v1941 = vunpack.c.l.b16 %v1907
        %v1942 = vunpack.c.l.b16 %v1908
        %v1943 = vpack.c.b16 %v1928, %v1927
        %v1944 = vpack.c.b16 %v1930, %v1929
        %v1945 = vpack.c.b16 %v1932, %v1931
        %v1946 = vpack.c.b16 %v1934, %v1933
        %v1947 = vpack.c.b16 %v1936, %v1935
        %v1948 = vpack.c.b16 %v1938, %v1937
        %v1949 = vpack.c.b16 %v1940, %v1939
        %v1950 = vpack.c.b16 %v1942, %v1941
        %v1951 = vrot.slane %v408, 6
        %v1952 = vrot.slane %v409, 6
        %v1954 = vsel %vm518, %v1943, 0
        %v1957 = vsel %vm518, %v1944, 0
        %v1960 = vsel %vm518, %v1945, 0
        %v1963 = vsel %vm518, %v1946, 0
        %v1966 = vsel %vm518, %v1947, 0
        %v1969 = vsel %vm518, %v1948, 0
        %v1972 = vsel %vm518, %v1949, 0
        %v1975 = vsel %vm518, %v1950, 0
        %v1978 = vsel %vm543, %v1951, 0
        %v1981 = vsel %vm543, %v1952, 0
        %1983 = vmatprep.subr.bf16.mxu0 %v1981
        %1984 = vmatpush1.bf16.msra.mxu0 %v1978
        %1985 = vmatprep.subr.bf16.mxu0 0
        %1986 = vmatpush1.bf16.msra.mxu0 0
        %1987 = vmatprep.subr.bf16.mxu0 0
        %1988 = vmatpush1.bf16.msra.mxu0 0
        %1989 = vmatprep.subr.bf16.mxu0 0
        %1990 = vmatpush1.bf16.msra.mxu0 0
        %1991 = vmatprep.subr.bf16.mxu0 0
        %1992 = vmatpush1.bf16.msra.mxu0 0
        %1993 = vmatprep.subr.bf16.mxu0 0
        %1994 = vmatpush1.bf16.msra.mxu0 0
        %1995 = vmatprep.subr.bf16.mxu0 0
        %1996 = vmatpush1.bf16.msra.mxu0 0
        %1997 = vmatprep.subr.bf16.mxu0 0
        %1998 = vmatpush1.bf16.msra.mxu0 0
        %1999 = vmatprep.subr.bf16.mxu0 0
        %2000 = vmatpush1.bf16.msra.mxu0 0
        %2001 = vmatprep.subr.bf16.mxu0 0
        %2002 = vmatpush1.bf16.msra.mxu0 0
        %2003 = vmatprep.subr.bf16.mxu0 0
        %2004 = vmatpush1.bf16.msra.mxu0 0
        %2005 = vmatprep.subr.bf16.mxu0 0
        %2006 = vmatpush1.bf16.msra.mxu0 0
        %2007 = vmatprep.subr.bf16.mxu0 0
        %2008 = vmatpush1.bf16.msra.mxu0 0
        %2009 = vmatprep.subr.bf16.mxu0 0
        %2010 = vmatpush1.bf16.msra.mxu0 0
        %2011 = vmatprep.subr.bf16.mxu0 0
        %2012 = vmatpush1.bf16.msra.mxu0 0
        %2013 = vmatprep.subr.bf16.mxu0 0
        %2014 = vmatpush1.bf16.msra.mxu0 0
        %2015 = vmatprep.mubr.bf16.mxu0 0
        %2016 = vmatmul.mubr.bf16.gmra.mrb[0].mxu0 %v1954
        %v2017 = vpop.f32.mrb[0].mxu0
        %v2018 = vadd.f32 %v445, %v2017
        %v2019 = vpop.f32.mrb[0].mxu0
        %v2020 = vadd.f32 %v445, %v2019
        %v2021 = vpop.f32.mrb[0].mxu0
        %v2022 = vadd.f32 %v446, %v2021
        %v2023 = vpop.f32.mrb[0].mxu0
        %v2024 = vadd.f32 %v446, %v2023
        %2025 = vmatprep.mubr.bf16.mxu0 0
        %2026 = vmatmul.mubr.bf16.gmra.mrb[0].mxu0 %v1957
        %v2027 = vpop.f32.mrb[0].mxu0
        %v2028 = vadd.f32 %v447, %v2027
        %v2029 = vpop.f32.mrb[0].mxu0
        %v2030 = vadd.f32 %v447, %v2029
        %v2031 = vpop.f32.mrb[0].mxu0
        %v2032 = vadd.f32 %v448, %v2031
        %v2033 = vpop.f32.mrb[0].mxu0
        %v2034 = vadd.f32 %v448, %v2033
        %2035 = vmatprep.mubr.bf16.mxu0 0
        %2036 = vmatmul.mubr.bf16.gmra.mrb[0].mxu0 %v1960
        %v2037 = vpop.f32.mrb[0].mxu0
        %v2038 = vadd.f32 %v449, %v2037
        %v2039 = vpop.f32.mrb[0].mxu0
        %v2040 = vadd.f32 %v449, %v2039
        %v2041 = vpop.f32.mrb[0].mxu0
        %v2042 = vadd.f32 %v450, %v2041
        %v2043 = vpop.f32.mrb[0].mxu0
        %v2044 = vadd.f32 %v450, %v2043
        %2045 = vmatprep.mubr.bf16.mxu0 0
        %2046 = vmatmul.mubr.bf16.gmra.mrb[0].mxu0 %v1963
        %v2047 = vpop.f32.mrb[0].mxu0
        %v2048 = vadd.f32 %v451, %v2047
        %v2049 = vpop.f32.mrb[0].mxu0
        %v2050 = vadd.f32 %v451, %v2049
        %v2051 = vpop.f32.mrb[0].mxu0
        %v2052 = vadd.f32 %v452, %v2051
        %v2053 = vpop.f32.mrb[0].mxu0
        %v2054 = vadd.f32 %v452, %v2053
        %2055 = vmatprep.mubr.bf16.mxu0 0
        %2056 = vmatmul.mubr.bf16.gmra.mrb[0].mxu0 %v1966
        %v2057 = vpop.f32.mrb[0].mxu0
        %v2058 = vadd.f32 %v453, %v2057
        %v2059 = vpop.f32.mrb[0].mxu0
        %v2060 = vadd.f32 %v453, %v2059
        %v2061 = vpop.f32.mrb[0].mxu0
        %v2062 = vadd.f32 %v454, %v2061
        %v2063 = vpop.f32.mrb[0].mxu0
        %v2064 = vadd.f32 %v454, %v2063
        %2065 = vmatprep.mubr.bf16.mxu0 0
        %2066 = vmatmul.mubr.bf16.gmra.mrb[0].mxu0 %v1969
        %v2067 = vpop.f32.mrb[0].mxu0
        %v2068 = vadd.f32 %v455, %v2067
        %v2069 = vpop.f32.mrb[0].mxu0
        %v2070 = vadd.f32 %v455, %v2069
        %v2071 = vpop.f32.mrb[0].mxu0
        %v2072 = vadd.f32 %v456, %v2071
        %v2073 = vpop.f32.mrb[0].mxu0
        %v2074 = vadd.f32 %v456, %v2073
        %2075 = vmatprep.mubr.bf16.mxu0 0
        %2076 = vmatmul.mubr.bf16.gmra.mrb[0].mxu0 %v1972
        %v2077 = vpop.f32.mrb[0].mxu0
        %v2078 = vadd.f32 %v457, %v2077
        %v2079 = vpop.f32.mrb[0].mxu0
        %v2080 = vadd.f32 %v457, %v2079
        %v2081 = vpop.f32.mrb[0].mxu0
        %v2082 = vadd.f32 %v458, %v2081
        %v2083 = vpop.f32.mrb[0].mxu0
        %v2084 = vadd.f32 %v458, %v2083
        %2085 = vmatprep.mubr.bf16.mxu0 0
        %2086 = vmatmul.mubr.bf16.gmra.mrb[0].mxu0 %v1975
        %v2087 = vpop.f32.mrb[0].mxu0
        %v2088 = vadd.f32 %v459, %v2087
        %v2089 = vpop.f32.mrb[0].mxu0
        %v2090 = vadd.f32 %v459, %v2089
        %v2091 = vpop.f32.mrb[0].mxu0
        %v2092 = vadd.f32 %v460, %v2091
        %v2093 = vpop.f32.mrb[0].mxu0
        %v2094 = vadd.f32 %v460, %v2093
        %2095 = vdwg.mxu0
        %v2096 = vmax.f32 %v2018, %v2028
        %v2097 = vmax.f32 %v2022, %v2032
        %v2098 = vmax.f32 %v2096, %v2038
        %v2099 = vmax.f32 %v2097, %v2042
        %v2100 = vmax.f32 %v2098, %v2048
        %v2101 = vmax.f32 %v2099, %v2052
        %v2102 = vmax.f32 %v2100, %v2058
        %v2103 = vmax.f32 %v2101, %v2062
        %v2104 = vmax.f32 %v2102, %v2068
        %v2105 = vmax.f32 %v2103, %v2072
        %v2106 = vmax.f32 %v2104, %v2078
        %v2107 = vmax.f32 %v2105, %v2082
        %v2108 = vmax.f32 %v2106, %v2088
        %v2109 = vmax.f32 %v2107, %v2092
        %v2110 = vmax.f32 %v2108, %v2109
        %v2111 = vrot.slane %v2110, 4
        %v2112 = vmax.f32 %v2110, %v2111
        %v2113 = vrot.slane %v2112, 2
        %v2114 = vmax.f32 %v2112, %v2113
        %v2115 = vrot.slane %v2114, 1
        %v2116 = vmax.f32 %v2114, %v2115
        %v2117 = vmax.f32 %v2020, %v2030
        %v2118 = vmax.f32 %v2024, %v2034
        %v2119 = vmax.f32 %v2117, %v2040
        %v2120 = vmax.f32 %v2118, %v2044
        %v2121 = vmax.f32 %v2119, %v2050
        %v2122 = vmax.f32 %v2120, %v2054
        %v2123 = vmax.f32 %v2121, %v2060
        %v2124 = vmax.f32 %v2122, %v2064
        %v2125 = vmax.f32 %v2123, %v2070
        %v2126 = vmax.f32 %v2124, %v2074
        %v2127 = vmax.f32 %v2125, %v2080
        %v2128 = vmax.f32 %v2126, %v2084
        %v2129 = vmax.f32 %v2127, %v2090
        %v2130 = vmax.f32 %v2128, %v2094
        %v2131 = vmax.f32 %v2129, %v2130
        %v2132 = vrot.slane %v2131, 4
        %v2133 = vmax.f32 %v2131, %v2132
        %v2134 = vrot.slane %v2133, 2
        %v2135 = vmax.f32 %v2133, %v2134
        %v2136 = vrot.slane %v2135, 1
        %v2137 = vmax.f32 %v2135, %v2136
        %v2138 = vsub.f32 %v2018, %v2116
        %v2139 = vsub.f32 %v2020, %v2137
        %v2140 = vsub.f32 %v2022, %v2116
        %v2141 = vsub.f32 %v2024, %v2137
        %v2142 = vsub.f32 %v2028, %v2116
        %v2143 = vsub.f32 %v2030, %v2137
        %v2144 = vsub.f32 %v2032, %v2116
        %v2145 = vsub.f32 %v2034, %v2137
        %v2146 = vsub.f32 %v2038, %v2116
        %v2147 = vsub.f32 %v2040, %v2137
        %v2148 = vsub.f32 %v2042, %v2116
        %v2149 = vsub.f32 %v2044, %v2137
        %v2150 = vsub.f32 %v2048, %v2116
        %v2151 = vsub.f32 %v2050, %v2137
        %v2152 = vsub.f32 %v2052, %v2116
        %v2153 = vsub.f32 %v2054, %v2137
        %v2154 = vsub.f32 %v2058, %v2116
        %v2155 = vsub.f32 %v2060, %v2137
        %v2156 = vsub.f32 %v2062, %v2116
        %v2157 = vsub.f32 %v2064, %v2137
        %v2158 = vsub.f32 %v2068, %v2116
        %v2159 = vsub.f32 %v2070, %v2137
        %v2160 = vsub.f32 %v2072, %v2116
        %v2161 = vsub.f32 %v2074, %v2137
        %v2162 = vsub.f32 %v2078, %v2116
        %v2163 = vsub.f32 %v2080, %v2137
        %v2164 = vsub.f32 %v2082, %v2116
        %v2165 = vsub.f32 %v2084, %v2137
        %v2166 = vsub.f32 %v2088, %v2116
        %v2167 = vsub.f32 %v2090, %v2137
        %v2168 = vsub.f32 %v2092, %v2116
        %v2169 = vsub.f32 %v2094, %v2137
        %v2170 = vmul.f32 %v2138, 1.442695
        %v2171 = vpow.pop %v2170
        %v2172 = vmul.f32 %v2139, 1.442695
        %v2173 = vpow.pop %v2172
        %v2174 = vmul.f32 %v2140, 1.442695
        %v2175 = vpow.pop %v2174
        %v2176 = vmul.f32 %v2141, 1.442695
        %v2177 = vpow.pop %v2176
        %v2178 = vmul.f32 %v2142, 1.442695
        %v2179 = vpow.pop %v2178
        %v2180 = vmul.f32 %v2143, 1.442695
        %v2181 = vpow.pop %v2180
        %v2182 = vmul.f32 %v2144, 1.442695
        %v2183 = vpow.pop %v2182
        %v2184 = vmul.f32 %v2145, 1.442695
        %v2185 = vpow.pop %v2184
        %v2186 = vmul.f32 %v2146, 1.442695
        %v2187 = vpow.pop %v2186
        %v2188 = vmul.f32 %v2147, 1.442695
        %v2189 = vpow.pop %v2188
        %v2190 = vmul.f32 %v2148, 1.442695
        %v2191 = vpow.pop %v2190
        %v2192 = vmul.f32 %v2149, 1.442695
        %v2193 = vpow.pop %v2192
        %v2194 = vmul.f32 %v2150, 1.442695
        %v2195 = vpow.pop %v2194
        %v2196 = vmul.f32 %v2151, 1.442695
        %v2197 = vpow.pop %v2196
        %v2198 = vmul.f32 %v2152, 1.442695
        %v2199 = vpow.pop %v2198
        %v2200 = vmul.f32 %v2153, 1.442695
        %v2201 = vpow.pop %v2200
        %v2202 = vmul.f32 %v2154, 1.442695
        %v2203 = vpow.pop %v2202
        %v2204 = vmul.f32 %v2155, 1.442695
        %v2205 = vpow.pop %v2204
        %v2206 = vmul.f32 %v2156, 1.442695
        %v2207 = vpow.pop %v2206
        %v2208 = vmul.f32 %v2157, 1.442695
        %v2209 = vpow.pop %v2208
        %v2210 = vmul.f32 %v2158, 1.442695
        %v2211 = vpow.pop %v2210
        %v2212 = vmul.f32 %v2159, 1.442695
        %v2213 = vpow.pop %v2212
        %v2214 = vmul.f32 %v2160, 1.442695
        %v2215 = vpow.pop %v2214
        %v2216 = vmul.f32 %v2161, 1.442695
        %v2217 = vpow.pop %v2216
        %v2218 = vmul.f32 %v2162, 1.442695
        %v2219 = vpow.pop %v2218
        %v2220 = vmul.f32 %v2163, 1.442695
        %v2221 = vpow.pop %v2220
        %v2222 = vmul.f32 %v2164, 1.442695
        %v2223 = vpow.pop %v2222
        %v2224 = vmul.f32 %v2165, 1.442695
        %v2225 = vpow.pop %v2224
        %v2226 = vmul.f32 %v2166, 1.442695
        %v2227 = vpow.pop %v2226
        %v2228 = vmul.f32 %v2167, 1.442695
        %v2229 = vpow.pop %v2228
        %v2230 = vmul.f32 %v2168, 1.442695
        %v2231 = vpow.pop %v2230
        %v2232 = vmul.f32 %v2169, 1.442695
        %v2233 = vpow.pop %v2232
        %v2234 = vadd.f32 %v2171, %v2175
        %v2235 = vadd.f32 %v2234, %v2179
        %v2236 = vadd.f32 %v2235, %v2183
        %v2237 = vadd.f32 %v2236, %v2187
        %v2238 = vadd.f32 %v2237, %v2191
        %v2239 = vadd.f32 %v2238, %v2195
        %v2240 = vadd.f32 %v2239, %v2199
        %v2241 = vadd.f32 %v2240, %v2203
        %v2242 = vadd.f32 %v2241, %v2207
        %v2243 = vadd.f32 %v2242, %v2211
        %v2244 = vadd.f32 %v2243, %v2215
        %v2245 = vadd.f32 %v2244, %v2219
        %v2246 = vadd.f32 %v2245, %v2223
        %v2247 = vadd.f32 %v2246, %v2227
        %v2248 = vadd.f32 %v2247, %v2231
        %v2249 = vrot.slane %v2248, 4
        %v2250 = vadd.f32 %v2248, %v2249
        %v2251 = vrot.slane %v2250, 2
        %v2252 = vadd.f32 %v2250, %v2251
        %v2253 = vrot.slane %v2252, 1
        %v2254 = vadd.f32 %v2252, %v2253
        %v2255 = vadd.f32 %v2173, %v2177
        %v2256 = vadd.f32 %v2255, %v2181
        %v2257 = vadd.f32 %v2256, %v2185
        %v2258 = vadd.f32 %v2257, %v2189
        %v2259 = vadd.f32 %v2258, %v2193
        %v2260 = vadd.f32 %v2259, %v2197
        %v2261 = vadd.f32 %v2260, %v2201
        %v2262 = vadd.f32 %v2261, %v2205
        %v2263 = vadd.f32 %v2262, %v2209
        %v2264 = vadd.f32 %v2263, %v2213
        %v2265 = vadd.f32 %v2264, %v2217
        %v2266 = vadd.f32 %v2265, %v2221
        %v2267 = vadd.f32 %v2266, %v2225
        %v2268 = vadd.f32 %v2267, %v2229
        %v2269 = vadd.f32 %v2268, %v2233
        %v2270 = vrot.slane %v2269, 4
        %v2271 = vadd.f32 %v2269, %v2270
        %v2272 = vrot.slane %v2271, 2
        %v2273 = vadd.f32 %v2271, %v2272
        %v2274 = vrot.slane %v2273, 1
        %v2275 = vadd.f32 %v2273, %v2274
        %v2276 = vrcp.pop %v2254
        %v2277 = vrcp.pop %v2275
        %v2278 = vmul.f32 %v2171, %v2276
        %v2279 = vmul.f32 %v2173, %v2277
        %v2280 = vmul.f32 %v2175, %v2276
        %v2281 = vmul.f32 %v2177, %v2277
        %v2282 = vmul.f32 %v2179, %v2276
        %v2283 = vmul.f32 %v2181, %v2277
        %v2284 = vmul.f32 %v2183, %v2276
        %v2285 = vmul.f32 %v2185, %v2277
        %v2286 = vmul.f32 %v2187, %v2276
        %v2287 = vmul.f32 %v2189, %v2277
        %v2288 = vmul.f32 %v2191, %v2276
        %v2289 = vmul.f32 %v2193, %v2277
        %v2290 = vmul.f32 %v2195, %v2276
        %v2291 = vmul.f32 %v2197, %v2277
        %v2292 = vmul.f32 %v2199, %v2276
        %v2293 = vmul.f32 %v2201, %v2277
        %v2294 = vmul.f32 %v2203, %v2276
        %v2295 = vmul.f32 %v2205, %v2277
        %v2296 = vmul.f32 %v2207, %v2276
        %v2297 = vmul.f32 %v2209, %v2277
        %v2298 = vmul.f32 %v2211, %v2276
        %v2299 = vmul.f32 %v2213, %v2277
        %v2300 = vmul.f32 %v2215, %v2276
        %v2301 = vmul.f32 %v2217, %v2277
        %v2302 = vmul.f32 %v2219, %v2276
        %v2303 = vmul.f32 %v2221, %v2277
        %v2304 = vmul.f32 %v2223, %v2276
        %v2305 = vmul.f32 %v2225, %v2277
        %v2306 = vmul.f32 %v2227, %v2276
        %v2307 = vmul.f32 %v2229, %v2277
        %v2308 = vmul.f32 %v2231, %v2276
        %v2309 = vmul.f32 %v2233, %v2277
        %v2310 = vpack.c.bf16 %v2280, %v2278
        %v2311 = vpack.c.bf16 %v2281, %v2279
        %v2312 = vpack.c.bf16 %v2284, %v2282
        %v2313 = vpack.c.bf16 %v2285, %v2283
        %v2314 = vpack.c.bf16 %v2288, %v2286
        %v2315 = vpack.c.bf16 %v2289, %v2287
        %v2316 = vpack.c.bf16 %v2292, %v2290
        %v2317 = vpack.c.bf16 %v2293, %v2291
        %v2318 = vpack.c.bf16 %v2296, %v2294
        %v2319 = vpack.c.bf16 %v2297, %v2295
        %v2320 = vpack.c.bf16 %v2300, %v2298
        %v2321 = vpack.c.bf16 %v2301, %v2299
        %v2322 = vpack.c.bf16 %v2304, %v2302
        %v2323 = vpack.c.bf16 %v2305, %v2303
        %v2324 = vpack.c.bf16 %v2308, %v2306
        %v2325 = vpack.c.bf16 %v2309, %v2307
        %2326 = vmatprep.subr.bf16.mxu0 %v2311
        %2327 = vmatpush1.bf16.msra.mxu0 %v2310
        %2328 = vmatprep.subr.bf16.mxu0 %v2313
        %2329 = vmatpush1.bf16.msra.mxu0 %v2312
        %2330 = vmatprep.subr.bf16.mxu0 %v2315
        %2331 = vmatpush1.bf16.msra.mxu0 %v2314
        %2332 = vmatprep.subr.bf16.mxu0 %v2317
        %2333 = vmatpush1.bf16.msra.mxu0 %v2316
        %2334 = vmatprep.subr.bf16.mxu0 %v2319
        %2335 = vmatpush1.bf16.msra.mxu0 %v2318
        %2336 = vmatprep.subr.bf16.mxu0 %v2321
        %2337 = vmatpush1.bf16.msra.mxu0 %v2320
        %2338 = vmatprep.subr.bf16.mxu0 %v2323
        %2339 = vmatpush1.bf16.msra.mxu0 %v2322
        %2340 = vmatprep.subr.bf16.mxu0 %v2325
        %2341 = vmatpush1.bf16.msra.mxu0 %v2324
        %2342 = vmatprep.subr.bf16.mxu0 0
        %2343 = vmatpush1.bf16.msra.mxu0 0
        %2344 = vmatprep.subr.bf16.mxu0 0
        %2345 = vmatpush1.bf16.msra.mxu0 0
        %2346 = vmatprep.subr.bf16.mxu0 0
        %2347 = vmatpush1.bf16.msra.mxu0 0
        %2348 = vmatprep.subr.bf16.mxu0 0
        %2349 = vmatpush1.bf16.msra.mxu0 0
        %2350 = vmatprep.subr.bf16.mxu0 0
        %2351 = vmatpush1.bf16.msra.mxu0 0
        %2352 = vmatprep.subr.bf16.mxu0 0
        %2353 = vmatpush1.bf16.msra.mxu0 0
        %2354 = vmatprep.subr.bf16.mxu0 0
        %2355 = vmatpush1.bf16.msra.mxu0 0
        %2356 = vmatprep.subr.bf16.mxu0 0
        %2357 = vmatpush1.bf16.msra.mxu0 0
        %2358 = vmatprep.mubr.bf16.mxu0 0
        %2359 = vmatmul.mubr.bf16.gmra.mrb[0].mxu0 %v1910
        %v2360 = vpop.f32.mrb[0].mxu0
        %v2361 = vadd.f32 0.0, %v2360
        %v2362 = vpop.f32.mrb[0].mxu0
        %v2363 = vadd.f32 0.0, %v2362
        %v2364 = vpop.f32.mrb[0].mxu0
        %v2365 = vpop.f32.mrb[0].mxu0
        %2366 = vdwg.mxu0
        %v2367 = vpack.c.bf16 %v2361, %v2361
        %v2368 = vpack.c.bf16 %v2363, %v2363
        %s2369 = scalar_lea.vmem %s314, 256
        %v2370 = vld [vmem:[%s2369] sm:$0xf]
        %v2371 = vld [vmem:[%s2369 + $0x4] sm:$0xf]
        %v2372 = vld [vmem:[%s2369 + $0x8] sm:$0xf]
        %v2373 = vld [vmem:[%s2369 + $0xc] sm:$0xf]
        %v2374 = vld [vmem:[%s2369 + $0x10] sm:$0xf]
        %v2375 = vld [vmem:[%s2369 + $0x14] sm:$0xf]
        %v2376 = vld [vmem:[%s2369 + $0x18] sm:$0xf]
        %v2377 = vld [vmem:[%s2369 + $0x1c] sm:$0xf]
        %v2378 = vld [vmem:[%s2369 + $0x20] sm:$0xf]
        %v2379 = vld [vmem:[%s2369 + $0x24] sm:$0xf]
        %v2380 = vld [vmem:[%s2369 + $0x28] sm:$0xf]
        %v2381 = vld [vmem:[%s2369 + $0x2c] sm:$0xf]
        %v2382 = vld [vmem:[%s2369 + $0x30] sm:$0xf]
        %v2383 = vld [vmem:[%s2369 + $0x34] sm:$0xf]
        %v2384 = vld [vmem:[%s2369 + $0x38] sm:$0xf]
        %v2385 = vld [vmem:[%s2369 + $0x3c] sm:$0xf]
        %s2386 = scalar_lea.vmem %s319, 8
        %v2387 = vld [vmem:[%s2386] sm:$0x3]
        %v2404 = vunpack.c.l.b16 %v2370
        %v2405 = vunpack.c.l.b16 %v2371
        %v2406 = vunpack.c.l.b16 %v2372
        %v2407 = vunpack.c.l.b16 %v2373
        %v2408 = vunpack.c.l.b16 %v2374
        %v2409 = vunpack.c.l.b16 %v2375
        %v2410 = vunpack.c.l.b16 %v2376
        %v2411 = vunpack.c.l.b16 %v2377
        %v2412 = vunpack.c.l.b16 %v2378
        %v2413 = vunpack.c.l.b16 %v2379
        %v2414 = vunpack.c.l.b16 %v2380
        %v2415 = vunpack.c.l.b16 %v2381
        %v2416 = vunpack.c.l.b16 %v2382
        %v2417 = vunpack.c.l.b16 %v2383
        %v2418 = vunpack.c.l.b16 %v2384
        %v2419 = vunpack.c.l.b16 %v2385
        %v2420 = vpack.c.b16 %v2405, %v2404
        %v2421 = vpack.c.b16 %v2407, %v2406
        %v2422 = vpack.c.b16 %v2409, %v2408
        %v2423 = vpack.c.b16 %v2411, %v2410
        %v2424 = vpack.c.b16 %v2413, %v2412
        %v2425 = vpack.c.b16 %v2415, %v2414
        %v2426 = vpack.c.b16 %v2417, %v2416
        %v2427 = vpack.c.b16 %v2419, %v2418
        %v2429 = vsel %vm518, %v2420, 0
        %v2432 = vsel %vm518, %v2421, 0
        %v2435 = vsel %vm518, %v2422, 0
        %v2438 = vsel %vm518, %v2423, 0
        %v2441 = vsel %vm518, %v2424, 0
        %v2444 = vsel %vm518, %v2425, 0
        %v2447 = vsel %vm518, %v2426, 0
        %v2450 = vsel %vm518, %v2427, 0
        %v2453 = vsel %vm543, %v410, 0
        %v2456 = vsel %vm543, %v411, 0
        %2458 = vmatprep.subr.bf16.mxu0 %v2456
        %2459 = vmatpush1.bf16.msra.mxu0 %v2453
        %2460 = vmatprep.subr.bf16.mxu0 0
        %2461 = vmatpush1.bf16.msra.mxu0 0
        %2462 = vmatprep.subr.bf16.mxu0 0
        %2463 = vmatpush1.bf16.msra.mxu0 0
        %2464 = vmatprep.subr.bf16.mxu0 0
        %2465 = vmatpush1.bf16.msra.mxu0 0
        %2466 = vmatprep.subr.bf16.mxu0 0
        %2467 = vmatpush1.bf16.msra.mxu0 0
        %2468 = vmatprep.subr.bf16.mxu0 0
        %2469 = vmatpush1.bf16.msra.mxu0 0
        %2470 = vmatprep.subr.bf16.mxu0 0
        %2471 = vmatpush1.bf16.msra.mxu0 0
        %2472 = vmatprep.subr.bf16.mxu0 0
        %2473 = vmatpush1.bf16.msra.mxu0 0
        %2474 = vmatprep.subr.bf16.mxu0 0
        %2475 = vmatpush1.bf16.msra.mxu0 0
        %2476 = vmatprep.subr.bf16.mxu0 0
        %2477 = vmatpush1.bf16.msra.mxu0 0
        %2478 = vmatprep.subr.bf16.mxu0 0
        %2479 = vmatpush1.bf16.msra.mxu0 0
        %2480 = vmatprep.subr.bf16.mxu0 0
        %2481 = vmatpush1.bf16.msra.mxu0 0
        %2482 = vmatprep.subr.bf16.mxu0 0
        %2483 = vmatpush1.bf16.msra.mxu0 0
        %2484 = vmatprep.subr.bf16.mxu0 0
        %2485 = vmatpush1.bf16.msra.mxu0 0
        %2486 = vmatprep.subr.bf16.mxu0 0
        %2487 = vmatpush1.bf16.msra.mxu0 0
        %2488 = vmatprep.subr.bf16.mxu0 0
        %2489 = vmatpush1.bf16.msra.mxu0 0
        %2490 = vmatprep.mubr.bf16.mxu0 0
        %2491 = vmatmul.mubr.bf16.gmra.mrb[0].mxu0 %v2429
        %v2492 = vpop.f32.mrb[0].mxu0
        %v2493 = vadd.f32 %v445, %v2492
        %v2494 = vpop.f32.mrb[0].mxu0
        %v2495 = vadd.f32 %v445, %v2494
        %v2496 = vpop.f32.mrb[0].mxu0
        %v2497 = vadd.f32 %v446, %v2496
        %v2498 = vpop.f32.mrb[0].mxu0
        %v2499 = vadd.f32 %v446, %v2498
        %2500 = vmatprep.mubr.bf16.mxu0 0
        %2501 = vmatmul.mubr.bf16.gmra.mrb[0].mxu0 %v2432
        %v2502 = vpop.f32.mrb[0].mxu0
        %v2503 = vadd.f32 %v447, %v2502
        %v2504 = vpop.f32.mrb[0].mxu0
        %v2505 = vadd.f32 %v447, %v2504
        %v2506 = vpop.f32.mrb[0].mxu0
        %v2507 = vadd.f32 %v448, %v2506
        %v2508 = vpop.f32.mrb[0].mxu0
        %v2509 = vadd.f32 %v448, %v2508
        %2510 = vmatprep.mubr.bf16.mxu0 0
        %2511 = vmatmul.mubr.bf16.gmra.mrb[0].mxu0 %v2435
        %v2512 = vpop.f32.mrb[0].mxu0
        %v2513 = vadd.f32 %v449, %v2512
        %v2514 = vpop.f32.mrb[0].mxu0
        %v2515 = vadd.f32 %v449, %v2514
        %v2516 = vpop.f32.mrb[0].mxu0
        %v2517 = vadd.f32 %v450, %v2516
        %v2518 = vpop.f32.mrb[0].mxu0
        %v2519 = vadd.f32 %v450, %v2518
        %2520 = vmatprep.mubr.bf16.mxu0 0
        %2521 = vmatmul.mubr.bf16.gmra.mrb[0].mxu0 %v2438
        %v2522 = vpop.f32.mrb[0].mxu0
        %v2523 = vadd.f32 %v451, %v2522
        %v2524 = vpop.f32.mrb[0].mxu0
        %v2525 = vadd.f32 %v451, %v2524
        %v2526 = vpop.f32.mrb[0].mxu0
        %v2527 = vadd.f32 %v452, %v2526
        %v2528 = vpop.f32.mrb[0].mxu0
        %v2529 = vadd.f32 %v452, %v2528
        %2530 = vmatprep.mubr.bf16.mxu0 0
        %2531 = vmatmul.mubr.bf16.gmra.mrb[0].mxu0 %v2441
        %v2532 = vpop.f32.mrb[0].mxu0
        %v2533 = vadd.f32 %v453, %v2532
        %v2534 = vpop.f32.mrb[0].mxu0
        %v2535 = vadd.f32 %v453, %v2534
        %v2536 = vpop.f32.mrb[0].mxu0
        %v2537 = vadd.f32 %v454, %v2536
        %v2538 = vpop.f32.mrb[0].mxu0
        %v2539 = vadd.f32 %v454, %v2538
        %2540 = vmatprep.mubr.bf16.mxu0 0
        %2541 = vmatmul.mubr.bf16.gmra.mrb[0].mxu0 %v2444
        %v2542 = vpop.f32.mrb[0].mxu0
        %v2543 = vadd.f32 %v455, %v2542
        %v2544 = vpop.f32.mrb[0].mxu0
        %v2545 = vadd.f32 %v455, %v2544
        %v2546 = vpop.f32.mrb[0].mxu0
        %v2547 = vadd.f32 %v456, %v2546
        %v2548 = vpop.f32.mrb[0].mxu0
        %v2549 = vadd.f32 %v456, %v2548
        %2550 = vmatprep.mubr.bf16.mxu0 0
        %2551 = vmatmul.mubr.bf16.gmra.mrb[0].mxu0 %v2447
        %v2552 = vpop.f32.mrb[0].mxu0
        %v2553 = vadd.f32 %v457, %v2552
        %v2554 = vpop.f32.mrb[0].mxu0
        %v2555 = vadd.f32 %v457, %v2554
        %v2556 = vpop.f32.mrb[0].mxu0
        %v2557 = vadd.f32 %v458, %v2556
        %v2558 = vpop.f32.mrb[0].mxu0
        %v2559 = vadd.f32 %v458, %v2558
        %2560 = vmatprep.mubr.bf16.mxu0 0
        %2561 = vmatmul.mubr.bf16.gmra.mrb[0].mxu0 %v2450
        %v2562 = vpop.f32.mrb[0].mxu0
        %v2563 = vadd.f32 %v459, %v2562
        %v2564 = vpop.f32.mrb[0].mxu0
        %v2565 = vadd.f32 %v459, %v2564
        %v2566 = vpop.f32.mrb[0].mxu0
        %v2567 = vadd.f32 %v460, %v2566
        %v2568 = vpop.f32.mrb[0].mxu0
        %v2569 = vadd.f32 %v460, %v2568
        %2570 = vdwg.mxu0
        %v2571 = vmax.f32 %v2493, %v2503
        %v2572 = vmax.f32 %v2497, %v2507
        %v2573 = vmax.f32 %v2571, %v2513
        %v2574 = vmax.f32 %v2572, %v2517
        %v2575 = vmax.f32 %v2573, %v2523
        %v2576 = vmax.f32 %v2574, %v2527
        %v2577 = vmax.f32 %v2575, %v2533
        %v2578 = vmax.f32 %v2576, %v2537
        %v2579 = vmax.f32 %v2577, %v2543
        %v2580 = vmax.f32 %v2578, %v2547
        %v2581 = vmax.f32 %v2579, %v2553
        %v2582 = vmax.f32 %v2580, %v2557
        %v2583 = vmax.f32 %v2581, %v2563
        %v2584 = vmax.f32 %v2582, %v2567
        %v2585 = vmax.f32 %v2583, %v2584
        %v2586 = vrot.slane %v2585, 4
        %v2587 = vmax.f32 %v2585, %v2586
        %v2588 = vrot.slane %v2587, 2
        %v2589 = vmax.f32 %v2587, %v2588
        %v2590 = vrot.slane %v2589, 1
        %v2591 = vmax.f32 %v2589, %v2590
        %v2592 = vmax.f32 %v2495, %v2505
        %v2593 = vmax.f32 %v2499, %v2509
        %v2594 = vmax.f32 %v2592, %v2515
        %v2595 = vmax.f32 %v2593, %v2519
        %v2596 = vmax.f32 %v2594, %v2525
        %v2597 = vmax.f32 %v2595, %v2529
        %v2598 = vmax.f32 %v2596, %v2535
        %v2599 = vmax.f32 %v2597, %v2539
        %v2600 = vmax.f32 %v2598, %v2545
        %v2601 = vmax.f32 %v2599, %v2549
        %v2602 = vmax.f32 %v2600, %v2555
        %v2603 = vmax.f32 %v2601, %v2559
        %v2604 = vmax.f32 %v2602, %v2565
        %v2605 = vmax.f32 %v2603, %v2569
        %v2606 = vmax.f32 %v2604, %v2605
        %v2607 = vrot.slane %v2606, 4
        %v2608 = vmax.f32 %v2606, %v2607
        %v2609 = vrot.slane %v2608, 2
        %v2610 = vmax.f32 %v2608, %v2609
        %v2611 = vrot.slane %v2610, 1
        %v2612 = vmax.f32 %v2610, %v2611
        %v2613 = vsub.f32 %v2493, %v2591
        %v2614 = vsub.f32 %v2495, %v2612
        %v2615 = vsub.f32 %v2497, %v2591
        %v2616 = vsub.f32 %v2499, %v2612
        %v2617 = vsub.f32 %v2503, %v2591
        %v2618 = vsub.f32 %v2505, %v2612
        %v2619 = vsub.f32 %v2507, %v2591
        %v2620 = vsub.f32 %v2509, %v2612
        %v2621 = vsub.f32 %v2513, %v2591
        %v2622 = vsub.f32 %v2515, %v2612
        %v2623 = vsub.f32 %v2517, %v2591
        %v2624 = vsub.f32 %v2519, %v2612
        %v2625 = vsub.f32 %v2523, %v2591
        %v2626 = vsub.f32 %v2525, %v2612
        %v2627 = vsub.f32 %v2527, %v2591
        %v2628 = vsub.f32 %v2529, %v2612
        %v2629 = vsub.f32 %v2533, %v2591
        %v2630 = vsub.f32 %v2535, %v2612
        %v2631 = vsub.f32 %v2537, %v2591
        %v2632 = vsub.f32 %v2539, %v2612
        %v2633 = vsub.f32 %v2543, %v2591
        %v2634 = vsub.f32 %v2545, %v2612
        %v2635 = vsub.f32 %v2547, %v2591
        %v2636 = vsub.f32 %v2549, %v2612
        %v2637 = vsub.f32 %v2553, %v2591
        %v2638 = vsub.f32 %v2555, %v2612
        %v2639 = vsub.f32 %v2557, %v2591
        %v2640 = vsub.f32 %v2559, %v2612
        %v2641 = vsub.f32 %v2563, %v2591
        %v2642 = vsub.f32 %v2565, %v2612
        %v2643 = vsub.f32 %v2567, %v2591
        %v2644 = vsub.f32 %v2569, %v2612
        %v2645 = vmul.f32 %v2613, 1.442695
        %v2646 = vpow.pop %v2645
        %v2647 = vmul.f32 %v2614, 1.442695
        %v2648 = vpow.pop %v2647
        %v2649 = vmul.f32 %v2615, 1.442695
        %v2650 = vpow.pop %v2649
        %v2651 = vmul.f32 %v2616, 1.442695
        %v2652 = vpow.pop %v2651
        %v2653 = vmul.f32 %v2617, 1.442695
        %v2654 = vpow.pop %v2653
        %v2655 = vmul.f32 %v2618, 1.442695
        %v2656 = vpow.pop %v2655
        %v2657 = vmul.f32 %v2619, 1.442695
        %v2658 = vpow.pop %v2657
        %v2659 = vmul.f32 %v2620, 1.442695
        %v2660 = vpow.pop %v2659
        %v2661 = vmul.f32 %v2621, 1.442695
        %v2662 = vpow.pop %v2661
        %v2663 = vmul.f32 %v2622, 1.442695
        %v2664 = vpow.pop %v2663
        %v2665 = vmul.f32 %v2623, 1.442695
        %v2666 = vpow.pop %v2665
        %v2667 = vmul.f32 %v2624, 1.442695
        %v2668 = vpow.pop %v2667
        %v2669 = vmul.f32 %v2625, 1.442695
        %v2670 = vpow.pop %v2669
        %v2671 = vmul.f32 %v2626, 1.442695
        %v2672 = vpow.pop %v2671
        %v2673 = vmul.f32 %v2627, 1.442695
        %v2674 = vpow.pop %v2673
        %v2675 = vmul.f32 %v2628, 1.442695
        %v2676 = vpow.pop %v2675
        %v2677 = vmul.f32 %v2629, 1.442695
        %v2678 = vpow.pop %v2677
        %v2679 = vmul.f32 %v2630, 1.442695
        %v2680 = vpow.pop %v2679
        %v2681 = vmul.f32 %v2631, 1.442695
        %v2682 = vpow.pop %v2681
        %v2683 = vmul.f32 %v2632, 1.442695
        %v2684 = vpow.pop %v2683
        %v2685 = vmul.f32 %v2633, 1.442695
        %v2686 = vpow.pop %v2685
        %v2687 = vmul.f32 %v2634, 1.442695
        %v2688 = vpow.pop %v2687
        %v2689 = vmul.f32 %v2635, 1.442695
        %v2690 = vpow.pop %v2689
        %v2691 = vmul.f32 %v2636, 1.442695
        %v2692 = vpow.pop %v2691
        %v2693 = vmul.f32 %v2637, 1.442695
        %v2694 = vpow.pop %v2693
        %v2695 = vmul.f32 %v2638, 1.442695
        %v2696 = vpow.pop %v2695
        %v2697 = vmul.f32 %v2639, 1.442695
        %v2698 = vpow.pop %v2697
        %v2699 = vmul.f32 %v2640, 1.442695
        %v2700 = vpow.pop %v2699
        %v2701 = vmul.f32 %v2641, 1.442695
        %v2702 = vpow.pop %v2701
        %v2703 = vmul.f32 %v2642, 1.442695
        %v2704 = vpow.pop %v2703
        %v2705 = vmul.f32 %v2643, 1.442695
        %v2706 = vpow.pop %v2705
        %v2707 = vmul.f32 %v2644, 1.442695
        %v2708 = vpow.pop %v2707
        %v2709 = vadd.f32 %v2646, %v2650
        %v2710 = vadd.f32 %v2709, %v2654
        %v2711 = vadd.f32 %v2710, %v2658
        %v2712 = vadd.f32 %v2711, %v2662
        %v2713 = vadd.f32 %v2712, %v2666
        %v2714 = vadd.f32 %v2713, %v2670
        %v2715 = vadd.f32 %v2714, %v2674
        %v2716 = vadd.f32 %v2715, %v2678
        %v2717 = vadd.f32 %v2716, %v2682
        %v2718 = vadd.f32 %v2717, %v2686
        %v2719 = vadd.f32 %v2718, %v2690
        %v2720 = vadd.f32 %v2719, %v2694
        %v2721 = vadd.f32 %v2720, %v2698
        %v2722 = vadd.f32 %v2721, %v2702
        %v2723 = vadd.f32 %v2722, %v2706
        %v2724 = vrot.slane %v2723, 4
        %v2725 = vadd.f32 %v2723, %v2724
        %v2726 = vrot.slane %v2725, 2
        %v2727 = vadd.f32 %v2725, %v2726
        %v2728 = vrot.slane %v2727, 1
        %v2729 = vadd.f32 %v2727, %v2728
        %v2730 = vadd.f32 %v2648, %v2652
        %v2731 = vadd.f32 %v2730, %v2656
        %v2732 = vadd.f32 %v2731, %v2660
        %v2733 = vadd.f32 %v2732, %v2664
        %v2734 = vadd.f32 %v2733, %v2668
        %v2735 = vadd.f32 %v2734, %v2672
        %v2736 = vadd.f32 %v2735, %v2676
        %v2737 = vadd.f32 %v2736, %v2680
        %v2738 = vadd.f32 %v2737, %v2684
        %v2739 = vadd.f32 %v2738, %v2688
        %v2740 = vadd.f32 %v2739, %v2692
        %v2741 = vadd.f32 %v2740, %v2696
        %v2742 = vadd.f32 %v2741, %v2700
        %v2743 = vadd.f32 %v2742, %v2704
        %v2744 = vadd.f32 %v2743, %v2708
        %v2745 = vrot.slane %v2744, 4
        %v2746 = vadd.f32 %v2744, %v2745
        %v2747 = vrot.slane %v2746, 2
        %v2748 = vadd.f32 %v2746, %v2747
        %v2749 = vrot.slane %v2748, 1
        %v2750 = vadd.f32 %v2748, %v2749
        %v2751 = vrcp.pop %v2729
        %v2752 = vrcp.pop %v2750
        %v2753 = vmul.f32 %v2646, %v2751
        %v2754 = vmul.f32 %v2648, %v2752
        %v2755 = vmul.f32 %v2650, %v2751
        %v2756 = vmul.f32 %v2652, %v2752
        %v2757 = vmul.f32 %v2654, %v2751
        %v2758 = vmul.f32 %v2656, %v2752
        %v2759 = vmul.f32 %v2658, %v2751
        %v2760 = vmul.f32 %v2660, %v2752
        %v2761 = vmul.f32 %v2662, %v2751
        %v2762 = vmul.f32 %v2664, %v2752
        %v2763 = vmul.f32 %v2666, %v2751
        %v2764 = vmul.f32 %v2668, %v2752
        %v2765 = vmul.f32 %v2670, %v2751
        %v2766 = vmul.f32 %v2672, %v2752
        %v2767 = vmul.f32 %v2674, %v2751
        %v2768 = vmul.f32 %v2676, %v2752
        %v2769 = vmul.f32 %v2678, %v2751
        %v2770 = vmul.f32 %v2680, %v2752
        %v2771 = vmul.f32 %v2682, %v2751
        %v2772 = vmul.f32 %v2684, %v2752
        %v2773 = vmul.f32 %v2686, %v2751
        %v2774 = vmul.f32 %v2688, %v2752
        %v2775 = vmul.f32 %v2690, %v2751
        %v2776 = vmul.f32 %v2692, %v2752
        %v2777 = vmul.f32 %v2694, %v2751
        %v2778 = vmul.f32 %v2696, %v2752
        %v2779 = vmul.f32 %v2698, %v2751
        %v2780 = vmul.f32 %v2700, %v2752
        %v2781 = vmul.f32 %v2702, %v2751
        %v2782 = vmul.f32 %v2704, %v2752
        %v2783 = vmul.f32 %v2706, %v2751
        %v2784 = vmul.f32 %v2708, %v2752
        %v2785 = vpack.c.bf16 %v2755, %v2753
        %v2786 = vpack.c.bf16 %v2756, %v2754
        %v2787 = vpack.c.bf16 %v2759, %v2757
        %v2788 = vpack.c.bf16 %v2760, %v2758
        %v2789 = vpack.c.bf16 %v2763, %v2761
        %v2790 = vpack.c.bf16 %v2764, %v2762
        %v2791 = vpack.c.bf16 %v2767, %v2765
        %v2792 = vpack.c.bf16 %v2768, %v2766
        %v2793 = vpack.c.bf16 %v2771, %v2769
        %v2794 = vpack.c.bf16 %v2772, %v2770
        %v2795 = vpack.c.bf16 %v2775, %v2773
        %v2796 = vpack.c.bf16 %v2776, %v2774
        %v2797 = vpack.c.bf16 %v2779, %v2777
        %v2798 = vpack.c.bf16 %v2780, %v2778
        %v2799 = vpack.c.bf16 %v2783, %v2781
        %v2800 = vpack.c.bf16 %v2784, %v2782
        %2801 = vmatprep.subr.bf16.mxu0 %v2786
        %2802 = vmatpush1.bf16.msra.mxu0 %v2785
        %2803 = vmatprep.subr.bf16.mxu0 %v2788
        %2804 = vmatpush1.bf16.msra.mxu0 %v2787
        %2805 = vmatprep.subr.bf16.mxu0 %v2790
        %2806 = vmatpush1.bf16.msra.mxu0 %v2789
        %2807 = vmatprep.subr.bf16.mxu0 %v2792
        %2808 = vmatpush1.bf16.msra.mxu0 %v2791
        %2809 = vmatprep.subr.bf16.mxu0 %v2794
        %2810 = vmatpush1.bf16.msra.mxu0 %v2793
        %2811 = vmatprep.subr.bf16.mxu0 %v2796
        %2812 = vmatpush1.bf16.msra.mxu0 %v2795
        %2813 = vmatprep.subr.bf16.mxu0 %v2798
        %2814 = vmatpush1.bf16.msra.mxu0 %v2797
        %2815 = vmatprep.subr.bf16.mxu0 %v2800
        %2816 = vmatpush1.bf16.msra.mxu0 %v2799
        %2817 = vmatprep.subr.bf16.mxu0 0
        %2818 = vmatpush1.bf16.msra.mxu0 0
        %2819 = vmatprep.subr.bf16.mxu0 0
        %2820 = vmatpush1.bf16.msra.mxu0 0
        %2821 = vmatprep.subr.bf16.mxu0 0
        %2822 = vmatpush1.bf16.msra.mxu0 0
        %2823 = vmatprep.subr.bf16.mxu0 0
        %2824 = vmatpush1.bf16.msra.mxu0 0
        %2825 = vmatprep.subr.bf16.mxu0 0
        %2826 = vmatpush1.bf16.msra.mxu0 0
        %2827 = vmatprep.subr.bf16.mxu0 0
        %2828 = vmatpush1.bf16.msra.mxu0 0
        %2829 = vmatprep.subr.bf16.mxu0 0
        %2830 = vmatpush1.bf16.msra.mxu0 0
        %2831 = vmatprep.subr.bf16.mxu0 0
        %2832 = vmatpush1.bf16.msra.mxu0 0
        %2833 = vmatprep.mubr.bf16.mxu0 0
        %2834 = vmatmul.mubr.bf16.gmra.mrb[0].mxu0 %v2387
        %v2835 = vpop.f32.mrb[0].mxu0
        %v2836 = vadd.f32 0.0, %v2835
        %v2837 = vpop.f32.mrb[0].mxu0
        %v2838 = vadd.f32 0.0, %v2837
        %v2839 = vpop.f32.mrb[0].mxu0
        %v2840 = vpop.f32.mrb[0].mxu0
        %2841 = vdwg.mxu0
        %v2842 = vpack.c.bf16 %v2836, %v2836
        %v2843 = vpack.c.bf16 %v2838, %v2838
        %s2844 = scalar_lea.vmem %s314, 320
        %v2845 = vld [vmem:[%s2844] sm:$0xf]
        %v2846 = vld [vmem:[%s2844 + $0x4] sm:$0xf]
        %v2847 = vld [vmem:[%s2844 + $0x8] sm:$0xf]
        %v2848 = vld [vmem:[%s2844 + $0xc] sm:$0xf]
        %v2849 = vld [vmem:[%s2844 + $0x10] sm:$0xf]
        %v2850 = vld [vmem:[%s2844 + $0x14] sm:$0xf]
        %v2851 = vld [vmem:[%s2844 + $0x18] sm:$0xf]
        %v2852 = vld [vmem:[%s2844 + $0x1c] sm:$0xf]
        %v2853 = vld [vmem:[%s2844 + $0x20] sm:$0xf]
        %v2854 = vld [vmem:[%s2844 + $0x24] sm:$0xf]
        %v2855 = vld [vmem:[%s2844 + $0x28] sm:$0xf]
        %v2856 = vld [vmem:[%s2844 + $0x2c] sm:$0xf]
        %v2857 = vld [vmem:[%s2844 + $0x30] sm:$0xf]
        %v2858 = vld [vmem:[%s2844 + $0x34] sm:$0xf]
        %v2859 = vld [vmem:[%s2844 + $0x38] sm:$0xf]
        %v2860 = vld [vmem:[%s2844 + $0x3c] sm:$0xf]
        %s2861 = scalar_lea.vmem %s319, 10
        %v2862 = vld [vmem:[%s2861] sm:$0x3]
        %v2879 = vunpack.c.l.b16 %v2845
        %v2880 = vunpack.c.l.b16 %v2846
        %v2881 = vunpack.c.l.b16 %v2847
        %v2882 = vunpack.c.l.b16 %v2848
        %v2883 = vunpack.c.l.b16 %v2849
        %v2884 = vunpack.c.l.b16 %v2850
        %v2885 = vunpack.c.l.b16 %v2851
        %v2886 = vunpack.c.l.b16 %v2852
        %v2887 = vunpack.c.l.b16 %v2853
        %v2888 = vunpack.c.l.b16 %v2854
        %v2889 = vunpack.c.l.b16 %v2855
        %v2890 = vunpack.c.l.b16 %v2856
        %v2891 = vunpack.c.l.b16 %v2857
        %v2892 = vunpack.c.l.b16 %v2858
        %v2893 = vunpack.c.l.b16 %v2859
        %v2894 = vunpack.c.l.b16 %v2860
        %v2895 = vpack.c.b16 %v2880, %v2879
        %v2896 = vpack.c.b16 %v2882, %v2881
        %v2897 = vpack.c.b16 %v2884, %v2883
        %v2898 = vpack.c.b16 %v2886, %v2885
        %v2899 = vpack.c.b16 %v2888, %v2887
        %v2900 = vpack.c.b16 %v2890, %v2889
        %v2901 = vpack.c.b16 %v2892, %v2891
        %v2902 = vpack.c.b16 %v2894, %v2893
        %v2905 = vrot.slane %v410, 2
        %v2906 = vrot.slane %v411, 2
        %v2908 = vsel %vm518, %v2895, 0
        %v2911 = vsel %vm518, %v2896, 0
        %v2914 = vsel %vm518, %v2897, 0
        %v2917 = vsel %vm518, %v2898, 0
        %v2920 = vsel %vm518, %v2899, 0
        %v2923 = vsel %vm518, %v2900, 0
        %v2926 = vsel %vm518, %v2901, 0
        %v2929 = vsel %vm518, %v2902, 0
        %v2932 = vsel %vm543, %v2905, 0
        %v2935 = vsel %vm543, %v2906, 0
        %2937 = vmatprep.subr.bf16.mxu0 %v2935
        %2938 = vmatpush1.bf16.msra.mxu0 %v2932
        %2939 = vmatprep.subr.bf16.mxu0 0
        %2940 = vmatpush1.bf16.msra.mxu0 0
        %2941 = vmatprep.subr.bf16.mxu0 0
        %2942 = vmatpush1.bf16.msra.mxu0 0
        %2943 = vmatprep.subr.bf16.mxu0 0
        %2944 = vmatpush1.bf16.msra.mxu0 0
        %2945 = vmatprep.subr.bf16.mxu0 0
        %2946 = vmatpush1.bf16.msra.mxu0 0
        %2947 = vmatprep.subr.bf16.mxu0 0
        %2948 = vmatpush1.bf16.msra.mxu0 0
        %2949 = vmatprep.subr.bf16.mxu0 0
        %2950 = vmatpush1.bf16.msra.mxu0 0
        %2951 = vmatprep.subr.bf16.mxu0 0
        %2952 = vmatpush1.bf16.msra.mxu0 0
        %2953 = vmatprep.subr.bf16.mxu0 0
        %2954 = vmatpush1.bf16.msra.mxu0 0
        %2955 = vmatprep.subr.bf16.mxu0 0
        %2956 = vmatpush1.bf16.msra.mxu0 0
        %2957 = vmatprep.subr.bf16.mxu0 0
        %2958 = vmatpush1.bf16.msra.mxu0 0
        %2959 = vmatprep.subr.bf16.mxu0 0
        %2960 = vmatpush1.bf16.msra.mxu0 0
        %2961 = vmatprep.subr.bf16.mxu0 0
        %2962 = vmatpush1.bf16.msra.mxu0 0
        %2963 = vmatprep.subr.bf16.mxu0 0
        %2964 = vmatpush1.bf16.msra.mxu0 0
        %2965 = vmatprep.subr.bf16.mxu0 0
        %2966 = vmatpush1.bf16.msra.mxu0 0
        %2967 = vmatprep.subr.bf16.mxu0 0
        %2968 = vmatpush1.bf16.msra.mxu0 0
        %2969 = vmatprep.mubr.bf16.mxu0 0
        %2970 = vmatmul.mubr.bf16.gmra.mrb[0].mxu0 %v2908
        %v2971 = vpop.f32.mrb[0].mxu0
        %v2972 = vadd.f32 %v445, %v2971
        %v2973 = vpop.f32.mrb[0].mxu0
        %v2974 = vadd.f32 %v445, %v2973
        %v2975 = vpop.f32.mrb[0].mxu0
        %v2976 = vadd.f32 %v446, %v2975
        %v2977 = vpop.f32.mrb[0].mxu0
        %v2978 = vadd.f32 %v446, %v2977
        %2979 = vmatprep.mubr.bf16.mxu0 0
        %2980 = vmatmul.mubr.bf16.gmra.mrb[0].mxu0 %v2911
        %v2981 = vpop.f32.mrb[0].mxu0
        %v2982 = vadd.f32 %v447, %v2981
        %v2983 = vpop.f32.mrb[0].mxu0
        %v2984 = vadd.f32 %v447, %v2983
        %v2985 = vpop.f32.mrb[0].mxu0
        %v2986 = vadd.f32 %v448, %v2985
        %v2987 = vpop.f32.mrb[0].mxu0
        %v2988 = vadd.f32 %v448, %v2987
        %2989 = vmatprep.mubr.bf16.mxu0 0
        %2990 = vmatmul.mubr.bf16.gmra.mrb[0].mxu0 %v2914
        %v2991 = vpop.f32.mrb[0].mxu0
        %v2992 = vadd.f32 %v449, %v2991
        %v2993 = vpop.f32.mrb[0].mxu0
        %v2994 = vadd.f32 %v449, %v2993
        %v2995 = vpop.f32.mrb[0].mxu0
        %v2996 = vadd.f32 %v450, %v2995
        %v2997 = vpop.f32.mrb[0].mxu0
        %v2998 = vadd.f32 %v450, %v2997
        %2999 = vmatprep.mubr.bf16.mxu0 0
        %3000 = vmatmul.mubr.bf16.gmra.mrb[0].mxu0 %v2917
        %v3001 = vpop.f32.mrb[0].mxu0
        %v3002 = vadd.f32 %v451, %v3001
        %v3003 = vpop.f32.mrb[0].mxu0
        %v3004 = vadd.f32 %v451, %v3003
        %v3005 = vpop.f32.mrb[0].mxu0
        %v3006 = vadd.f32 %v452, %v3005
        %v3007 = vpop.f32.mrb[0].mxu0
        %v3008 = vadd.f32 %v452, %v3007
        %3009 = vmatprep.mubr.bf16.mxu0 0
        %3010 = vmatmul.mubr.bf16.gmra.mrb[0].mxu0 %v2920
        %v3011 = vpop.f32.mrb[0].mxu0
        %v3012 = vadd.f32 %v453, %v3011
        %v3013 = vpop.f32.mrb[0].mxu0
        %v3014 = vadd.f32 %v453, %v3013
        %v3015 = vpop.f32.mrb[0].mxu0
        %v3016 = vadd.f32 %v454, %v3015
        %v3017 = vpop.f32.mrb[0].mxu0
        %v3018 = vadd.f32 %v454, %v3017
        %3019 = vmatprep.mubr.bf16.mxu0 0
        %3020 = vmatmul.mubr.bf16.gmra.mrb[0].mxu0 %v2923
        %v3021 = vpop.f32.mrb[0].mxu0
        %v3022 = vadd.f32 %v455, %v3021
        %v3023 = vpop.f32.mrb[0].mxu0
        %v3024 = vadd.f32 %v455, %v3023
        %v3025 = vpop.f32.mrb[0].mxu0
        %v3026 = vadd.f32 %v456, %v3025
        %v3027 = vpop.f32.mrb[0].mxu0
        %v3028 = vadd.f32 %v456, %v3027
        %3029 = vmatprep.mubr.bf16.mxu0 0
        %3030 = vmatmul.mubr.bf16.gmra.mrb[0].mxu0 %v2926
        %v3031 = vpop.f32.mrb[0].mxu0
        %v3032 = vadd.f32 %v457, %v3031
        %v3033 = vpop.f32.mrb[0].mxu0
        %v3034 = vadd.f32 %v457, %v3033
        %v3035 = vpop.f32.mrb[0].mxu0
        %v3036 = vadd.f32 %v458, %v3035
        %v3037 = vpop.f32.mrb[0].mxu0
        %v3038 = vadd.f32 %v458, %v3037
        %3039 = vmatprep.mubr.bf16.mxu0 0
        %3040 = vmatmul.mubr.bf16.gmra.mrb[0].mxu0 %v2929
        %v3041 = vpop.f32.mrb[0].mxu0
        %v3042 = vadd.f32 %v459, %v3041
        %v3043 = vpop.f32.mrb[0].mxu0
        %v3044 = vadd.f32 %v459, %v3043
        %v3045 = vpop.f32.mrb[0].mxu0
        %v3046 = vadd.f32 %v460, %v3045
        %v3047 = vpop.f32.mrb[0].mxu0
        %v3048 = vadd.f32 %v460, %v3047
        %3049 = vdwg.mxu0
        %v3050 = vmax.f32 %v2972, %v2982
        %v3051 = vmax.f32 %v2976, %v2986
        %v3052 = vmax.f32 %v3050, %v2992
        %v3053 = vmax.f32 %v3051, %v2996
        %v3054 = vmax.f32 %v3052, %v3002
        %v3055 = vmax.f32 %v3053, %v3006
        %v3056 = vmax.f32 %v3054, %v3012
        %v3057 = vmax.f32 %v3055, %v3016
        %v3058 = vmax.f32 %v3056, %v3022
        %v3059 = vmax.f32 %v3057, %v3026
        %v3060 = vmax.f32 %v3058, %v3032
        %v3061 = vmax.f32 %v3059, %v3036
        %v3062 = vmax.f32 %v3060, %v3042
        %v3063 = vmax.f32 %v3061, %v3046
        %v3064 = vmax.f32 %v3062, %v3063
        %v3065 = vrot.slane %v3064, 4
        %v3066 = vmax.f32 %v3064, %v3065
        %v3067 = vrot.slane %v3066, 2
        %v3068 = vmax.f32 %v3066, %v3067
        %v3069 = vrot.slane %v3068, 1
        %v3070 = vmax.f32 %v3068, %v3069
        %v3071 = vmax.f32 %v2974, %v2984
        %v3072 = vmax.f32 %v2978, %v2988
        %v3073 = vmax.f32 %v3071, %v2994
        %v3074 = vmax.f32 %v3072, %v2998
        %v3075 = vmax.f32 %v3073, %v3004
        %v3076 = vmax.f32 %v3074, %v3008
        %v3077 = vmax.f32 %v3075, %v3014
        %v3078 = vmax.f32 %v3076, %v3018
        %v3079 = vmax.f32 %v3077, %v3024
        %v3080 = vmax.f32 %v3078, %v3028
        %v3081 = vmax.f32 %v3079, %v3034
        %v3082 = vmax.f32 %v3080, %v3038
        %v3083 = vmax.f32 %v3081, %v3044
        %v3084 = vmax.f32 %v3082, %v3048
        %v3085 = vmax.f32 %v3083, %v3084
        %v3086 = vrot.slane %v3085, 4
        %v3087 = vmax.f32 %v3085, %v3086
        %v3088 = vrot.slane %v3087, 2
        %v3089 = vmax.f32 %v3087, %v3088
        %v3090 = vrot.slane %v3089, 1
        %v3091 = vmax.f32 %v3089, %v3090
        %v3092 = vsub.f32 %v2972, %v3070
        %v3093 = vsub.f32 %v2974, %v3091
        %v3094 = vsub.f32 %v2976, %v3070
        %v3095 = vsub.f32 %v2978, %v3091
        %v3096 = vsub.f32 %v2982, %v3070
        %v3097 = vsub.f32 %v2984, %v3091
        %v3098 = vsub.f32 %v2986, %v3070
        %v3099 = vsub.f32 %v2988, %v3091
        %v3100 = vsub.f32 %v2992, %v3070
        %v3101 = vsub.f32 %v2994, %v3091
        %v3102 = vsub.f32 %v2996, %v3070
        %v3103 = vsub.f32 %v2998, %v3091
        %v3104 = vsub.f32 %v3002, %v3070
        %v3105 = vsub.f32 %v3004, %v3091
        %v3106 = vsub.f32 %v3006, %v3070
        %v3107 = vsub.f32 %v3008, %v3091
        %v3108 = vsub.f32 %v3012, %v3070
        %v3109 = vsub.f32 %v3014, %v3091
        %v3110 = vsub.f32 %v3016, %v3070
        %v3111 = vsub.f32 %v3018, %v3091
        %v3112 = vsub.f32 %v3022, %v3070
        %v3113 = vsub.f32 %v3024, %v3091
        %v3114 = vsub.f32 %v3026, %v3070
        %v3115 = vsub.f32 %v3028, %v3091
        %v3116 = vsub.f32 %v3032, %v3070
        %v3117 = vsub.f32 %v3034, %v3091
        %v3118 = vsub.f32 %v3036, %v3070
        %v3119 = vsub.f32 %v3038, %v3091
        %v3120 = vsub.f32 %v3042, %v3070
        %v3121 = vsub.f32 %v3044, %v3091
        %v3122 = vsub.f32 %v3046, %v3070
        %v3123 = vsub.f32 %v3048, %v3091
        %v3124 = vmul.f32 %v3092, 1.442695
        %v3125 = vpow.pop %v3124
        %v3126 = vmul.f32 %v3093, 1.442695
        %v3127 = vpow.pop %v3126
        %v3128 = vmul.f32 %v3094, 1.442695
        %v3129 = vpow.pop %v3128
        %v3130 = vmul.f32 %v3095, 1.442695
        %v3131 = vpow.pop %v3130
        %v3132 = vmul.f32 %v3096, 1.442695
        %v3133 = vpow.pop %v3132
        %v3134 = vmul.f32 %v3097, 1.442695
        %v3135 = vpow.pop %v3134
        %v3136 = vmul.f32 %v3098, 1.442695
        %v3137 = vpow.pop %v3136
        %v3138 = vmul.f32 %v3099, 1.442695
        %v3139 = vpow.pop %v3138
        %v3140 = vmul.f32 %v3100, 1.442695
        %v3141 = vpow.pop %v3140
        %v3142 = vmul.f32 %v3101, 1.442695
        %v3143 = vpow.pop %v3142
        %v3144 = vmul.f32 %v3102, 1.442695
        %v3145 = vpow.pop %v3144
        %v3146 = vmul.f32 %v3103, 1.442695
        %v3147 = vpow.pop %v3146
        %v3148 = vmul.f32 %v3104, 1.442695
        %v3149 = vpow.pop %v3148
        %v3150 = vmul.f32 %v3105, 1.442695
        %v3151 = vpow.pop %v3150
        %v3152 = vmul.f32 %v3106, 1.442695
        %v3153 = vpow.pop %v3152
        %v3154 = vmul.f32 %v3107, 1.442695
        %v3155 = vpow.pop %v3154
        %v3156 = vmul.f32 %v3108, 1.442695
        %v3157 = vpow.pop %v3156
        %v3158 = vmul.f32 %v3109, 1.442695
        %v3159 = vpow.pop %v3158
        %v3160 = vmul.f32 %v3110, 1.442695
        %v3161 = vpow.pop %v3160
        %v3162 = vmul.f32 %v3111, 1.442695
        %v3163 = vpow.pop %v3162
        %v3164 = vmul.f32 %v3112, 1.442695
        %v3165 = vpow.pop %v3164
        %v3166 = vmul.f32 %v3113, 1.442695
        %v3167 = vpow.pop %v3166
        %v3168 = vmul.f32 %v3114, 1.442695
        %v3169 = vpow.pop %v3168
        %v3170 = vmul.f32 %v3115, 1.442695
        %v3171 = vpow.pop %v3170
        %v3172 = vmul.f32 %v3116, 1.442695
        %v3173 = vpow.pop %v3172
        %v3174 = vmul.f32 %v3117, 1.442695
        %v3175 = vpow.pop %v3174
        %v3176 = vmul.f32 %v3118, 1.442695
        %v3177 = vpow.pop %v3176
        %v3178 = vmul.f32 %v3119, 1.442695
        %v3179 = vpow.pop %v3178
        %v3180 = vmul.f32 %v3120, 1.442695
        %v3181 = vpow.pop %v3180
        %v3182 = vmul.f32 %v3121, 1.442695
        %v3183 = vpow.pop %v3182
        %v3184 = vmul.f32 %v3122, 1.442695
        %v3185 = vpow.pop %v3184
        %v3186 = vmul.f32 %v3123, 1.442695
        %v3187 = vpow.pop %v3186
        %v3188 = vadd.f32 %v3125, %v3129
        %v3189 = vadd.f32 %v3188, %v3133
        %v3190 = vadd.f32 %v3189, %v3137
        %v3191 = vadd.f32 %v3190, %v3141
        %v3192 = vadd.f32 %v3191, %v3145
        %v3193 = vadd.f32 %v3192, %v3149
        %v3194 = vadd.f32 %v3193, %v3153
        %v3195 = vadd.f32 %v3194, %v3157
        %v3196 = vadd.f32 %v3195, %v3161
        %v3197 = vadd.f32 %v3196, %v3165
        %v3198 = vadd.f32 %v3197, %v3169
        %v3199 = vadd.f32 %v3198, %v3173
        %v3200 = vadd.f32 %v3199, %v3177
        %v3201 = vadd.f32 %v3200, %v3181
        %v3202 = vadd.f32 %v3201, %v3185
        %v3203 = vrot.slane %v3202, 4
        %v3204 = vadd.f32 %v3202, %v3203
        %v3205 = vrot.slane %v3204, 2
        %v3206 = vadd.f32 %v3204, %v3205
        %v3207 = vrot.slane %v3206, 1
        %v3208 = vadd.f32 %v3206, %v3207
        %v3209 = vadd.f32 %v3127, %v3131
        %v3210 = vadd.f32 %v3209, %v3135
        %v3211 = vadd.f32 %v3210, %v3139
        %v3212 = vadd.f32 %v3211, %v3143
        %v3213 = vadd.f32 %v3212, %v3147
        %v3214 = vadd.f32 %v3213, %v3151
        %v3215 = vadd.f32 %v3214, %v3155
        %v3216 = vadd.f32 %v3215, %v3159
        %v3217 = vadd.f32 %v3216, %v3163
        %v3218 = vadd.f32 %v3217, %v3167
        %v3219 = vadd.f32 %v3218, %v3171
        %v3220 = vadd.f32 %v3219, %v3175
        %v3221 = vadd.f32 %v3220, %v3179
        %v3222 = vadd.f32 %v3221, %v3183
        %v3223 = vadd.f32 %v3222, %v3187
        %v3224 = vrot.slane %v3223, 4
        %v3225 = vadd.f32 %v3223, %v3224
        %v3226 = vrot.slane %v3225, 2
        %v3227 = vadd.f32 %v3225, %v3226
        %v3228 = vrot.slane %v3227, 1
        %v3229 = vadd.f32 %v3227, %v3228
        %v3230 = vrcp.pop %v3208
        %v3231 = vrcp.pop %v3229
        %v3232 = vmul.f32 %v3125, %v3230
        %v3233 = vmul.f32 %v3127, %v3231
        %v3234 = vmul.f32 %v3129, %v3230
        %v3235 = vmul.f32 %v3131, %v3231
        %v3236 = vmul.f32 %v3133, %v3230
        %v3237 = vmul.f32 %v3135, %v3231
        %v3238 = vmul.f32 %v3137, %v3230
        %v3239 = vmul.f32 %v3139, %v3231
        %v3240 = vmul.f32 %v3141, %v3230
        %v3241 = vmul.f32 %v3143, %v3231
        %v3242 = vmul.f32 %v3145, %v3230
        %v3243 = vmul.f32 %v3147, %v3231
        %v3244 = vmul.f32 %v3149, %v3230
        %v3245 = vmul.f32 %v3151, %v3231
        %v3246 = vmul.f32 %v3153, %v3230
        %v3247 = vmul.f32 %v3155, %v3231
        %v3248 = vmul.f32 %v3157, %v3230
        %v3249 = vmul.f32 %v3159, %v3231
        %v3250 = vmul.f32 %v3161, %v3230
        %v3251 = vmul.f32 %v3163, %v3231
        %v3252 = vmul.f32 %v3165, %v3230
        %v3253 = vmul.f32 %v3167, %v3231
        %v3254 = vmul.f32 %v3169, %v3230
        %v3255 = vmul.f32 %v3171, %v3231
        %v3256 = vmul.f32 %v3173, %v3230
        %v3257 = vmul.f32 %v3175, %v3231
        %v3258 = vmul.f32 %v3177, %v3230
        %v3259 = vmul.f32 %v3179, %v3231
        %v3260 = vmul.f32 %v3181, %v3230
        %v3261 = vmul.f32 %v3183, %v3231
        %v3262 = vmul.f32 %v3185, %v3230
        %v3263 = vmul.f32 %v3187, %v3231
        %v3264 = vpack.c.bf16 %v3234, %v3232
        %v3265 = vpack.c.bf16 %v3235, %v3233
        %v3266 = vpack.c.bf16 %v3238, %v3236
        %v3267 = vpack.c.bf16 %v3239, %v3237
        %v3268 = vpack.c.bf16 %v3242, %v3240
        %v3269 = vpack.c.bf16 %v3243, %v3241
        %v3270 = vpack.c.bf16 %v3246, %v3244
        %v3271 = vpack.c.bf16 %v3247, %v3245
        %v3272 = vpack.c.bf16 %v3250, %v3248
        %v3273 = vpack.c.bf16 %v3251, %v3249
        %v3274 = vpack.c.bf16 %v3254, %v3252
        %v3275 = vpack.c.bf16 %v3255, %v3253
        %v3276 = vpack.c.bf16 %v3258, %v3256
        %v3277 = vpack.c.bf16 %v3259, %v3257
        %v3278 = vpack.c.bf16 %v3262, %v3260
        %v3279 = vpack.c.bf16 %v3263, %v3261
        %3280 = vmatprep.subr.bf16.mxu0 %v3265
        %3281 = vmatpush1.bf16.msra.mxu0 %v3264
        %3282 = vmatprep.subr.bf16.mxu0 %v3267
        %3283 = vmatpush1.bf16.msra.mxu0 %v3266
        %3284 = vmatprep.subr.bf16.mxu0 %v3269
        %3285 = vmatpush1.bf16.msra.mxu0 %v3268
        %3286 = vmatprep.subr.bf16.mxu0 %v3271
        %3287 = vmatpush1.bf16.msra.mxu0 %v3270
        %3288 = vmatprep.subr.bf16.mxu0 %v3273
        %3289 = vmatpush1.bf16.msra.mxu0 %v3272
        %3290 = vmatprep.subr.bf16.mxu0 %v3275
        %3291 = vmatpush1.bf16.msra.mxu0 %v3274
        %3292 = vmatprep.subr.bf16.mxu0 %v3277
        %3293 = vmatpush1.bf16.msra.mxu0 %v3276
        %3294 = vmatprep.subr.bf16.mxu0 %v3279
        %3295 = vmatpush1.bf16.msra.mxu0 %v3278
        %3296 = vmatprep.subr.bf16.mxu0 0
        %3297 = vmatpush1.bf16.msra.mxu0 0
        %3298 = vmatprep.subr.bf16.mxu0 0
        %3299 = vmatpush1.bf16.msra.mxu0 0
        %3300 = vmatprep.subr.bf16.mxu0 0
        %3301 = vmatpush1.bf16.msra.mxu0 0
        %3302 = vmatprep.subr.bf16.mxu0 0
        %3303 = vmatpush1.bf16.msra.mxu0 0
        %3304 = vmatprep.subr.bf16.mxu0 0
        %3305 = vmatpush1.bf16.msra.mxu0 0
        %3306 = vmatprep.subr.bf16.mxu0 0
        %3307 = vmatpush1.bf16.msra.mxu0 0
        %3308 = vmatprep.subr.bf16.mxu0 0
        %3309 = vmatpush1.bf16.msra.mxu0 0
        %3310 = vmatprep.subr.bf16.mxu0 0
        %3311 = vmatpush1.bf16.msra.mxu0 0
        %3312 = vmatprep.mubr.bf16.mxu0 0
        %3313 = vmatmul.mubr.bf16.gmra.mrb[0].mxu0 %v2862
        %v3314 = vpop.f32.mrb[0].mxu0
        %v3315 = vadd.f32 0.0, %v3314
        %v3316 = vpop.f32.mrb[0].mxu0
        %v3317 = vadd.f32 0.0, %v3316
        %v3318 = vpop.f32.mrb[0].mxu0
        %v3319 = vpop.f32.mrb[0].mxu0
        %3320 = vdwg.mxu0
        %v3321 = vpack.c.bf16 %v3315, %v3315
        %v3322 = vpack.c.bf16 %v3317, %v3317
        %s3323 = scalar_lea.vmem %s314, 384
        %v3324 = vld [vmem:[%s3323] sm:$0xf]
        %v3325 = vld [vmem:[%s3323 + $0x4] sm:$0xf]
        %v3326 = vld [vmem:[%s3323 + $0x8] sm:$0xf]
        %v3327 = vld [vmem:[%s3323 + $0xc] sm:$0xf]
        %v3328 = vld [vmem:[%s3323 + $0x10] sm:$0xf]
        %v3329 = vld [vmem:[%s3323 + $0x14] sm:$0xf]
        %v3330 = vld [vmem:[%s3323 + $0x18] sm:$0xf]
        %v3331 = vld [vmem:[%s3323 + $0x1c] sm:$0xf]
        %v3332 = vld [vmem:[%s3323 + $0x20] sm:$0xf]
        %v3333 = vld [vmem:[%s3323 + $0x24] sm:$0xf]
        %v3334 = vld [vmem:[%s3323 + $0x28] sm:$0xf]
        %v3335 = vld [vmem:[%s3323 + $0x2c] sm:$0xf]
        %v3336 = vld [vmem:[%s3323 + $0x30] sm:$0xf]
        %v3337 = vld [vmem:[%s3323 + $0x34] sm:$0xf]
        %v3338 = vld [vmem:[%s3323 + $0x38] sm:$0xf]
        %v3339 = vld [vmem:[%s3323 + $0x3c] sm:$0xf]
        %s3340 = scalar_lea.vmem %s319, 12
        %v3341 = vld [vmem:[%s3340] sm:$0x3]
        %v3358 = vunpack.c.l.b16 %v3324
        %v3359 = vunpack.c.l.b16 %v3325
        %v3360 = vunpack.c.l.b16 %v3326
        %v3361 = vunpack.c.l.b16 %v3327
        %v3362 = vunpack.c.l.b16 %v3328
        %v3363 = vunpack.c.l.b16 %v3329
        %v3364 = vunpack.c.l.b16 %v3330
        %v3365 = vunpack.c.l.b16 %v3331
        %v3366 = vunpack.c.l.b16 %v3332
        %v3367 = vunpack.c.l.b16 %v3333
        %v3368 = vunpack.c.l.b16 %v3334
        %v3369 = vunpack.c.l.b16 %v3335
        %v3370 = vunpack.c.l.b16 %v3336
        %v3371 = vunpack.c.l.b16 %v3337
        %v3372 = vunpack.c.l.b16 %v3338
        %v3373 = vunpack.c.l.b16 %v3339
        %v3374 = vpack.c.b16 %v3359, %v3358
        %v3375 = vpack.c.b16 %v3361, %v3360
        %v3376 = vpack.c.b16 %v3363, %v3362
        %v3377 = vpack.c.b16 %v3365, %v3364
        %v3378 = vpack.c.b16 %v3367, %v3366
        %v3379 = vpack.c.b16 %v3369, %v3368
        %v3380 = vpack.c.b16 %v3371, %v3370
        %v3381 = vpack.c.b16 %v3373, %v3372
        %v3382 = vrot.slane %v410, 4
        %v3383 = vrot.slane %v411, 4
        %v3385 = vsel %vm518, %v3374, 0
        %v3388 = vsel %vm518, %v3375, 0
        %v3391 = vsel %vm518, %v3376, 0
        %v3394 = vsel %vm518, %v3377, 0
        %v3397 = vsel %vm518, %v3378, 0
        %v3400 = vsel %vm518, %v3379, 0
        %v3403 = vsel %vm518, %v3380, 0
        %v3406 = vsel %vm518, %v3381, 0
        %v3409 = vsel %vm543, %v3382, 0
        %v3412 = vsel %vm543, %v3383, 0
        %3414 = vmatprep.subr.bf16.mxu0 %v3412
        %3415 = vmatpush1.bf16.msra.mxu0 %v3409
        %3416 = vmatprep.subr.bf16.mxu0 0
        %3417 = vmatpush1.bf16.msra.mxu0 0
        %3418 = vmatprep.subr.bf16.mxu0 0
        %3419 = vmatpush1.bf16.msra.mxu0 0
        %3420 = vmatprep.subr.bf16.mxu0 0
        %3421 = vmatpush1.bf16.msra.mxu0 0
        %3422 = vmatprep.subr.bf16.mxu0 0
        %3423 = vmatpush1.bf16.msra.mxu0 0
        %3424 = vmatprep.subr.bf16.mxu0 0
        %3425 = vmatpush1.bf16.msra.mxu0 0
        %3426 = vmatprep.subr.bf16.mxu0 0
        %3427 = vmatpush1.bf16.msra.mxu0 0
        %3428 = vmatprep.subr.bf16.mxu0 0
        %3429 = vmatpush1.bf16.msra.mxu0 0
        %3430 = vmatprep.subr.bf16.mxu0 0
        %3431 = vmatpush1.bf16.msra.mxu0 0
        %3432 = vmatprep.subr.bf16.mxu0 0
        %3433 = vmatpush1.bf16.msra.mxu0 0
        %3434 = vmatprep.subr.bf16.mxu0 0
        %3435 = vmatpush1.bf16.msra.mxu0 0
        %3436 = vmatprep.subr.bf16.mxu0 0
        %3437 = vmatpush1.bf16.msra.mxu0 0
        %3438 = vmatprep.subr.bf16.mxu0 0
        %3439 = vmatpush1.bf16.msra.mxu0 0
        %3440 = vmatprep.subr.bf16.mxu0 0
        %3441 = vmatpush1.bf16.msra.mxu0 0
        %3442 = vmatprep.subr.bf16.mxu0 0
        %3443 = vmatpush1.bf16.msra.mxu0 0
        %3444 = vmatprep.subr.bf16.mxu0 0
        %3445 = vmatpush1.bf16.msra.mxu0 0
        %3446 = vmatprep.mubr.bf16.mxu0 0
        %3447 = vmatmul.mubr.bf16.gmra.mrb[0].mxu0 %v3385
        %v3448 = vpop.f32.mrb[0].mxu0
        %v3449 = vadd.f32 %v445, %v3448
        %v3450 = vpop.f32.mrb[0].mxu0
        %v3451 = vadd.f32 %v445, %v3450
        %v3452 = vpop.f32.mrb[0].mxu0
        %v3453 = vadd.f32 %v446, %v3452
        %v3454 = vpop.f32.mrb[0].mxu0
        %v3455 = vadd.f32 %v446, %v3454
        %3456 = vmatprep.mubr.bf16.mxu0 0
        %3457 = vmatmul.mubr.bf16.gmra.mrb[0].mxu0 %v3388
        %v3458 = vpop.f32.mrb[0].mxu0
        %v3459 = vadd.f32 %v447, %v3458
        %v3460 = vpop.f32.mrb[0].mxu0
        %v3461 = vadd.f32 %v447, %v3460
        %v3462 = vpop.f32.mrb[0].mxu0
        %v3463 = vadd.f32 %v448, %v3462
        %v3464 = vpop.f32.mrb[0].mxu0
        %v3465 = vadd.f32 %v448, %v3464
        %3466 = vmatprep.mubr.bf16.mxu0 0
        %3467 = vmatmul.mubr.bf16.gmra.mrb[0].mxu0 %v3391
        %v3468 = vpop.f32.mrb[0].mxu0
        %v3469 = vadd.f32 %v449, %v3468
        %v3470 = vpop.f32.mrb[0].mxu0
        %v3471 = vadd.f32 %v449, %v3470
        %v3472 = vpop.f32.mrb[0].mxu0
        %v3473 = vadd.f32 %v450, %v3472
        %v3474 = vpop.f32.mrb[0].mxu0
        %v3475 = vadd.f32 %v450, %v3474
        %3476 = vmatprep.mubr.bf16.mxu0 0
        %3477 = vmatmul.mubr.bf16.gmra.mrb[0].mxu0 %v3394
        %v3478 = vpop.f32.mrb[0].mxu0
        %v3479 = vadd.f32 %v451, %v3478
        %v3480 = vpop.f32.mrb[0].mxu0
        %v3481 = vadd.f32 %v451, %v3480
        %v3482 = vpop.f32.mrb[0].mxu0
        %v3483 = vadd.f32 %v452, %v3482
        %v3484 = vpop.f32.mrb[0].mxu0
        %v3485 = vadd.f32 %v452, %v3484
        %3486 = vmatprep.mubr.bf16.mxu0 0
        %3487 = vmatmul.mubr.bf16.gmra.mrb[0].mxu0 %v3397
        %v3488 = vpop.f32.mrb[0].mxu0
        %v3489 = vadd.f32 %v453, %v3488
        %v3490 = vpop.f32.mrb[0].mxu0
        %v3491 = vadd.f32 %v453, %v3490
        %v3492 = vpop.f32.mrb[0].mxu0
        %v3493 = vadd.f32 %v454, %v3492
        %v3494 = vpop.f32.mrb[0].mxu0
        %v3495 = vadd.f32 %v454, %v3494
        %3496 = vmatprep.mubr.bf16.mxu0 0
        %3497 = vmatmul.mubr.bf16.gmra.mrb[0].mxu0 %v3400
        %v3498 = vpop.f32.mrb[0].mxu0
        %v3499 = vadd.f32 %v455, %v3498
        %v3500 = vpop.f32.mrb[0].mxu0
        %v3501 = vadd.f32 %v455, %v3500
        %v3502 = vpop.f32.mrb[0].mxu0
        %v3503 = vadd.f32 %v456, %v3502
        %v3504 = vpop.f32.mrb[0].mxu0
        %v3505 = vadd.f32 %v456, %v3504
        %3506 = vmatprep.mubr.bf16.mxu0 0
        %3507 = vmatmul.mubr.bf16.gmra.mrb[0].mxu0 %v3403
        %v3508 = vpop.f32.mrb[0].mxu0
        %v3509 = vadd.f32 %v457, %v3508
        %v3510 = vpop.f32.mrb[0].mxu0
        %v3511 = vadd.f32 %v457, %v3510
        %v3512 = vpop.f32.mrb[0].mxu0
        %v3513 = vadd.f32 %v458, %v3512
        %v3514 = vpop.f32.mrb[0].mxu0
        %v3515 = vadd.f32 %v458, %v3514
        %3516 = vmatprep.mubr.bf16.mxu0 0
        %3517 = vmatmul.mubr.bf16.gmra.mrb[0].mxu0 %v3406
        %v3518 = vpop.f32.mrb[0].mxu0
        %v3519 = vadd.f32 %v459, %v3518
        %v3520 = vpop.f32.mrb[0].mxu0
        %v3521 = vadd.f32 %v459, %v3520
        %v3522 = vpop.f32.mrb[0].mxu0
        %v3523 = vadd.f32 %v460, %v3522
        %v3524 = vpop.f32.mrb[0].mxu0
        %v3525 = vadd.f32 %v460, %v3524
        %3526 = vdwg.mxu0
        %v3527 = vmax.f32 %v3449, %v3459
        %v3528 = vmax.f32 %v3453, %v3463
        %v3529 = vmax.f32 %v3527, %v3469
        %v3530 = vmax.f32 %v3528, %v3473
        %v3531 = vmax.f32 %v3529, %v3479
        %v3532 = vmax.f32 %v3530, %v3483
        %v3533 = vmax.f32 %v3531, %v3489
        %v3534 = vmax.f32 %v3532, %v3493
        %v3535 = vmax.f32 %v3533, %v3499
        %v3536 = vmax.f32 %v3534, %v3503
        %v3537 = vmax.f32 %v3535, %v3509
        %v3538 = vmax.f32 %v3536, %v3513
        %v3539 = vmax.f32 %v3537, %v3519
        %v3540 = vmax.f32 %v3538, %v3523
        %v3541 = vmax.f32 %v3539, %v3540
        %v3542 = vrot.slane %v3541, 4
        %v3543 = vmax.f32 %v3541, %v3542
        %v3544 = vrot.slane %v3543, 2
        %v3545 = vmax.f32 %v3543, %v3544
        %v3546 = vrot.slane %v3545, 1
        %v3547 = vmax.f32 %v3545, %v3546
        %v3548 = vmax.f32 %v3451, %v3461
        %v3549 = vmax.f32 %v3455, %v3465
        %v3550 = vmax.f32 %v3548, %v3471
        %v3551 = vmax.f32 %v3549, %v3475
        %v3552 = vmax.f32 %v3550, %v3481
        %v3553 = vmax.f32 %v3551, %v3485
        %v3554 = vmax.f32 %v3552, %v3491
        %v3555 = vmax.f32 %v3553, %v3495
        %v3556 = vmax.f32 %v3554, %v3501
        %v3557 = vmax.f32 %v3555, %v3505
        %v3558 = vmax.f32 %v3556, %v3511
        %v3559 = vmax.f32 %v3557, %v3515
        %v3560 = vmax.f32 %v3558, %v3521
        %v3561 = vmax.f32 %v3559, %v3525
        %v3562 = vmax.f32 %v3560, %v3561
        %v3563 = vrot.slane %v3562, 4
        %v3564 = vmax.f32 %v3562, %v3563
        %v3565 = vrot.slane %v3564, 2
        %v3566 = vmax.f32 %v3564, %v3565
        %v3567 = vrot.slane %v3566, 1
        %v3568 = vmax.f32 %v3566, %v3567
        %v3569 = vsub.f32 %v3449, %v3547
        %v3570 = vsub.f32 %v3451, %v3568
        %v3571 = vsub.f32 %v3453, %v3547
        %v3572 = vsub.f32 %v3455, %v3568
        %v3573 = vsub.f32 %v3459, %v3547
        %v3574 = vsub.f32 %v3461, %v3568
        %v3575 = vsub.f32 %v3463, %v3547
        %v3576 = vsub.f32 %v3465, %v3568
        %v3577 = vsub.f32 %v3469, %v3547
        %v3578 = vsub.f32 %v3471, %v3568
        %v3579 = vsub.f32 %v3473, %v3547
        %v3580 = vsub.f32 %v3475, %v3568
        %v3581 = vsub.f32 %v3479, %v3547
        %v3582 = vsub.f32 %v3481, %v3568
        %v3583 = vsub.f32 %v3483, %v3547
        %v3584 = vsub.f32 %v3485, %v3568
        %v3585 = vsub.f32 %v3489, %v3547
        %v3586 = vsub.f32 %v3491, %v3568
        %v3587 = vsub.f32 %v3493, %v3547
        %v3588 = vsub.f32 %v3495, %v3568
        %v3589 = vsub.f32 %v3499, %v3547
        %v3590 = vsub.f32 %v3501, %v3568
        %v3591 = vsub.f32 %v3503, %v3547
        %v3592 = vsub.f32 %v3505, %v3568
        %v3593 = vsub.f32 %v3509, %v3547
        %v3594 = vsub.f32 %v3511, %v3568
        %v3595 = vsub.f32 %v3513, %v3547
        %v3596 = vsub.f32 %v3515, %v3568
        %v3597 = vsub.f32 %v3519, %v3547
        %v3598 = vsub.f32 %v3521, %v3568
        %v3599 = vsub.f32 %v3523, %v3547
        %v3600 = vsub.f32 %v3525, %v3568
        %v3601 = vmul.f32 %v3569, 1.442695
        %v3602 = vpow.pop %v3601
        %v3603 = vmul.f32 %v3570, 1.442695
        %v3604 = vpow.pop %v3603
        %v3605 = vmul.f32 %v3571, 1.442695
        %v3606 = vpow.pop %v3605
        %v3607 = vmul.f32 %v3572, 1.442695
        %v3608 = vpow.pop %v3607
        %v3609 = vmul.f32 %v3573, 1.442695
        %v3610 = vpow.pop %v3609
        %v3611 = vmul.f32 %v3574, 1.442695
        %v3612 = vpow.pop %v3611
        %v3613 = vmul.f32 %v3575, 1.442695
        %v3614 = vpow.pop %v3613
        %v3615 = vmul.f32 %v3576, 1.442695
        %v3616 = vpow.pop %v3615
        %v3617 = vmul.f32 %v3577, 1.442695
        %v3618 = vpow.pop %v3617
        %v3619 = vmul.f32 %v3578, 1.442695
        %v3620 = vpow.pop %v3619
        %v3621 = vmul.f32 %v3579, 1.442695
        %v3622 = vpow.pop %v3621
        %v3623 = vmul.f32 %v3580, 1.442695
        %v3624 = vpow.pop %v3623
        %v3625 = vmul.f32 %v3581, 1.442695
        %v3626 = vpow.pop %v3625
        %v3627 = vmul.f32 %v3582, 1.442695
        %v3628 = vpow.pop %v3627
        %v3629 = vmul.f32 %v3583, 1.442695
        %v3630 = vpow.pop %v3629
        %v3631 = vmul.f32 %v3584, 1.442695
        %v3632 = vpow.pop %v3631
        %v3633 = vmul.f32 %v3585, 1.442695
        %v3634 = vpow.pop %v3633
        %v3635 = vmul.f32 %v3586, 1.442695
        %v3636 = vpow.pop %v3635
        %v3637 = vmul.f32 %v3587, 1.442695
        %v3638 = vpow.pop %v3637
        %v3639 = vmul.f32 %v3588, 1.442695
        %v3640 = vpow.pop %v3639
        %v3641 = vmul.f32 %v3589, 1.442695
        %v3642 = vpow.pop %v3641
        %v3643 = vmul.f32 %v3590, 1.442695
        %v3644 = vpow.pop %v3643
        %v3645 = vmul.f32 %v3591, 1.442695
        %v3646 = vpow.pop %v3645
        %v3647 = vmul.f32 %v3592, 1.442695
        %v3648 = vpow.pop %v3647
        %v3649 = vmul.f32 %v3593, 1.442695
        %v3650 = vpow.pop %v3649
        %v3651 = vmul.f32 %v3594, 1.442695
        %v3652 = vpow.pop %v3651
        %v3653 = vmul.f32 %v3595, 1.442695
        %v3654 = vpow.pop %v3653
        %v3655 = vmul.f32 %v3596, 1.442695
        %v3656 = vpow.pop %v3655
        %v3657 = vmul.f32 %v3597, 1.442695
        %v3658 = vpow.pop %v3657
        %v3659 = vmul.f32 %v3598, 1.442695
        %v3660 = vpow.pop %v3659
        %v3661 = vmul.f32 %v3599, 1.442695
        %v3662 = vpow.pop %v3661
        %v3663 = vmul.f32 %v3600, 1.442695
        %v3664 = vpow.pop %v3663
        %v3665 = vadd.f32 %v3602, %v3606
        %v3666 = vadd.f32 %v3665, %v3610
        %v3667 = vadd.f32 %v3666, %v3614
        %v3668 = vadd.f32 %v3667, %v3618
        %v3669 = vadd.f32 %v3668, %v3622
        %v3670 = vadd.f32 %v3669, %v3626
        %v3671 = vadd.f32 %v3670, %v3630
        %v3672 = vadd.f32 %v3671, %v3634
        %v3673 = vadd.f32 %v3672, %v3638
        %v3674 = vadd.f32 %v3673, %v3642
        %v3675 = vadd.f32 %v3674, %v3646
        %v3676 = vadd.f32 %v3675, %v3650
        %v3677 = vadd.f32 %v3676, %v3654
        %v3678 = vadd.f32 %v3677, %v3658
        %v3679 = vadd.f32 %v3678, %v3662
        %v3680 = vrot.slane %v3679, 4
        %v3681 = vadd.f32 %v3679, %v3680
        %v3682 = vrot.slane %v3681, 2
        %v3683 = vadd.f32 %v3681, %v3682
        %v3684 = vrot.slane %v3683, 1
        %v3685 = vadd.f32 %v3683, %v3684
        %v3686 = vadd.f32 %v3604, %v3608
        %v3687 = vadd.f32 %v3686, %v3612
        %v3688 = vadd.f32 %v3687, %v3616
        %v3689 = vadd.f32 %v3688, %v3620
        %v3690 = vadd.f32 %v3689, %v3624
        %v3691 = vadd.f32 %v3690, %v3628
        %v3692 = vadd.f32 %v3691, %v3632
        %v3693 = vadd.f32 %v3692, %v3636
        %v3694 = vadd.f32 %v3693, %v3640
        %v3695 = vadd.f32 %v3694, %v3644
        %v3696 = vadd.f32 %v3695, %v3648
        %v3697 = vadd.f32 %v3696, %v3652
        %v3698 = vadd.f32 %v3697, %v3656
        %v3699 = vadd.f32 %v3698, %v3660
        %v3700 = vadd.f32 %v3699, %v3664
        %v3701 = vrot.slane %v3700, 4
        %v3702 = vadd.f32 %v3700, %v3701
        %v3703 = vrot.slane %v3702, 2
        %v3704 = vadd.f32 %v3702, %v3703
        %v3705 = vrot.slane %v3704, 1
        %v3706 = vadd.f32 %v3704, %v3705
        %v3707 = vrcp.pop %v3685
        %v3708 = vrcp.pop %v3706
        %v3709 = vmul.f32 %v3602, %v3707
        %v3710 = vmul.f32 %v3604, %v3708
        %v3711 = vmul.f32 %v3606, %v3707
        %v3712 = vmul.f32 %v3608, %v3708
        %v3713 = vmul.f32 %v3610, %v3707
        %v3714 = vmul.f32 %v3612, %v3708
        %v3715 = vmul.f32 %v3614, %v3707
        %v3716 = vmul.f32 %v3616, %v3708
        %v3717 = vmul.f32 %v3618, %v3707
        %v3718 = vmul.f32 %v3620, %v3708
        %v3719 = vmul.f32 %v3622, %v3707
        %v3720 = vmul.f32 %v3624, %v3708
        %v3721 = vmul.f32 %v3626, %v3707
        %v3722 = vmul.f32 %v3628, %v3708
        %v3723 = vmul.f32 %v3630, %v3707
        %v3724 = vmul.f32 %v3632, %v3708
        %v3725 = vmul.f32 %v3634, %v3707
        %v3726 = vmul.f32 %v3636, %v3708
        %v3727 = vmul.f32 %v3638, %v3707
        %v3728 = vmul.f32 %v3640, %v3708
        %v3729 = vmul.f32 %v3642, %v3707
        %v3730 = vmul.f32 %v3644, %v3708
        %v3731 = vmul.f32 %v3646, %v3707
        %v3732 = vmul.f32 %v3648, %v3708
        %v3733 = vmul.f32 %v3650, %v3707
        %v3734 = vmul.f32 %v3652, %v3708
        %v3735 = vmul.f32 %v3654, %v3707
        %v3736 = vmul.f32 %v3656, %v3708
        %v3737 = vmul.f32 %v3658, %v3707
        %v3738 = vmul.f32 %v3660, %v3708
        %v3739 = vmul.f32 %v3662, %v3707
        %v3740 = vmul.f32 %v3664, %v3708
        %v3741 = vpack.c.bf16 %v3711, %v3709
        %v3742 = vpack.c.bf16 %v3712, %v3710
        %v3743 = vpack.c.bf16 %v3715, %v3713
        %v3744 = vpack.c.bf16 %v3716, %v3714
        %v3745 = vpack.c.bf16 %v3719, %v3717
        %v3746 = vpack.c.bf16 %v3720, %v3718
        %v3747 = vpack.c.bf16 %v3723, %v3721
        %v3748 = vpack.c.bf16 %v3724, %v3722
        %v3749 = vpack.c.bf16 %v3727, %v3725
        %v3750 = vpack.c.bf16 %v3728, %v3726
        %v3751 = vpack.c.bf16 %v3731, %v3729
        %v3752 = vpack.c.bf16 %v3732, %v3730
        %v3753 = vpack.c.bf16 %v3735, %v3733
        %v3754 = vpack.c.bf16 %v3736, %v3734
        %v3755 = vpack.c.bf16 %v3739, %v3737
        %v3756 = vpack.c.bf16 %v3740, %v3738
        %3757 = vmatprep.subr.bf16.mxu0 %v3742
        %3758 = vmatpush1.bf16.msra.mxu0 %v3741
        %3759 = vmatprep.subr.bf16.mxu0 %v3744
        %3760 = vmatpush1.bf16.msra.mxu0 %v3743
        %3761 = vmatprep.subr.bf16.mxu0 %v3746
        %3762 = vmatpush1.bf16.msra.mxu0 %v3745
        %3763 = vmatprep.subr.bf16.mxu0 %v3748
        %3764 = vmatpush1.bf16.msra.mxu0 %v3747
        %3765 = vmatprep.subr.bf16.mxu0 %v3750
        %3766 = vmatpush1.bf16.msra.mxu0 %v3749
        %3767 = vmatprep.subr.bf16.mxu0 %v3752
        %3768 = vmatpush1.bf16.msra.mxu0 %v3751
        %3769 = vmatprep.subr.bf16.mxu0 %v3754
        %3770 = vmatpush1.bf16.msra.mxu0 %v3753
        %3771 = vmatprep.subr.bf16.mxu0 %v3756
        %3772 = vmatpush1.bf16.msra.mxu0 %v3755
        %3773 = vmatprep.subr.bf16.mxu0 0
        %3774 = vmatpush1.bf16.msra.mxu0 0
        %3775 = vmatprep.subr.bf16.mxu0 0
        %3776 = vmatpush1.bf16.msra.mxu0 0
        %3777 = vmatprep.subr.bf16.mxu0 0
        %3778 = vmatpush1.bf16.msra.mxu0 0
        %3779 = vmatprep.subr.bf16.mxu0 0
        %3780 = vmatpush1.bf16.msra.mxu0 0
        %3781 = vmatprep.subr.bf16.mxu0 0
        %3782 = vmatpush1.bf16.msra.mxu0 0
        %3783 = vmatprep.subr.bf16.mxu0 0
        %3784 = vmatpush1.bf16.msra.mxu0 0
        %3785 = vmatprep.subr.bf16.mxu0 0
        %3786 = vmatpush1.bf16.msra.mxu0 0
        %3787 = vmatprep.subr.bf16.mxu0 0
        %3788 = vmatpush1.bf16.msra.mxu0 0
        %3789 = vmatprep.mubr.bf16.mxu0 0
        %3790 = vmatmul.mubr.bf16.gmra.mrb[0].mxu0 %v3341
        %v3791 = vpop.f32.mrb[0].mxu0
        %v3792 = vadd.f32 0.0, %v3791
        %v3793 = vpop.f32.mrb[0].mxu0
        %v3794 = vadd.f32 0.0, %v3793
        %v3795 = vpop.f32.mrb[0].mxu0
        %v3796 = vpop.f32.mrb[0].mxu0
        %3797 = vdwg.mxu0
        %v3798 = vpack.c.bf16 %v3792, %v3792
        %v3799 = vpack.c.bf16 %v3794, %v3794
        %s3800 = scalar_lea.vmem %s314, 448
        %v3801 = vld [vmem:[%s3800] sm:$0xf]
        %v3802 = vld [vmem:[%s3800 + $0x4] sm:$0xf]
        %v3803 = vld [vmem:[%s3800 + $0x8] sm:$0xf]
        %v3804 = vld [vmem:[%s3800 + $0xc] sm:$0xf]
        %v3805 = vld [vmem:[%s3800 + $0x10] sm:$0xf]
        %v3806 = vld [vmem:[%s3800 + $0x14] sm:$0xf]
        %v3807 = vld [vmem:[%s3800 + $0x18] sm:$0xf]
        %v3808 = vld [vmem:[%s3800 + $0x1c] sm:$0xf]
        %v3809 = vld [vmem:[%s3800 + $0x20] sm:$0xf]
        %v3810 = vld [vmem:[%s3800 + $0x24] sm:$0xf]
        %v3811 = vld [vmem:[%s3800 + $0x28] sm:$0xf]
        %v3812 = vld [vmem:[%s3800 + $0x2c] sm:$0xf]
        %v3813 = vld [vmem:[%s3800 + $0x30] sm:$0xf]
        %v3814 = vld [vmem:[%s3800 + $0x34] sm:$0xf]
        %v3815 = vld [vmem:[%s3800 + $0x38] sm:$0xf]
        %v3816 = vld [vmem:[%s3800 + $0x3c] sm:$0xf]
        %s3817 = scalar_lea.vmem %s319, 14
        %v3818 = vld [vmem:[%s3817] sm:$0x3]
        %v3835 = vunpack.c.l.b16 %v3801
        %v3836 = vunpack.c.l.b16 %v3802
        %v3837 = vunpack.c.l.b16 %v3803
        %v3838 = vunpack.c.l.b16 %v3804
        %v3839 = vunpack.c.l.b16 %v3805
        %v3840 = vunpack.c.l.b16 %v3806
        %v3841 = vunpack.c.l.b16 %v3807
        %v3842 = vunpack.c.l.b16 %v3808
        %v3843 = vunpack.c.l.b16 %v3809
        %v3844 = vunpack.c.l.b16 %v3810
        %v3845 = vunpack.c.l.b16 %v3811
        %v3846 = vunpack.c.l.b16 %v3812
        %v3847 = vunpack.c.l.b16 %v3813
        %v3848 = vunpack.c.l.b16 %v3814
        %v3849 = vunpack.c.l.b16 %v3815
        %v3850 = vunpack.c.l.b16 %v3816
        %v3851 = vpack.c.b16 %v3836, %v3835
        %v3852 = vpack.c.b16 %v3838, %v3837
        %v3853 = vpack.c.b16 %v3840, %v3839
        %v3854 = vpack.c.b16 %v3842, %v3841
        %v3855 = vpack.c.b16 %v3844, %v3843
        %v3856 = vpack.c.b16 %v3846, %v3845
        %v3857 = vpack.c.b16 %v3848, %v3847
        %v3858 = vpack.c.b16 %v3850, %v3849
        %v3859 = vrot.slane %v410, 6
        %v3860 = vrot.slane %v411, 6
        %v3862 = vsel %vm518, %v3851, 0
        %v3865 = vsel %vm518, %v3852, 0
        %v3868 = vsel %vm518, %v3853, 0
        %v3871 = vsel %vm518, %v3854, 0
        %v3874 = vsel %vm518, %v3855, 0
        %v3877 = vsel %vm518, %v3856, 0
        %v3880 = vsel %vm518, %v3857, 0
        %v3883 = vsel %vm518, %v3858, 0
        %v3886 = vsel %vm543, %v3859, 0
        %v3889 = vsel %vm543, %v3860, 0
        %3891 = vmatprep.subr.bf16.mxu0 %v3889
        %3892 = vmatpush1.bf16.msra.mxu0 %v3886
        %3893 = vmatprep.subr.bf16.mxu0 0
        %3894 = vmatpush1.bf16.msra.mxu0 0
        %3895 = vmatprep.subr.bf16.mxu0 0
        %3896 = vmatpush1.bf16.msra.mxu0 0
        %3897 = vmatprep.subr.bf16.mxu0 0
        %3898 = vmatpush1.bf16.msra.mxu0 0
        %3899 = vmatprep.subr.bf16.mxu0 0
        %3900 = vmatpush1.bf16.msra.mxu0 0
        %3901 = vmatprep.subr.bf16.mxu0 0
        %3902 = vmatpush1.bf16.msra.mxu0 0
        %3903 = vmatprep.subr.bf16.mxu0 0
        %3904 = vmatpush1.bf16.msra.mxu0 0
        %3905 = vmatprep.subr.bf16.mxu0 0
        %3906 = vmatpush1.bf16.msra.mxu0 0
        %3907 = vmatprep.subr.bf16.mxu0 0
        %3908 = vmatpush1.bf16.msra.mxu0 0
        %3909 = vmatprep.subr.bf16.mxu0 0
        %3910 = vmatpush1.bf16.msra.mxu0 0
        %3911 = vmatprep.subr.bf16.mxu0 0
        %3912 = vmatpush1.bf16.msra.mxu0 0
        %3913 = vmatprep.subr.bf16.mxu0 0
        %3914 = vmatpush1.bf16.msra.mxu0 0
        %3915 = vmatprep.subr.bf16.mxu0 0
        %3916 = vmatpush1.bf16.msra.mxu0 0
        %3917 = vmatprep.subr.bf16.mxu0 0
        %3918 = vmatpush1.bf16.msra.mxu0 0
        %3919 = vmatprep.subr.bf16.mxu0 0
        %3920 = vmatpush1.bf16.msra.mxu0 0
        %3921 = vmatprep.subr.bf16.mxu0 0
        %3922 = vmatpush1.bf16.msra.mxu0 0
        %3923 = vmatprep.mubr.bf16.mxu0 0
        %3924 = vmatmul.mubr.bf16.gmra.mrb[0].mxu0 %v3862
        %v3925 = vpop.f32.mrb[0].mxu0
        %v3926 = vadd.f32 %v445, %v3925
        %v3927 = vpop.f32.mrb[0].mxu0
        %v3928 = vadd.f32 %v445, %v3927
        %v3929 = vpop.f32.mrb[0].mxu0
        %v3930 = vadd.f32 %v446, %v3929
        %v3931 = vpop.f32.mrb[0].mxu0
        %v3932 = vadd.f32 %v446, %v3931
        %3933 = vmatprep.mubr.bf16.mxu0 0
        %3934 = vmatmul.mubr.bf16.gmra.mrb[0].mxu0 %v3865
        %v3935 = vpop.f32.mrb[0].mxu0
        %v3936 = vadd.f32 %v447, %v3935
        %v3937 = vpop.f32.mrb[0].mxu0
        %v3938 = vadd.f32 %v447, %v3937
        %v3939 = vpop.f32.mrb[0].mxu0
        %v3940 = vadd.f32 %v448, %v3939
        %v3941 = vpop.f32.mrb[0].mxu0
        %v3942 = vadd.f32 %v448, %v3941
        %3943 = vmatprep.mubr.bf16.mxu0 0
        %3944 = vmatmul.mubr.bf16.gmra.mrb[0].mxu0 %v3868
        %v3945 = vpop.f32.mrb[0].mxu0
        %v3946 = vadd.f32 %v449, %v3945
        %v3947 = vpop.f32.mrb[0].mxu0
        %v3948 = vadd.f32 %v449, %v3947
        %v3949 = vpop.f32.mrb[0].mxu0
        %v3950 = vadd.f32 %v450, %v3949
        %v3951 = vpop.f32.mrb[0].mxu0
        %v3952 = vadd.f32 %v450, %v3951
        %3953 = vmatprep.mubr.bf16.mxu0 0
        %3954 = vmatmul.mubr.bf16.gmra.mrb[0].mxu0 %v3871
        %v3955 = vpop.f32.mrb[0].mxu0
        %v3956 = vadd.f32 %v451, %v3955
        %v3957 = vpop.f32.mrb[0].mxu0
        %v3958 = vadd.f32 %v451, %v3957
        %v3959 = vpop.f32.mrb[0].mxu0
        %v3960 = vadd.f32 %v452, %v3959
        %v3961 = vpop.f32.mrb[0].mxu0
        %v3962 = vadd.f32 %v452, %v3961
        %3963 = vmatprep.mubr.bf16.mxu0 0
        %3964 = vmatmul.mubr.bf16.gmra.mrb[0].mxu0 %v3874
        %v3965 = vpop.f32.mrb[0].mxu0
        %v3966 = vadd.f32 %v453, %v3965
        %v3967 = vpop.f32.mrb[0].mxu0
        %v3968 = vadd.f32 %v453, %v3967
        %v3969 = vpop.f32.mrb[0].mxu0
        %v3970 = vadd.f32 %v454, %v3969
        %v3971 = vpop.f32.mrb[0].mxu0
        %v3972 = vadd.f32 %v454, %v3971
        %3973 = vmatprep.mubr.bf16.mxu0 0
        %3974 = vmatmul.mubr.bf16.gmra.mrb[0].mxu0 %v3877
        %v3975 = vpop.f32.mrb[0].mxu0
        %v3976 = vadd.f32 %v455, %v3975
        %v3977 = vpop.f32.mrb[0].mxu0
        %v3978 = vadd.f32 %v455, %v3977
        %v3979 = vpop.f32.mrb[0].mxu0
        %v3980 = vadd.f32 %v456, %v3979
        %v3981 = vpop.f32.mrb[0].mxu0
        %v3982 = vadd.f32 %v456, %v3981
        %3983 = vmatprep.mubr.bf16.mxu0 0
        %3984 = vmatmul.mubr.bf16.gmra.mrb[0].mxu0 %v3880
        %v3985 = vpop.f32.mrb[0].mxu0
        %v3986 = vadd.f32 %v457, %v3985
        %v3987 = vpop.f32.mrb[0].mxu0
        %v3988 = vadd.f32 %v457, %v3987
        %v3989 = vpop.f32.mrb[0].mxu0
        %v3990 = vadd.f32 %v458, %v3989
        %v3991 = vpop.f32.mrb[0].mxu0
        %v3992 = vadd.f32 %v458, %v3991
        %3993 = vmatprep.mubr.bf16.mxu0 0
        %3994 = vmatmul.mubr.bf16.gmra.mrb[0].mxu0 %v3883
        %v3995 = vpop.f32.mrb[0].mxu0
        %v3996 = vadd.f32 %v459, %v3995
        %v3997 = vpop.f32.mrb[0].mxu0
        %v3998 = vadd.f32 %v459, %v3997
        %v3999 = vpop.f32.mrb[0].mxu0
        %v4000 = vadd.f32 %v460, %v3999
        %v4001 = vpop.f32.mrb[0].mxu0
        %v4002 = vadd.f32 %v460, %v4001
        %4003 = vdwg.mxu0
        %v4004 = vmax.f32 %v3926, %v3936
        %v4005 = vmax.f32 %v3930, %v3940
        %v4006 = vmax.f32 %v4004, %v3946
        %v4007 = vmax.f32 %v4005, %v3950
        %v4008 = vmax.f32 %v4006, %v3956
        %v4009 = vmax.f32 %v4007, %v3960
        %v4010 = vmax.f32 %v4008, %v3966
        %v4011 = vmax.f32 %v4009, %v3970
        %v4012 = vmax.f32 %v4010, %v3976
        %v4013 = vmax.f32 %v4011, %v3980
        %v4014 = vmax.f32 %v4012, %v3986
        %v4015 = vmax.f32 %v4013, %v3990
        %v4016 = vmax.f32 %v4014, %v3996
        %v4017 = vmax.f32 %v4015, %v4000
        %v4018 = vmax.f32 %v4016, %v4017
        %v4019 = vrot.slane %v4018, 4
        %v4020 = vmax.f32 %v4018, %v4019
        %v4021 = vrot.slane %v4020, 2
        %v4022 = vmax.f32 %v4020, %v4021
        %v4023 = vrot.slane %v4022, 1
        %v4024 = vmax.f32 %v4022, %v4023
        %v4025 = vmax.f32 %v3928, %v3938
        %v4026 = vmax.f32 %v3932, %v3942
        %v4027 = vmax.f32 %v4025, %v3948
        %v4028 = vmax.f32 %v4026, %v3952
        %v4029 = vmax.f32 %v4027, %v3958
        %v4030 = vmax.f32 %v4028, %v3962
        %v4031 = vmax.f32 %v4029, %v3968
        %v4032 = vmax.f32 %v4030, %v3972
        %v4033 = vmax.f32 %v4031, %v3978
        %v4034 = vmax.f32 %v4032, %v3982
        %v4035 = vmax.f32 %v4033, %v3988
        %v4036 = vmax.f32 %v4034, %v3992
        %v4037 = vmax.f32 %v4035, %v3998
        %v4038 = vmax.f32 %v4036, %v4002
        %v4039 = vmax.f32 %v4037, %v4038
        %v4040 = vrot.slane %v4039, 4
        %v4041 = vmax.f32 %v4039, %v4040
        %v4042 = vrot.slane %v4041, 2
        %v4043 = vmax.f32 %v4041, %v4042
        %v4044 = vrot.slane %v4043, 1
        %v4045 = vmax.f32 %v4043, %v4044
        %v4046 = vsub.f32 %v3926, %v4024
        %v4047 = vsub.f32 %v3928, %v4045
        %v4048 = vsub.f32 %v3930, %v4024
        %v4049 = vsub.f32 %v3932, %v4045
        %v4050 = vsub.f32 %v3936, %v4024
        %v4051 = vsub.f32 %v3938, %v4045
        %v4052 = vsub.f32 %v3940, %v4024
        %v4053 = vsub.f32 %v3942, %v4045
        %v4054 = vsub.f32 %v3946, %v4024
        %v4055 = vsub.f32 %v3948, %v4045
        %v4056 = vsub.f32 %v3950, %v4024
        %v4057 = vsub.f32 %v3952, %v4045
        %v4058 = vsub.f32 %v3956, %v4024
        %v4059 = vsub.f32 %v3958, %v4045
        %v4060 = vsub.f32 %v3960, %v4024
        %v4061 = vsub.f32 %v3962, %v4045
        %v4062 = vsub.f32 %v3966, %v4024
        %v4063 = vsub.f32 %v3968, %v4045
        %v4064 = vsub.f32 %v3970, %v4024
        %v4065 = vsub.f32 %v3972, %v4045
        %v4066 = vsub.f32 %v3976, %v4024
        %v4067 = vsub.f32 %v3978, %v4045
        %v4068 = vsub.f32 %v3980, %v4024
        %v4069 = vsub.f32 %v3982, %v4045
        %v4070 = vsub.f32 %v3986, %v4024
        %v4071 = vsub.f32 %v3988, %v4045
        %v4072 = vsub.f32 %v3990, %v4024
        %v4073 = vsub.f32 %v3992, %v4045
        %v4074 = vsub.f32 %v3996, %v4024
        %v4075 = vsub.f32 %v3998, %v4045
        %v4076 = vsub.f32 %v4000, %v4024
        %v4077 = vsub.f32 %v4002, %v4045
        %v4078 = vmul.f32 %v4046, 1.442695
        %v4079 = vpow.pop %v4078
        %v4080 = vmul.f32 %v4047, 1.442695
        %v4081 = vpow.pop %v4080
        %v4082 = vmul.f32 %v4048, 1.442695
        %v4083 = vpow.pop %v4082
        %v4084 = vmul.f32 %v4049, 1.442695
        %v4085 = vpow.pop %v4084
        %v4086 = vmul.f32 %v4050, 1.442695
        %v4087 = vpow.pop %v4086
        %v4088 = vmul.f32 %v4051, 1.442695
        %v4089 = vpow.pop %v4088
        %v4090 = vmul.f32 %v4052, 1.442695
        %v4091 = vpow.pop %v4090
        %v4092 = vmul.f32 %v4053, 1.442695
        %v4093 = vpow.pop %v4092
        %v4094 = vmul.f32 %v4054, 1.442695
        %v4095 = vpow.pop %v4094
        %v4096 = vmul.f32 %v4055, 1.442695
        %v4097 = vpow.pop %v4096
        %v4098 = vmul.f32 %v4056, 1.442695
        %v4099 = vpow.pop %v4098
        %v4100 = vmul.f32 %v4057, 1.442695
        %v4101 = vpow.pop %v4100
        %v4102 = vmul.f32 %v4058, 1.442695
        %v4103 = vpow.pop %v4102
        %v4104 = vmul.f32 %v4059, 1.442695
        %v4105 = vpow.pop %v4104
        %v4106 = vmul.f32 %v4060, 1.442695
        %v4107 = vpow.pop %v4106
        %v4108 = vmul.f32 %v4061, 1.442695
        %v4109 = vpow.pop %v4108
        %v4110 = vmul.f32 %v4062, 1.442695
        %v4111 = vpow.pop %v4110
        %v4112 = vmul.f32 %v4063, 1.442695
        %v4113 = vpow.pop %v4112
        %v4114 = vmul.f32 %v4064, 1.442695
        %v4115 = vpow.pop %v4114
        %v4116 = vmul.f32 %v4065, 1.442695
        %v4117 = vpow.pop %v4116
        %v4118 = vmul.f32 %v4066, 1.442695
        %v4119 = vpow.pop %v4118
        %v4120 = vmul.f32 %v4067, 1.442695
        %v4121 = vpow.pop %v4120
        %v4122 = vmul.f32 %v4068, 1.442695
        %v4123 = vpow.pop %v4122
        %v4124 = vmul.f32 %v4069, 1.442695
        %v4125 = vpow.pop %v4124
        %v4126 = vmul.f32 %v4070, 1.442695
        %v4127 = vpow.pop %v4126
        %v4128 = vmul.f32 %v4071, 1.442695
        %v4129 = vpow.pop %v4128
        %v4130 = vmul.f32 %v4072, 1.442695
        %v4131 = vpow.pop %v4130
        %v4132 = vmul.f32 %v4073, 1.442695
        %v4133 = vpow.pop %v4132
        %v4134 = vmul.f32 %v4074, 1.442695
        %v4135 = vpow.pop %v4134
        %v4136 = vmul.f32 %v4075, 1.442695
        %v4137 = vpow.pop %v4136
        %v4138 = vmul.f32 %v4076, 1.442695
        %v4139 = vpow.pop %v4138
        %v4140 = vmul.f32 %v4077, 1.442695
        %v4141 = vpow.pop %v4140
        %v4142 = vadd.f32 %v4079, %v4083
        %v4143 = vadd.f32 %v4142, %v4087
        %v4144 = vadd.f32 %v4143, %v4091
        %v4145 = vadd.f32 %v4144, %v4095
        %v4146 = vadd.f32 %v4145, %v4099
        %v4147 = vadd.f32 %v4146, %v4103
        %v4148 = vadd.f32 %v4147, %v4107
        %v4149 = vadd.f32 %v4148, %v4111
        %v4150 = vadd.f32 %v4149, %v4115
        %v4151 = vadd.f32 %v4150, %v4119
        %v4152 = vadd.f32 %v4151, %v4123
        %v4153 = vadd.f32 %v4152, %v4127
        %v4154 = vadd.f32 %v4153, %v4131
        %v4155 = vadd.f32 %v4154, %v4135
        %v4156 = vadd.f32 %v4155, %v4139
        %v4157 = vrot.slane %v4156, 4
        %v4158 = vadd.f32 %v4156, %v4157
        %v4159 = vrot.slane %v4158, 2
        %v4160 = vadd.f32 %v4158, %v4159
        %v4161 = vrot.slane %v4160, 1
        %v4162 = vadd.f32 %v4160, %v4161
        %v4163 = vadd.f32 %v4081, %v4085
        %v4164 = vadd.f32 %v4163, %v4089
        %v4165 = vadd.f32 %v4164, %v4093
        %v4166 = vadd.f32 %v4165, %v4097
        %v4167 = vadd.f32 %v4166, %v4101
        %v4168 = vadd.f32 %v4167, %v4105
        %v4169 = vadd.f32 %v4168, %v4109
        %v4170 = vadd.f32 %v4169, %v4113
        %v4171 = vadd.f32 %v4170, %v4117
        %v4172 = vadd.f32 %v4171, %v4121
        %v4173 = vadd.f32 %v4172, %v4125
        %v4174 = vadd.f32 %v4173, %v4129
        %v4175 = vadd.f32 %v4174, %v4133
        %v4176 = vadd.f32 %v4175, %v4137
        %v4177 = vadd.f32 %v4176, %v4141
        %v4178 = vrot.slane %v4177, 4
        %v4179 = vadd.f32 %v4177, %v4178
        %v4180 = vrot.slane %v4179, 2
        %v4181 = vadd.f32 %v4179, %v4180
        %v4182 = vrot.slane %v4181, 1
        %v4183 = vadd.f32 %v4181, %v4182
        %v4184 = vrcp.pop %v4162
        %v4185 = vrcp.pop %v4183
        %v4186 = vmul.f32 %v4079, %v4184
        %v4187 = vmul.f32 %v4081, %v4185
        %v4188 = vmul.f32 %v4083, %v4184
        %v4189 = vmul.f32 %v4085, %v4185
        %v4190 = vmul.f32 %v4087, %v4184
        %v4191 = vmul.f32 %v4089, %v4185
        %v4192 = vmul.f32 %v4091, %v4184
        %v4193 = vmul.f32 %v4093, %v4185
        %v4194 = vmul.f32 %v4095, %v4184
        %v4195 = vmul.f32 %v4097, %v4185
        %v4196 = vmul.f32 %v4099, %v4184
        %v4197 = vmul.f32 %v4101, %v4185
        %v4198 = vmul.f32 %v4103, %v4184
        %v4199 = vmul.f32 %v4105, %v4185
        %v4200 = vmul.f32 %v4107, %v4184
        %v4201 = vmul.f32 %v4109, %v4185
        %v4202 = vmul.f32 %v4111, %v4184
        %v4203 = vmul.f32 %v4113, %v4185
        %v4204 = vmul.f32 %v4115, %v4184
        %v4205 = vmul.f32 %v4117, %v4185
        %v4206 = vmul.f32 %v4119, %v4184
        %v4207 = vmul.f32 %v4121, %v4185
        %v4208 = vmul.f32 %v4123, %v4184
        %v4209 = vmul.f32 %v4125, %v4185
        %v4210 = vmul.f32 %v4127, %v4184
        %v4211 = vmul.f32 %v4129, %v4185
        %v4212 = vmul.f32 %v4131, %v4184
        %v4213 = vmul.f32 %v4133, %v4185
        %v4214 = vmul.f32 %v4135, %v4184
        %v4215 = vmul.f32 %v4137, %v4185
        %v4216 = vmul.f32 %v4139, %v4184
        %v4217 = vmul.f32 %v4141, %v4185
        %v4218 = vpack.c.bf16 %v4188, %v4186
        %v4219 = vpack.c.bf16 %v4189, %v4187
        %v4220 = vpack.c.bf16 %v4192, %v4190
        %v4221 = vpack.c.bf16 %v4193, %v4191
        %v4222 = vpack.c.bf16 %v4196, %v4194
        %v4223 = vpack.c.bf16 %v4197, %v4195
        %v4224 = vpack.c.bf16 %v4200, %v4198
        %v4225 = vpack.c.bf16 %v4201, %v4199
        %v4226 = vpack.c.bf16 %v4204, %v4202
        %v4227 = vpack.c.bf16 %v4205, %v4203
        %v4228 = vpack.c.bf16 %v4208, %v4206
        %v4229 = vpack.c.bf16 %v4209, %v4207
        %v4230 = vpack.c.bf16 %v4212, %v4210
        %v4231 = vpack.c.bf16 %v4213, %v4211
        %v4232 = vpack.c.bf16 %v4216, %v4214
        %v4233 = vpack.c.bf16 %v4217, %v4215
        %4234 = vmatprep.subr.bf16.mxu0 %v4219
        %4235 = vmatpush1.bf16.msra.mxu0 %v4218
        %4236 = vmatprep.subr.bf16.mxu0 %v4221
        %4237 = vmatpush1.bf16.msra.mxu0 %v4220
        %4238 = vmatprep.subr.bf16.mxu0 %v4223
        %4239 = vmatpush1.bf16.msra.mxu0 %v4222
        %4240 = vmatprep.subr.bf16.mxu0 %v4225
        %4241 = vmatpush1.bf16.msra.mxu0 %v4224
        %4242 = vmatprep.subr.bf16.mxu0 %v4227
        %4243 = vmatpush1.bf16.msra.mxu0 %v4226
        %4244 = vmatprep.subr.bf16.mxu0 %v4229
        %4245 = vmatpush1.bf16.msra.mxu0 %v4228
        %4246 = vmatprep.subr.bf16.mxu0 %v4231
        %4247 = vmatpush1.bf16.msra.mxu0 %v4230
        %4248 = vmatprep.subr.bf16.mxu0 %v4233
        %4249 = vmatpush1.bf16.msra.mxu0 %v4232
        %4250 = vmatprep.subr.bf16.mxu0 0
        %4251 = vmatpush1.bf16.msra.mxu0 0
        %4252 = vmatprep.subr.bf16.mxu0 0
        %4253 = vmatpush1.bf16.msra.mxu0 0
        %4254 = vmatprep.subr.bf16.mxu0 0
        %4255 = vmatpush1.bf16.msra.mxu0 0
        %4256 = vmatprep.subr.bf16.mxu0 0
        %4257 = vmatpush1.bf16.msra.mxu0 0
        %4258 = vmatprep.subr.bf16.mxu0 0
        %4259 = vmatpush1.bf16.msra.mxu0 0
        %4260 = vmatprep.subr.bf16.mxu0 0
        %4261 = vmatpush1.bf16.msra.mxu0 0
        %4262 = vmatprep.subr.bf16.mxu0 0
        %4263 = vmatpush1.bf16.msra.mxu0 0
        %4264 = vmatprep.subr.bf16.mxu0 0
        %4265 = vmatpush1.bf16.msra.mxu0 0
        %4266 = vmatprep.mubr.bf16.mxu0 0
        %4267 = vmatmul.mubr.bf16.gmra.mrb[0].mxu0 %v3818
        %v4268 = vpop.f32.mrb[0].mxu0
        %v4269 = vadd.f32 0.0, %v4268
        %v4270 = vpop.f32.mrb[0].mxu0
        %v4271 = vadd.f32 0.0, %v4270
        %v4272 = vpop.f32.mrb[0].mxu0
        %v4273 = vpop.f32.mrb[0].mxu0
        %4274 = vdwg.mxu0
        %v4275 = vpack.c.bf16 %v4269, %v4269
        %v4276 = vpack.c.bf16 %v4271, %v4271
        %v4279 = vrot.slane %v1413, 6
        %v4280 = vrot.slane %v1414, 6
        %v4283 = vrot.slane %v1890, 4
        %v4284 = vrot.slane %v1891, 4
        %v4287 = vrot.slane %v2367, 2
        %v4288 = vrot.slane %v2368, 2
        %v4291 = vrot.slane %v3321, 6
        %v4292 = vrot.slane %v3322, 6
        %v4295 = vrot.slane %v3798, 4
        %v4296 = vrot.slane %v3799, 4
        %v4299 = vrot.slane %v4275, 2
        %v4300 = vrot.slane %v4276, 2
        %v4303 = vsel %vm543, %v934, %v4279
        %v4306 = vsel %vm543, %v935, %v4280
        %vm4307 = vcmask 1043456
        %v4309 = vsel %vm4307, %v4303, %v4283
        %v4311 = vsel %vm4307, %v4306, %v4284
        %vm4312 = vcmask 1045504
        %v4314 = vsel %vm4312, %v4309, %v4287
        %v4317 = vsel %vm4312, %v4311, %v4288
        %v4321 = vsel %vm543, %v2842, %v4291
        %v4324 = vsel %vm543, %v2843, %v4292
        %v4326 = vsel %vm4307, %v4321, %v4295
        %v4328 = vsel %vm4307, %v4324, %v4296
        %v4330 = vsel %vm4312, %v4326, %v4299
        %v4333 = vsel %vm4312, %v4328, %v4300
        %v4335 = vld [vmem:[%s4] sm:$0xf]
        %v4336 = vld [vmem:[%s4 + $0x4] sm:$0xf]
        %v4337 = vld [vmem:[%s4 + $0x8] sm:$0xf]
        %v4338 = vld [vmem:[%s4 + $0xc] sm:$0xf]
        %v4339 = vld [vmem:[%s5] sm:$0xff]
        %v4340 = vld [vmem:[%s5 + $0x8] sm:$0xff]
        %v4341 = vld [vmem:[%s5 + $0x10] sm:$0xff]
        %v4342 = vld [vmem:[%s5 + $0x18] sm:$0xff]
        %4344 = vset.pattern.permute.xlu0 0
        %4345 = vperm.xlu0 %4344, %v4339
        %v4346 = vpop.permute.xlu0 %4345
        %4349 = vset.pattern.permute.xlu0 0
        %4350 = vperm.xlu0 %4349, %v4340
        %v4351 = vpop.permute.xlu0 %4350
        %4354 = vset.pattern.permute.xlu0 0
        %4355 = vperm.xlu0 %4354, %v4341
        %v4356 = vpop.permute.xlu0 %4355
        %4359 = vset.pattern.permute.xlu0 0
        %4360 = vperm.xlu0 %4359, %v4342
        %v4361 = vpop.permute.xlu0 %4360
        %v4367 = vunpack.c.l.b16 %v4335
        %v4368 = vunpack.c.l.b16 %v4336
        %v4369 = vunpack.c.l.b16 %v4337
        %v4370 = vunpack.c.l.b16 %v4338
        %v4371 = vpack.c.b16 %v4368, %v4367
        %v4372 = vpack.c.b16 %v4370, %v4369
        %v4374 = vsel %vm348, %v4371, 0
        %v4377 = vsel %vm348, %v4372, 0
        %4379 = vmatprep.subr.bf16.mxu0 %v4317
        %4380 = vmatpush1.bf16.msra.mxu0 %v4314
        %4381 = vmatprep.subr.bf16.mxu0 %v4333
        %4382 = vmatpush1.bf16.msra.mxu0 %v4330
        %4383 = vmatprep.subr.bf16.mxu0 0
        %4384 = vmatpush1.bf16.msra.mxu0 0
        %4385 = vmatprep.subr.bf16.mxu0 0
        %4386 = vmatpush1.bf16.msra.mxu0 0
        %4387 = vmatprep.subr.bf16.mxu0 0
        %4388 = vmatpush1.bf16.msra.mxu0 0
        %4389 = vmatprep.subr.bf16.mxu0 0
        %4390 = vmatpush1.bf16.msra.mxu0 0
        %4391 = vmatprep.subr.bf16.mxu0 0
        %4392 = vmatpush1.bf16.msra.mxu0 0
        %4393 = vmatprep.subr.bf16.mxu0 0
        %4394 = vmatpush1.bf16.msra.mxu0 0
        %4395 = vmatprep.subr.bf16.mxu0 0
        %4396 = vmatpush1.bf16.msra.mxu0 0
        %4397 = vmatprep.subr.bf16.mxu0 0
        %4398 = vmatpush1.bf16.msra.mxu0 0
        %4399 = vmatprep.subr.bf16.mxu0 0
        %4400 = vmatpush1.bf16.msra.mxu0 0
        %4401 = vmatprep.subr.bf16.mxu0 0
        %4402 = vmatpush1.bf16.msra.mxu0 0
        %4403 = vmatprep.subr.bf16.mxu0 0
        %4404 = vmatpush1.bf16.msra.mxu0 0
        %4405 = vmatprep.subr.bf16.mxu0 0
        %4406 = vmatpush1.bf16.msra.mxu0 0
        %4407 = vmatprep.subr.bf16.mxu0 0
        %4408 = vmatpush1.bf16.msra.mxu0 0
        %4409 = vmatprep.subr.bf16.mxu0 0
        %4410 = vmatpush1.bf16.msra.mxu0 0
        %4411 = vmatprep.mubr.bf16.mxu0 0
        %4412 = vmatmul.mubr.bf16.gmra.mrb[0].mxu0 %v4374
        %v4413 = vpop.f32.mrb[0].mxu0
        %v4414 = vadd.f32 %v4346, %v4413
        %v4415 = vpop.f32.mrb[0].mxu0
        %v4416 = vadd.f32 %v4346, %v4415
        %v4417 = vpop.f32.mrb[0].mxu0
        %v4418 = vadd.f32 %v4351, %v4417
        %v4419 = vpop.f32.mrb[0].mxu0
        %v4420 = vadd.f32 %v4351, %v4419
        %4421 = vmatprep.mubr.bf16.mxu0 0
        %4422 = vmatmul.mubr.bf16.gmra.mrb[0].mxu0 %v4377
        %v4423 = vpop.f32.mrb[0].mxu0
        %v4424 = vadd.f32 %v4356, %v4423
        %v4425 = vpop.f32.mrb[0].mxu0
        %v4426 = vadd.f32 %v4356, %v4425
        %v4427 = vpop.f32.mrb[0].mxu0
        %v4428 = vadd.f32 %v4361, %v4427
        %v4429 = vpop.f32.mrb[0].mxu0
        %v4430 = vadd.f32 %v4361, %v4429
        %4431 = vdwg.mxu0
        %v4432 = vadd.f32 %v4414, %v322
        %v4433 = vadd.f32 %v4416, %v323
        %v4434 = vadd.f32 %v4418, %v324
        %v4435 = vadd.f32 %v4420, %v325
        %v4436 = vadd.f32 %v4424, %v326
        %v4437 = vadd.f32 %v4426, %v327
        %v4438 = vadd.f32 %v4428, %v328
        %v4439 = vadd.f32 %v4430, %v329
        %4440 = vst [vmem:[%s299] sm:$0xff] %v4432
        %4441 = vst [vmem:[%s299 + $0x8] sm:$0xff] %v4433
        %4442 = vst [vmem:[%s299 + $0x10] sm:$0xff] %v4434
        %4443 = vst [vmem:[%s299 + $0x18] sm:$0xff] %v4435
        %4444 = vst [vmem:[%s299 + $0x20] sm:$0xff] %v4436
        %4445 = vst [vmem:[%s299 + $0x28] sm:$0xff] %v4437
        %4446 = vst [vmem:[%s299 + $0x30] sm:$0xff] %v4438
        %4447 = vst [vmem:[%s299 + $0x38] sm:$0xff] %v4439
        %s4448 = sand.u32 %s185, 1
        %s4449 = scalar_lea.sflag [#allocation3], %s4448
        %s4450 = sand.u32 %s185, 1
        %s4451 = smul.addr %s4450, 64
        %s4452 = scalar_lea.vmem [#allocation2], %s4451
        // Predicated region
        $region45: #{tpu_custom_call.1} parent=43 // pred_check
          %p4453 = pneg %p195
        $region46: #{tpu_custom_call.1} parent=43 // pred_check_branch
          %4455 = sbr.rel (%p4453) target = $region48
        $region47: #{tpu_custom_call.1} parent=43 // pred_region
          %s4456 = smul.u32 2, %s25
          %s4458 = ssub.s32 1024, 1024
          %4459 = vsyncadd %s4449, %s4458
          %s4460 = smul.addr %s24, 8
          %s4461 = sadd.s32 %s4456, %s4460
          %s4462 = smul.addr %s4461, 128
          %s4463 = scalar_lea.hbm %s6, %s4462
          %s4464 = sshll.u32 %s4452, 4
          %s4465 = int_to_ptr.vmem [resolvable:$true] %s4464
          %4470 = dma.vmem_to_hbm [thread:$0]  %s4465, 1024, %s4463, %s4449, 256, 256, 16
        $region48: #{tpu_custom_call.1} parent=43 // pred_fallthru
          _
      $region44: #{tpu_custom_call.1} parent=5 // pred_fallthru
        _
      %p4471 = scmp.le.s32.totalorder 2, %s15
      // Predicated region
      $region49: #{tpu_custom_call.1} parent=5 // pred_check
        %p4472 = pneg %p4471
      $region50: #{tpu_custom_call.1} parent=5 // pred_check_branch
        %4474 = sbr.rel (%p4472) target = $region52
      $region51: #{tpu_custom_call.1} parent=5 // pred_region
        %s4475 = ssub.s32 %s15, 2
        // Predicated region
        $region53: #{tpu_custom_call.1} parent=51 // pred_check
          %p4476 = pneg %p201
        $region54: #{tpu_custom_call.1} parent=51 // pred_check_branch
          %4478 = sbr.rel (%p4476) target = $region56
        $region55: #{tpu_custom_call.1} parent=51 // pred_region
          %s4479 = sand.u32 %s186, 1
          %s4480 = scalar_lea.sflag [#allocation3], %s4479
          %s4481 = sand.u32 %s186, 1
          %s4482 = smul.addr %s4481, 64
          %s4483 = scalar_lea.vmem [#allocation2], %s4482
          %4484 = dma.done %s4480, 1024
        $region56: #{tpu_custom_call.1} parent=51 // pred_fallthru
          _
      $region52: #{tpu_custom_call.1} parent=5 // pred_fallthru
        _
    $region6: #{tpu_custom_call.1} parent=1 // loop_footer
      %s19 = sadd.s32 1, %s15
    $region7: #{tpu_custom_call.1} parent=1 // loop_footer_branch
      %14 = sbr.rel target = $region3
    $region8: #{tpu_custom_call.1} parent=1 // loop_exit
      _
    %4485 = vsyncpa [#allocation3], 1
    %s4486 = scalar_lea.sflag [#allocation3], 1
    %4487 = vsyncpa %s4486, 1

</llo_original>
